<compile_context>
chip_gen: v7x
topology: tpu7x:2x2x1
jax: 0.10.0
libtpu: 0.0.40
codegen_flags: <defaults>
</compile_context>

<pallas_src>
import functools

import jax
import jax.numpy as jnp
from jax import lax
from jax.experimental import pallas as pl
from jax.experimental.pallas import tpu as pltpu

COMPUTE_DTYPE = jnp.bfloat16   # MXU inputs / streamed activations
STATE_DTYPE = jnp.float32      # recurrent state, gates, nonlinearities


def _round_up(x, m):
    return ((x + m - 1) // m) * m


def _vmem_budget_bytes():
    """Generation-aware VMEM budget (review: derive limits from get_tpu_info)."""
    try:
        cap = int(pltpu.get_tpu_info().vmem_capacity_bytes)
    except Exception:
        cap = 64 * 1024 * 1024   # conservative default (v7x per-TC VMEM)
    return cap // 2              # headroom for Mosaic internals / double buffers


def _pick_time_tile(T_pad, Tc, B_pad, max_rows=2048):
    """Largest multiple of Tc that divides T_pad with <= max_rows rows/tile."""
    NT = T_pad // Tc
    best = 1
    for k in range(1, NT + 1):
        if NT % k == 0 and Tc * k * B_pad <= max_rows:
            best = k
    return Tc * best


def _lstm_cell(z, c_prev, H):
    """LSTM cell update from pre-activations z = x@W_ih + h@W_hh + b.

    EUP-friendly: a single full-width tanh(0.5*z) yields all three sigmoids
    (sigmoid(x) = 0.5*tanh(0.5*x) + 0.5); only the g gate needs a second tanh.
    Gate order is PyTorch's (i, f, g, o)."""
    th = jnp.tanh(0.5 * z)
    i_g = 0.5 * th[:, 0 * H:1 * H] + 0.5
    f_g = 0.5 * th[:, 1 * H:2 * H] + 0.5
    o_g = 0.5 * th[:, 3 * H:4 * H] + 0.5
    g_g = jnp.tanh(z[:, 2 * H:3 * H])
    c_new = f_g * c_prev + i_g * g_g
    h_new = o_g * jnp.tanh(c_new)
    return h_new, c_new


# ---------------------------------------------------------------------------
# Path A: fully fused model (all layers + both directions + projection in one
# pallas_call, everything VMEM-resident).  Used when the footprint fits.
# ---------------------------------------------------------------------------

def _fused_kernel(*refs, n_layers, T, B_pad, H, P, D, unroll):
    # refs = [lens, x, (w_ih, w_hh, b) * n_layers, proj_w, proj_b,
    #         out, act_f, act_b, gates_f, gates_b]
    assert len(refs) == 9 + 3 * n_layers
    lens_ref, x_ref = refs[0], refs[1]
    layer_refs = [tuple(refs[2 + 3 * l:5 + 3 * l]) for l in range(n_layers)]
    pos = 2 + 3 * n_layers
    pw_ref, pb_ref, out_ref = refs[pos], refs[pos + 1], refs[pos + 2]
    actf_scr, actb_scr, gf_scr, gb_scr = refs[pos + 3:pos + 7]

    H4 = 4 * H
    N = T * B_pad
    lens = lens_ref[...]                                   # (B_pad, 1) int32

    for layer, (wih_ref, whh_ref, b_ref) in enumerate(layer_refs):
        # --- input->gates for ALL timesteps & both directions: hoisted MXU
        #     matmuls, no HBM round trip (gates live in VMEM scratch). ---
        if layer == 0:
            xin = x_ref[...].reshape(N, D)                 # bf16
            for d, g_scr in ((0, gf_scr), (1, gb_scr)):
                g = jnp.dot(xin, wih_ref[d],
                            preferred_element_type=jnp.float32) + b_ref[d]
                g_scr[...] = g.reshape(T, B_pad, H4)
        else:
            af = actf_scr[...].reshape(N, H).astype(COMPUTE_DTYPE)
            ab = actb_scr[...].reshape(N, H).astype(COMPUTE_DTYPE)
            for d, g_scr in ((0, gf_scr), (1, gb_scr)):
                g = (jnp.dot(af, wih_ref[d, 0:H, :],
                             preferred_element_type=jnp.float32)
                     + jnp.dot(ab, wih_ref[d, H:2 * H, :],
                               preferred_element_type=jnp.float32)
                     + b_ref[d])
                g_scr[...] = g.reshape(T, B_pad, H4)

        # --- recurrence: both directions interleaved in ONE loop body so the
        #     two independent chains hide each other's MXU/EUP latency. ---
        w_hh_f = whh_ref[0]                                # (H, 4H) bf16
        w_hh_b = whh_ref[1]

        def step(s, carry):
            hf, cf, hb, cb = carry
            tb = T - 1 - s
            # forward, time s
            zf = gf_scr[s] + jnp.dot(hf.astype(COMPUTE_DTYPE), w_hh_f,
                                     preferred_element_type=jnp.float32)
            hf_new, cf_new = _lstm_cell(zf, cf, H)
            live_f = s < lens
            hf = jnp.where(live_f, hf_new, hf)
            cf = jnp.where(live_f, cf_new, cf)
            actf_scr[s] = jnp.where(live_f, hf_new, 0.0)
            # backward, time T-1-s
            zb = gb_scr[tb] + jnp.dot(hb.astype(COMPUTE_DTYPE), w_hh_b,
                                      preferred_element_type=jnp.float32)
            hb_new, cb_new = _lstm_cell(zb, cb, H)
            live_b = tb < lens
            hb = jnp.where(live_b, hb_new, hb)
            cb = jnp.where(live_b, cb_new, cb)
            actb_scr[tb] = jnp.where(live_b, hb_new, 0.0)
            return hf, cf, hb, cb

        z0 = jnp.zeros((B_pad, H), jnp.float32)
        lax.fori_loop(0, T, step, (z0, z0, z0, z0), unroll=unroll)

    # --- projection of both directions; one lane-dense (., 2P) store ---
    af = actf_scr[...].reshape(N, H).astype(COMPUTE_DTYPE)
    ab = actb_scr[...].reshape(N, H).astype(COMPUTE_DTYPE)
    pw = pw_ref[...]
    pbias = pb_ref[...]
    proj_f = jnp.dot(af, pw, preferred_element_type=jnp.float32) + pbias
    proj_b = jnp.dot(ab, pw, preferred_element_type=jnp.float32) + pbias
    out_ref[...] = jnp.concatenate([proj_f, proj_b],
                                   axis=-1).reshape(T, B_pad, 2 * P)


def _fused_forward(params, x_tm, lens_col, *, T, B_pad, H, P, vmem_limit,
                   unroll):
    D = x_tm.shape[-1]
    n_layers = len(params["layers"])
    H4 = 4 * H

    specs = [pl.BlockSpec((B_pad, 1), lambda i: (0, 0)),
             pl.BlockSpec((T, B_pad, D), lambda i: (0, 0, 0))]
    args = [lens_col, x_tm]
    for li, lp in enumerate(params["layers"]):
        Din = D if li == 0 else 2 * H
        specs += [pl.BlockSpec((2, Din, H4), lambda i: (0, 0, 0)),
                  pl.BlockSpec((2, H, H4), lambda i: (0, 0, 0)),
                  pl.BlockSpec((2, 1, H4), lambda i: (0, 0, 0))]
        args += [lp["w_ih"], lp["w_hh"], lp["b"]]
    specs += [pl.BlockSpec((H, P), lambda i: (0, 0)),
              pl.BlockSpec((1, P), lambda i: (0, 0))]
    args += [params["proj_w"], params["proj_b"]]

    kernel = functools.partial(_fused_kernel, n_layers=n_layers, T=T,
                               B_pad=B_pad, H=H, P=P, D=D, unroll=unroll)
    return pl.pallas_call(
        kernel,
        out_shape=jax.ShapeDtypeStruct((T, B_pad, 2 * P), jnp.float32),
        grid=(1,),
        in_specs=specs,
        out_specs=pl.BlockSpec((T, B_pad, 2 * P), lambda i: (0, 0, 0)),
        scratch_shapes=[
            pltpu.VMEM((T, B_pad, H), jnp.float32),    # act fwd
            pltpu.VMEM((T, B_pad, H), jnp.float32),    # act bwd
            pltpu.VMEM((T, B_pad, H4), jnp.float32),   # gates fwd
            pltpu.VMEM((T, B_pad, H4), jnp.float32),   # gates bwd
        ],
        compiler_params=pltpu.CompilerParams(
            dimension_semantics=("arbitrary",),
            vmem_limit_bytes=vmem_limit),
    )(*args)


# ---------------------------------------------------------------------------
# Path B: per-layer streamed kernel (large configs).  One pallas_call per
# layer: gates computed in-chunk (no HBM gates tensor), both directions
# interleaved, single sequential time-chunk grid axis, resident (T, B, 2H)
# output slab so deep layers need only one K=2H dot.
# ---------------------------------------------------------------------------

def _bilstm_layer_kernel(lens_ref, xf_ref, xb_ref, whh_ref, b_ref, wih_hbm,
                         out_ref,
                         wih_scr, gf_scr, gb_scr, hf_scr, cf_scr, hb_scr,
                         cb_scr, dma_sem, *, Tc, H, NT, unroll):
    tc = pl.program_id(0)          # time-chunk counter (sequential, 'arbitrary')
    rtc = NT - 1 - tc              # backward direction walks chunks in reverse

    @pl.when(tc == 0)
    def _init():
        # W_ih is the largest constant block: DMA it ONCE into VMEM scratch
        # instead of double-buffering it through the pipeline (review item).
        cp = pltpu.make_async_copy(wih_hbm, wih_scr, dma_sem)
        cp.start()
        cp.wait()
        hf_scr[...] = jnp.zeros_like(hf_scr)
        cf_scr[...] = jnp.zeros_like(cf_scr)
        hb_scr[...] = jnp.zeros_like(hb_scr)
        cb_scr[...] = jnp.zeros_like(cb_scr)

    B_pad = hf_scr.shape[0]
    Din = xf_ref.shape[-1]
    H4 = 4 * H
    lens = lens_ref[...]                                   # (B_pad, 1) int32

    # per-chunk input->gates for both directions (fused into the recurrence
    # kernel: the (2, T, B, 4H) gates tensor never touches HBM).
    xf = xf_ref[...].reshape(Tc * B_pad, Din)
    xb = xb_ref[...].reshape(Tc * B_pad, Din)
    gf_scr[...] = (jnp.dot(xf, wih_scr[0], preferred_element_type=jnp.float32)
                   + b_ref[0]).reshape(Tc, B_pad, H4)
    gb_scr[...] = (jnp.dot(xb, wih_scr[1], preferred_element_type=jnp.float32)
                   + b_ref[1]).reshape(Tc, B_pad, H4)

    w_hh_f = whh_ref[0]
    w_hh_b = whh_ref[1]
    t0f = tc * Tc
    t0b = rtc * Tc

    def step(s, carry):
        hf, cf, hb, cb = carry
        # forward direction, global time t0f + s
        tf = t0f + s
        zf = gf_scr[s] + jnp.dot(hf.astype(COMPUTE_DTYPE), w_hh_f,
                                 preferred_element_type=jnp.float32)
        hf_new, cf_new = _lstm_cell(zf, cf, H)
        live_f = tf < lens
        hf = jnp.where(live_f, hf_new, hf)
        cf = jnp.where(live_f, cf_new, cf)
        out_ref[tf, :, 0:H] = jnp.where(live_f, hf_new, 0.0).astype(out_ref.dtype)
        # backward direction, global time t0b + (Tc - 1 - s)
        lb = Tc - 1 - s
        tb = t0b + lb
        zb = gb_scr[lb] + jnp.dot(hb.astype(COMPUTE_DTYPE), w_hh_b,
                                  preferred_element_type=jnp.float32)
        hb_new, cb_new = _lstm_cell(zb, cb, H)
        live_b = tb < lens
        hb = jnp.where(live_b, hb_new, hb)
        cb = jnp.where(live_b, cb_new, cb)
        out_ref[tb, :, H:2 * H] = jnp.where(live_b, hb_new, 0.0).astype(out_ref.dtype)
        return hf, cf, hb, cb

    carry0 = (hf_scr[...], cf_scr[...], hb_scr[...], cb_scr[...])
    hf, cf, hb, cb = lax.fori_loop(0, Tc, step, carry0, unroll=unroll)
    hf_scr[...] = hf
    cf_scr[...] = cf
    hb_scr[...] = hb
    cb_scr[...] = cb


def _bilstm_layer(x, lp, lens_col, *, T_pad, B_pad, H, Tc, vmem_limit, unroll):
    NT = T_pad // Tc
    Din = x.shape[-1]
    H4 = 4 * H
    kernel = functools.partial(_bilstm_layer_kernel, Tc=Tc, H=H, NT=NT,
                               unroll=unroll)
    return pl.pallas_call(
        kernel,
        out_shape=jax.ShapeDtypeStruct((T_pad, B_pad, 2 * H), COMPUTE_DTYPE),
        grid=(NT,),
        in_specs=[
            pl.BlockSpec((B_pad, 1), lambda tc: (0, 0)),                     # lengths
            pl.BlockSpec((Tc, B_pad, Din), lambda tc: (tc, 0, 0)),           # x, fwd chunk
            pl.BlockSpec((Tc, B_pad, Din), lambda tc: (NT - 1 - tc, 0, 0)),  # x, bwd chunk
            pl.BlockSpec((2, H, H4), lambda tc: (0, 0, 0)),                  # W_hh
            pl.BlockSpec((2, 1, H4), lambda tc: (0, 0, 0)),                  # bias
            pl.BlockSpec(memory_space=pl.ANY),                               # W_ih (HBM)
        ],
        # single resident output slab (fwd half in lanes [0:H], bwd in [H:2H])
        out_specs=pl.BlockSpec((T_pad, B_pad, 2 * H), lambda tc: (0, 0, 0)),
        scratch_shapes=[
            pltpu.VMEM((2, Din, H4), COMPUTE_DTYPE),     # W_ih, DMA'd once
            pltpu.VMEM((Tc, B_pad, H4), jnp.float32),    # fwd chunk gates
            pltpu.VMEM((Tc, B_pad, H4), jnp.float32),    # bwd chunk gates
            pltpu.VMEM((B_pad, H), jnp.float32),         # h fwd
            pltpu.VMEM((B_pad, H), jnp.float32),         # c fwd
            pltpu.VMEM((B_pad, H), jnp.float32),         # h bwd
            pltpu.VMEM((B_pad, H), jnp.float32),         # c bwd
            pltpu.SemaphoreType.DMA(()),
        ],
        compiler_params=pltpu.CompilerParams(
            # single sequential time axis carries the h/c state in scratch.
            # TODO(synk): a v7x-only 2-TensorCore split of the directions could
            # be added via core_map; on v5e/v6e interleaving is strictly better.
            dimension_semantics=("arbitrary",),
            vmem_limit_bytes=vmem_limit),
    )(lens_col, x, x, lp["w_hh"], lp["b"], lp["w_ih"])


def _proj_kernel(x_ref, w_ref, b_ref, o_ref, *, H, P):
    Tp, B_pad, _ = x_ref.shape
    x = x_ref[...].reshape(Tp * B_pad, 2 * H)
    w = w_ref[...]
    bias = b_ref[...]
    pf = jnp.dot(x[:, 0:H], w, preferred_element_type=jnp.float32) + bias
    pb = jnp.dot(x[:, H:2 * H], w, preferred_element_type=jnp.float32) + bias
    o_ref[...] = jnp.concatenate([pf, pb], axis=-1).reshape(Tp, B_pad, 2 * P)


def _projection(x, w, b, *, T_pad, B_pad, H, P, Tp, vmem_limit):
    kernel = functools.partial(_proj_kernel, H=H, P=P)
    return pl.pallas_call(
        kernel,
        out_shape=jax.ShapeDtypeStruct((T_pad, B_pad, 2 * P), jnp.float32),
        grid=(T_pad // Tp,),
        in_specs=[
            pl.BlockSpec((Tp, B_pad, 2 * H), lambda i: (i, 0, 0)),
            pl.BlockSpec((H, P), lambda i: (0, 0)),
            pl.BlockSpec((1, P), lambda i: (0, 0)),
        ],
        out_specs=pl.BlockSpec((Tp, B_pad, 2 * P), lambda i: (i, 0, 0)),
        compiler_params=pltpu.CompilerParams(
            dimension_semantics=("parallel",),
            vmem_limit_bytes=vmem_limit),
    )(x, w, b)


# ----------------------------- parameter setup -----------------------------

def init_params(key, proj_dim, hidden_dim, n_layers):
    """Deterministic init mirroring nn.LSTM / nn.Linear parameter shapes,
    repacked into kernel-friendly layouts:
      w_ih: (2, D_in, 4H) bf16  (== weight_ih_l{k}{,_reverse}.T)
      w_hh: (2, H, 4H)   bf16
      b   : (2, 1, 4H)   f32    (b_ih + b_hh)
      proj_w: (H, P) bf16, proj_b: (1, P) f32
    PyTorch gate order (i, f, g, o)."""
    H = hidden_dim
    k = 1.0 / float(H) ** 0.5
    layers = []
    for layer in range(n_layers):
        d_in = proj_dim if layer == 0 else 2 * H
        wih_l, whh_l, b_l = [], [], []
        for _ in range(2):  # fwd, bwd
            key, k1, k2, k3, k4 = jax.random.split(key, 5)
            w_ih = jax.random.uniform(k1, (4 * H, d_in), minval=-k, maxval=k)
            w_hh = jax.random.uniform(k2, (4 * H, H), minval=-k, maxval=k)
            b_ih = jax.random.uniform(k3, (4 * H,), minval=-k, maxval=k)
            b_hh = jax.random.uniform(k4, (4 * H,), minval=-k, maxval=k)
            wih_l.append(jnp.transpose(w_ih))
            whh_l.append(jnp.transpose(w_hh))
            b_l.append((b_ih + b_hh).reshape(1, 4 * H))
        layers.append({
            "w_ih": jnp.stack(wih_l).astype(COMPUTE_DTYPE),      # (2, d_in, 4H)
            "w_hh": jnp.stack(whh_l).astype(COMPUTE_DTYPE),      # (2, H, 4H)
            "b": jnp.stack(b_l).astype(jnp.float32),             # (2, 1, 4H)
        })
    key, k1, k2 = jax.random.split(key, 3)
    w_proj = jax.random.uniform(k1, (proj_dim, hidden_dim), minval=-k, maxval=k)
    b_proj = jax.random.uniform(k2, (proj_dim,), minval=-k, maxval=k)
    return {
        "layers": layers,
        "proj_w": jnp.transpose(w_proj).astype(COMPUTE_DTYPE),   # (H, P)
        "proj_b": b_proj.reshape(1, proj_dim).astype(jnp.float32),
    }


# ------------------------------- forward pass ------------------------------

def lstm_bi_lm_forward(params, inputs, seq_len, *, force_tiled=False):
    """inputs: (B, T, proj_dim) f32 batch-first; seq_len: (B,) int.
    Returns (B, T, 2*proj_dim) f32.  Assumes max(seq_len) == T."""
    B, T, D = inputs.shape
    H = int(params["layers"][0]["w_hh"].shape[1])
    P = int(params["proj_w"].shape[1])
    assert H % 8 == 0, "hidden dim must be a multiple of 8 (sublane alignment)"

    B_pad = _round_up(B, 8)                    # sublane-align the batch
    budget = _vmem_budget_bytes()

    # time-major + batch padding; padded rows get length 0 -> fully masked.
    x_tm = jnp.transpose(inputs, (1, 0, 2)).astype(COMPUTE_DTYPE)   # (T, B, D)
    lens_col = jnp.pad(seq_len.astype(jnp.int32),
                       (0, B_pad - B)).reshape(B_pad, 1)

    # fused-path footprint (weights + resident activations/scratch), bytes
    H4 = 4 * H
    w_bytes = 0
    for li in range(len(params["layers"])):
        Din = D if li == 0 else 2 * H
        w_bytes += 2 * Din * H4 * 2 + 2 * H * H4 * 2 + 2 * H4 * 4
    w_bytes += H * P * 2 + P * 4
    act_bytes = T * B_pad * (D * 2 + 2 * P * 4 + 2 * H * 4 + 2 * H4 * 4)
    fused_fits = (w_bytes + act_bytes) <= budget // 4

    if fused_fits and not force_tiled:
        # ---- Path A: one pallas_call for the whole model ----
        x_pad = jnp.pad(x_tm, ((0, 0), (0, B_pad - B), (0, 0)))
        proj_tm = _fused_forward(params, x_pad, lens_col, T=T, B_pad=B_pad,
                                 H=H, P=P, vmem_limit=budget,
                                 unroll=min(8, T))
    else:
        # ---- Path B: one streamed kernel per layer + one projection ----
        Tc = 8 if T <= 256 else 16
        T_pad = _round_up(T, Tc)
        x_pad = jnp.pad(x_tm, ((0, T_pad - T), (0, B_pad - B), (0, 0)))
        cur = x_pad
        for lp in params["layers"]:
            cur = _bilstm_layer(cur, lp, lens_col, T_pad=T_pad, B_pad=B_pad,
                                H=H, Tc=Tc, vmem_limit=budget,
                                unroll=min(4, Tc))
        Tp = _pick_time_tile(T_pad, Tc, B_pad)
        proj_tm = _projection(cur, params["proj_w"], params["proj_b"],
                              T_pad=T_pad, B_pad=B_pad, H=H, P=P, Tp=Tp,
                              vmem_limit=budget)

    # assemble batch-first (B, T, 2P).
    # TODO(synk): the (T,B)->(B,T) transpose could be folded into the
    # projection out_spec; kept as one small XLA op for clarity/safety.
    out = jnp.transpose(proj_tm, (1, 0, 2))
    return out[:B, :T]


# --------------------------- pure-JAX reference -----------------------------

def _reference_forward(params, inputs, seq_len):
    """lax.scan reference with matching numerics (bf16 matmul operands, f32
    accumulation / state) used only for correctness checking."""
    B, T, _ = inputs.shape
    H = int(params["layers"][0]["w_hh"].shape[1])
    P = int(params["proj_w"].shape[1])
    lens = seq_len.astype(jnp.int32)
    x = jnp.transpose(inputs, (1, 0, 2)).astype(jnp.float32)        # (T, B, D)

    def run_layer(x_seq, lp):
        def run_dir(d, ts):
            w_ih, w_hh, b = lp["w_ih"][d], lp["w_hh"][d], lp["b"][d]

            def step(carry, t):
                h, c = carry
                xt = x_seq[t].astype(jnp.bfloat16)
                z = (jnp.dot(xt, w_ih, preferred_element_type=jnp.float32)
                     + jnp.dot(h.astype(jnp.bfloat16), w_hh,
                               preferred_element_type=jnp.float32) + b)
                i = jax.nn.sigmoid(z[:, 0 * H:1 * H])
                f = jax.nn.sigmoid(z[:, 1 * H:2 * H])
                g = jnp.tanh(z[:, 2 * H:3 * H])
                o = jax.nn.sigmoid(z[:, 3 * H:4 * H])
                c_new = f * c + i * g
                h_new = o * jnp.tanh(c_new)
                live = (t < lens)[:, None]
                h = jnp.where(live, h_new, h)
                c = jnp.where(live, c_new, c)
                return (h, c), jnp.where(live, h_new, 0.0)

            zeros = jnp.zeros((B, H), jnp.float32)
            _, outs = jax.lax.scan(step, (zeros, zeros), ts)
            return outs

        out_f = run_dir(0, jnp.arange(T))
        out_b = run_dir(1, jnp.arange(T - 1, -1, -1))[::-1]
        return jnp.concatenate([out_f, out_b], axis=-1)             # (T, B, 2H)

    h = x
    for lp in params["layers"]:
        h = run_layer(h, lp)

    hf = h[..., :H].astype(jnp.bfloat16).reshape(T * B, H)
    hb = h[..., H:].astype(jnp.bfloat16).reshape(T * B, H)
    pw, pb = params["proj_w"], params["proj_b"]
    pf = jnp.dot(hf, pw, preferred_element_type=jnp.float32) + pb
    pbk = jnp.dot(hb, pw, preferred_element_type=jnp.float32) + pb
    out = jnp.concatenate([pf, pbk], axis=-1).reshape(T, B, 2 * P)
    return jnp.transpose(out, (1, 0, 2))


# ----------------------------------- main -----------------------------------

if __name__ == "__main__":
    key = jax.random.PRNGKey(0)

    # --- 1) shipped toy config -> fused single-kernel path ---
    # config = {'encoder': {'projection_dim': 32, 'dim': 32, 'n_layers': 2},
    #           'dropout': 0.1}
    PROJ_DIM, HIDDEN_DIM, N_LAYERS = 32, 32, 2
    B, T = 4, 8
    key, k_p, k_in = jax.random.split(key, 3)
    params = init_params(k_p, PROJ_DIM, HIDDEN_DIM, N_LAYERS)
    inputs = jax.random.normal(k_in, (B, T, PROJ_DIM), dtype=jnp.float32)
    seq_len = jnp.array([T, 5, 3, T], dtype=jnp.int32)     # max(seq_len) == T

    fwd = jax.jit(lstm_bi_lm_forward)
    out = jax.block_until_ready(fwd(params, inputs, seq_len))
    assert out.shape == (B, T, 2 * PROJ_DIM), out.shape
    assert bool(jnp.all(jnp.isfinite(out)))

    ref = _reference_forward(params, inputs, seq_len)
    assert float(jnp.max(jnp.abs(ref))) > 1e-3             # non-degenerate
    err = float(jnp.max(jnp.abs(out - ref)))
    assert err < 2e-2, f"fused path mismatch vs reference: {err}"
    # padded positions equal the projection bias (pad_packed_sequence + Linear)
    pad_row = jnp.tile(params["proj_b"][0], 2)
    assert bool(jnp.allclose(out[1, 5:], pad_row, atol=1e-5))
    assert bool(jnp.allclose(out[2, 3:], pad_row, atol=1e-5))

    # --- 2) larger config forced through the per-layer streamed path ---
    P2, H2, L2 = 64, 128, 2
    B2, T2 = 5, 20
    key, k_p2, k_in2 = jax.random.split(key, 3)
    params2 = init_params(k_p2, P2, H2, L2)
    inputs2 = jax.random.normal(k_in2, (B2, T2, P2), dtype=jnp.float32)
    seq_len2 = jnp.array([T2, 13, 1, 7, T2], dtype=jnp.int32)

    fwd_tiled = jax.jit(functools.partial(lstm_bi_lm_forward, force_tiled=True))
    out2 = jax.block_until_ready(fwd_tiled(params2, inputs2, seq_len2))
    assert out2.shape == (B2, T2, 2 * P2), out2.shape
    ref2 = _reference_forward(params2, inputs2, seq_len2)
    err2 = float(jnp.max(jnp.abs(out2 - ref2)))
    assert err2 < 2e-2, f"tiled path mismatch vs reference: {err2}"

    print("KERNEL_OK")
</pallas_src>

<mosaic_0001>
module attributes {stable_mosaic.version = 11 : i64} {
  func.func @_fused_kernel(%arg0: i32, %arg1: memref<8x1xi32, #tpu.memory_space<vmem>>, %arg2: memref<8x8x32xbf16, #tpu.memory_space<vmem>>, %arg3: memref<2x32x128xbf16, #tpu.memory_space<vmem>>, %arg4: memref<2x32x128xbf16, #tpu.memory_space<vmem>>, %arg5: memref<2x1x128xf32, #tpu.memory_space<vmem>>, %arg6: memref<2x64x128xbf16, #tpu.memory_space<vmem>>, %arg7: memref<2x32x128xbf16, #tpu.memory_space<vmem>>, %arg8: memref<2x1x128xf32, #tpu.memory_space<vmem>>, %arg9: memref<32x32xbf16, #tpu.memory_space<vmem>>, %arg10: memref<1x32xf32, #tpu.memory_space<vmem>>, %arg11: memref<8x8x64xf32, #tpu.memory_space<vmem>>, %arg12: memref<8x8x32xf32, #tpu.memory_space<vmem>>, %arg13: memref<8x8x32xf32, #tpu.memory_space<vmem>>, %arg14: memref<8x8x128xf32, #tpu.memory_space<vmem>>, %arg15: memref<8x8x128xf32, #tpu.memory_space<vmem>>) attributes {dimension_semantics = [#tpu.dimension_semantics<arbitrary>], iteration_bounds = array<i64: 1>, scalar_prefetch = 0 : i64, scratch_operands = 4 : i64, tpu.core_type = #tpu.core_type<tc>, window_params = [{pipeline_mode = #tpu.pipeline_mode<synchronous>, transform_indices = @transform_0, window_bounds = array<i64: 8, 1>}, {pipeline_mode = #tpu.pipeline_mode<synchronous>, transform_indices = @transform_1, window_bounds = array<i64: 8, 8, 32>}, {pipeline_mode = #tpu.pipeline_mode<synchronous>, transform_indices = @transform_2, window_bounds = array<i64: 2, 32, 128>}, {pipeline_mode = #tpu.pipeline_mode<synchronous>, transform_indices = @transform_3, window_bounds = array<i64: 2, 32, 128>}, {pipeline_mode = #tpu.pipeline_mode<synchronous>, transform_indices = @transform_4, window_bounds = array<i64: 2, 1, 128>}, {pipeline_mode = #tpu.pipeline_mode<synchronous>, transform_indices = @transform_5, window_bounds = array<i64: 2, 64, 128>}, {pipeline_mode = #tpu.pipeline_mode<synchronous>, transform_indices = @transform_6, window_bounds = array<i64: 2, 32, 128>}, {pipeline_mode = #tpu.pipeline_mode<synchronous>, transform_indices = @transform_7, window_bounds = array<i64: 2, 1, 128>}, {pipeline_mode = #tpu.pipeline_mode<synchronous>, transform_indices = @transform_8, window_bounds = array<i64: 32, 32>}, {pipeline_mode = #tpu.pipeline_mode<synchronous>, transform_indices = @transform_9, window_bounds = array<i64: 1, 32>}, {pipeline_mode = #tpu.pipeline_mode<synchronous>, transform_indices = @transform_10, window_bounds = array<i64: 8, 8, 64>}]} {
    %c0 = arith.constant 0 : index
    %c0_0 = arith.constant 0 : index
    %0 = vector.load %arg1[%c0, %c0_0] : memref<8x1xi32, #tpu.memory_space<vmem>>, vector<8x1xi32>
    %c0_1 = arith.constant 0 : index
    %c0_2 = arith.constant 0 : index
    %c0_3 = arith.constant 0 : index
    %1 = vector.load %arg2[%c0_1, %c0_2, %c0_3] : memref<8x8x32xbf16, #tpu.memory_space<vmem>>, vector<8x8x32xbf16>
    %2 = vector.shape_cast %1 : vector<8x8x32xbf16> to vector<64x32xbf16>
    %c0_4 = arith.constant 0 : index
    %c0_5 = arith.constant 0 : index
    %c0_6 = arith.constant 0 : index
    %3 = vector.load %arg3[%c0_4, %c0_5, %c0_6] : memref<2x32x128xbf16, #tpu.memory_space<vmem>>, vector<1x32x128xbf16>
    %4 = vector.shape_cast %3 : vector<1x32x128xbf16> to vector<32x128xbf16>
    %cst = arith.constant dense<0.000000e+00> : vector<64x128xf32>
    %5 = tpu.matmul %2, %4, %cst {dimension_numbers = #tpu.dot_dimension_numbers<[1], [0], [0], [1], [0, 0, 1, 1], [], []>} : vector<64x32xbf16>, vector<32x128xbf16>, vector<64x128xf32> -> vector<64x128xf32>
    %c0_7 = arith.constant 0 : index
    %c0_8 = arith.constant 0 : index
    %c0_9 = arith.constant 0 : index
    %6 = vector.load %arg5[%c0_7, %c0_8, %c0_9] : memref<2x1x128xf32, #tpu.memory_space<vmem>>, vector<1x1x128xf32>
    %7 = vector.shape_cast %6 : vector<1x1x128xf32> to vector<1x128xf32>
    %8 = vector.broadcast %7 : vector<1x128xf32> to vector<64x128xf32>
    %9 = arith.addf %5, %8 : vector<64x128xf32>
    %10 = vector.shape_cast %9 : vector<64x128xf32> to vector<8x8x128xf32>
    %c0_10 = arith.constant 0 : index
    %c0_11 = arith.constant 0 : index
    %c0_12 = arith.constant 0 : index
    %11 = vector.load %arg14[%c0_10, %c0_11, %c0_12] : memref<8x8x128xf32, #tpu.memory_space<vmem>>, vector<8x8x128xf32>
    tpu.vector_store %arg14[%c0_10, %c0_11, %c0_12], %10 {strides = array<i32>} : memref<8x8x128xf32, #tpu.memory_space<vmem>>, vector<8x8x128xf32>,
    %c1 = arith.constant 1 : index
    %c0_13 = arith.constant 0 : index
    %c0_14 = arith.constant 0 : index
    %12 = vector.load %arg3[%c1, %c0_13, %c0_14] : memref<2x32x128xbf16, #tpu.memory_space<vmem>>, vector<1x32x128xbf16>
    %13 = vector.shape_cast %12 : vector<1x32x128xbf16> to vector<32x128xbf16>
    %cst_15 = arith.constant dense<0.000000e+00> : vector<64x128xf32>
    %14 = tpu.matmul %2, %13, %cst_15 {dimension_numbers = #tpu.dot_dimension_numbers<[1], [0], [0], [1], [0, 0, 1, 1], [], []>} : vector<64x32xbf16>, vector<32x128xbf16>, vector<64x128xf32> -> vector<64x128xf32>
    %c1_16 = arith.constant 1 : index
    %c0_17 = arith.constant 0 : index
    %c0_18 = arith.constant 0 : index
    %15 = vector.load %arg5[%c1_16, %c0_17, %c0_18] : memref<2x1x128xf32, #tpu.memory_space<vmem>>, vector<1x1x128xf32>
    %16 = vector.shape_cast %15 : vector<1x1x128xf32> to vector<1x128xf32>
    %17 = vector.broadcast %16 : vector<1x128xf32> to vector<64x128xf32>
    %18 = arith.addf %14, %17 : vector<64x128xf32>
    %19 = vector.shape_cast %18 : vector<64x128xf32> to vector<8x8x128xf32>
    %c0_19 = arith.constant 0 : index
    %c0_20 = arith.constant 0 : index
    %c0_21 = arith.constant 0 : index
    %20 = vector.load %arg15[%c0_19, %c0_20, %c0_21] : memref<8x8x128xf32, #tpu.memory_space<vmem>>, vector<8x8x128xf32>
    tpu.vector_store %arg15[%c0_19, %c0_20, %c0_21], %19 {strides = array<i32>} : memref<8x8x128xf32, #tpu.memory_space<vmem>>, vector<8x8x128xf32>,
    %c0_22 = arith.constant 0 : index
    %c0_23 = arith.constant 0 : index
    %c0_24 = arith.constant 0 : index
    %21 = vector.load %arg4[%c0_22, %c0_23, %c0_24] : memref<2x32x128xbf16, #tpu.memory_space<vmem>>, vector<1x32x128xbf16>
    %22 = vector.shape_cast %21 : vector<1x32x128xbf16> to vector<32x128xbf16>
    %c1_25 = arith.constant 1 : index
    %c0_26 = arith.constant 0 : index
    %c0_27 = arith.constant 0 : index
    %23 = vector.load %arg4[%c1_25, %c0_26, %c0_27] : memref<2x32x128xbf16, #tpu.memory_space<vmem>>, vector<1x32x128xbf16>
    %24 = vector.shape_cast %23 : vector<1x32x128xbf16> to vector<32x128xbf16>
    %cst_28 = arith.constant 0.000000e+00 : f32
    %25 = vector.broadcast %cst_28 : f32 to vector<8x32xf32>
    %c0_i32 = arith.constant 0 : i32
    %c7_i32 = arith.constant 7 : i32
    %26 = arith.subi %c7_i32, %c0_i32 : i32
    %27 = arith.index_cast %c0_i32 : i32 to index
    %c0_29 = arith.constant 0 : index
    %c0_30 = arith.constant 0 : index
    %28 = vector.load %arg14[%27, %c0_29, %c0_30] : memref<8x8x128xf32, #tpu.memory_space<vmem>>, vector<1x8x128xf32>
    %29 = vector.shape_cast %28 : vector<1x8x128xf32> to vector<8x128xf32>
    %30 = arith.truncf %25 : vector<8x32xf32> to vector<8x32xbf16>
    %cst_31 = arith.constant dense<0.000000e+00> : vector<8x128xf32>
    %31 = tpu.matmul %30, %22, %cst_31 {dimension_numbers = #tpu.dot_dimension_numbers<[1], [0], [0], [1], [0, 0, 1, 1], [], []>} : vector<8x32xbf16>, vector<32x128xbf16>, vector<8x128xf32> -> vector<8x128xf32>
    %32 = arith.addf %29, %31 : vector<8x128xf32>
    %cst_32 = arith.constant 5.000000e-01 : f32
    %33 = vector.broadcast %cst_32 : f32 to vector<8x128xf32>
    %34 = arith.mulf %33, %32 : vector<8x128xf32>
    %35 = math.tanh %34 : vector<8x128xf32>
    %36 = vector.extract_strided_slice %35 {offsets = [0, 0], sizes = [8, 32], strides = [1, 1]} : vector<8x128xf32> to vector<8x32xf32>
    %cst_33 = arith.constant 5.000000e-01 : f32
    %37 = vector.broadcast %cst_33 : f32 to vector<8x32xf32>
    %38 = arith.mulf %37, %36 : vector<8x32xf32>
    %cst_34 = arith.constant 5.000000e-01 : f32
    %39 = vector.broadcast %cst_34 : f32 to vector<8x32xf32>
    %40 = arith.addf %38, %39 : vector<8x32xf32>
    %41 = vector.extract_strided_slice %35 {offsets = [0, 32], sizes = [8, 32], strides = [1, 1]} : vector<8x128xf32> to vector<8x32xf32>
    %cst_35 = arith.constant 5.000000e-01 : f32
    %42 = vector.broadcast %cst_35 : f32 to vector<8x32xf32>
    %43 = arith.mulf %42, %41 : vector<8x32xf32>
    %cst_36 = arith.constant 5.000000e-01 : f32
    %44 = vector.broadcast %cst_36 : f32 to vector<8x32xf32>
    %45 = arith.addf %43, %44 : vector<8x32xf32>
    %46 = vector.extract_strided_slice %35 {offsets = [0, 96], sizes = [8, 32], strides = [1, 1]} : vector<8x128xf32> to vector<8x32xf32>
    %cst_37 = arith.constant 5.000000e-01 : f32
    %47 = vector.broadcast %cst_37 : f32 to vector<8x32xf32>
    %48 = arith.mulf %47, %46 : vector<8x32xf32>
    %cst_38 = arith.constant 5.000000e-01 : f32
    %49 = vector.broadcast %cst_38 : f32 to vector<8x32xf32>
    %50 = arith.addf %48, %49 : vector<8x32xf32>
    %51 = vector.extract_strided_slice %32 {offsets = [0, 64], sizes = [8, 32], strides = [1, 1]} : vector<8x128xf32> to vector<8x32xf32>
    %52 = math.tanh %51 : vector<8x32xf32>
    %53 = arith.mulf %45, %25 : vector<8x32xf32>
    %54 = arith.mulf %40, %52 : vector<8x32xf32>
    %55 = arith.addf %53, %54 : vector<8x32xf32>
    %56 = math.tanh %55 : vector<8x32xf32>
    %57 = arith.mulf %50, %56 : vector<8x32xf32>
    %58 = vector.broadcast %c0_i32 : i32 to vector<8x1xi32>
    %59 = arith.cmpi slt, %58, %0 : vector<8x1xi32>
    %60 = vector.shape_cast %59 : vector<8x1xi1> to vector<8x1xi1>
    %61 = vector.broadcast %60 : vector<8x1xi1> to vector<8x32xi1>
    %62 = arith.select %61, %57, %25 : vector<8x32xi1>, vector<8x32xf32>
    %63 = vector.shape_cast %59 : vector<8x1xi1> to vector<8x1xi1>
    %64 = vector.broadcast %63 : vector<8x1xi1> to vector<8x32xi1>
    %65 = arith.select %64, %55, %25 : vector<8x32xi1>, vector<8x32xf32>
    %cst_39 = arith.constant 0.000000e+00 : f32
    %66 = vector.shape_cast %59 : vector<8x1xi1> to vector<8x1xi1>
    %67 = vector.broadcast %66 : vector<8x1xi1> to vector<8x32xi1>
    %68 = vector.broadcast %cst_39 : f32 to vector<8x32xf32>
    %69 = arith.select %67, %57, %68 : vector<8x32xi1>, vector<8x32xf32>
    %70 = arith.index_cast %c0_i32 : i32 to index
    %c0_40 = arith.constant 0 : index
    %c0_41 = arith.constant 0 : index
    %71 = vector.load %arg12[%70, %c0_40, %c0_41] : memref<8x8x32xf32, #tpu.memory_space<vmem>>, vector<1x8x32xf32>
    %72 = vector.shape_cast %71 : vector<1x8x32xf32> to vector<8x32xf32>
    %73 = vector.shape_cast %69 : vector<8x32xf32> to vector<1x8x32xf32>
    tpu.vector_store %arg12[%70, %c0_40, %c0_41], %73 {strides = array<i32>} : memref<8x8x32xf32, #tpu.memory_space<vmem>>, vector<1x8x32xf32>,
    %74 = arith.index_cast %26 : i32 to index
    %c0_42 = arith.constant 0 : index
    %c0_43 = arith.constant 0 : index
    %75 = vector.load %arg15[%74, %c0_42, %c0_43] : memref<8x8x128xf32, #tpu.memory_space<vmem>>, vector<1x8x128xf32>
    %76 = vector.shape_cast %75 : vector<1x8x128xf32> to vector<8x128xf32>
    %77 = arith.truncf %25 : vector<8x32xf32> to vector<8x32xbf16>
    %cst_44 = arith.constant dense<0.000000e+00> : vector<8x128xf32>
    %78 = tpu.matmul %77, %24, %cst_44 {dimension_numbers = #tpu.dot_dimension_numbers<[1], [0], [0], [1], [0, 0, 1, 1], [], []>} : vector<8x32xbf16>, vector<32x128xbf16>, vector<8x128xf32> -> vector<8x128xf32>
    %79 = arith.addf %76, %78 : vector<8x128xf32>
    %cst_45 = arith.constant 5.000000e-01 : f32
    %80 = vector.broadcast %cst_45 : f32 to vector<8x128xf32>
    %81 = arith.mulf %80, %79 : vector<8x128xf32>
    %82 = math.tanh %81 : vector<8x128xf32>
    %83 = vector.extract_strided_slice %82 {offsets = [0, 0], sizes = [8, 32], strides = [1, 1]} : vector<8x128xf32> to vector<8x32xf32>
    %cst_46 = arith.constant 5.000000e-01 : f32
    %84 = vector.broadcast %cst_46 : f32 to vector<8x32xf32>
    %85 = arith.mulf %84, %83 : vector<8x32xf32>
    %cst_47 = arith.constant 5.000000e-01 : f32
    %86 = vector.broadcast %cst_47 : f32 to vector<8x32xf32>
    %87 = arith.addf %85, %86 : vector<8x32xf32>
    %88 = vector.extract_strided_slice %82 {offsets = [0, 32], sizes = [8, 32], strides = [1, 1]} : vector<8x128xf32> to vector<8x32xf32>
    %cst_48 = arith.constant 5.000000e-01 : f32
    %89 = vector.broadcast %cst_48 : f32 to vector<8x32xf32>
    %90 = arith.mulf %89, %88 : vector<8x32xf32>
    %cst_49 = arith.constant 5.000000e-01 : f32
    %91 = vector.broadcast %cst_49 : f32 to vector<8x32xf32>
    %92 = arith.addf %90, %91 : vector<8x32xf32>
    %93 = vector.extract_strided_slice %82 {offsets = [0, 96], sizes = [8, 32], strides = [1, 1]} : vector<8x128xf32> to vector<8x32xf32>
    %cst_50 = arith.constant 5.000000e-01 : f32
    %94 = vector.broadcast %cst_50 : f32 to vector<8x32xf32>
    %95 = arith.mulf %94, %93 : vector<8x32xf32>
    %cst_51 = arith.constant 5.000000e-01 : f32
    %96 = vector.broadcast %cst_51 : f32 to vector<8x32xf32>
    %97 = arith.addf %95, %96 : vector<8x32xf32>
    %98 = vector.extract_strided_slice %79 {offsets = [0, 64], sizes = [8, 32], strides = [1, 1]} : vector<8x128xf32> to vector<8x32xf32>
    %99 = math.tanh %98 : vector<8x32xf32>
    %100 = arith.mulf %92, %25 : vector<8x32xf32>
    %101 = arith.mulf %87, %99 : vector<8x32xf32>
    %102 = arith.addf %100, %101 : vector<8x32xf32>
    %103 = math.tanh %102 : vector<8x32xf32>
    %104 = arith.mulf %97, %103 : vector<8x32xf32>
    %105 = vector.broadcast %26 : i32 to vector<8x1xi32>
    %106 = arith.cmpi slt, %105, %0 : vector<8x1xi32>
    %107 = vector.shape_cast %106 : vector<8x1xi1> to vector<8x1xi1>
    %108 = vector.broadcast %107 : vector<8x1xi1> to vector<8x32xi1>
    %109 = arith.select %108, %104, %25 : vector<8x32xi1>, vector<8x32xf32>
    %110 = vector.shape_cast %106 : vector<8x1xi1> to vector<8x1xi1>
    %111 = vector.broadcast %110 : vector<8x1xi1> to vector<8x32xi1>
    %112 = arith.select %111, %102, %25 : vector<8x32xi1>, vector<8x32xf32>
    %cst_52 = arith.constant 0.000000e+00 : f32
    %113 = vector.shape_cast %106 : vector<8x1xi1> to vector<8x1xi1>
    %114 = vector.broadcast %113 : vector<8x1xi1> to vector<8x32xi1>
    %115 = vector.broadcast %cst_52 : f32 to vector<8x32xf32>
    %116 = arith.select %114, %104, %115 : vector<8x32xi1>, vector<8x32xf32>
    %117 = arith.index_cast %26 : i32 to index
    %c0_53 = arith.constant 0 : index
    %c0_54 = arith.constant 0 : index
    %118 = vector.load %arg13[%117, %c0_53, %c0_54] : memref<8x8x32xf32, #tpu.memory_space<vmem>>, vector<1x8x32xf32>
    %119 = vector.shape_cast %118 : vector<1x8x32xf32> to vector<8x32xf32>
    %120 = vector.shape_cast %116 : vector<8x32xf32> to vector<1x8x32xf32>
    tpu.vector_store %arg13[%117, %c0_53, %c0_54], %120 {strides = array<i32>} : memref<8x8x32xf32, #tpu.memory_space<vmem>>, vector<1x8x32xf32>,
    %c1_i32 = arith.constant 1 : i32
    %c7_i32_55 = arith.constant 7 : i32
    %121 = arith.subi %c7_i32_55, %c1_i32 : i32
    %122 = arith.index_cast %c1_i32 : i32 to index
    %c0_56 = arith.constant 0 : index
    %c0_57 = arith.constant 0 : index
    %123 = vector.load %arg14[%122, %c0_56, %c0_57] : memref<8x8x128xf32, #tpu.memory_space<vmem>>, vector<1x8x128xf32>
    %124 = vector.shape_cast %123 : vector<1x8x128xf32> to vector<8x128xf32>
    %125 = arith.truncf %62 : vector<8x32xf32> to vector<8x32xbf16>
    %cst_58 = arith.constant dense<0.000000e+00> : vector<8x128xf32>
    %126 = tpu.matmul %125, %22, %cst_58 {dimension_numbers = #tpu.dot_dimension_numbers<[1], [0], [0], [1], [0, 0, 1, 1], [], []>} : vector<8x32xbf16>, vector<32x128xbf16>, vector<8x128xf32> -> vector<8x128xf32>
    %127 = arith.addf %124, %126 : vector<8x128xf32>
    %cst_59 = arith.constant 5.000000e-01 : f32
    %128 = vector.broadcast %cst_59 : f32 to vector<8x128xf32>
    %129 = arith.mulf %128, %127 : vector<8x128xf32>
    %130 = math.tanh %129 : vector<8x128xf32>
    %131 = vector.extract_strided_slice %130 {offsets = [0, 0], sizes = [8, 32], strides = [1, 1]} : vector<8x128xf32> to vector<8x32xf32>
    %cst_60 = arith.constant 5.000000e-01 : f32
    %132 = vector.broadcast %cst_60 : f32 to vector<8x32xf32>
    %133 = arith.mulf %132, %131 : vector<8x32xf32>
    %cst_61 = arith.constant 5.000000e-01 : f32
    %134 = vector.broadcast %cst_61 : f32 to vector<8x32xf32>
    %135 = arith.addf %133, %134 : vector<8x32xf32>
    %136 = vector.extract_strided_slice %130 {offsets = [0, 32], sizes = [8, 32], strides = [1, 1]} : vector<8x128xf32> to vector<8x32xf32>
    %cst_62 = arith.constant 5.000000e-01 : f32
    %137 = vector.broadcast %cst_62 : f32 to vector<8x32xf32>
    %138 = arith.mulf %137, %136 : vector<8x32xf32>
    %cst_63 = arith.constant 5.000000e-01 : f32
    %139 = vector.broadcast %cst_63 : f32 to vector<8x32xf32>
    %140 = arith.addf %138, %139 : vector<8x32xf32>
    %141 = vector.extract_strided_slice %130 {offsets = [0, 96], sizes = [8, 32], strides = [1, 1]} : vector<8x128xf32> to vector<8x32xf32>
    %cst_64 = arith.constant 5.000000e-01 : f32
    %142 = vector.broadcast %cst_64 : f32 to vector<8x32xf32>
    %143 = arith.mulf %142, %141 : vector<8x32xf32>
    %cst_65 = arith.constant 5.000000e-01 : f32
    %144 = vector.broadcast %cst_65 : f32 to vector<8x32xf32>
    %145 = arith.addf %143, %144 : vector<8x32xf32>
    %146 = vector.extract_strided_slice %127 {offsets = [0, 64], sizes = [8, 32], strides = [1, 1]} : vector<8x128xf32> to vector<8x32xf32>
    %147 = math.tanh %146 : vector<8x32xf32>
    %148 = arith.mulf %140, %65 : vector<8x32xf32>
    %149 = arith.mulf %135, %147 : vector<8x32xf32>
    %150 = arith.addf %148, %149 : vector<8x32xf32>
    %151 = math.tanh %150 : vector<8x32xf32>
    %152 = arith.mulf %145, %151 : vector<8x32xf32>
    %153 = vector.broadcast %c1_i32 : i32 to vector<8x1xi32>
    %154 = arith.cmpi slt, %153, %0 : vector<8x1xi32>
    %155 = vector.shape_cast %154 : vector<8x1xi1> to vector<8x1xi1>
    %156 = vector.broadcast %155 : vector<8x1xi1> to vector<8x32xi1>
    %157 = arith.select %156, %152, %62 : vector<8x32xi1>, vector<8x32xf32>
    %158 = vector.shape_cast %154 : vector<8x1xi1> to vector<8x1xi1>
    %159 = vector.broadcast %158 : vector<8x1xi1> to vector<8x32xi1>
    %160 = arith.select %159, %150, %65 : vector<8x32xi1>, vector<8x32xf32>
    %cst_66 = arith.constant 0.000000e+00 : f32
    %161 = vector.shape_cast %154 : vector<8x1xi1> to vector<8x1xi1>
    %162 = vector.broadcast %161 : vector<8x1xi1> to vector<8x32xi1>
    %163 = vector.broadcast %cst_66 : f32 to vector<8x32xf32>
    %164 = arith.select %162, %152, %163 : vector<8x32xi1>, vector<8x32xf32>
    %165 = arith.index_cast %c1_i32 : i32 to index
    %c0_67 = arith.constant 0 : index
    %c0_68 = arith.constant 0 : index
    %166 = vector.load %arg12[%165, %c0_67, %c0_68] : memref<8x8x32xf32, #tpu.memory_space<vmem>>, vector<1x8x32xf32>
    %167 = vector.shape_cast %166 : vector<1x8x32xf32> to vector<8x32xf32>
    %168 = vector.shape_cast %164 : vector<8x32xf32> to vector<1x8x32xf32>
    tpu.vector_store %arg12[%165, %c0_67, %c0_68], %168 {strides = array<i32>} : memref<8x8x32xf32, #tpu.memory_space<vmem>>, vector<1x8x32xf32>,
    %169 = arith.index_cast %121 : i32 to index
    %c0_69 = arith.constant 0 : index
    %c0_70 = arith.constant 0 : index
    %170 = vector.load %arg15[%169, %c0_69, %c0_70] : memref<8x8x128xf32, #tpu.memory_space<vmem>>, vector<1x8x128xf32>
    %171 = vector.shape_cast %170 : vector<1x8x128xf32> to vector<8x128xf32>
    %172 = arith.truncf %109 : vector<8x32xf32> to vector<8x32xbf16>
    %cst_71 = arith.constant dense<0.000000e+00> : vector<8x128xf32>
    %173 = tpu.matmul %172, %24, %cst_71 {dimension_numbers = #tpu.dot_dimension_numbers<[1], [0], [0], [1], [0, 0, 1, 1], [], []>} : vector<8x32xbf16>, vector<32x128xbf16>, vector<8x128xf32> -> vector<8x128xf32>
    %174 = arith.addf %171, %173 : vector<8x128xf32>
    %cst_72 = arith.constant 5.000000e-01 : f32
    %175 = vector.broadcast %cst_72 : f32 to vector<8x128xf32>
    %176 = arith.mulf %175, %174 : vector<8x128xf32>
    %177 = math.tanh %176 : vector<8x128xf32>
    %178 = vector.extract_strided_slice %177 {offsets = [0, 0], sizes = [8, 32], strides = [1, 1]} : vector<8x128xf32> to vector<8x32xf32>
    %cst_73 = arith.constant 5.000000e-01 : f32
    %179 = vector.broadcast %cst_73 : f32 to vector<8x32xf32>
    %180 = arith.mulf %179, %178 : vector<8x32xf32>
    %cst_74 = arith.constant 5.000000e-01 : f32
    %181 = vector.broadcast %cst_74 : f32 to vector<8x32xf32>
    %182 = arith.addf %180, %181 : vector<8x32xf32>
    %183 = vector.extract_strided_slice %177 {offsets = [0, 32], sizes = [8, 32], strides = [1, 1]} : vector<8x128xf32> to vector<8x32xf32>
    %cst_75 = arith.constant 5.000000e-01 : f32
    %184 = vector.broadcast %cst_75 : f32 to vector<8x32xf32>
    %185 = arith.mulf %184, %183 : vector<8x32xf32>
    %cst_76 = arith.constant 5.000000e-01 : f32
    %186 = vector.broadcast %cst_76 : f32 to vector<8x32xf32>
    %187 = arith.addf %185, %186 : vector<8x32xf32>
    %188 = vector.extract_strided_slice %177 {offsets = [0, 96], sizes = [8, 32], strides = [1, 1]} : vector<8x128xf32> to vector<8x32xf32>
    %cst_77 = arith.constant 5.000000e-01 : f32
    %189 = vector.broadcast %cst_77 : f32 to vector<8x32xf32>
    %190 = arith.mulf %189, %188 : vector<8x32xf32>
    %cst_78 = arith.constant 5.000000e-01 : f32
    %191 = vector.broadcast %cst_78 : f32 to vector<8x32xf32>
    %192 = arith.addf %190, %191 : vector<8x32xf32>
    %193 = vector.extract_strided_slice %174 {offsets = [0, 64], sizes = [8, 32], strides = [1, 1]} : vector<8x128xf32> to vector<8x32xf32>
    %194 = math.tanh %193 : vector<8x32xf32>
    %195 = arith.mulf %187, %112 : vector<8x32xf32>
    %196 = arith.mulf %182, %194 : vector<8x32xf32>
    %197 = arith.addf %195, %196 : vector<8x32xf32>
    %198 = math.tanh %197 : vector<8x32xf32>
    %199 = arith.mulf %192, %198 : vector<8x32xf32>
    %200 = vector.broadcast %121 : i32 to vector<8x1xi32>
    %201 = arith.cmpi slt, %200, %0 : vector<8x1xi32>
    %202 = vector.shape_cast %201 : vector<8x1xi1> to vector<8x1xi1>
    %203 = vector.broadcast %202 : vector<8x1xi1> to vector<8x32xi1>
    %204 = arith.select %203, %199, %109 : vector<8x32xi1>, vector<8x32xf32>
    %205 = vector.shape_cast %201 : vector<8x1xi1> to vector<8x1xi1>
    %206 = vector.broadcast %205 : vector<8x1xi1> to vector<8x32xi1>
    %207 = arith.select %206, %197, %112 : vector<8x32xi1>, vector<8x32xf32>
    %cst_79 = arith.constant 0.000000e+00 : f32
    %208 = vector.shape_cast %201 : vector<8x1xi1> to vector<8x1xi1>
    %209 = vector.broadcast %208 : vector<8x1xi1> to vector<8x32xi1>
    %210 = vector.broadcast %cst_79 : f32 to vector<8x32xf32>
    %211 = arith.select %209, %199, %210 : vector<8x32xi1>, vector<8x32xf32>
    %212 = arith.index_cast %121 : i32 to index
    %c0_80 = arith.constant 0 : index
    %c0_81 = arith.constant 0 : index
    %213 = vector.load %arg13[%212, %c0_80, %c0_81] : memref<8x8x32xf32, #tpu.memory_space<vmem>>, vector<1x8x32xf32>
    %214 = vector.shape_cast %213 : vector<1x8x32xf32> to vector<8x32xf32>
    %215 = vector.shape_cast %211 : vector<8x32xf32> to vector<1x8x32xf32>
    tpu.vector_store %arg13[%212, %c0_80, %c0_81], %215 {strides = array<i32>} : memref<8x8x32xf32, #tpu.memory_space<vmem>>, vector<1x8x32xf32>,
    %c2_i32 = arith.constant 2 : i32
    %c7_i32_82 = arith.constant 7 : i32
    %216 = arith.subi %c7_i32_82, %c2_i32 : i32
    %217 = arith.index_cast %c2_i32 : i32 to index
    %c0_83 = arith.constant 0 : index
    %c0_84 = arith.constant 0 : index
    %218 = vector.load %arg14[%217, %c0_83, %c0_84] : memref<8x8x128xf32, #tpu.memory_space<vmem>>, vector<1x8x128xf32>
    %219 = vector.shape_cast %218 : vector<1x8x128xf32> to vector<8x128xf32>
    %220 = arith.truncf %157 : vector<8x32xf32> to vector<8x32xbf16>
    %cst_85 = arith.constant dense<0.000000e+00> : vector<8x128xf32>
    %221 = tpu.matmul %220, %22, %cst_85 {dimension_numbers = #tpu.dot_dimension_numbers<[1], [0], [0], [1], [0, 0, 1, 1], [], []>} : vector<8x32xbf16>, vector<32x128xbf16>, vector<8x128xf32> -> vector<8x128xf32>
    %222 = arith.addf %219, %221 : vector<8x128xf32>
    %cst_86 = arith.constant 5.000000e-01 : f32
    %223 = vector.broadcast %cst_86 : f32 to vector<8x128xf32>
    %224 = arith.mulf %223, %222 : vector<8x128xf32>
    %225 = math.tanh %224 : vector<8x128xf32>
    %226 = vector.extract_strided_slice %225 {offsets = [0, 0], sizes = [8, 32], strides = [1, 1]} : vector<8x128xf32> to vector<8x32xf32>
    %cst_87 = arith.constant 5.000000e-01 : f32
    %227 = vector.broadcast %cst_87 : f32 to vector<8x32xf32>
    %228 = arith.mulf %227, %226 : vector<8x32xf32>
    %cst_88 = arith.constant 5.000000e-01 : f32
    %229 = vector.broadcast %cst_88 : f32 to vector<8x32xf32>
    %230 = arith.addf %228, %229 : vector<8x32xf32>
    %231 = vector.extract_strided_slice %225 {offsets = [0, 32], sizes = [8, 32], strides = [1, 1]} : vector<8x128xf32> to vector<8x32xf32>
    %cst_89 = arith.constant 5.000000e-01 : f32
    %232 = vector.broadcast %cst_89 : f32 to vector<8x32xf32>
    %233 = arith.mulf %232, %231 : vector<8x32xf32>
    %cst_90 = arith.constant 5.000000e-01 : f32
    %234 = vector.broadcast %cst_90 : f32 to vector<8x32xf32>
    %235 = arith.addf %233, %234 : vector<8x32xf32>
    %236 = vector.extract_strided_slice %225 {offsets = [0, 96], sizes = [8, 32], strides = [1, 1]} : vector<8x128xf32> to vector<8x32xf32>
    %cst_91 = arith.constant 5.000000e-01 : f32
    %237 = vector.broadcast %cst_91 : f32 to vector<8x32xf32>
    %238 = arith.mulf %237, %236 : vector<8x32xf32>
    %cst_92 = arith.constant 5.000000e-01 : f32
    %239 = vector.broadcast %cst_92 : f32 to vector<8x32xf32>
    %240 = arith.addf %238, %239 : vector<8x32xf32>
    %241 = vector.extract_strided_slice %222 {offsets = [0, 64], sizes = [8, 32], strides = [1, 1]} : vector<8x128xf32> to vector<8x32xf32>
    %242 = math.tanh %241 : vector<8x32xf32>
    %243 = arith.mulf %235, %160 : vector<8x32xf32>
    %244 = arith.mulf %230, %242 : vector<8x32xf32>
    %245 = arith.addf %243, %244 : vector<8x32xf32>
    %246 = math.tanh %245 : vector<8x32xf32>
    %247 = arith.mulf %240, %246 : vector<8x32xf32>
    %248 = vector.broadcast %c2_i32 : i32 to vector<8x1xi32>
    %249 = arith.cmpi slt, %248, %0 : vector<8x1xi32>
    %250 = vector.shape_cast %249 : vector<8x1xi1> to vector<8x1xi1>
    %251 = vector.broadcast %250 : vector<8x1xi1> to vector<8x32xi1>
    %252 = arith.select %251, %247, %157 : vector<8x32xi1>, vector<8x32xf32>
    %253 = vector.shape_cast %249 : vector<8x1xi1> to vector<8x1xi1>
    %254 = vector.broadcast %253 : vector<8x1xi1> to vector<8x32xi1>
    %255 = arith.select %254, %245, %160 : vector<8x32xi1>, vector<8x32xf32>
    %cst_93 = arith.constant 0.000000e+00 : f32
    %256 = vector.shape_cast %249 : vector<8x1xi1> to vector<8x1xi1>
    %257 = vector.broadcast %256 : vector<8x1xi1> to vector<8x32xi1>
    %258 = vector.broadcast %cst_93 : f32 to vector<8x32xf32>
    %259 = arith.select %257, %247, %258 : vector<8x32xi1>, vector<8x32xf32>
    %260 = arith.index_cast %c2_i32 : i32 to index
    %c0_94 = arith.constant 0 : index
    %c0_95 = arith.constant 0 : index
    %261 = vector.load %arg12[%260, %c0_94, %c0_95] : memref<8x8x32xf32, #tpu.memory_space<vmem>>, vector<1x8x32xf32>
    %262 = vector.shape_cast %261 : vector<1x8x32xf32> to vector<8x32xf32>
    %263 = vector.shape_cast %259 : vector<8x32xf32> to vector<1x8x32xf32>
    tpu.vector_store %arg12[%260, %c0_94, %c0_95], %263 {strides = array<i32>} : memref<8x8x32xf32, #tpu.memory_space<vmem>>, vector<1x8x32xf32>,
    %264 = arith.index_cast %216 : i32 to index
    %c0_96 = arith.constant 0 : index
    %c0_97 = arith.constant 0 : index
    %265 = vector.load %arg15[%264, %c0_96, %c0_97] : memref<8x8x128xf32, #tpu.memory_space<vmem>>, vector<1x8x128xf32>
    %266 = vector.shape_cast %265 : vector<1x8x128xf32> to vector<8x128xf32>
    %267 = arith.truncf %204 : vector<8x32xf32> to vector<8x32xbf16>
    %cst_98 = arith.constant dense<0.000000e+00> : vector<8x128xf32>
    %268 = tpu.matmul %267, %24, %cst_98 {dimension_numbers = #tpu.dot_dimension_numbers<[1], [0], [0], [1], [0, 0, 1, 1], [], []>} : vector<8x32xbf16>, vector<32x128xbf16>, vector<8x128xf32> -> vector<8x128xf32>
    %269 = arith.addf %266, %268 : vector<8x128xf32>
    %cst_99 = arith.constant 5.000000e-01 : f32
    %270 = vector.broadcast %cst_99 : f32 to vector<8x128xf32>
    %271 = arith.mulf %270, %269 : vector<8x128xf32>
    %272 = math.tanh %271 : vector<8x128xf32>
    %273 = vector.extract_strided_slice %272 {offsets = [0, 0], sizes = [8, 32], strides = [1, 1]} : vector<8x128xf32> to vector<8x32xf32>
    %cst_100 = arith.constant 5.000000e-01 : f32
    %274 = vector.broadcast %cst_100 : f32 to vector<8x32xf32>
    %275 = arith.mulf %274, %273 : vector<8x32xf32>
    %cst_101 = arith.constant 5.000000e-01 : f32
    %276 = vector.broadcast %cst_101 : f32 to vector<8x32xf32>
    %277 = arith.addf %275, %276 : vector<8x32xf32>
    %278 = vector.extract_strided_slice %272 {offsets = [0, 32], sizes = [8, 32], strides = [1, 1]} : vector<8x128xf32> to vector<8x32xf32>
    %cst_102 = arith.constant 5.000000e-01 : f32
    %279 = vector.broadcast %cst_102 : f32 to vector<8x32xf32>
    %280 = arith.mulf %279, %278 : vector<8x32xf32>
    %cst_103 = arith.constant 5.000000e-01 : f32
    %281 = vector.broadcast %cst_103 : f32 to vector<8x32xf32>
    %282 = arith.addf %280, %281 : vector<8x32xf32>
    %283 = vector.extract_strided_slice %272 {offsets = [0, 96], sizes = [8, 32], strides = [1, 1]} : vector<8x128xf32> to vector<8x32xf32>
    %cst_104 = arith.constant 5.000000e-01 : f32
    %284 = vector.broadcast %cst_104 : f32 to vector<8x32xf32>
    %285 = arith.mulf %284, %283 : vector<8x32xf32>
    %cst_105 = arith.constant 5.000000e-01 : f32
    %286 = vector.broadcast %cst_105 : f32 to vector<8x32xf32>
    %287 = arith.addf %285, %286 : vector<8x32xf32>
    %288 = vector.extract_strided_slice %269 {offsets = [0, 64], sizes = [8, 32], strides = [1, 1]} : vector<8x128xf32> to vector<8x32xf32>
    %289 = math.tanh %288 : vector<8x32xf32>
    %290 = arith.mulf %282, %207 : vector<8x32xf32>
    %291 = arith.mulf %277, %289 : vector<8x32xf32>
    %292 = arith.addf %290, %291 : vector<8x32xf32>
    %293 = math.tanh %292 : vector<8x32xf32>
    %294 = arith.mulf %287, %293 : vector<8x32xf32>
    %295 = vector.broadcast %216 : i32 to vector<8x1xi32>
    %296 = arith.cmpi slt, %295, %0 : vector<8x1xi32>
    %297 = vector.shape_cast %296 : vector<8x1xi1> to vector<8x1xi1>
    %298 = vector.broadcast %297 : vector<8x1xi1> to vector<8x32xi1>
    %299 = arith.select %298, %294, %204 : vector<8x32xi1>, vector<8x32xf32>
    %300 = vector.shape_cast %296 : vector<8x1xi1> to vector<8x1xi1>
    %301 = vector.broadcast %300 : vector<8x1xi1> to vector<8x32xi1>
    %302 = arith.select %301, %292, %207 : vector<8x32xi1>, vector<8x32xf32>
    %cst_106 = arith.constant 0.000000e+00 : f32
    %303 = vector.shape_cast %296 : vector<8x1xi1> to vector<8x1xi1>
    %304 = vector.broadcast %303 : vector<8x1xi1> to vector<8x32xi1>
    %305 = vector.broadcast %cst_106 : f32 to vector<8x32xf32>
    %306 = arith.select %304, %294, %305 : vector<8x32xi1>, vector<8x32xf32>
    %307 = arith.index_cast %216 : i32 to index
    %c0_107 = arith.constant 0 : index
    %c0_108 = arith.constant 0 : index
    %308 = vector.load %arg13[%307, %c0_107, %c0_108] : memref<8x8x32xf32, #tpu.memory_space<vmem>>, vector<1x8x32xf32>
    %309 = vector.shape_cast %308 : vector<1x8x32xf32> to vector<8x32xf32>
    %310 = vector.shape_cast %306 : vector<8x32xf32> to vector<1x8x32xf32>
    tpu.vector_store %arg13[%307, %c0_107, %c0_108], %310 {strides = array<i32>} : memref<8x8x32xf32, #tpu.memory_space<vmem>>, vector<1x8x32xf32>,
    %c3_i32 = arith.constant 3 : i32
    %c7_i32_109 = arith.constant 7 : i32
    %311 = arith.subi %c7_i32_109, %c3_i32 : i32
    %312 = arith.index_cast %c3_i32 : i32 to index
    %c0_110 = arith.constant 0 : index
    %c0_111 = arith.constant 0 : index
    %313 = vector.load %arg14[%312, %c0_110, %c0_111] : memref<8x8x128xf32, #tpu.memory_space<vmem>>, vector<1x8x128xf32>
    %314 = vector.shape_cast %313 : vector<1x8x128xf32> to vector<8x128xf32>
    %315 = arith.truncf %252 : vector<8x32xf32> to vector<8x32xbf16>
    %cst_112 = arith.constant dense<0.000000e+00> : vector<8x128xf32>
    %316 = tpu.matmul %315, %22, %cst_112 {dimension_numbers = #tpu.dot_dimension_numbers<[1], [0], [0], [1], [0, 0, 1, 1], [], []>} : vector<8x32xbf16>, vector<32x128xbf16>, vector<8x128xf32> -> vector<8x128xf32>
    %317 = arith.addf %314, %316 : vector<8x128xf32>
    %cst_113 = arith.constant 5.000000e-01 : f32
    %318 = vector.broadcast %cst_113 : f32 to vector<8x128xf32>
    %319 = arith.mulf %318, %317 : vector<8x128xf32>
    %320 = math.tanh %319 : vector<8x128xf32>
    %321 = vector.extract_strided_slice %320 {offsets = [0, 0], sizes = [8, 32], strides = [1, 1]} : vector<8x128xf32> to vector<8x32xf32>
    %cst_114 = arith.constant 5.000000e-01 : f32
    %322 = vector.broadcast %cst_114 : f32 to vector<8x32xf32>
    %323 = arith.mulf %322, %321 : vector<8x32xf32>
    %cst_115 = arith.constant 5.000000e-01 : f32
    %324 = vector.broadcast %cst_115 : f32 to vector<8x32xf32>
    %325 = arith.addf %323, %324 : vector<8x32xf32>
    %326 = vector.extract_strided_slice %320 {offsets = [0, 32], sizes = [8, 32], strides = [1, 1]} : vector<8x128xf32> to vector<8x32xf32>
    %cst_116 = arith.constant 5.000000e-01 : f32
    %327 = vector.broadcast %cst_116 : f32 to vector<8x32xf32>
    %328 = arith.mulf %327, %326 : vector<8x32xf32>
    %cst_117 = arith.constant 5.000000e-01 : f32
    %329 = vector.broadcast %cst_117 : f32 to vector<8x32xf32>
    %330 = arith.addf %328, %329 : vector<8x32xf32>
    %331 = vector.extract_strided_slice %320 {offsets = [0, 96], sizes = [8, 32], strides = [1, 1]} : vector<8x128xf32> to vector<8x32xf32>
    %cst_118 = arith.constant 5.000000e-01 : f32
    %332 = vector.broadcast %cst_118 : f32 to vector<8x32xf32>
    %333 = arith.mulf %332, %331 : vector<8x32xf32>
    %cst_119 = arith.constant 5.000000e-01 : f32
    %334 = vector.broadcast %cst_119 : f32 to vector<8x32xf32>
    %335 = arith.addf %333, %334 : vector<8x32xf32>
    %336 = vector.extract_strided_slice %317 {offsets = [0, 64], sizes = [8, 32], strides = [1, 1]} : vector<8x128xf32> to vector<8x32xf32>
    %337 = math.tanh %336 : vector<8x32xf32>
    %338 = arith.mulf %330, %255 : vector<8x32xf32>
    %339 = arith.mulf %325, %337 : vector<8x32xf32>
    %340 = arith.addf %338, %339 : vector<8x32xf32>
    %341 = math.tanh %340 : vector<8x32xf32>
    %342 = arith.mulf %335, %341 : vector<8x32xf32>
    %343 = vector.broadcast %c3_i32 : i32 to vector<8x1xi32>
    %344 = arith.cmpi slt, %343, %0 : vector<8x1xi32>
    %345 = vector.shape_cast %344 : vector<8x1xi1> to vector<8x1xi1>
    %346 = vector.broadcast %345 : vector<8x1xi1> to vector<8x32xi1>
    %347 = arith.select %346, %342, %252 : vector<8x32xi1>, vector<8x32xf32>
    %348 = vector.shape_cast %344 : vector<8x1xi1> to vector<8x1xi1>
    %349 = vector.broadcast %348 : vector<8x1xi1> to vector<8x32xi1>
    %350 = arith.select %349, %340, %255 : vector<8x32xi1>, vector<8x32xf32>
    %cst_120 = arith.constant 0.000000e+00 : f32
    %351 = vector.shape_cast %344 : vector<8x1xi1> to vector<8x1xi1>
    %352 = vector.broadcast %351 : vector<8x1xi1> to vector<8x32xi1>
    %353 = vector.broadcast %cst_120 : f32 to vector<8x32xf32>
    %354 = arith.select %352, %342, %353 : vector<8x32xi1>, vector<8x32xf32>
    %355 = arith.index_cast %c3_i32 : i32 to index
    %c0_121 = arith.constant 0 : index
    %c0_122 = arith.constant 0 : index
    %356 = vector.load %arg12[%355, %c0_121, %c0_122] : memref<8x8x32xf32, #tpu.memory_space<vmem>>, vector<1x8x32xf32>
    %357 = vector.shape_cast %356 : vector<1x8x32xf32> to vector<8x32xf32>
    %358 = vector.shape_cast %354 : vector<8x32xf32> to vector<1x8x32xf32>
    tpu.vector_store %arg12[%355, %c0_121, %c0_122], %358 {strides = array<i32>} : memref<8x8x32xf32, #tpu.memory_space<vmem>>, vector<1x8x32xf32>,
    %359 = arith.index_cast %311 : i32 to index
    %c0_123 = arith.constant 0 : index
    %c0_124 = arith.constant 0 : index
    %360 = vector.load %arg15[%359, %c0_123, %c0_124] : memref<8x8x128xf32, #tpu.memory_space<vmem>>, vector<1x8x128xf32>
    %361 = vector.shape_cast %360 : vector<1x8x128xf32> to vector<8x128xf32>
    %362 = arith.truncf %299 : vector<8x32xf32> to vector<8x32xbf16>
    %cst_125 = arith.constant dense<0.000000e+00> : vector<8x128xf32>
    %363 = tpu.matmul %362, %24, %cst_125 {dimension_numbers = #tpu.dot_dimension_numbers<[1], [0], [0], [1], [0, 0, 1, 1], [], []>} : vector<8x32xbf16>, vector<32x128xbf16>, vector<8x128xf32> -> vector<8x128xf32>
    %364 = arith.addf %361, %363 : vector<8x128xf32>
    %cst_126 = arith.constant 5.000000e-01 : f32
    %365 = vector.broadcast %cst_126 : f32 to vector<8x128xf32>
    %366 = arith.mulf %365, %364 : vector<8x128xf32>
    %367 = math.tanh %366 : vector<8x128xf32>
    %368 = vector.extract_strided_slice %367 {offsets = [0, 0], sizes = [8, 32], strides = [1, 1]} : vector<8x128xf32> to vector<8x32xf32>
    %cst_127 = arith.constant 5.000000e-01 : f32
    %369 = vector.broadcast %cst_127 : f32 to vector<8x32xf32>
    %370 = arith.mulf %369, %368 : vector<8x32xf32>
    %cst_128 = arith.constant 5.000000e-01 : f32
    %371 = vector.broadcast %cst_128 : f32 to vector<8x32xf32>
    %372 = arith.addf %370, %371 : vector<8x32xf32>
    %373 = vector.extract_strided_slice %367 {offsets = [0, 32], sizes = [8, 32], strides = [1, 1]} : vector<8x128xf32> to vector<8x32xf32>
    %cst_129 = arith.constant 5.000000e-01 : f32
    %374 = vector.broadcast %cst_129 : f32 to vector<8x32xf32>
    %375 = arith.mulf %374, %373 : vector<8x32xf32>
    %cst_130 = arith.constant 5.000000e-01 : f32
    %376 = vector.broadcast %cst_130 : f32 to vector<8x32xf32>
    %377 = arith.addf %375, %376 : vector<8x32xf32>
    %378 = vector.extract_strided_slice %367 {offsets = [0, 96], sizes = [8, 32], strides = [1, 1]} : vector<8x128xf32> to vector<8x32xf32>
    %cst_131 = arith.constant 5.000000e-01 : f32
    %379 = vector.broadcast %cst_131 : f32 to vector<8x32xf32>
    %380 = arith.mulf %379, %378 : vector<8x32xf32>
    %cst_132 = arith.constant 5.000000e-01 : f32
    %381 = vector.broadcast %cst_132 : f32 to vector<8x32xf32>
    %382 = arith.addf %380, %381 : vector<8x32xf32>
    %383 = vector.extract_strided_slice %364 {offsets = [0, 64], sizes = [8, 32], strides = [1, 1]} : vector<8x128xf32> to vector<8x32xf32>
    %384 = math.tanh %383 : vector<8x32xf32>
    %385 = arith.mulf %377, %302 : vector<8x32xf32>
    %386 = arith.mulf %372, %384 : vector<8x32xf32>
    %387 = arith.addf %385, %386 : vector<8x32xf32>
    %388 = math.tanh %387 : vector<8x32xf32>
    %389 = arith.mulf %382, %388 : vector<8x32xf32>
    %390 = vector.broadcast %311 : i32 to vector<8x1xi32>
    %391 = arith.cmpi slt, %390, %0 : vector<8x1xi32>
    %392 = vector.shape_cast %391 : vector<8x1xi1> to vector<8x1xi1>
    %393 = vector.broadcast %392 : vector<8x1xi1> to vector<8x32xi1>
    %394 = arith.select %393, %389, %299 : vector<8x32xi1>, vector<8x32xf32>
    %395 = vector.shape_cast %391 : vector<8x1xi1> to vector<8x1xi1>
    %396 = vector.broadcast %395 : vector<8x1xi1> to vector<8x32xi1>
    %397 = arith.select %396, %387, %302 : vector<8x32xi1>, vector<8x32xf32>
    %cst_133 = arith.constant 0.000000e+00 : f32
    %398 = vector.shape_cast %391 : vector<8x1xi1> to vector<8x1xi1>
    %399 = vector.broadcast %398 : vector<8x1xi1> to vector<8x32xi1>
    %400 = vector.broadcast %cst_133 : f32 to vector<8x32xf32>
    %401 = arith.select %399, %389, %400 : vector<8x32xi1>, vector<8x32xf32>
    %402 = arith.index_cast %311 : i32 to index
    %c0_134 = arith.constant 0 : index
    %c0_135 = arith.constant 0 : index
    %403 = vector.load %arg13[%402, %c0_134, %c0_135] : memref<8x8x32xf32, #tpu.memory_space<vmem>>, vector<1x8x32xf32>
    %404 = vector.shape_cast %403 : vector<1x8x32xf32> to vector<8x32xf32>
    %405 = vector.shape_cast %401 : vector<8x32xf32> to vector<1x8x32xf32>
    tpu.vector_store %arg13[%402, %c0_134, %c0_135], %405 {strides = array<i32>} : memref<8x8x32xf32, #tpu.memory_space<vmem>>, vector<1x8x32xf32>,
    %c4_i32 = arith.constant 4 : i32
    %c7_i32_136 = arith.constant 7 : i32
    %406 = arith.subi %c7_i32_136, %c4_i32 : i32
    %407 = arith.index_cast %c4_i32 : i32 to index
    %c0_137 = arith.constant 0 : index
    %c0_138 = arith.constant 0 : index
    %408 = vector.load %arg14[%407, %c0_137, %c0_138] : memref<8x8x128xf32, #tpu.memory_space<vmem>>, vector<1x8x128xf32>
    %409 = vector.shape_cast %408 : vector<1x8x128xf32> to vector<8x128xf32>
    %410 = arith.truncf %347 : vector<8x32xf32> to vector<8x32xbf16>
    %cst_139 = arith.constant dense<0.000000e+00> : vector<8x128xf32>
    %411 = tpu.matmul %410, %22, %cst_139 {dimension_numbers = #tpu.dot_dimension_numbers<[1], [0], [0], [1], [0, 0, 1, 1], [], []>} : vector<8x32xbf16>, vector<32x128xbf16>, vector<8x128xf32> -> vector<8x128xf32>
    %412 = arith.addf %409, %411 : vector<8x128xf32>
    %cst_140 = arith.constant 5.000000e-01 : f32
    %413 = vector.broadcast %cst_140 : f32 to vector<8x128xf32>
    %414 = arith.mulf %413, %412 : vector<8x128xf32>
    %415 = math.tanh %414 : vector<8x128xf32>
    %416 = vector.extract_strided_slice %415 {offsets = [0, 0], sizes = [8, 32], strides = [1, 1]} : vector<8x128xf32> to vector<8x32xf32>
    %cst_141 = arith.constant 5.000000e-01 : f32
    %417 = vector.broadcast %cst_141 : f32 to vector<8x32xf32>
    %418 = arith.mulf %417, %416 : vector<8x32xf32>
    %cst_142 = arith.constant 5.000000e-01 : f32
    %419 = vector.broadcast %cst_142 : f32 to vector<8x32xf32>
    %420 = arith.addf %418, %419 : vector<8x32xf32>
    %421 = vector.extract_strided_slice %415 {offsets = [0, 32], sizes = [8, 32], strides = [1, 1]} : vector<8x128xf32> to vector<8x32xf32>
    %cst_143 = arith.constant 5.000000e-01 : f32
    %422 = vector.broadcast %cst_143 : f32 to vector<8x32xf32>
    %423 = arith.mulf %422, %421 : vector<8x32xf32>
    %cst_144 = arith.constant 5.000000e-01 : f32
    %424 = vector.broadcast %cst_144 : f32 to vector<8x32xf32>
    %425 = arith.addf %423, %424 : vector<8x32xf32>
    %426 = vector.extract_strided_slice %415 {offsets = [0, 96], sizes = [8, 32], strides = [1, 1]} : vector<8x128xf32> to vector<8x32xf32>
    %cst_145 = arith.constant 5.000000e-01 : f32
    %427 = vector.broadcast %cst_145 : f32 to vector<8x32xf32>
    %428 = arith.mulf %427, %426 : vector<8x32xf32>
    %cst_146 = arith.constant 5.000000e-01 : f32
    %429 = vector.broadcast %cst_146 : f32 to vector<8x32xf32>
    %430 = arith.addf %428, %429 : vector<8x32xf32>
    %431 = vector.extract_strided_slice %412 {offsets = [0, 64], sizes = [8, 32], strides = [1, 1]} : vector<8x128xf32> to vector<8x32xf32>
    %432 = math.tanh %431 : vector<8x32xf32>
    %433 = arith.mulf %425, %350 : vector<8x32xf32>
    %434 = arith.mulf %420, %432 : vector<8x32xf32>
    %435 = arith.addf %433, %434 : vector<8x32xf32>
    %436 = math.tanh %435 : vector<8x32xf32>
    %437 = arith.mulf %430, %436 : vector<8x32xf32>
    %438 = vector.broadcast %c4_i32 : i32 to vector<8x1xi32>
    %439 = arith.cmpi slt, %438, %0 : vector<8x1xi32>
    %440 = vector.shape_cast %439 : vector<8x1xi1> to vector<8x1xi1>
    %441 = vector.broadcast %440 : vector<8x1xi1> to vector<8x32xi1>
    %442 = arith.select %441, %437, %347 : vector<8x32xi1>, vector<8x32xf32>
    %443 = vector.shape_cast %439 : vector<8x1xi1> to vector<8x1xi1>
    %444 = vector.broadcast %443 : vector<8x1xi1> to vector<8x32xi1>
    %445 = arith.select %444, %435, %350 : vector<8x32xi1>, vector<8x32xf32>
    %cst_147 = arith.constant 0.000000e+00 : f32
    %446 = vector.shape_cast %439 : vector<8x1xi1> to vector<8x1xi1>
    %447 = vector.broadcast %446 : vector<8x1xi1> to vector<8x32xi1>
    %448 = vector.broadcast %cst_147 : f32 to vector<8x32xf32>
    %449 = arith.select %447, %437, %448 : vector<8x32xi1>, vector<8x32xf32>
    %450 = arith.index_cast %c4_i32 : i32 to index
    %c0_148 = arith.constant 0 : index
    %c0_149 = arith.constant 0 : index
    %451 = vector.load %arg12[%450, %c0_148, %c0_149] : memref<8x8x32xf32, #tpu.memory_space<vmem>>, vector<1x8x32xf32>
    %452 = vector.shape_cast %451 : vector<1x8x32xf32> to vector<8x32xf32>
    %453 = vector.shape_cast %449 : vector<8x32xf32> to vector<1x8x32xf32>
    tpu.vector_store %arg12[%450, %c0_148, %c0_149], %453 {strides = array<i32>} : memref<8x8x32xf32, #tpu.memory_space<vmem>>, vector<1x8x32xf32>,
    %454 = arith.index_cast %406 : i32 to index
    %c0_150 = arith.constant 0 : index
    %c0_151 = arith.constant 0 : index
    %455 = vector.load %arg15[%454, %c0_150, %c0_151] : memref<8x8x128xf32, #tpu.memory_space<vmem>>, vector<1x8x128xf32>
    %456 = vector.shape_cast %455 : vector<1x8x128xf32> to vector<8x128xf32>
    %457 = arith.truncf %394 : vector<8x32xf32> to vector<8x32xbf16>
    %cst_152 = arith.constant dense<0.000000e+00> : vector<8x128xf32>
    %458 = tpu.matmul %457, %24, %cst_152 {dimension_numbers = #tpu.dot_dimension_numbers<[1], [0], [0], [1], [0, 0, 1, 1], [], []>} : vector<8x32xbf16>, vector<32x128xbf16>, vector<8x128xf32> -> vector<8x128xf32>
    %459 = arith.addf %456, %458 : vector<8x128xf32>
    %cst_153 = arith.constant 5.000000e-01 : f32
    %460 = vector.broadcast %cst_153 : f32 to vector<8x128xf32>
    %461 = arith.mulf %460, %459 : vector<8x128xf32>
    %462 = math.tanh %461 : vector<8x128xf32>
    %463 = vector.extract_strided_slice %462 {offsets = [0, 0], sizes = [8, 32], strides = [1, 1]} : vector<8x128xf32> to vector<8x32xf32>
    %cst_154 = arith.constant 5.000000e-01 : f32
    %464 = vector.broadcast %cst_154 : f32 to vector<8x32xf32>
    %465 = arith.mulf %464, %463 : vector<8x32xf32>
    %cst_155 = arith.constant 5.000000e-01 : f32
    %466 = vector.broadcast %cst_155 : f32 to vector<8x32xf32>
    %467 = arith.addf %465, %466 : vector<8x32xf32>
    %468 = vector.extract_strided_slice %462 {offsets = [0, 32], sizes = [8, 32], strides = [1, 1]} : vector<8x128xf32> to vector<8x32xf32>
    %cst_156 = arith.constant 5.000000e-01 : f32
    %469 = vector.broadcast %cst_156 : f32 to vector<8x32xf32>
    %470 = arith.mulf %469, %468 : vector<8x32xf32>
    %cst_157 = arith.constant 5.000000e-01 : f32
    %471 = vector.broadcast %cst_157 : f32 to vector<8x32xf32>
    %472 = arith.addf %470, %471 : vector<8x32xf32>
    %473 = vector.extract_strided_slice %462 {offsets = [0, 96], sizes = [8, 32], strides = [1, 1]} : vector<8x128xf32> to vector<8x32xf32>
    %cst_158 = arith.constant 5.000000e-01 : f32
    %474 = vector.broadcast %cst_158 : f32 to vector<8x32xf32>
    %475 = arith.mulf %474, %473 : vector<8x32xf32>
    %cst_159 = arith.constant 5.000000e-01 : f32
    %476 = vector.broadcast %cst_159 : f32 to vector<8x32xf32>
    %477 = arith.addf %475, %476 : vector<8x32xf32>
    %478 = vector.extract_strided_slice %459 {offsets = [0, 64], sizes = [8, 32], strides = [1, 1]} : vector<8x128xf32> to vector<8x32xf32>
    %479 = math.tanh %478 : vector<8x32xf32>
    %480 = arith.mulf %472, %397 : vector<8x32xf32>
    %481 = arith.mulf %467, %479 : vector<8x32xf32>
    %482 = arith.addf %480, %481 : vector<8x32xf32>
    %483 = math.tanh %482 : vector<8x32xf32>
    %484 = arith.mulf %477, %483 : vector<8x32xf32>
    %485 = vector.broadcast %406 : i32 to vector<8x1xi32>
    %486 = arith.cmpi slt, %485, %0 : vector<8x1xi32>
    %487 = vector.shape_cast %486 : vector<8x1xi1> to vector<8x1xi1>
    %488 = vector.broadcast %487 : vector<8x1xi1> to vector<8x32xi1>
    %489 = arith.select %488, %484, %394 : vector<8x32xi1>, vector<8x32xf32>
    %490 = vector.shape_cast %486 : vector<8x1xi1> to vector<8x1xi1>
    %491 = vector.broadcast %490 : vector<8x1xi1> to vector<8x32xi1>
    %492 = arith.select %491, %482, %397 : vector<8x32xi1>, vector<8x32xf32>
    %cst_160 = arith.constant 0.000000e+00 : f32
    %493 = vector.shape_cast %486 : vector<8x1xi1> to vector<8x1xi1>
    %494 = vector.broadcast %493 : vector<8x1xi1> to vector<8x32xi1>
    %495 = vector.broadcast %cst_160 : f32 to vector<8x32xf32>
    %496 = arith.select %494, %484, %495 : vector<8x32xi1>, vector<8x32xf32>
    %497 = arith.index_cast %406 : i32 to index
    %c0_161 = arith.constant 0 : index
    %c0_162 = arith.constant 0 : index
    %498 = vector.load %arg13[%497, %c0_161, %c0_162] : memref<8x8x32xf32, #tpu.memory_space<vmem>>, vector<1x8x32xf32>
    %499 = vector.shape_cast %498 : vector<1x8x32xf32> to vector<8x32xf32>
    %500 = vector.shape_cast %496 : vector<8x32xf32> to vector<1x8x32xf32>
    tpu.vector_store %arg13[%497, %c0_161, %c0_162], %500 {strides = array<i32>} : memref<8x8x32xf32, #tpu.memory_space<vmem>>, vector<1x8x32xf32>,
    %c5_i32 = arith.constant 5 : i32
    %c7_i32_163 = arith.constant 7 : i32
    %501 = arith.subi %c7_i32_163, %c5_i32 : i32
    %502 = arith.index_cast %c5_i32 : i32 to index
    %c0_164 = arith.constant 0 : index
    %c0_165 = arith.constant 0 : index
    %503 = vector.load %arg14[%502, %c0_164, %c0_165] : memref<8x8x128xf32, #tpu.memory_space<vmem>>, vector<1x8x128xf32>
    %504 = vector.shape_cast %503 : vector<1x8x128xf32> to vector<8x128xf32>
    %505 = arith.truncf %442 : vector<8x32xf32> to vector<8x32xbf16>
    %cst_166 = arith.constant dense<0.000000e+00> : vector<8x128xf32>
    %506 = tpu.matmul %505, %22, %cst_166 {dimension_numbers = #tpu.dot_dimension_numbers<[1], [0], [0], [1], [0, 0, 1, 1], [], []>} : vector<8x32xbf16>, vector<32x128xbf16>, vector<8x128xf32> -> vector<8x128xf32>
    %507 = arith.addf %504, %506 : vector<8x128xf32>
    %cst_167 = arith.constant 5.000000e-01 : f32
    %508 = vector.broadcast %cst_167 : f32 to vector<8x128xf32>
    %509 = arith.mulf %508, %507 : vector<8x128xf32>
    %510 = math.tanh %509 : vector<8x128xf32>
    %511 = vector.extract_strided_slice %510 {offsets = [0, 0], sizes = [8, 32], strides = [1, 1]} : vector<8x128xf32> to vector<8x32xf32>
    %cst_168 = arith.constant 5.000000e-01 : f32
    %512 = vector.broadcast %cst_168 : f32 to vector<8x32xf32>
    %513 = arith.mulf %512, %511 : vector<8x32xf32>
    %cst_169 = arith.constant 5.000000e-01 : f32
    %514 = vector.broadcast %cst_169 : f32 to vector<8x32xf32>
    %515 = arith.addf %513, %514 : vector<8x32xf32>
    %516 = vector.extract_strided_slice %510 {offsets = [0, 32], sizes = [8, 32], strides = [1, 1]} : vector<8x128xf32> to vector<8x32xf32>
    %cst_170 = arith.constant 5.000000e-01 : f32
    %517 = vector.broadcast %cst_170 : f32 to vector<8x32xf32>
    %518 = arith.mulf %517, %516 : vector<8x32xf32>
    %cst_171 = arith.constant 5.000000e-01 : f32
    %519 = vector.broadcast %cst_171 : f32 to vector<8x32xf32>
    %520 = arith.addf %518, %519 : vector<8x32xf32>
    %521 = vector.extract_strided_slice %510 {offsets = [0, 96], sizes = [8, 32], strides = [1, 1]} : vector<8x128xf32> to vector<8x32xf32>
    %cst_172 = arith.constant 5.000000e-01 : f32
    %522 = vector.broadcast %cst_172 : f32 to vector<8x32xf32>
    %523 = arith.mulf %522, %521 : vector<8x32xf32>
    %cst_173 = arith.constant 5.000000e-01 : f32
    %524 = vector.broadcast %cst_173 : f32 to vector<8x32xf32>
    %525 = arith.addf %523, %524 : vector<8x32xf32>
    %526 = vector.extract_strided_slice %507 {offsets = [0, 64], sizes = [8, 32], strides = [1, 1]} : vector<8x128xf32> to vector<8x32xf32>
    %527 = math.tanh %526 : vector<8x32xf32>
    %528 = arith.mulf %520, %445 : vector<8x32xf32>
    %529 = arith.mulf %515, %527 : vector<8x32xf32>
    %530 = arith.addf %528, %529 : vector<8x32xf32>
    %531 = math.tanh %530 : vector<8x32xf32>
    %532 = arith.mulf %525, %531 : vector<8x32xf32>
    %533 = vector.broadcast %c5_i32 : i32 to vector<8x1xi32>
    %534 = arith.cmpi slt, %533, %0 : vector<8x1xi32>
    %535 = vector.shape_cast %534 : vector<8x1xi1> to vector<8x1xi1>
    %536 = vector.broadcast %535 : vector<8x1xi1> to vector<8x32xi1>
    %537 = arith.select %536, %532, %442 : vector<8x32xi1>, vector<8x32xf32>
    %538 = vector.shape_cast %534 : vector<8x1xi1> to vector<8x1xi1>
    %539 = vector.broadcast %538 : vector<8x1xi1> to vector<8x32xi1>
    %540 = arith.select %539, %530, %445 : vector<8x32xi1>, vector<8x32xf32>
    %cst_174 = arith.constant 0.000000e+00 : f32
    %541 = vector.shape_cast %534 : vector<8x1xi1> to vector<8x1xi1>
    %542 = vector.broadcast %541 : vector<8x1xi1> to vector<8x32xi1>
    %543 = vector.broadcast %cst_174 : f32 to vector<8x32xf32>
    %544 = arith.select %542, %532, %543 : vector<8x32xi1>, vector<8x32xf32>
    %545 = arith.index_cast %c5_i32 : i32 to index
    %c0_175 = arith.constant 0 : index
    %c0_176 = arith.constant 0 : index
    %546 = vector.load %arg12[%545, %c0_175, %c0_176] : memref<8x8x32xf32, #tpu.memory_space<vmem>>, vector<1x8x32xf32>
    %547 = vector.shape_cast %546 : vector<1x8x32xf32> to vector<8x32xf32>
    %548 = vector.shape_cast %544 : vector<8x32xf32> to vector<1x8x32xf32>
    tpu.vector_store %arg12[%545, %c0_175, %c0_176], %548 {strides = array<i32>} : memref<8x8x32xf32, #tpu.memory_space<vmem>>, vector<1x8x32xf32>,
    %549 = arith.index_cast %501 : i32 to index
    %c0_177 = arith.constant 0 : index
    %c0_178 = arith.constant 0 : index
    %550 = vector.load %arg15[%549, %c0_177, %c0_178] : memref<8x8x128xf32, #tpu.memory_space<vmem>>, vector<1x8x128xf32>
    %551 = vector.shape_cast %550 : vector<1x8x128xf32> to vector<8x128xf32>
    %552 = arith.truncf %489 : vector<8x32xf32> to vector<8x32xbf16>
    %cst_179 = arith.constant dense<0.000000e+00> : vector<8x128xf32>
    %553 = tpu.matmul %552, %24, %cst_179 {dimension_numbers = #tpu.dot_dimension_numbers<[1], [0], [0], [1], [0, 0, 1, 1], [], []>} : vector<8x32xbf16>, vector<32x128xbf16>, vector<8x128xf32> -> vector<8x128xf32>
    %554 = arith.addf %551, %553 : vector<8x128xf32>
    %cst_180 = arith.constant 5.000000e-01 : f32
    %555 = vector.broadcast %cst_180 : f32 to vector<8x128xf32>
    %556 = arith.mulf %555, %554 : vector<8x128xf32>
    %557 = math.tanh %556 : vector<8x128xf32>
    %558 = vector.extract_strided_slice %557 {offsets = [0, 0], sizes = [8, 32], strides = [1, 1]} : vector<8x128xf32> to vector<8x32xf32>
    %cst_181 = arith.constant 5.000000e-01 : f32
    %559 = vector.broadcast %cst_181 : f32 to vector<8x32xf32>
    %560 = arith.mulf %559, %558 : vector<8x32xf32>
    %cst_182 = arith.constant 5.000000e-01 : f32
    %561 = vector.broadcast %cst_182 : f32 to vector<8x32xf32>
    %562 = arith.addf %560, %561 : vector<8x32xf32>
    %563 = vector.extract_strided_slice %557 {offsets = [0, 32], sizes = [8, 32], strides = [1, 1]} : vector<8x128xf32> to vector<8x32xf32>
    %cst_183 = arith.constant 5.000000e-01 : f32
    %564 = vector.broadcast %cst_183 : f32 to vector<8x32xf32>
    %565 = arith.mulf %564, %563 : vector<8x32xf32>
    %cst_184 = arith.constant 5.000000e-01 : f32
    %566 = vector.broadcast %cst_184 : f32 to vector<8x32xf32>
    %567 = arith.addf %565, %566 : vector<8x32xf32>
    %568 = vector.extract_strided_slice %557 {offsets = [0, 96], sizes = [8, 32], strides = [1, 1]} : vector<8x128xf32> to vector<8x32xf32>
    %cst_185 = arith.constant 5.000000e-01 : f32
    %569 = vector.broadcast %cst_185 : f32 to vector<8x32xf32>
    %570 = arith.mulf %569, %568 : vector<8x32xf32>
    %cst_186 = arith.constant 5.000000e-01 : f32
    %571 = vector.broadcast %cst_186 : f32 to vector<8x32xf32>
    %572 = arith.addf %570, %571 : vector<8x32xf32>
    %573 = vector.extract_strided_slice %554 {offsets = [0, 64], sizes = [8, 32], strides = [1, 1]} : vector<8x128xf32> to vector<8x32xf32>
    %574 = math.tanh %573 : vector<8x32xf32>
    %575 = arith.mulf %567, %492 : vector<8x32xf32>
    %576 = arith.mulf %562, %574 : vector<8x32xf32>
    %577 = arith.addf %575, %576 : vector<8x32xf32>
    %578 = math.tanh %577 : vector<8x32xf32>
    %579 = arith.mulf %572, %578 : vector<8x32xf32>
    %580 = vector.broadcast %501 : i32 to vector<8x1xi32>
    %581 = arith.cmpi slt, %580, %0 : vector<8x1xi32>
    %582 = vector.shape_cast %581 : vector<8x1xi1> to vector<8x1xi1>
    %583 = vector.broadcast %582 : vector<8x1xi1> to vector<8x32xi1>
    %584 = arith.select %583, %579, %489 : vector<8x32xi1>, vector<8x32xf32>
    %585 = vector.shape_cast %581 : vector<8x1xi1> to vector<8x1xi1>
    %586 = vector.broadcast %585 : vector<8x1xi1> to vector<8x32xi1>
    %587 = arith.select %586, %577, %492 : vector<8x32xi1>, vector<8x32xf32>
    %cst_187 = arith.constant 0.000000e+00 : f32
    %588 = vector.shape_cast %581 : vector<8x1xi1> to vector<8x1xi1>
    %589 = vector.broadcast %588 : vector<8x1xi1> to vector<8x32xi1>
    %590 = vector.broadcast %cst_187 : f32 to vector<8x32xf32>
    %591 = arith.select %589, %579, %590 : vector<8x32xi1>, vector<8x32xf32>
    %592 = arith.index_cast %501 : i32 to index
    %c0_188 = arith.constant 0 : index
    %c0_189 = arith.constant 0 : index
    %593 = vector.load %arg13[%592, %c0_188, %c0_189] : memref<8x8x32xf32, #tpu.memory_space<vmem>>, vector<1x8x32xf32>
    %594 = vector.shape_cast %593 : vector<1x8x32xf32> to vector<8x32xf32>
    %595 = vector.shape_cast %591 : vector<8x32xf32> to vector<1x8x32xf32>
    tpu.vector_store %arg13[%592, %c0_188, %c0_189], %595 {strides = array<i32>} : memref<8x8x32xf32, #tpu.memory_space<vmem>>, vector<1x8x32xf32>,
    %c6_i32 = arith.constant 6 : i32
    %c7_i32_190 = arith.constant 7 : i32
    %596 = arith.subi %c7_i32_190, %c6_i32 : i32
    %597 = arith.index_cast %c6_i32 : i32 to index
    %c0_191 = arith.constant 0 : index
    %c0_192 = arith.constant 0 : index
    %598 = vector.load %arg14[%597, %c0_191, %c0_192] : memref<8x8x128xf32, #tpu.memory_space<vmem>>, vector<1x8x128xf32>
    %599 = vector.shape_cast %598 : vector<1x8x128xf32> to vector<8x128xf32>
    %600 = arith.truncf %537 : vector<8x32xf32> to vector<8x32xbf16>
    %cst_193 = arith.constant dense<0.000000e+00> : vector<8x128xf32>
    %601 = tpu.matmul %600, %22, %cst_193 {dimension_numbers = #tpu.dot_dimension_numbers<[1], [0], [0], [1], [0, 0, 1, 1], [], []>} : vector<8x32xbf16>, vector<32x128xbf16>, vector<8x128xf32> -> vector<8x128xf32>
    %602 = arith.addf %599, %601 : vector<8x128xf32>
    %cst_194 = arith.constant 5.000000e-01 : f32
    %603 = vector.broadcast %cst_194 : f32 to vector<8x128xf32>
    %604 = arith.mulf %603, %602 : vector<8x128xf32>
    %605 = math.tanh %604 : vector<8x128xf32>
    %606 = vector.extract_strided_slice %605 {offsets = [0, 0], sizes = [8, 32], strides = [1, 1]} : vector<8x128xf32> to vector<8x32xf32>
    %cst_195 = arith.constant 5.000000e-01 : f32
    %607 = vector.broadcast %cst_195 : f32 to vector<8x32xf32>
    %608 = arith.mulf %607, %606 : vector<8x32xf32>
    %cst_196 = arith.constant 5.000000e-01 : f32
    %609 = vector.broadcast %cst_196 : f32 to vector<8x32xf32>
    %610 = arith.addf %608, %609 : vector<8x32xf32>
    %611 = vector.extract_strided_slice %605 {offsets = [0, 32], sizes = [8, 32], strides = [1, 1]} : vector<8x128xf32> to vector<8x32xf32>
    %cst_197 = arith.constant 5.000000e-01 : f32
    %612 = vector.broadcast %cst_197 : f32 to vector<8x32xf32>
    %613 = arith.mulf %612, %611 : vector<8x32xf32>
    %cst_198 = arith.constant 5.000000e-01 : f32
    %614 = vector.broadcast %cst_198 : f32 to vector<8x32xf32>
    %615 = arith.addf %613, %614 : vector<8x32xf32>
    %616 = vector.extract_strided_slice %605 {offsets = [0, 96], sizes = [8, 32], strides = [1, 1]} : vector<8x128xf32> to vector<8x32xf32>
    %cst_199 = arith.constant 5.000000e-01 : f32
    %617 = vector.broadcast %cst_199 : f32 to vector<8x32xf32>
    %618 = arith.mulf %617, %616 : vector<8x32xf32>
    %cst_200 = arith.constant 5.000000e-01 : f32
    %619 = vector.broadcast %cst_200 : f32 to vector<8x32xf32>
    %620 = arith.addf %618, %619 : vector<8x32xf32>
    %621 = vector.extract_strided_slice %602 {offsets = [0, 64], sizes = [8, 32], strides = [1, 1]} : vector<8x128xf32> to vector<8x32xf32>
    %622 = math.tanh %621 : vector<8x32xf32>
    %623 = arith.mulf %615, %540 : vector<8x32xf32>
    %624 = arith.mulf %610, %622 : vector<8x32xf32>
    %625 = arith.addf %623, %624 : vector<8x32xf32>
    %626 = math.tanh %625 : vector<8x32xf32>
    %627 = arith.mulf %620, %626 : vector<8x32xf32>
    %628 = vector.broadcast %c6_i32 : i32 to vector<8x1xi32>
    %629 = arith.cmpi slt, %628, %0 : vector<8x1xi32>
    %630 = vector.shape_cast %629 : vector<8x1xi1> to vector<8x1xi1>
    %631 = vector.broadcast %630 : vector<8x1xi1> to vector<8x32xi1>
    %632 = arith.select %631, %627, %537 : vector<8x32xi1>, vector<8x32xf32>
    %633 = vector.shape_cast %629 : vector<8x1xi1> to vector<8x1xi1>
    %634 = vector.broadcast %633 : vector<8x1xi1> to vector<8x32xi1>
    %635 = arith.select %634, %625, %540 : vector<8x32xi1>, vector<8x32xf32>
    %cst_201 = arith.constant 0.000000e+00 : f32
    %636 = vector.shape_cast %629 : vector<8x1xi1> to vector<8x1xi1>
    %637 = vector.broadcast %636 : vector<8x1xi1> to vector<8x32xi1>
    %638 = vector.broadcast %cst_201 : f32 to vector<8x32xf32>
    %639 = arith.select %637, %627, %638 : vector<8x32xi1>, vector<8x32xf32>
    %640 = arith.index_cast %c6_i32 : i32 to index
    %c0_202 = arith.constant 0 : index
    %c0_203 = arith.constant 0 : index
    %641 = vector.load %arg12[%640, %c0_202, %c0_203] : memref<8x8x32xf32, #tpu.memory_space<vmem>>, vector<1x8x32xf32>
    %642 = vector.shape_cast %641 : vector<1x8x32xf32> to vector<8x32xf32>
    %643 = vector.shape_cast %639 : vector<8x32xf32> to vector<1x8x32xf32>
    tpu.vector_store %arg12[%640, %c0_202, %c0_203], %643 {strides = array<i32>} : memref<8x8x32xf32, #tpu.memory_space<vmem>>, vector<1x8x32xf32>,
    %644 = arith.index_cast %596 : i32 to index
    %c0_204 = arith.constant 0 : index
    %c0_205 = arith.constant 0 : index
    %645 = vector.load %arg15[%644, %c0_204, %c0_205] : memref<8x8x128xf32, #tpu.memory_space<vmem>>, vector<1x8x128xf32>
    %646 = vector.shape_cast %645 : vector<1x8x128xf32> to vector<8x128xf32>
    %647 = arith.truncf %584 : vector<8x32xf32> to vector<8x32xbf16>
    %cst_206 = arith.constant dense<0.000000e+00> : vector<8x128xf32>
    %648 = tpu.matmul %647, %24, %cst_206 {dimension_numbers = #tpu.dot_dimension_numbers<[1], [0], [0], [1], [0, 0, 1, 1], [], []>} : vector<8x32xbf16>, vector<32x128xbf16>, vector<8x128xf32> -> vector<8x128xf32>
    %649 = arith.addf %646, %648 : vector<8x128xf32>
    %cst_207 = arith.constant 5.000000e-01 : f32
    %650 = vector.broadcast %cst_207 : f32 to vector<8x128xf32>
    %651 = arith.mulf %650, %649 : vector<8x128xf32>
    %652 = math.tanh %651 : vector<8x128xf32>
    %653 = vector.extract_strided_slice %652 {offsets = [0, 0], sizes = [8, 32], strides = [1, 1]} : vector<8x128xf32> to vector<8x32xf32>
    %cst_208 = arith.constant 5.000000e-01 : f32
    %654 = vector.broadcast %cst_208 : f32 to vector<8x32xf32>
    %655 = arith.mulf %654, %653 : vector<8x32xf32>
    %cst_209 = arith.constant 5.000000e-01 : f32
    %656 = vector.broadcast %cst_209 : f32 to vector<8x32xf32>
    %657 = arith.addf %655, %656 : vector<8x32xf32>
    %658 = vector.extract_strided_slice %652 {offsets = [0, 32], sizes = [8, 32], strides = [1, 1]} : vector<8x128xf32> to vector<8x32xf32>
    %cst_210 = arith.constant 5.000000e-01 : f32
    %659 = vector.broadcast %cst_210 : f32 to vector<8x32xf32>
    %660 = arith.mulf %659, %658 : vector<8x32xf32>
    %cst_211 = arith.constant 5.000000e-01 : f32
    %661 = vector.broadcast %cst_211 : f32 to vector<8x32xf32>
    %662 = arith.addf %660, %661 : vector<8x32xf32>
    %663 = vector.extract_strided_slice %652 {offsets = [0, 96], sizes = [8, 32], strides = [1, 1]} : vector<8x128xf32> to vector<8x32xf32>
    %cst_212 = arith.constant 5.000000e-01 : f32
    %664 = vector.broadcast %cst_212 : f32 to vector<8x32xf32>
    %665 = arith.mulf %664, %663 : vector<8x32xf32>
    %cst_213 = arith.constant 5.000000e-01 : f32
    %666 = vector.broadcast %cst_213 : f32 to vector<8x32xf32>
    %667 = arith.addf %665, %666 : vector<8x32xf32>
    %668 = vector.extract_strided_slice %649 {offsets = [0, 64], sizes = [8, 32], strides = [1, 1]} : vector<8x128xf32> to vector<8x32xf32>
    %669 = math.tanh %668 : vector<8x32xf32>
    %670 = arith.mulf %662, %587 : vector<8x32xf32>
    %671 = arith.mulf %657, %669 : vector<8x32xf32>
    %672 = arith.addf %670, %671 : vector<8x32xf32>
    %673 = math.tanh %672 : vector<8x32xf32>
    %674 = arith.mulf %667, %673 : vector<8x32xf32>
    %675 = vector.broadcast %596 : i32 to vector<8x1xi32>
    %676 = arith.cmpi slt, %675, %0 : vector<8x1xi32>
    %677 = vector.shape_cast %676 : vector<8x1xi1> to vector<8x1xi1>
    %678 = vector.broadcast %677 : vector<8x1xi1> to vector<8x32xi1>
    %679 = arith.select %678, %674, %584 : vector<8x32xi1>, vector<8x32xf32>
    %680 = vector.shape_cast %676 : vector<8x1xi1> to vector<8x1xi1>
    %681 = vector.broadcast %680 : vector<8x1xi1> to vector<8x32xi1>
    %682 = arith.select %681, %672, %587 : vector<8x32xi1>, vector<8x32xf32>
    %cst_214 = arith.constant 0.000000e+00 : f32
    %683 = vector.shape_cast %676 : vector<8x1xi1> to vector<8x1xi1>
    %684 = vector.broadcast %683 : vector<8x1xi1> to vector<8x32xi1>
    %685 = vector.broadcast %cst_214 : f32 to vector<8x32xf32>
    %686 = arith.select %684, %674, %685 : vector<8x32xi1>, vector<8x32xf32>
    %687 = arith.index_cast %596 : i32 to index
    %c0_215 = arith.constant 0 : index
    %c0_216 = arith.constant 0 : index
    %688 = vector.load %arg13[%687, %c0_215, %c0_216] : memref<8x8x32xf32, #tpu.memory_space<vmem>>, vector<1x8x32xf32>
    %689 = vector.shape_cast %688 : vector<1x8x32xf32> to vector<8x32xf32>
    %690 = vector.shape_cast %686 : vector<8x32xf32> to vector<1x8x32xf32>
    tpu.vector_store %arg13[%687, %c0_215, %c0_216], %690 {strides = array<i32>} : memref<8x8x32xf32, #tpu.memory_space<vmem>>, vector<1x8x32xf32>,
    %c7_i32_217 = arith.constant 7 : i32
    %c7_i32_218 = arith.constant 7 : i32
    %691 = arith.subi %c7_i32_218, %c7_i32_217 : i32
    %692 = arith.index_cast %c7_i32_217 : i32 to index
    %c0_219 = arith.constant 0 : index
    %c0_220 = arith.constant 0 : index
    %693 = vector.load %arg14[%692, %c0_219, %c0_220] : memref<8x8x128xf32, #tpu.memory_space<vmem>>, vector<1x8x128xf32>
    %694 = vector.shape_cast %693 : vector<1x8x128xf32> to vector<8x128xf32>
    %695 = arith.truncf %632 : vector<8x32xf32> to vector<8x32xbf16>
    %cst_221 = arith.constant dense<0.000000e+00> : vector<8x128xf32>
    %696 = tpu.matmul %695, %22, %cst_221 {dimension_numbers = #tpu.dot_dimension_numbers<[1], [0], [0], [1], [0, 0, 1, 1], [], []>} : vector<8x32xbf16>, vector<32x128xbf16>, vector<8x128xf32> -> vector<8x128xf32>
    %697 = arith.addf %694, %696 : vector<8x128xf32>
    %cst_222 = arith.constant 5.000000e-01 : f32
    %698 = vector.broadcast %cst_222 : f32 to vector<8x128xf32>
    %699 = arith.mulf %698, %697 : vector<8x128xf32>
    %700 = math.tanh %699 : vector<8x128xf32>
    %701 = vector.extract_strided_slice %700 {offsets = [0, 0], sizes = [8, 32], strides = [1, 1]} : vector<8x128xf32> to vector<8x32xf32>
    %cst_223 = arith.constant 5.000000e-01 : f32
    %702 = vector.broadcast %cst_223 : f32 to vector<8x32xf32>
    %703 = arith.mulf %702, %701 : vector<8x32xf32>
    %cst_224 = arith.constant 5.000000e-01 : f32
    %704 = vector.broadcast %cst_224 : f32 to vector<8x32xf32>
    %705 = arith.addf %703, %704 : vector<8x32xf32>
    %706 = vector.extract_strided_slice %700 {offsets = [0, 32], sizes = [8, 32], strides = [1, 1]} : vector<8x128xf32> to vector<8x32xf32>
    %cst_225 = arith.constant 5.000000e-01 : f32
    %707 = vector.broadcast %cst_225 : f32 to vector<8x32xf32>
    %708 = arith.mulf %707, %706 : vector<8x32xf32>
    %cst_226 = arith.constant 5.000000e-01 : f32
    %709 = vector.broadcast %cst_226 : f32 to vector<8x32xf32>
    %710 = arith.addf %708, %709 : vector<8x32xf32>
    %711 = vector.extract_strided_slice %700 {offsets = [0, 96], sizes = [8, 32], strides = [1, 1]} : vector<8x128xf32> to vector<8x32xf32>
    %cst_227 = arith.constant 5.000000e-01 : f32
    %712 = vector.broadcast %cst_227 : f32 to vector<8x32xf32>
    %713 = arith.mulf %712, %711 : vector<8x32xf32>
    %cst_228 = arith.constant 5.000000e-01 : f32
    %714 = vector.broadcast %cst_228 : f32 to vector<8x32xf32>
    %715 = arith.addf %713, %714 : vector<8x32xf32>
    %716 = vector.extract_strided_slice %697 {offsets = [0, 64], sizes = [8, 32], strides = [1, 1]} : vector<8x128xf32> to vector<8x32xf32>
    %717 = math.tanh %716 : vector<8x32xf32>
    %718 = arith.mulf %710, %635 : vector<8x32xf32>
    %719 = arith.mulf %705, %717 : vector<8x32xf32>
    %720 = arith.addf %718, %719 : vector<8x32xf32>
    %721 = math.tanh %720 : vector<8x32xf32>
    %722 = arith.mulf %715, %721 : vector<8x32xf32>
    %723 = vector.broadcast %c7_i32_217 : i32 to vector<8x1xi32>
    %724 = arith.cmpi slt, %723, %0 : vector<8x1xi32>
    %725 = vector.shape_cast %724 : vector<8x1xi1> to vector<8x1xi1>
    %726 = vector.broadcast %725 : vector<8x1xi1> to vector<8x32xi1>
    %727 = arith.select %726, %722, %632 : vector<8x32xi1>, vector<8x32xf32>
    %728 = vector.shape_cast %724 : vector<8x1xi1> to vector<8x1xi1>
    %729 = vector.broadcast %728 : vector<8x1xi1> to vector<8x32xi1>
    %730 = arith.select %729, %720, %635 : vector<8x32xi1>, vector<8x32xf32>
    %cst_229 = arith.constant 0.000000e+00 : f32
    %731 = vector.shape_cast %724 : vector<8x1xi1> to vector<8x1xi1>
    %732 = vector.broadcast %731 : vector<8x1xi1> to vector<8x32xi1>
    %733 = vector.broadcast %cst_229 : f32 to vector<8x32xf32>
    %734 = arith.select %732, %722, %733 : vector<8x32xi1>, vector<8x32xf32>
    %735 = arith.index_cast %c7_i32_217 : i32 to index
    %c0_230 = arith.constant 0 : index
    %c0_231 = arith.constant 0 : index
    %736 = vector.load %arg12[%735, %c0_230, %c0_231] : memref<8x8x32xf32, #tpu.memory_space<vmem>>, vector<1x8x32xf32>
    %737 = vector.shape_cast %736 : vector<1x8x32xf32> to vector<8x32xf32>
    %738 = vector.shape_cast %734 : vector<8x32xf32> to vector<1x8x32xf32>
    tpu.vector_store %arg12[%735, %c0_230, %c0_231], %738 {strides = array<i32>} : memref<8x8x32xf32, #tpu.memory_space<vmem>>, vector<1x8x32xf32>,
    %739 = arith.index_cast %691 : i32 to index
    %c0_232 = arith.constant 0 : index
    %c0_233 = arith.constant 0 : index
    %740 = vector.load %arg15[%739, %c0_232, %c0_233] : memref<8x8x128xf32, #tpu.memory_space<vmem>>, vector<1x8x128xf32>
    %741 = vector.shape_cast %740 : vector<1x8x128xf32> to vector<8x128xf32>
    %742 = arith.truncf %679 : vector<8x32xf32> to vector<8x32xbf16>
    %cst_234 = arith.constant dense<0.000000e+00> : vector<8x128xf32>
    %743 = tpu.matmul %742, %24, %cst_234 {dimension_numbers = #tpu.dot_dimension_numbers<[1], [0], [0], [1], [0, 0, 1, 1], [], []>} : vector<8x32xbf16>, vector<32x128xbf16>, vector<8x128xf32> -> vector<8x128xf32>
    %744 = arith.addf %741, %743 : vector<8x128xf32>
    %cst_235 = arith.constant 5.000000e-01 : f32
    %745 = vector.broadcast %cst_235 : f32 to vector<8x128xf32>
    %746 = arith.mulf %745, %744 : vector<8x128xf32>
    %747 = math.tanh %746 : vector<8x128xf32>
    %748 = vector.extract_strided_slice %747 {offsets = [0, 0], sizes = [8, 32], strides = [1, 1]} : vector<8x128xf32> to vector<8x32xf32>
    %cst_236 = arith.constant 5.000000e-01 : f32
    %749 = vector.broadcast %cst_236 : f32 to vector<8x32xf32>
    %750 = arith.mulf %749, %748 : vector<8x32xf32>
    %cst_237 = arith.constant 5.000000e-01 : f32
    %751 = vector.broadcast %cst_237 : f32 to vector<8x32xf32>
    %752 = arith.addf %750, %751 : vector<8x32xf32>
    %753 = vector.extract_strided_slice %747 {offsets = [0, 32], sizes = [8, 32], strides = [1, 1]} : vector<8x128xf32> to vector<8x32xf32>
    %cst_238 = arith.constant 5.000000e-01 : f32
    %754 = vector.broadcast %cst_238 : f32 to vector<8x32xf32>
    %755 = arith.mulf %754, %753 : vector<8x32xf32>
    %cst_239 = arith.constant 5.000000e-01 : f32
    %756 = vector.broadcast %cst_239 : f32 to vector<8x32xf32>
    %757 = arith.addf %755, %756 : vector<8x32xf32>
    %758 = vector.extract_strided_slice %747 {offsets = [0, 96], sizes = [8, 32], strides = [1, 1]} : vector<8x128xf32> to vector<8x32xf32>
    %cst_240 = arith.constant 5.000000e-01 : f32
    %759 = vector.broadcast %cst_240 : f32 to vector<8x32xf32>
    %760 = arith.mulf %759, %758 : vector<8x32xf32>
    %cst_241 = arith.constant 5.000000e-01 : f32
    %761 = vector.broadcast %cst_241 : f32 to vector<8x32xf32>
    %762 = arith.addf %760, %761 : vector<8x32xf32>
    %763 = vector.extract_strided_slice %744 {offsets = [0, 64], sizes = [8, 32], strides = [1, 1]} : vector<8x128xf32> to vector<8x32xf32>
    %764 = math.tanh %763 : vector<8x32xf32>
    %765 = arith.mulf %757, %682 : vector<8x32xf32>
    %766 = arith.mulf %752, %764 : vector<8x32xf32>
    %767 = arith.addf %765, %766 : vector<8x32xf32>
    %768 = math.tanh %767 : vector<8x32xf32>
    %769 = arith.mulf %762, %768 : vector<8x32xf32>
    %770 = vector.broadcast %691 : i32 to vector<8x1xi32>
    %771 = arith.cmpi slt, %770, %0 : vector<8x1xi32>
    %772 = vector.shape_cast %771 : vector<8x1xi1> to vector<8x1xi1>
    %773 = vector.broadcast %772 : vector<8x1xi1> to vector<8x32xi1>
    %774 = arith.select %773, %769, %679 : vector<8x32xi1>, vector<8x32xf32>
    %775 = vector.shape_cast %771 : vector<8x1xi1> to vector<8x1xi1>
    %776 = vector.broadcast %775 : vector<8x1xi1> to vector<8x32xi1>
    %777 = arith.select %776, %767, %682 : vector<8x32xi1>, vector<8x32xf32>
    %cst_242 = arith.constant 0.000000e+00 : f32
    %778 = vector.shape_cast %771 : vector<8x1xi1> to vector<8x1xi1>
    %779 = vector.broadcast %778 : vector<8x1xi1> to vector<8x32xi1>
    %780 = vector.broadcast %cst_242 : f32 to vector<8x32xf32>
    %781 = arith.select %779, %769, %780 : vector<8x32xi1>, vector<8x32xf32>
    %782 = arith.index_cast %691 : i32 to index
    %c0_243 = arith.constant 0 : index
    %c0_244 = arith.constant 0 : index
    %783 = vector.load %arg13[%782, %c0_243, %c0_244] : memref<8x8x32xf32, #tpu.memory_space<vmem>>, vector<1x8x32xf32>
    %784 = vector.shape_cast %783 : vector<1x8x32xf32> to vector<8x32xf32>
    %785 = vector.shape_cast %781 : vector<8x32xf32> to vector<1x8x32xf32>
    tpu.vector_store %arg13[%782, %c0_243, %c0_244], %785 {strides = array<i32>} : memref<8x8x32xf32, #tpu.memory_space<vmem>>, vector<1x8x32xf32>,
    %c8_i32 = arith.constant 8 : i32
    %c0_245 = arith.constant 0 : index
    %c0_246 = arith.constant 0 : index
    %c0_247 = arith.constant 0 : index
    %786 = vector.load %arg12[%c0_245, %c0_246, %c0_247] : memref<8x8x32xf32, #tpu.memory_space<vmem>>, vector<8x8x32xf32>
    %787 = vector.shape_cast %786 : vector<8x8x32xf32> to vector<64x32xf32>
    %788 = arith.truncf %787 : vector<64x32xf32> to vector<64x32xbf16>
    %c0_248 = arith.constant 0 : index
    %c0_249 = arith.constant 0 : index
    %c0_250 = arith.constant 0 : index
    %789 = vector.load %arg13[%c0_248, %c0_249, %c0_250] : memref<8x8x32xf32, #tpu.memory_space<vmem>>, vector<8x8x32xf32>
    %790 = vector.shape_cast %789 : vector<8x8x32xf32> to vector<64x32xf32>
    %791 = arith.truncf %790 : vector<64x32xf32> to vector<64x32xbf16>
    %c0_251 = arith.constant 0 : index
    %c0_252 = arith.constant 0 : index
    %c0_253 = arith.constant 0 : index
    %792 = vector.load %arg6[%c0_251, %c0_252, %c0_253] : memref<2x64x128xbf16, #tpu.memory_space<vmem>>, vector<1x32x128xbf16>
    %793 = vector.shape_cast %792 : vector<1x32x128xbf16> to vector<32x128xbf16>
    %cst_254 = arith.constant dense<0.000000e+00> : vector<64x128xf32>
    %794 = tpu.matmul %788, %793, %cst_254 {dimension_numbers = #tpu.dot_dimension_numbers<[1], [0], [0], [1], [0, 0, 1, 1], [], []>} : vector<64x32xbf16>, vector<32x128xbf16>, vector<64x128xf32> -> vector<64x128xf32>
    %c0_255 = arith.constant 0 : index
    %c32 = arith.constant 32 : index
    %c0_256 = arith.constant 0 : index
    %795 = vector.load %arg6[%c0_255, %c32, %c0_256] : memref<2x64x128xbf16, #tpu.memory_space<vmem>>, vector<1x32x128xbf16>
    %796 = vector.shape_cast %795 : vector<1x32x128xbf16> to vector<32x128xbf16>
    %cst_257 = arith.constant dense<0.000000e+00> : vector<64x128xf32>
    %797 = tpu.matmul %791, %796, %cst_257 {dimension_numbers = #tpu.dot_dimension_numbers<[1], [0], [0], [1], [0, 0, 1, 1], [], []>} : vector<64x32xbf16>, vector<32x128xbf16>, vector<64x128xf32> -> vector<64x128xf32>
    %798 = arith.addf %794, %797 : vector<64x128xf32>
    %c0_258 = arith.constant 0 : index
    %c0_259 = arith.constant 0 : index
    %c0_260 = arith.constant 0 : index
    %799 = vector.load %arg8[%c0_258, %c0_259, %c0_260] : memref<2x1x128xf32, #tpu.memory_space<vmem>>, vector<1x1x128xf32>
    %800 = vector.shape_cast %799 : vector<1x1x128xf32> to vector<1x128xf32>
    %801 = vector.broadcast %800 : vector<1x128xf32> to vector<64x128xf32>
    %802 = arith.addf %798, %801 : vector<64x128xf32>
    %803 = vector.shape_cast %802 : vector<64x128xf32> to vector<8x8x128xf32>
    %c0_261 = arith.constant 0 : index
    %c0_262 = arith.constant 0 : index
    %c0_263 = arith.constant 0 : index
    %804 = vector.load %arg14[%c0_261, %c0_262, %c0_263] : memref<8x8x128xf32, #tpu.memory_space<vmem>>, vector<8x8x128xf32>
    tpu.vector_store %arg14[%c0_261, %c0_262, %c0_263], %803 {strides = array<i32>} : memref<8x8x128xf32, #tpu.memory_space<vmem>>, vector<8x8x128xf32>,
    %c1_264 = arith.constant 1 : index
    %c0_265 = arith.constant 0 : index
    %c0_266 = arith.constant 0 : index
    %805 = vector.load %arg6[%c1_264, %c0_265, %c0_266] : memref<2x64x128xbf16, #tpu.memory_space<vmem>>, vector<1x32x128xbf16>
    %806 = vector.shape_cast %805 : vector<1x32x128xbf16> to vector<32x128xbf16>
    %cst_267 = arith.constant dense<0.000000e+00> : vector<64x128xf32>
    %807 = tpu.matmul %788, %806, %cst_267 {dimension_numbers = #tpu.dot_dimension_numbers<[1], [0], [0], [1], [0, 0, 1, 1], [], []>} : vector<64x32xbf16>, vector<32x128xbf16>, vector<64x128xf32> -> vector<64x128xf32>
    %c1_268 = arith.constant 1 : index
    %c32_269 = arith.constant 32 : index
    %c0_270 = arith.constant 0 : index
    %808 = vector.load %arg6[%c1_268, %c32_269, %c0_270] : memref<2x64x128xbf16, #tpu.memory_space<vmem>>, vector<1x32x128xbf16>
    %809 = vector.shape_cast %808 : vector<1x32x128xbf16> to vector<32x128xbf16>
    %cst_271 = arith.constant dense<0.000000e+00> : vector<64x128xf32>
    %810 = tpu.matmul %791, %809, %cst_271 {dimension_numbers = #tpu.dot_dimension_numbers<[1], [0], [0], [1], [0, 0, 1, 1], [], []>} : vector<64x32xbf16>, vector<32x128xbf16>, vector<64x128xf32> -> vector<64x128xf32>
    %811 = arith.addf %807, %810 : vector<64x128xf32>
    %c1_272 = arith.constant 1 : index
    %c0_273 = arith.constant 0 : index
    %c0_274 = arith.constant 0 : index
    %812 = vector.load %arg8[%c1_272, %c0_273, %c0_274] : memref<2x1x128xf32, #tpu.memory_space<vmem>>, vector<1x1x128xf32>
    %813 = vector.shape_cast %812 : vector<1x1x128xf32> to vector<1x128xf32>
    %814 = vector.broadcast %813 : vector<1x128xf32> to vector<64x128xf32>
    %815 = arith.addf %811, %814 : vector<64x128xf32>
    %816 = vector.shape_cast %815 : vector<64x128xf32> to vector<8x8x128xf32>
    %c0_275 = arith.constant 0 : index
    %c0_276 = arith.constant 0 : index
    %c0_277 = arith.constant 0 : index
    %817 = vector.load %arg15[%c0_275, %c0_276, %c0_277] : memref<8x8x128xf32, #tpu.memory_space<vmem>>, vector<8x8x128xf32>
    tpu.vector_store %arg15[%c0_275, %c0_276, %c0_277], %816 {strides = array<i32>} : memref<8x8x128xf32, #tpu.memory_space<vmem>>, vector<8x8x128xf32>,
    %c0_278 = arith.constant 0 : index
    %c0_279 = arith.constant 0 : index
    %c0_280 = arith.constant 0 : index
    %818 = vector.load %arg7[%c0_278, %c0_279, %c0_280] : memref<2x32x128xbf16, #tpu.memory_space<vmem>>, vector<1x32x128xbf16>
    %819 = vector.shape_cast %818 : vector<1x32x128xbf16> to vector<32x128xbf16>
    %c1_281 = arith.constant 1 : index
    %c0_282 = arith.constant 0 : index
    %c0_283 = arith.constant 0 : index
    %820 = vector.load %arg7[%c1_281, %c0_282, %c0_283] : memref<2x32x128xbf16, #tpu.memory_space<vmem>>, vector<1x32x128xbf16>
    %821 = vector.shape_cast %820 : vector<1x32x128xbf16> to vector<32x128xbf16>
    %cst_284 = arith.constant 0.000000e+00 : f32
    %822 = vector.broadcast %cst_284 : f32 to vector<8x32xf32>
    %c0_i32_285 = arith.constant 0 : i32
    %c7_i32_286 = arith.constant 7 : i32
    %823 = arith.subi %c7_i32_286, %c0_i32_285 : i32
    %824 = arith.index_cast %c0_i32_285 : i32 to index
    %c0_287 = arith.constant 0 : index
    %c0_288 = arith.constant 0 : index
    %825 = vector.load %arg14[%824, %c0_287, %c0_288] : memref<8x8x128xf32, #tpu.memory_space<vmem>>, vector<1x8x128xf32>
    %826 = vector.shape_cast %825 : vector<1x8x128xf32> to vector<8x128xf32>
    %827 = arith.truncf %822 : vector<8x32xf32> to vector<8x32xbf16>
    %cst_289 = arith.constant dense<0.000000e+00> : vector<8x128xf32>
    %828 = tpu.matmul %827, %819, %cst_289 {dimension_numbers = #tpu.dot_dimension_numbers<[1], [0], [0], [1], [0, 0, 1, 1], [], []>} : vector<8x32xbf16>, vector<32x128xbf16>, vector<8x128xf32> -> vector<8x128xf32>
    %829 = arith.addf %826, %828 : vector<8x128xf32>
    %cst_290 = arith.constant 5.000000e-01 : f32
    %830 = vector.broadcast %cst_290 : f32 to vector<8x128xf32>
    %831 = arith.mulf %830, %829 : vector<8x128xf32>
    %832 = math.tanh %831 : vector<8x128xf32>
    %833 = vector.extract_strided_slice %832 {offsets = [0, 0], sizes = [8, 32], strides = [1, 1]} : vector<8x128xf32> to vector<8x32xf32>
    %cst_291 = arith.constant 5.000000e-01 : f32
    %834 = vector.broadcast %cst_291 : f32 to vector<8x32xf32>
    %835 = arith.mulf %834, %833 : vector<8x32xf32>
    %cst_292 = arith.constant 5.000000e-01 : f32
    %836 = vector.broadcast %cst_292 : f32 to vector<8x32xf32>
    %837 = arith.addf %835, %836 : vector<8x32xf32>
    %838 = vector.extract_strided_slice %832 {offsets = [0, 32], sizes = [8, 32], strides = [1, 1]} : vector<8x128xf32> to vector<8x32xf32>
    %cst_293 = arith.constant 5.000000e-01 : f32
    %839 = vector.broadcast %cst_293 : f32 to vector<8x32xf32>
    %840 = arith.mulf %839, %838 : vector<8x32xf32>
    %cst_294 = arith.constant 5.000000e-01 : f32
    %841 = vector.broadcast %cst_294 : f32 to vector<8x32xf32>
    %842 = arith.addf %840, %841 : vector<8x32xf32>
    %843 = vector.extract_strided_slice %832 {offsets = [0, 96], sizes = [8, 32], strides = [1, 1]} : vector<8x128xf32> to vector<8x32xf32>
    %cst_295 = arith.constant 5.000000e-01 : f32
    %844 = vector.broadcast %cst_295 : f32 to vector<8x32xf32>
    %845 = arith.mulf %844, %843 : vector<8x32xf32>
    %cst_296 = arith.constant 5.000000e-01 : f32
    %846 = vector.broadcast %cst_296 : f32 to vector<8x32xf32>
    %847 = arith.addf %845, %846 : vector<8x32xf32>
    %848 = vector.extract_strided_slice %829 {offsets = [0, 64], sizes = [8, 32], strides = [1, 1]} : vector<8x128xf32> to vector<8x32xf32>
    %849 = math.tanh %848 : vector<8x32xf32>
    %850 = arith.mulf %842, %822 : vector<8x32xf32>
    %851 = arith.mulf %837, %849 : vector<8x32xf32>
    %852 = arith.addf %850, %851 : vector<8x32xf32>
    %853 = math.tanh %852 : vector<8x32xf32>
    %854 = arith.mulf %847, %853 : vector<8x32xf32>
    %855 = vector.broadcast %c0_i32_285 : i32 to vector<8x1xi32>
    %856 = arith.cmpi slt, %855, %0 : vector<8x1xi32>
    %857 = vector.shape_cast %856 : vector<8x1xi1> to vector<8x1xi1>
    %858 = vector.broadcast %857 : vector<8x1xi1> to vector<8x32xi1>
    %859 = arith.select %858, %854, %822 : vector<8x32xi1>, vector<8x32xf32>
    %860 = vector.shape_cast %856 : vector<8x1xi1> to vector<8x1xi1>
    %861 = vector.broadcast %860 : vector<8x1xi1> to vector<8x32xi1>
    %862 = arith.select %861, %852, %822 : vector<8x32xi1>, vector<8x32xf32>
    %cst_297 = arith.constant 0.000000e+00 : f32
    %863 = vector.shape_cast %856 : vector<8x1xi1> to vector<8x1xi1>
    %864 = vector.broadcast %863 : vector<8x1xi1> to vector<8x32xi1>
    %865 = vector.broadcast %cst_297 : f32 to vector<8x32xf32>
    %866 = arith.select %864, %854, %865 : vector<8x32xi1>, vector<8x32xf32>
    %867 = arith.index_cast %c0_i32_285 : i32 to index
    %c0_298 = arith.constant 0 : index
    %c0_299 = arith.constant 0 : index
    %868 = vector.load %arg12[%867, %c0_298, %c0_299] : memref<8x8x32xf32, #tpu.memory_space<vmem>>, vector<1x8x32xf32>
    %869 = vector.shape_cast %868 : vector<1x8x32xf32> to vector<8x32xf32>
    %870 = vector.shape_cast %866 : vector<8x32xf32> to vector<1x8x32xf32>
    tpu.vector_store %arg12[%867, %c0_298, %c0_299], %870 {strides = array<i32>} : memref<8x8x32xf32, #tpu.memory_space<vmem>>, vector<1x8x32xf32>,
    %871 = arith.index_cast %823 : i32 to index
    %c0_300 = arith.constant 0 : index
    %c0_301 = arith.constant 0 : index
    %872 = vector.load %arg15[%871, %c0_300, %c0_301] : memref<8x8x128xf32, #tpu.memory_space<vmem>>, vector<1x8x128xf32>
    %873 = vector.shape_cast %872 : vector<1x8x128xf32> to vector<8x128xf32>
    %874 = arith.truncf %822 : vector<8x32xf32> to vector<8x32xbf16>
    %cst_302 = arith.constant dense<0.000000e+00> : vector<8x128xf32>
    %875 = tpu.matmul %874, %821, %cst_302 {dimension_numbers = #tpu.dot_dimension_numbers<[1], [0], [0], [1], [0, 0, 1, 1], [], []>} : vector<8x32xbf16>, vector<32x128xbf16>, vector<8x128xf32> -> vector<8x128xf32>
    %876 = arith.addf %873, %875 : vector<8x128xf32>
    %cst_303 = arith.constant 5.000000e-01 : f32
    %877 = vector.broadcast %cst_303 : f32 to vector<8x128xf32>
    %878 = arith.mulf %877, %876 : vector<8x128xf32>
    %879 = math.tanh %878 : vector<8x128xf32>
    %880 = vector.extract_strided_slice %879 {offsets = [0, 0], sizes = [8, 32], strides = [1, 1]} : vector<8x128xf32> to vector<8x32xf32>
    %cst_304 = arith.constant 5.000000e-01 : f32
    %881 = vector.broadcast %cst_304 : f32 to vector<8x32xf32>
    %882 = arith.mulf %881, %880 : vector<8x32xf32>
    %cst_305 = arith.constant 5.000000e-01 : f32
    %883 = vector.broadcast %cst_305 : f32 to vector<8x32xf32>
    %884 = arith.addf %882, %883 : vector<8x32xf32>
    %885 = vector.extract_strided_slice %879 {offsets = [0, 32], sizes = [8, 32], strides = [1, 1]} : vector<8x128xf32> to vector<8x32xf32>
    %cst_306 = arith.constant 5.000000e-01 : f32
    %886 = vector.broadcast %cst_306 : f32 to vector<8x32xf32>
    %887 = arith.mulf %886, %885 : vector<8x32xf32>
    %cst_307 = arith.constant 5.000000e-01 : f32
    %888 = vector.broadcast %cst_307 : f32 to vector<8x32xf32>
    %889 = arith.addf %887, %888 : vector<8x32xf32>
    %890 = vector.extract_strided_slice %879 {offsets = [0, 96], sizes = [8, 32], strides = [1, 1]} : vector<8x128xf32> to vector<8x32xf32>
    %cst_308 = arith.constant 5.000000e-01 : f32
    %891 = vector.broadcast %cst_308 : f32 to vector<8x32xf32>
    %892 = arith.mulf %891, %890 : vector<8x32xf32>
    %cst_309 = arith.constant 5.000000e-01 : f32
    %893 = vector.broadcast %cst_309 : f32 to vector<8x32xf32>
    %894 = arith.addf %892, %893 : vector<8x32xf32>
    %895 = vector.extract_strided_slice %876 {offsets = [0, 64], sizes = [8, 32], strides = [1, 1]} : vector<8x128xf32> to vector<8x32xf32>
    %896 = math.tanh %895 : vector<8x32xf32>
    %897 = arith.mulf %889, %822 : vector<8x32xf32>
    %898 = arith.mulf %884, %896 : vector<8x32xf32>
    %899 = arith.addf %897, %898 : vector<8x32xf32>
    %900 = math.tanh %899 : vector<8x32xf32>
    %901 = arith.mulf %894, %900 : vector<8x32xf32>
    %902 = vector.broadcast %823 : i32 to vector<8x1xi32>
    %903 = arith.cmpi slt, %902, %0 : vector<8x1xi32>
    %904 = vector.shape_cast %903 : vector<8x1xi1> to vector<8x1xi1>
    %905 = vector.broadcast %904 : vector<8x1xi1> to vector<8x32xi1>
    %906 = arith.select %905, %901, %822 : vector<8x32xi1>, vector<8x32xf32>
    %907 = vector.shape_cast %903 : vector<8x1xi1> to vector<8x1xi1>
    %908 = vector.broadcast %907 : vector<8x1xi1> to vector<8x32xi1>
    %909 = arith.select %908, %899, %822 : vector<8x32xi1>, vector<8x32xf32>
    %cst_310 = arith.constant 0.000000e+00 : f32
    %910 = vector.shape_cast %903 : vector<8x1xi1> to vector<8x1xi1>
    %911 = vector.broadcast %910 : vector<8x1xi1> to vector<8x32xi1>
    %912 = vector.broadcast %cst_310 : f32 to vector<8x32xf32>
    %913 = arith.select %911, %901, %912 : vector<8x32xi1>, vector<8x32xf32>
    %914 = arith.index_cast %823 : i32 to index
    %c0_311 = arith.constant 0 : index
    %c0_312 = arith.constant 0 : index
    %915 = vector.load %arg13[%914, %c0_311, %c0_312] : memref<8x8x32xf32, #tpu.memory_space<vmem>>, vector<1x8x32xf32>
    %916 = vector.shape_cast %915 : vector<1x8x32xf32> to vector<8x32xf32>
    %917 = vector.shape_cast %913 : vector<8x32xf32> to vector<1x8x32xf32>
    tpu.vector_store %arg13[%914, %c0_311, %c0_312], %917 {strides = array<i32>} : memref<8x8x32xf32, #tpu.memory_space<vmem>>, vector<1x8x32xf32>,
    %c1_i32_313 = arith.constant 1 : i32
    %c7_i32_314 = arith.constant 7 : i32
    %918 = arith.subi %c7_i32_314, %c1_i32_313 : i32
    %919 = arith.index_cast %c1_i32_313 : i32 to index
    %c0_315 = arith.constant 0 : index
    %c0_316 = arith.constant 0 : index
    %920 = vector.load %arg14[%919, %c0_315, %c0_316] : memref<8x8x128xf32, #tpu.memory_space<vmem>>, vector<1x8x128xf32>
    %921 = vector.shape_cast %920 : vector<1x8x128xf32> to vector<8x128xf32>
    %922 = arith.truncf %859 : vector<8x32xf32> to vector<8x32xbf16>
    %cst_317 = arith.constant dense<0.000000e+00> : vector<8x128xf32>
    %923 = tpu.matmul %922, %819, %cst_317 {dimension_numbers = #tpu.dot_dimension_numbers<[1], [0], [0], [1], [0, 0, 1, 1], [], []>} : vector<8x32xbf16>, vector<32x128xbf16>, vector<8x128xf32> -> vector<8x128xf32>
    %924 = arith.addf %921, %923 : vector<8x128xf32>
    %cst_318 = arith.constant 5.000000e-01 : f32
    %925 = vector.broadcast %cst_318 : f32 to vector<8x128xf32>
    %926 = arith.mulf %925, %924 : vector<8x128xf32>
    %927 = math.tanh %926 : vector<8x128xf32>
    %928 = vector.extract_strided_slice %927 {offsets = [0, 0], sizes = [8, 32], strides = [1, 1]} : vector<8x128xf32> to vector<8x32xf32>
    %cst_319 = arith.constant 5.000000e-01 : f32
    %929 = vector.broadcast %cst_319 : f32 to vector<8x32xf32>
    %930 = arith.mulf %929, %928 : vector<8x32xf32>
    %cst_320 = arith.constant 5.000000e-01 : f32
    %931 = vector.broadcast %cst_320 : f32 to vector<8x32xf32>
    %932 = arith.addf %930, %931 : vector<8x32xf32>
    %933 = vector.extract_strided_slice %927 {offsets = [0, 32], sizes = [8, 32], strides = [1, 1]} : vector<8x128xf32> to vector<8x32xf32>
    %cst_321 = arith.constant 5.000000e-01 : f32
    %934 = vector.broadcast %cst_321 : f32 to vector<8x32xf32>
    %935 = arith.mulf %934, %933 : vector<8x32xf32>
    %cst_322 = arith.constant 5.000000e-01 : f32
    %936 = vector.broadcast %cst_322 : f32 to vector<8x32xf32>
    %937 = arith.addf %935, %936 : vector<8x32xf32>
    %938 = vector.extract_strided_slice %927 {offsets = [0, 96], sizes = [8, 32], strides = [1, 1]} : vector<8x128xf32> to vector<8x32xf32>
    %cst_323 = arith.constant 5.000000e-01 : f32
    %939 = vector.broadcast %cst_323 : f32 to vector<8x32xf32>
    %940 = arith.mulf %939, %938 : vector<8x32xf32>
    %cst_324 = arith.constant 5.000000e-01 : f32
    %941 = vector.broadcast %cst_324 : f32 to vector<8x32xf32>
    %942 = arith.addf %940, %941 : vector<8x32xf32>
    %943 = vector.extract_strided_slice %924 {offsets = [0, 64], sizes = [8, 32], strides = [1, 1]} : vector<8x128xf32> to vector<8x32xf32>
    %944 = math.tanh %943 : vector<8x32xf32>
    %945 = arith.mulf %937, %862 : vector<8x32xf32>
    %946 = arith.mulf %932, %944 : vector<8x32xf32>
    %947 = arith.addf %945, %946 : vector<8x32xf32>
    %948 = math.tanh %947 : vector<8x32xf32>
    %949 = arith.mulf %942, %948 : vector<8x32xf32>
    %950 = vector.broadcast %c1_i32_313 : i32 to vector<8x1xi32>
    %951 = arith.cmpi slt, %950, %0 : vector<8x1xi32>
    %952 = vector.shape_cast %951 : vector<8x1xi1> to vector<8x1xi1>
    %953 = vector.broadcast %952 : vector<8x1xi1> to vector<8x32xi1>
    %954 = arith.select %953, %949, %859 : vector<8x32xi1>, vector<8x32xf32>
    %955 = vector.shape_cast %951 : vector<8x1xi1> to vector<8x1xi1>
    %956 = vector.broadcast %955 : vector<8x1xi1> to vector<8x32xi1>
    %957 = arith.select %956, %947, %862 : vector<8x32xi1>, vector<8x32xf32>
    %cst_325 = arith.constant 0.000000e+00 : f32
    %958 = vector.shape_cast %951 : vector<8x1xi1> to vector<8x1xi1>
    %959 = vector.broadcast %958 : vector<8x1xi1> to vector<8x32xi1>
    %960 = vector.broadcast %cst_325 : f32 to vector<8x32xf32>
    %961 = arith.select %959, %949, %960 : vector<8x32xi1>, vector<8x32xf32>
    %962 = arith.index_cast %c1_i32_313 : i32 to index
    %c0_326 = arith.constant 0 : index
    %c0_327 = arith.constant 0 : index
    %963 = vector.load %arg12[%962, %c0_326, %c0_327] : memref<8x8x32xf32, #tpu.memory_space<vmem>>, vector<1x8x32xf32>
    %964 = vector.shape_cast %963 : vector<1x8x32xf32> to vector<8x32xf32>
    %965 = vector.shape_cast %961 : vector<8x32xf32> to vector<1x8x32xf32>
    tpu.vector_store %arg12[%962, %c0_326, %c0_327], %965 {strides = array<i32>} : memref<8x8x32xf32, #tpu.memory_space<vmem>>, vector<1x8x32xf32>,
    %966 = arith.index_cast %918 : i32 to index
    %c0_328 = arith.constant 0 : index
    %c0_329 = arith.constant 0 : index
    %967 = vector.load %arg15[%966, %c0_328, %c0_329] : memref<8x8x128xf32, #tpu.memory_space<vmem>>, vector<1x8x128xf32>
    %968 = vector.shape_cast %967 : vector<1x8x128xf32> to vector<8x128xf32>
    %969 = arith.truncf %906 : vector<8x32xf32> to vector<8x32xbf16>
    %cst_330 = arith.constant dense<0.000000e+00> : vector<8x128xf32>
    %970 = tpu.matmul %969, %821, %cst_330 {dimension_numbers = #tpu.dot_dimension_numbers<[1], [0], [0], [1], [0, 0, 1, 1], [], []>} : vector<8x32xbf16>, vector<32x128xbf16>, vector<8x128xf32> -> vector<8x128xf32>
    %971 = arith.addf %968, %970 : vector<8x128xf32>
    %cst_331 = arith.constant 5.000000e-01 : f32
    %972 = vector.broadcast %cst_331 : f32 to vector<8x128xf32>
    %973 = arith.mulf %972, %971 : vector<8x128xf32>
    %974 = math.tanh %973 : vector<8x128xf32>
    %975 = vector.extract_strided_slice %974 {offsets = [0, 0], sizes = [8, 32], strides = [1, 1]} : vector<8x128xf32> to vector<8x32xf32>
    %cst_332 = arith.constant 5.000000e-01 : f32
    %976 = vector.broadcast %cst_332 : f32 to vector<8x32xf32>
    %977 = arith.mulf %976, %975 : vector<8x32xf32>
    %cst_333 = arith.constant 5.000000e-01 : f32
    %978 = vector.broadcast %cst_333 : f32 to vector<8x32xf32>
    %979 = arith.addf %977, %978 : vector<8x32xf32>
    %980 = vector.extract_strided_slice %974 {offsets = [0, 32], sizes = [8, 32], strides = [1, 1]} : vector<8x128xf32> to vector<8x32xf32>
    %cst_334 = arith.constant 5.000000e-01 : f32
    %981 = vector.broadcast %cst_334 : f32 to vector<8x32xf32>
    %982 = arith.mulf %981, %980 : vector<8x32xf32>
    %cst_335 = arith.constant 5.000000e-01 : f32
    %983 = vector.broadcast %cst_335 : f32 to vector<8x32xf32>
    %984 = arith.addf %982, %983 : vector<8x32xf32>
    %985 = vector.extract_strided_slice %974 {offsets = [0, 96], sizes = [8, 32], strides = [1, 1]} : vector<8x128xf32> to vector<8x32xf32>
    %cst_336 = arith.constant 5.000000e-01 : f32
    %986 = vector.broadcast %cst_336 : f32 to vector<8x32xf32>
    %987 = arith.mulf %986, %985 : vector<8x32xf32>
    %cst_337 = arith.constant 5.000000e-01 : f32
    %988 = vector.broadcast %cst_337 : f32 to vector<8x32xf32>
    %989 = arith.addf %987, %988 : vector<8x32xf32>
    %990 = vector.extract_strided_slice %971 {offsets = [0, 64], sizes = [8, 32], strides = [1, 1]} : vector<8x128xf32> to vector<8x32xf32>
    %991 = math.tanh %990 : vector<8x32xf32>
    %992 = arith.mulf %984, %909 : vector<8x32xf32>
    %993 = arith.mulf %979, %991 : vector<8x32xf32>
    %994 = arith.addf %992, %993 : vector<8x32xf32>
    %995 = math.tanh %994 : vector<8x32xf32>
    %996 = arith.mulf %989, %995 : vector<8x32xf32>
    %997 = vector.broadcast %918 : i32 to vector<8x1xi32>
    %998 = arith.cmpi slt, %997, %0 : vector<8x1xi32>
    %999 = vector.shape_cast %998 : vector<8x1xi1> to vector<8x1xi1>
    %1000 = vector.broadcast %999 : vector<8x1xi1> to vector<8x32xi1>
    %1001 = arith.select %1000, %996, %906 : vector<8x32xi1>, vector<8x32xf32>
    %1002 = vector.shape_cast %998 : vector<8x1xi1> to vector<8x1xi1>
    %1003 = vector.broadcast %1002 : vector<8x1xi1> to vector<8x32xi1>
    %1004 = arith.select %1003, %994, %909 : vector<8x32xi1>, vector<8x32xf32>
    %cst_338 = arith.constant 0.000000e+00 : f32
    %1005 = vector.shape_cast %998 : vector<8x1xi1> to vector<8x1xi1>
    %1006 = vector.broadcast %1005 : vector<8x1xi1> to vector<8x32xi1>
    %1007 = vector.broadcast %cst_338 : f32 to vector<8x32xf32>
    %1008 = arith.select %1006, %996, %1007 : vector<8x32xi1>, vector<8x32xf32>
    %1009 = arith.index_cast %918 : i32 to index
    %c0_339 = arith.constant 0 : index
    %c0_340 = arith.constant 0 : index
    %1010 = vector.load %arg13[%1009, %c0_339, %c0_340] : memref<8x8x32xf32, #tpu.memory_space<vmem>>, vector<1x8x32xf32>
    %1011 = vector.shape_cast %1010 : vector<1x8x32xf32> to vector<8x32xf32>
    %1012 = vector.shape_cast %1008 : vector<8x32xf32> to vector<1x8x32xf32>
    tpu.vector_store %arg13[%1009, %c0_339, %c0_340], %1012 {strides = array<i32>} : memref<8x8x32xf32, #tpu.memory_space<vmem>>, vector<1x8x32xf32>,
    %c2_i32_341 = arith.constant 2 : i32
    %c7_i32_342 = arith.constant 7 : i32
    %1013 = arith.subi %c7_i32_342, %c2_i32_341 : i32
    %1014 = arith.index_cast %c2_i32_341 : i32 to index
    %c0_343 = arith.constant 0 : index
    %c0_344 = arith.constant 0 : index
    %1015 = vector.load %arg14[%1014, %c0_343, %c0_344] : memref<8x8x128xf32, #tpu.memory_space<vmem>>, vector<1x8x128xf32>
    %1016 = vector.shape_cast %1015 : vector<1x8x128xf32> to vector<8x128xf32>
    %1017 = arith.truncf %954 : vector<8x32xf32> to vector<8x32xbf16>
    %cst_345 = arith.constant dense<0.000000e+00> : vector<8x128xf32>
    %1018 = tpu.matmul %1017, %819, %cst_345 {dimension_numbers = #tpu.dot_dimension_numbers<[1], [0], [0], [1], [0, 0, 1, 1], [], []>} : vector<8x32xbf16>, vector<32x128xbf16>, vector<8x128xf32> -> vector<8x128xf32>
    %1019 = arith.addf %1016, %1018 : vector<8x128xf32>
    %cst_346 = arith.constant 5.000000e-01 : f32
    %1020 = vector.broadcast %cst_346 : f32 to vector<8x128xf32>
    %1021 = arith.mulf %1020, %1019 : vector<8x128xf32>
    %1022 = math.tanh %1021 : vector<8x128xf32>
    %1023 = vector.extract_strided_slice %1022 {offsets = [0, 0], sizes = [8, 32], strides = [1, 1]} : vector<8x128xf32> to vector<8x32xf32>
    %cst_347 = arith.constant 5.000000e-01 : f32
    %1024 = vector.broadcast %cst_347 : f32 to vector<8x32xf32>
    %1025 = arith.mulf %1024, %1023 : vector<8x32xf32>
    %cst_348 = arith.constant 5.000000e-01 : f32
    %1026 = vector.broadcast %cst_348 : f32 to vector<8x32xf32>
    %1027 = arith.addf %1025, %1026 : vector<8x32xf32>
    %1028 = vector.extract_strided_slice %1022 {offsets = [0, 32], sizes = [8, 32], strides = [1, 1]} : vector<8x128xf32> to vector<8x32xf32>
    %cst_349 = arith.constant 5.000000e-01 : f32
    %1029 = vector.broadcast %cst_349 : f32 to vector<8x32xf32>
    %1030 = arith.mulf %1029, %1028 : vector<8x32xf32>
    %cst_350 = arith.constant 5.000000e-01 : f32
    %1031 = vector.broadcast %cst_350 : f32 to vector<8x32xf32>
    %1032 = arith.addf %1030, %1031 : vector<8x32xf32>
    %1033 = vector.extract_strided_slice %1022 {offsets = [0, 96], sizes = [8, 32], strides = [1, 1]} : vector<8x128xf32> to vector<8x32xf32>
    %cst_351 = arith.constant 5.000000e-01 : f32
    %1034 = vector.broadcast %cst_351 : f32 to vector<8x32xf32>
    %1035 = arith.mulf %1034, %1033 : vector<8x32xf32>
    %cst_352 = arith.constant 5.000000e-01 : f32
    %1036 = vector.broadcast %cst_352 : f32 to vector<8x32xf32>
    %1037 = arith.addf %1035, %1036 : vector<8x32xf32>
    %1038 = vector.extract_strided_slice %1019 {offsets = [0, 64], sizes = [8, 32], strides = [1, 1]} : vector<8x128xf32> to vector<8x32xf32>
    %1039 = math.tanh %1038 : vector<8x32xf32>
    %1040 = arith.mulf %1032, %957 : vector<8x32xf32>
    %1041 = arith.mulf %1027, %1039 : vector<8x32xf32>
    %1042 = arith.addf %1040, %1041 : vector<8x32xf32>
    %1043 = math.tanh %1042 : vector<8x32xf32>
    %1044 = arith.mulf %1037, %1043 : vector<8x32xf32>
    %1045 = vector.broadcast %c2_i32_341 : i32 to vector<8x1xi32>
    %1046 = arith.cmpi slt, %1045, %0 : vector<8x1xi32>
    %1047 = vector.shape_cast %1046 : vector<8x1xi1> to vector<8x1xi1>
    %1048 = vector.broadcast %1047 : vector<8x1xi1> to vector<8x32xi1>
    %1049 = arith.select %1048, %1044, %954 : vector<8x32xi1>, vector<8x32xf32>
    %1050 = vector.shape_cast %1046 : vector<8x1xi1> to vector<8x1xi1>
    %1051 = vector.broadcast %1050 : vector<8x1xi1> to vector<8x32xi1>
    %1052 = arith.select %1051, %1042, %957 : vector<8x32xi1>, vector<8x32xf32>
    %cst_353 = arith.constant 0.000000e+00 : f32
    %1053 = vector.shape_cast %1046 : vector<8x1xi1> to vector<8x1xi1>
    %1054 = vector.broadcast %1053 : vector<8x1xi1> to vector<8x32xi1>
    %1055 = vector.broadcast %cst_353 : f32 to vector<8x32xf32>
    %1056 = arith.select %1054, %1044, %1055 : vector<8x32xi1>, vector<8x32xf32>
    %1057 = arith.index_cast %c2_i32_341 : i32 to index
    %c0_354 = arith.constant 0 : index
    %c0_355 = arith.constant 0 : index
    %1058 = vector.load %arg12[%1057, %c0_354, %c0_355] : memref<8x8x32xf32, #tpu.memory_space<vmem>>, vector<1x8x32xf32>
    %1059 = vector.shape_cast %1058 : vector<1x8x32xf32> to vector<8x32xf32>
    %1060 = vector.shape_cast %1056 : vector<8x32xf32> to vector<1x8x32xf32>
    tpu.vector_store %arg12[%1057, %c0_354, %c0_355], %1060 {strides = array<i32>} : memref<8x8x32xf32, #tpu.memory_space<vmem>>, vector<1x8x32xf32>,
    %1061 = arith.index_cast %1013 : i32 to index
    %c0_356 = arith.constant 0 : index
    %c0_357 = arith.constant 0 : index
    %1062 = vector.load %arg15[%1061, %c0_356, %c0_357] : memref<8x8x128xf32, #tpu.memory_space<vmem>>, vector<1x8x128xf32>
    %1063 = vector.shape_cast %1062 : vector<1x8x128xf32> to vector<8x128xf32>
    %1064 = arith.truncf %1001 : vector<8x32xf32> to vector<8x32xbf16>
    %cst_358 = arith.constant dense<0.000000e+00> : vector<8x128xf32>
    %1065 = tpu.matmul %1064, %821, %cst_358 {dimension_numbers = #tpu.dot_dimension_numbers<[1], [0], [0], [1], [0, 0, 1, 1], [], []>} : vector<8x32xbf16>, vector<32x128xbf16>, vector<8x128xf32> -> vector<8x128xf32>
    %1066 = arith.addf %1063, %1065 : vector<8x128xf32>
    %cst_359 = arith.constant 5.000000e-01 : f32
    %1067 = vector.broadcast %cst_359 : f32 to vector<8x128xf32>
    %1068 = arith.mulf %1067, %1066 : vector<8x128xf32>
    %1069 = math.tanh %1068 : vector<8x128xf32>
    %1070 = vector.extract_strided_slice %1069 {offsets = [0, 0], sizes = [8, 32], strides = [1, 1]} : vector<8x128xf32> to vector<8x32xf32>
    %cst_360 = arith.constant 5.000000e-01 : f32
    %1071 = vector.broadcast %cst_360 : f32 to vector<8x32xf32>
    %1072 = arith.mulf %1071, %1070 : vector<8x32xf32>
    %cst_361 = arith.constant 5.000000e-01 : f32
    %1073 = vector.broadcast %cst_361 : f32 to vector<8x32xf32>
    %1074 = arith.addf %1072, %1073 : vector<8x32xf32>
    %1075 = vector.extract_strided_slice %1069 {offsets = [0, 32], sizes = [8, 32], strides = [1, 1]} : vector<8x128xf32> to vector<8x32xf32>
    %cst_362 = arith.constant 5.000000e-01 : f32
    %1076 = vector.broadcast %cst_362 : f32 to vector<8x32xf32>
    %1077 = arith.mulf %1076, %1075 : vector<8x32xf32>
    %cst_363 = arith.constant 5.000000e-01 : f32
    %1078 = vector.broadcast %cst_363 : f32 to vector<8x32xf32>
    %1079 = arith.addf %1077, %1078 : vector<8x32xf32>
    %1080 = vector.extract_strided_slice %1069 {offsets = [0, 96], sizes = [8, 32], strides = [1, 1]} : vector<8x128xf32> to vector<8x32xf32>
    %cst_364 = arith.constant 5.000000e-01 : f32
    %1081 = vector.broadcast %cst_364 : f32 to vector<8x32xf32>
    %1082 = arith.mulf %1081, %1080 : vector<8x32xf32>
    %cst_365 = arith.constant 5.000000e-01 : f32
    %1083 = vector.broadcast %cst_365 : f32 to vector<8x32xf32>
    %1084 = arith.addf %1082, %1083 : vector<8x32xf32>
    %1085 = vector.extract_strided_slice %1066 {offsets = [0, 64], sizes = [8, 32], strides = [1, 1]} : vector<8x128xf32> to vector<8x32xf32>
    %1086 = math.tanh %1085 : vector<8x32xf32>
    %1087 = arith.mulf %1079, %1004 : vector<8x32xf32>
    %1088 = arith.mulf %1074, %1086 : vector<8x32xf32>
    %1089 = arith.addf %1087, %1088 : vector<8x32xf32>
    %1090 = math.tanh %1089 : vector<8x32xf32>
    %1091 = arith.mulf %1084, %1090 : vector<8x32xf32>
    %1092 = vector.broadcast %1013 : i32 to vector<8x1xi32>
    %1093 = arith.cmpi slt, %1092, %0 : vector<8x1xi32>
    %1094 = vector.shape_cast %1093 : vector<8x1xi1> to vector<8x1xi1>
    %1095 = vector.broadcast %1094 : vector<8x1xi1> to vector<8x32xi1>
    %1096 = arith.select %1095, %1091, %1001 : vector<8x32xi1>, vector<8x32xf32>
    %1097 = vector.shape_cast %1093 : vector<8x1xi1> to vector<8x1xi1>
    %1098 = vector.broadcast %1097 : vector<8x1xi1> to vector<8x32xi1>
    %1099 = arith.select %1098, %1089, %1004 : vector<8x32xi1>, vector<8x32xf32>
    %cst_366 = arith.constant 0.000000e+00 : f32
    %1100 = vector.shape_cast %1093 : vector<8x1xi1> to vector<8x1xi1>
    %1101 = vector.broadcast %1100 : vector<8x1xi1> to vector<8x32xi1>
    %1102 = vector.broadcast %cst_366 : f32 to vector<8x32xf32>
    %1103 = arith.select %1101, %1091, %1102 : vector<8x32xi1>, vector<8x32xf32>
    %1104 = arith.index_cast %1013 : i32 to index
    %c0_367 = arith.constant 0 : index
    %c0_368 = arith.constant 0 : index
    %1105 = vector.load %arg13[%1104, %c0_367, %c0_368] : memref<8x8x32xf32, #tpu.memory_space<vmem>>, vector<1x8x32xf32>
    %1106 = vector.shape_cast %1105 : vector<1x8x32xf32> to vector<8x32xf32>
    %1107 = vector.shape_cast %1103 : vector<8x32xf32> to vector<1x8x32xf32>
    tpu.vector_store %arg13[%1104, %c0_367, %c0_368], %1107 {strides = array<i32>} : memref<8x8x32xf32, #tpu.memory_space<vmem>>, vector<1x8x32xf32>,
    %c3_i32_369 = arith.constant 3 : i32
    %c7_i32_370 = arith.constant 7 : i32
    %1108 = arith.subi %c7_i32_370, %c3_i32_369 : i32
    %1109 = arith.index_cast %c3_i32_369 : i32 to index
    %c0_371 = arith.constant 0 : index
    %c0_372 = arith.constant 0 : index
    %1110 = vector.load %arg14[%1109, %c0_371, %c0_372] : memref<8x8x128xf32, #tpu.memory_space<vmem>>, vector<1x8x128xf32>
    %1111 = vector.shape_cast %1110 : vector<1x8x128xf32> to vector<8x128xf32>
    %1112 = arith.truncf %1049 : vector<8x32xf32> to vector<8x32xbf16>
    %cst_373 = arith.constant dense<0.000000e+00> : vector<8x128xf32>
    %1113 = tpu.matmul %1112, %819, %cst_373 {dimension_numbers = #tpu.dot_dimension_numbers<[1], [0], [0], [1], [0, 0, 1, 1], [], []>} : vector<8x32xbf16>, vector<32x128xbf16>, vector<8x128xf32> -> vector<8x128xf32>
    %1114 = arith.addf %1111, %1113 : vector<8x128xf32>
    %cst_374 = arith.constant 5.000000e-01 : f32
    %1115 = vector.broadcast %cst_374 : f32 to vector<8x128xf32>
    %1116 = arith.mulf %1115, %1114 : vector<8x128xf32>
    %1117 = math.tanh %1116 : vector<8x128xf32>
    %1118 = vector.extract_strided_slice %1117 {offsets = [0, 0], sizes = [8, 32], strides = [1, 1]} : vector<8x128xf32> to vector<8x32xf32>
    %cst_375 = arith.constant 5.000000e-01 : f32
    %1119 = vector.broadcast %cst_375 : f32 to vector<8x32xf32>
    %1120 = arith.mulf %1119, %1118 : vector<8x32xf32>
    %cst_376 = arith.constant 5.000000e-01 : f32
    %1121 = vector.broadcast %cst_376 : f32 to vector<8x32xf32>
    %1122 = arith.addf %1120, %1121 : vector<8x32xf32>
    %1123 = vector.extract_strided_slice %1117 {offsets = [0, 32], sizes = [8, 32], strides = [1, 1]} : vector<8x128xf32> to vector<8x32xf32>
    %cst_377 = arith.constant 5.000000e-01 : f32
    %1124 = vector.broadcast %cst_377 : f32 to vector<8x32xf32>
    %1125 = arith.mulf %1124, %1123 : vector<8x32xf32>
    %cst_378 = arith.constant 5.000000e-01 : f32
    %1126 = vector.broadcast %cst_378 : f32 to vector<8x32xf32>
    %1127 = arith.addf %1125, %1126 : vector<8x32xf32>
    %1128 = vector.extract_strided_slice %1117 {offsets = [0, 96], sizes = [8, 32], strides = [1, 1]} : vector<8x128xf32> to vector<8x32xf32>
    %cst_379 = arith.constant 5.000000e-01 : f32
    %1129 = vector.broadcast %cst_379 : f32 to vector<8x32xf32>
    %1130 = arith.mulf %1129, %1128 : vector<8x32xf32>
    %cst_380 = arith.constant 5.000000e-01 : f32
    %1131 = vector.broadcast %cst_380 : f32 to vector<8x32xf32>
    %1132 = arith.addf %1130, %1131 : vector<8x32xf32>
    %1133 = vector.extract_strided_slice %1114 {offsets = [0, 64], sizes = [8, 32], strides = [1, 1]} : vector<8x128xf32> to vector<8x32xf32>
    %1134 = math.tanh %1133 : vector<8x32xf32>
    %1135 = arith.mulf %1127, %1052 : vector<8x32xf32>
    %1136 = arith.mulf %1122, %1134 : vector<8x32xf32>
    %1137 = arith.addf %1135, %1136 : vector<8x32xf32>
    %1138 = math.tanh %1137 : vector<8x32xf32>
    %1139 = arith.mulf %1132, %1138 : vector<8x32xf32>
    %1140 = vector.broadcast %c3_i32_369 : i32 to vector<8x1xi32>
    %1141 = arith.cmpi slt, %1140, %0 : vector<8x1xi32>
    %1142 = vector.shape_cast %1141 : vector<8x1xi1> to vector<8x1xi1>
    %1143 = vector.broadcast %1142 : vector<8x1xi1> to vector<8x32xi1>
    %1144 = arith.select %1143, %1139, %1049 : vector<8x32xi1>, vector<8x32xf32>
    %1145 = vector.shape_cast %1141 : vector<8x1xi1> to vector<8x1xi1>
    %1146 = vector.broadcast %1145 : vector<8x1xi1> to vector<8x32xi1>
    %1147 = arith.select %1146, %1137, %1052 : vector<8x32xi1>, vector<8x32xf32>
    %cst_381 = arith.constant 0.000000e+00 : f32
    %1148 = vector.shape_cast %1141 : vector<8x1xi1> to vector<8x1xi1>
    %1149 = vector.broadcast %1148 : vector<8x1xi1> to vector<8x32xi1>
    %1150 = vector.broadcast %cst_381 : f32 to vector<8x32xf32>
    %1151 = arith.select %1149, %1139, %1150 : vector<8x32xi1>, vector<8x32xf32>
    %1152 = arith.index_cast %c3_i32_369 : i32 to index
    %c0_382 = arith.constant 0 : index
    %c0_383 = arith.constant 0 : index
    %1153 = vector.load %arg12[%1152, %c0_382, %c0_383] : memref<8x8x32xf32, #tpu.memory_space<vmem>>, vector<1x8x32xf32>
    %1154 = vector.shape_cast %1153 : vector<1x8x32xf32> to vector<8x32xf32>
    %1155 = vector.shape_cast %1151 : vector<8x32xf32> to vector<1x8x32xf32>
    tpu.vector_store %arg12[%1152, %c0_382, %c0_383], %1155 {strides = array<i32>} : memref<8x8x32xf32, #tpu.memory_space<vmem>>, vector<1x8x32xf32>,
    %1156 = arith.index_cast %1108 : i32 to index
    %c0_384 = arith.constant 0 : index
    %c0_385 = arith.constant 0 : index
    %1157 = vector.load %arg15[%1156, %c0_384, %c0_385] : memref<8x8x128xf32, #tpu.memory_space<vmem>>, vector<1x8x128xf32>
    %1158 = vector.shape_cast %1157 : vector<1x8x128xf32> to vector<8x128xf32>
    %1159 = arith.truncf %1096 : vector<8x32xf32> to vector<8x32xbf16>
    %cst_386 = arith.constant dense<0.000000e+00> : vector<8x128xf32>
    %1160 = tpu.matmul %1159, %821, %cst_386 {dimension_numbers = #tpu.dot_dimension_numbers<[1], [0], [0], [1], [0, 0, 1, 1], [], []>} : vector<8x32xbf16>, vector<32x128xbf16>, vector<8x128xf32> -> vector<8x128xf32>
    %1161 = arith.addf %1158, %1160 : vector<8x128xf32>
    %cst_387 = arith.constant 5.000000e-01 : f32
    %1162 = vector.broadcast %cst_387 : f32 to vector<8x128xf32>
    %1163 = arith.mulf %1162, %1161 : vector<8x128xf32>
    %1164 = math.tanh %1163 : vector<8x128xf32>
    %1165 = vector.extract_strided_slice %1164 {offsets = [0, 0], sizes = [8, 32], strides = [1, 1]} : vector<8x128xf32> to vector<8x32xf32>
    %cst_388 = arith.constant 5.000000e-01 : f32
    %1166 = vector.broadcast %cst_388 : f32 to vector<8x32xf32>
    %1167 = arith.mulf %1166, %1165 : vector<8x32xf32>
    %cst_389 = arith.constant 5.000000e-01 : f32
    %1168 = vector.broadcast %cst_389 : f32 to vector<8x32xf32>
    %1169 = arith.addf %1167, %1168 : vector<8x32xf32>
    %1170 = vector.extract_strided_slice %1164 {offsets = [0, 32], sizes = [8, 32], strides = [1, 1]} : vector<8x128xf32> to vector<8x32xf32>
    %cst_390 = arith.constant 5.000000e-01 : f32
    %1171 = vector.broadcast %cst_390 : f32 to vector<8x32xf32>
    %1172 = arith.mulf %1171, %1170 : vector<8x32xf32>
    %cst_391 = arith.constant 5.000000e-01 : f32
    %1173 = vector.broadcast %cst_391 : f32 to vector<8x32xf32>
    %1174 = arith.addf %1172, %1173 : vector<8x32xf32>
    %1175 = vector.extract_strided_slice %1164 {offsets = [0, 96], sizes = [8, 32], strides = [1, 1]} : vector<8x128xf32> to vector<8x32xf32>
    %cst_392 = arith.constant 5.000000e-01 : f32
    %1176 = vector.broadcast %cst_392 : f32 to vector<8x32xf32>
    %1177 = arith.mulf %1176, %1175 : vector<8x32xf32>
    %cst_393 = arith.constant 5.000000e-01 : f32
    %1178 = vector.broadcast %cst_393 : f32 to vector<8x32xf32>
    %1179 = arith.addf %1177, %1178 : vector<8x32xf32>
    %1180 = vector.extract_strided_slice %1161 {offsets = [0, 64], sizes = [8, 32], strides = [1, 1]} : vector<8x128xf32> to vector<8x32xf32>
    %1181 = math.tanh %1180 : vector<8x32xf32>
    %1182 = arith.mulf %1174, %1099 : vector<8x32xf32>
    %1183 = arith.mulf %1169, %1181 : vector<8x32xf32>
    %1184 = arith.addf %1182, %1183 : vector<8x32xf32>
    %1185 = math.tanh %1184 : vector<8x32xf32>
    %1186 = arith.mulf %1179, %1185 : vector<8x32xf32>
    %1187 = vector.broadcast %1108 : i32 to vector<8x1xi32>
    %1188 = arith.cmpi slt, %1187, %0 : vector<8x1xi32>
    %1189 = vector.shape_cast %1188 : vector<8x1xi1> to vector<8x1xi1>
    %1190 = vector.broadcast %1189 : vector<8x1xi1> to vector<8x32xi1>
    %1191 = arith.select %1190, %1186, %1096 : vector<8x32xi1>, vector<8x32xf32>
    %1192 = vector.shape_cast %1188 : vector<8x1xi1> to vector<8x1xi1>
    %1193 = vector.broadcast %1192 : vector<8x1xi1> to vector<8x32xi1>
    %1194 = arith.select %1193, %1184, %1099 : vector<8x32xi1>, vector<8x32xf32>
    %cst_394 = arith.constant 0.000000e+00 : f32
    %1195 = vector.shape_cast %1188 : vector<8x1xi1> to vector<8x1xi1>
    %1196 = vector.broadcast %1195 : vector<8x1xi1> to vector<8x32xi1>
    %1197 = vector.broadcast %cst_394 : f32 to vector<8x32xf32>
    %1198 = arith.select %1196, %1186, %1197 : vector<8x32xi1>, vector<8x32xf32>
    %1199 = arith.index_cast %1108 : i32 to index
    %c0_395 = arith.constant 0 : index
    %c0_396 = arith.constant 0 : index
    %1200 = vector.load %arg13[%1199, %c0_395, %c0_396] : memref<8x8x32xf32, #tpu.memory_space<vmem>>, vector<1x8x32xf32>
    %1201 = vector.shape_cast %1200 : vector<1x8x32xf32> to vector<8x32xf32>
    %1202 = vector.shape_cast %1198 : vector<8x32xf32> to vector<1x8x32xf32>
    tpu.vector_store %arg13[%1199, %c0_395, %c0_396], %1202 {strides = array<i32>} : memref<8x8x32xf32, #tpu.memory_space<vmem>>, vector<1x8x32xf32>,
    %c4_i32_397 = arith.constant 4 : i32
    %c7_i32_398 = arith.constant 7 : i32
    %1203 = arith.subi %c7_i32_398, %c4_i32_397 : i32
    %1204 = arith.index_cast %c4_i32_397 : i32 to index
    %c0_399 = arith.constant 0 : index
    %c0_400 = arith.constant 0 : index
    %1205 = vector.load %arg14[%1204, %c0_399, %c0_400] : memref<8x8x128xf32, #tpu.memory_space<vmem>>, vector<1x8x128xf32>
    %1206 = vector.shape_cast %1205 : vector<1x8x128xf32> to vector<8x128xf32>
    %1207 = arith.truncf %1144 : vector<8x32xf32> to vector<8x32xbf16>
    %cst_401 = arith.constant dense<0.000000e+00> : vector<8x128xf32>
    %1208 = tpu.matmul %1207, %819, %cst_401 {dimension_numbers = #tpu.dot_dimension_numbers<[1], [0], [0], [1], [0, 0, 1, 1], [], []>} : vector<8x32xbf16>, vector<32x128xbf16>, vector<8x128xf32> -> vector<8x128xf32>
    %1209 = arith.addf %1206, %1208 : vector<8x128xf32>
    %cst_402 = arith.constant 5.000000e-01 : f32
    %1210 = vector.broadcast %cst_402 : f32 to vector<8x128xf32>
    %1211 = arith.mulf %1210, %1209 : vector<8x128xf32>
    %1212 = math.tanh %1211 : vector<8x128xf32>
    %1213 = vector.extract_strided_slice %1212 {offsets = [0, 0], sizes = [8, 32], strides = [1, 1]} : vector<8x128xf32> to vector<8x32xf32>
    %cst_403 = arith.constant 5.000000e-01 : f32
    %1214 = vector.broadcast %cst_403 : f32 to vector<8x32xf32>
    %1215 = arith.mulf %1214, %1213 : vector<8x32xf32>
    %cst_404 = arith.constant 5.000000e-01 : f32
    %1216 = vector.broadcast %cst_404 : f32 to vector<8x32xf32>
    %1217 = arith.addf %1215, %1216 : vector<8x32xf32>
    %1218 = vector.extract_strided_slice %1212 {offsets = [0, 32], sizes = [8, 32], strides = [1, 1]} : vector<8x128xf32> to vector<8x32xf32>
    %cst_405 = arith.constant 5.000000e-01 : f32
    %1219 = vector.broadcast %cst_405 : f32 to vector<8x32xf32>
    %1220 = arith.mulf %1219, %1218 : vector<8x32xf32>
    %cst_406 = arith.constant 5.000000e-01 : f32
    %1221 = vector.broadcast %cst_406 : f32 to vector<8x32xf32>
    %1222 = arith.addf %1220, %1221 : vector<8x32xf32>
    %1223 = vector.extract_strided_slice %1212 {offsets = [0, 96], sizes = [8, 32], strides = [1, 1]} : vector<8x128xf32> to vector<8x32xf32>
    %cst_407 = arith.constant 5.000000e-01 : f32
    %1224 = vector.broadcast %cst_407 : f32 to vector<8x32xf32>
    %1225 = arith.mulf %1224, %1223 : vector<8x32xf32>
    %cst_408 = arith.constant 5.000000e-01 : f32
    %1226 = vector.broadcast %cst_408 : f32 to vector<8x32xf32>
    %1227 = arith.addf %1225, %1226 : vector<8x32xf32>
    %1228 = vector.extract_strided_slice %1209 {offsets = [0, 64], sizes = [8, 32], strides = [1, 1]} : vector<8x128xf32> to vector<8x32xf32>
    %1229 = math.tanh %1228 : vector<8x32xf32>
    %1230 = arith.mulf %1222, %1147 : vector<8x32xf32>
    %1231 = arith.mulf %1217, %1229 : vector<8x32xf32>
    %1232 = arith.addf %1230, %1231 : vector<8x32xf32>
    %1233 = math.tanh %1232 : vector<8x32xf32>
    %1234 = arith.mulf %1227, %1233 : vector<8x32xf32>
    %1235 = vector.broadcast %c4_i32_397 : i32 to vector<8x1xi32>
    %1236 = arith.cmpi slt, %1235, %0 : vector<8x1xi32>
    %1237 = vector.shape_cast %1236 : vector<8x1xi1> to vector<8x1xi1>
    %1238 = vector.broadcast %1237 : vector<8x1xi1> to vector<8x32xi1>
    %1239 = arith.select %1238, %1234, %1144 : vector<8x32xi1>, vector<8x32xf32>
    %1240 = vector.shape_cast %1236 : vector<8x1xi1> to vector<8x1xi1>
    %1241 = vector.broadcast %1240 : vector<8x1xi1> to vector<8x32xi1>
    %1242 = arith.select %1241, %1232, %1147 : vector<8x32xi1>, vector<8x32xf32>
    %cst_409 = arith.constant 0.000000e+00 : f32
    %1243 = vector.shape_cast %1236 : vector<8x1xi1> to vector<8x1xi1>
    %1244 = vector.broadcast %1243 : vector<8x1xi1> to vector<8x32xi1>
    %1245 = vector.broadcast %cst_409 : f32 to vector<8x32xf32>
    %1246 = arith.select %1244, %1234, %1245 : vector<8x32xi1>, vector<8x32xf32>
    %1247 = arith.index_cast %c4_i32_397 : i32 to index
    %c0_410 = arith.constant 0 : index
    %c0_411 = arith.constant 0 : index
    %1248 = vector.load %arg12[%1247, %c0_410, %c0_411] : memref<8x8x32xf32, #tpu.memory_space<vmem>>, vector<1x8x32xf32>
    %1249 = vector.shape_cast %1248 : vector<1x8x32xf32> to vector<8x32xf32>
    %1250 = vector.shape_cast %1246 : vector<8x32xf32> to vector<1x8x32xf32>
    tpu.vector_store %arg12[%1247, %c0_410, %c0_411], %1250 {strides = array<i32>} : memref<8x8x32xf32, #tpu.memory_space<vmem>>, vector<1x8x32xf32>,
    %1251 = arith.index_cast %1203 : i32 to index
    %c0_412 = arith.constant 0 : index
    %c0_413 = arith.constant 0 : index
    %1252 = vector.load %arg15[%1251, %c0_412, %c0_413] : memref<8x8x128xf32, #tpu.memory_space<vmem>>, vector<1x8x128xf32>
    %1253 = vector.shape_cast %1252 : vector<1x8x128xf32> to vector<8x128xf32>
    %1254 = arith.truncf %1191 : vector<8x32xf32> to vector<8x32xbf16>
    %cst_414 = arith.constant dense<0.000000e+00> : vector<8x128xf32>
    %1255 = tpu.matmul %1254, %821, %cst_414 {dimension_numbers = #tpu.dot_dimension_numbers<[1], [0], [0], [1], [0, 0, 1, 1], [], []>} : vector<8x32xbf16>, vector<32x128xbf16>, vector<8x128xf32> -> vector<8x128xf32>
    %1256 = arith.addf %1253, %1255 : vector<8x128xf32>
    %cst_415 = arith.constant 5.000000e-01 : f32
    %1257 = vector.broadcast %cst_415 : f32 to vector<8x128xf32>
    %1258 = arith.mulf %1257, %1256 : vector<8x128xf32>
    %1259 = math.tanh %1258 : vector<8x128xf32>
    %1260 = vector.extract_strided_slice %1259 {offsets = [0, 0], sizes = [8, 32], strides = [1, 1]} : vector<8x128xf32> to vector<8x32xf32>
    %cst_416 = arith.constant 5.000000e-01 : f32
    %1261 = vector.broadcast %cst_416 : f32 to vector<8x32xf32>
    %1262 = arith.mulf %1261, %1260 : vector<8x32xf32>
    %cst_417 = arith.constant 5.000000e-01 : f32
    %1263 = vector.broadcast %cst_417 : f32 to vector<8x32xf32>
    %1264 = arith.addf %1262, %1263 : vector<8x32xf32>
    %1265 = vector.extract_strided_slice %1259 {offsets = [0, 32], sizes = [8, 32], strides = [1, 1]} : vector<8x128xf32> to vector<8x32xf32>
    %cst_418 = arith.constant 5.000000e-01 : f32
    %1266 = vector.broadcast %cst_418 : f32 to vector<8x32xf32>
    %1267 = arith.mulf %1266, %1265 : vector<8x32xf32>
    %cst_419 = arith.constant 5.000000e-01 : f32
    %1268 = vector.broadcast %cst_419 : f32 to vector<8x32xf32>
    %1269 = arith.addf %1267, %1268 : vector<8x32xf32>
    %1270 = vector.extract_strided_slice %1259 {offsets = [0, 96], sizes = [8, 32], strides = [1, 1]} : vector<8x128xf32> to vector<8x32xf32>
    %cst_420 = arith.constant 5.000000e-01 : f32
    %1271 = vector.broadcast %cst_420 : f32 to vector<8x32xf32>
    %1272 = arith.mulf %1271, %1270 : vector<8x32xf32>
    %cst_421 = arith.constant 5.000000e-01 : f32
    %1273 = vector.broadcast %cst_421 : f32 to vector<8x32xf32>
    %1274 = arith.addf %1272, %1273 : vector<8x32xf32>
    %1275 = vector.extract_strided_slice %1256 {offsets = [0, 64], sizes = [8, 32], strides = [1, 1]} : vector<8x128xf32> to vector<8x32xf32>
    %1276 = math.tanh %1275 : vector<8x32xf32>
    %1277 = arith.mulf %1269, %1194 : vector<8x32xf32>
    %1278 = arith.mulf %1264, %1276 : vector<8x32xf32>
    %1279 = arith.addf %1277, %1278 : vector<8x32xf32>
    %1280 = math.tanh %1279 : vector<8x32xf32>
    %1281 = arith.mulf %1274, %1280 : vector<8x32xf32>
    %1282 = vector.broadcast %1203 : i32 to vector<8x1xi32>
    %1283 = arith.cmpi slt, %1282, %0 : vector<8x1xi32>
    %1284 = vector.shape_cast %1283 : vector<8x1xi1> to vector<8x1xi1>
    %1285 = vector.broadcast %1284 : vector<8x1xi1> to vector<8x32xi1>
    %1286 = arith.select %1285, %1281, %1191 : vector<8x32xi1>, vector<8x32xf32>
    %1287 = vector.shape_cast %1283 : vector<8x1xi1> to vector<8x1xi1>
    %1288 = vector.broadcast %1287 : vector<8x1xi1> to vector<8x32xi1>
    %1289 = arith.select %1288, %1279, %1194 : vector<8x32xi1>, vector<8x32xf32>
    %cst_422 = arith.constant 0.000000e+00 : f32
    %1290 = vector.shape_cast %1283 : vector<8x1xi1> to vector<8x1xi1>
    %1291 = vector.broadcast %1290 : vector<8x1xi1> to vector<8x32xi1>
    %1292 = vector.broadcast %cst_422 : f32 to vector<8x32xf32>
    %1293 = arith.select %1291, %1281, %1292 : vector<8x32xi1>, vector<8x32xf32>
    %1294 = arith.index_cast %1203 : i32 to index
    %c0_423 = arith.constant 0 : index
    %c0_424 = arith.constant 0 : index
    %1295 = vector.load %arg13[%1294, %c0_423, %c0_424] : memref<8x8x32xf32, #tpu.memory_space<vmem>>, vector<1x8x32xf32>
    %1296 = vector.shape_cast %1295 : vector<1x8x32xf32> to vector<8x32xf32>
    %1297 = vector.shape_cast %1293 : vector<8x32xf32> to vector<1x8x32xf32>
    tpu.vector_store %arg13[%1294, %c0_423, %c0_424], %1297 {strides = array<i32>} : memref<8x8x32xf32, #tpu.memory_space<vmem>>, vector<1x8x32xf32>,
    %c5_i32_425 = arith.constant 5 : i32
    %c7_i32_426 = arith.constant 7 : i32
    %1298 = arith.subi %c7_i32_426, %c5_i32_425 : i32
    %1299 = arith.index_cast %c5_i32_425 : i32 to index
    %c0_427 = arith.constant 0 : index
    %c0_428 = arith.constant 0 : index
    %1300 = vector.load %arg14[%1299, %c0_427, %c0_428] : memref<8x8x128xf32, #tpu.memory_space<vmem>>, vector<1x8x128xf32>
    %1301 = vector.shape_cast %1300 : vector<1x8x128xf32> to vector<8x128xf32>
    %1302 = arith.truncf %1239 : vector<8x32xf32> to vector<8x32xbf16>
    %cst_429 = arith.constant dense<0.000000e+00> : vector<8x128xf32>
    %1303 = tpu.matmul %1302, %819, %cst_429 {dimension_numbers = #tpu.dot_dimension_numbers<[1], [0], [0], [1], [0, 0, 1, 1], [], []>} : vector<8x32xbf16>, vector<32x128xbf16>, vector<8x128xf32> -> vector<8x128xf32>
    %1304 = arith.addf %1301, %1303 : vector<8x128xf32>
    %cst_430 = arith.constant 5.000000e-01 : f32
    %1305 = vector.broadcast %cst_430 : f32 to vector<8x128xf32>
    %1306 = arith.mulf %1305, %1304 : vector<8x128xf32>
    %1307 = math.tanh %1306 : vector<8x128xf32>
    %1308 = vector.extract_strided_slice %1307 {offsets = [0, 0], sizes = [8, 32], strides = [1, 1]} : vector<8x128xf32> to vector<8x32xf32>
    %cst_431 = arith.constant 5.000000e-01 : f32
    %1309 = vector.broadcast %cst_431 : f32 to vector<8x32xf32>
    %1310 = arith.mulf %1309, %1308 : vector<8x32xf32>
    %cst_432 = arith.constant 5.000000e-01 : f32
    %1311 = vector.broadcast %cst_432 : f32 to vector<8x32xf32>
    %1312 = arith.addf %1310, %1311 : vector<8x32xf32>
    %1313 = vector.extract_strided_slice %1307 {offsets = [0, 32], sizes = [8, 32], strides = [1, 1]} : vector<8x128xf32> to vector<8x32xf32>
    %cst_433 = arith.constant 5.000000e-01 : f32
    %1314 = vector.broadcast %cst_433 : f32 to vector<8x32xf32>
    %1315 = arith.mulf %1314, %1313 : vector<8x32xf32>
    %cst_434 = arith.constant 5.000000e-01 : f32
    %1316 = vector.broadcast %cst_434 : f32 to vector<8x32xf32>
    %1317 = arith.addf %1315, %1316 : vector<8x32xf32>
    %1318 = vector.extract_strided_slice %1307 {offsets = [0, 96], sizes = [8, 32], strides = [1, 1]} : vector<8x128xf32> to vector<8x32xf32>
    %cst_435 = arith.constant 5.000000e-01 : f32
    %1319 = vector.broadcast %cst_435 : f32 to vector<8x32xf32>
    %1320 = arith.mulf %1319, %1318 : vector<8x32xf32>
    %cst_436 = arith.constant 5.000000e-01 : f32
    %1321 = vector.broadcast %cst_436 : f32 to vector<8x32xf32>
    %1322 = arith.addf %1320, %1321 : vector<8x32xf32>
    %1323 = vector.extract_strided_slice %1304 {offsets = [0, 64], sizes = [8, 32], strides = [1, 1]} : vector<8x128xf32> to vector<8x32xf32>
    %1324 = math.tanh %1323 : vector<8x32xf32>
    %1325 = arith.mulf %1317, %1242 : vector<8x32xf32>
    %1326 = arith.mulf %1312, %1324 : vector<8x32xf32>
    %1327 = arith.addf %1325, %1326 : vector<8x32xf32>
    %1328 = math.tanh %1327 : vector<8x32xf32>
    %1329 = arith.mulf %1322, %1328 : vector<8x32xf32>
    %1330 = vector.broadcast %c5_i32_425 : i32 to vector<8x1xi32>
    %1331 = arith.cmpi slt, %1330, %0 : vector<8x1xi32>
    %1332 = vector.shape_cast %1331 : vector<8x1xi1> to vector<8x1xi1>
    %1333 = vector.broadcast %1332 : vector<8x1xi1> to vector<8x32xi1>
    %1334 = arith.select %1333, %1329, %1239 : vector<8x32xi1>, vector<8x32xf32>
    %1335 = vector.shape_cast %1331 : vector<8x1xi1> to vector<8x1xi1>
    %1336 = vector.broadcast %1335 : vector<8x1xi1> to vector<8x32xi1>
    %1337 = arith.select %1336, %1327, %1242 : vector<8x32xi1>, vector<8x32xf32>
    %cst_437 = arith.constant 0.000000e+00 : f32
    %1338 = vector.shape_cast %1331 : vector<8x1xi1> to vector<8x1xi1>
    %1339 = vector.broadcast %1338 : vector<8x1xi1> to vector<8x32xi1>
    %1340 = vector.broadcast %cst_437 : f32 to vector<8x32xf32>
    %1341 = arith.select %1339, %1329, %1340 : vector<8x32xi1>, vector<8x32xf32>
    %1342 = arith.index_cast %c5_i32_425 : i32 to index
    %c0_438 = arith.constant 0 : index
    %c0_439 = arith.constant 0 : index
    %1343 = vector.load %arg12[%1342, %c0_438, %c0_439] : memref<8x8x32xf32, #tpu.memory_space<vmem>>, vector<1x8x32xf32>
    %1344 = vector.shape_cast %1343 : vector<1x8x32xf32> to vector<8x32xf32>
    %1345 = vector.shape_cast %1341 : vector<8x32xf32> to vector<1x8x32xf32>
    tpu.vector_store %arg12[%1342, %c0_438, %c0_439], %1345 {strides = array<i32>} : memref<8x8x32xf32, #tpu.memory_space<vmem>>, vector<1x8x32xf32>,
    %1346 = arith.index_cast %1298 : i32 to index
    %c0_440 = arith.constant 0 : index
    %c0_441 = arith.constant 0 : index
    %1347 = vector.load %arg15[%1346, %c0_440, %c0_441] : memref<8x8x128xf32, #tpu.memory_space<vmem>>, vector<1x8x128xf32>
    %1348 = vector.shape_cast %1347 : vector<1x8x128xf32> to vector<8x128xf32>
    %1349 = arith.truncf %1286 : vector<8x32xf32> to vector<8x32xbf16>
    %cst_442 = arith.constant dense<0.000000e+00> : vector<8x128xf32>
    %1350 = tpu.matmul %1349, %821, %cst_442 {dimension_numbers = #tpu.dot_dimension_numbers<[1], [0], [0], [1], [0, 0, 1, 1], [], []>} : vector<8x32xbf16>, vector<32x128xbf16>, vector<8x128xf32> -> vector<8x128xf32>
    %1351 = arith.addf %1348, %1350 : vector<8x128xf32>
    %cst_443 = arith.constant 5.000000e-01 : f32
    %1352 = vector.broadcast %cst_443 : f32 to vector<8x128xf32>
    %1353 = arith.mulf %1352, %1351 : vector<8x128xf32>
    %1354 = math.tanh %1353 : vector<8x128xf32>
    %1355 = vector.extract_strided_slice %1354 {offsets = [0, 0], sizes = [8, 32], strides = [1, 1]} : vector<8x128xf32> to vector<8x32xf32>
    %cst_444 = arith.constant 5.000000e-01 : f32
    %1356 = vector.broadcast %cst_444 : f32 to vector<8x32xf32>
    %1357 = arith.mulf %1356, %1355 : vector<8x32xf32>
    %cst_445 = arith.constant 5.000000e-01 : f32
    %1358 = vector.broadcast %cst_445 : f32 to vector<8x32xf32>
    %1359 = arith.addf %1357, %1358 : vector<8x32xf32>
    %1360 = vector.extract_strided_slice %1354 {offsets = [0, 32], sizes = [8, 32], strides = [1, 1]} : vector<8x128xf32> to vector<8x32xf32>
    %cst_446 = arith.constant 5.000000e-01 : f32
    %1361 = vector.broadcast %cst_446 : f32 to vector<8x32xf32>
    %1362 = arith.mulf %1361, %1360 : vector<8x32xf32>
    %cst_447 = arith.constant 5.000000e-01 : f32
    %1363 = vector.broadcast %cst_447 : f32 to vector<8x32xf32>
    %1364 = arith.addf %1362, %1363 : vector<8x32xf32>
    %1365 = vector.extract_strided_slice %1354 {offsets = [0, 96], sizes = [8, 32], strides = [1, 1]} : vector<8x128xf32> to vector<8x32xf32>
    %cst_448 = arith.constant 5.000000e-01 : f32
    %1366 = vector.broadcast %cst_448 : f32 to vector<8x32xf32>
    %1367 = arith.mulf %1366, %1365 : vector<8x32xf32>
    %cst_449 = arith.constant 5.000000e-01 : f32
    %1368 = vector.broadcast %cst_449 : f32 to vector<8x32xf32>
    %1369 = arith.addf %1367, %1368 : vector<8x32xf32>
    %1370 = vector.extract_strided_slice %1351 {offsets = [0, 64], sizes = [8, 32], strides = [1, 1]} : vector<8x128xf32> to vector<8x32xf32>
    %1371 = math.tanh %1370 : vector<8x32xf32>
    %1372 = arith.mulf %1364, %1289 : vector<8x32xf32>
    %1373 = arith.mulf %1359, %1371 : vector<8x32xf32>
    %1374 = arith.addf %1372, %1373 : vector<8x32xf32>
    %1375 = math.tanh %1374 : vector<8x32xf32>
    %1376 = arith.mulf %1369, %1375 : vector<8x32xf32>
    %1377 = vector.broadcast %1298 : i32 to vector<8x1xi32>
    %1378 = arith.cmpi slt, %1377, %0 : vector<8x1xi32>
    %1379 = vector.shape_cast %1378 : vector<8x1xi1> to vector<8x1xi1>
    %1380 = vector.broadcast %1379 : vector<8x1xi1> to vector<8x32xi1>
    %1381 = arith.select %1380, %1376, %1286 : vector<8x32xi1>, vector<8x32xf32>
    %1382 = vector.shape_cast %1378 : vector<8x1xi1> to vector<8x1xi1>
    %1383 = vector.broadcast %1382 : vector<8x1xi1> to vector<8x32xi1>
    %1384 = arith.select %1383, %1374, %1289 : vector<8x32xi1>, vector<8x32xf32>
    %cst_450 = arith.constant 0.000000e+00 : f32
    %1385 = vector.shape_cast %1378 : vector<8x1xi1> to vector<8x1xi1>
    %1386 = vector.broadcast %1385 : vector<8x1xi1> to vector<8x32xi1>
    %1387 = vector.broadcast %cst_450 : f32 to vector<8x32xf32>
    %1388 = arith.select %1386, %1376, %1387 : vector<8x32xi1>, vector<8x32xf32>
    %1389 = arith.index_cast %1298 : i32 to index
    %c0_451 = arith.constant 0 : index
    %c0_452 = arith.constant 0 : index
    %1390 = vector.load %arg13[%1389, %c0_451, %c0_452] : memref<8x8x32xf32, #tpu.memory_space<vmem>>, vector<1x8x32xf32>
    %1391 = vector.shape_cast %1390 : vector<1x8x32xf32> to vector<8x32xf32>
    %1392 = vector.shape_cast %1388 : vector<8x32xf32> to vector<1x8x32xf32>
    tpu.vector_store %arg13[%1389, %c0_451, %c0_452], %1392 {strides = array<i32>} : memref<8x8x32xf32, #tpu.memory_space<vmem>>, vector<1x8x32xf32>,
    %c6_i32_453 = arith.constant 6 : i32
    %c7_i32_454 = arith.constant 7 : i32
    %1393 = arith.subi %c7_i32_454, %c6_i32_453 : i32
    %1394 = arith.index_cast %c6_i32_453 : i32 to index
    %c0_455 = arith.constant 0 : index
    %c0_456 = arith.constant 0 : index
    %1395 = vector.load %arg14[%1394, %c0_455, %c0_456] : memref<8x8x128xf32, #tpu.memory_space<vmem>>, vector<1x8x128xf32>
    %1396 = vector.shape_cast %1395 : vector<1x8x128xf32> to vector<8x128xf32>
    %1397 = arith.truncf %1334 : vector<8x32xf32> to vector<8x32xbf16>
    %cst_457 = arith.constant dense<0.000000e+00> : vector<8x128xf32>
    %1398 = tpu.matmul %1397, %819, %cst_457 {dimension_numbers = #tpu.dot_dimension_numbers<[1], [0], [0], [1], [0, 0, 1, 1], [], []>} : vector<8x32xbf16>, vector<32x128xbf16>, vector<8x128xf32> -> vector<8x128xf32>
    %1399 = arith.addf %1396, %1398 : vector<8x128xf32>
    %cst_458 = arith.constant 5.000000e-01 : f32
    %1400 = vector.broadcast %cst_458 : f32 to vector<8x128xf32>
    %1401 = arith.mulf %1400, %1399 : vector<8x128xf32>
    %1402 = math.tanh %1401 : vector<8x128xf32>
    %1403 = vector.extract_strided_slice %1402 {offsets = [0, 0], sizes = [8, 32], strides = [1, 1]} : vector<8x128xf32> to vector<8x32xf32>
    %cst_459 = arith.constant 5.000000e-01 : f32
    %1404 = vector.broadcast %cst_459 : f32 to vector<8x32xf32>
    %1405 = arith.mulf %1404, %1403 : vector<8x32xf32>
    %cst_460 = arith.constant 5.000000e-01 : f32
    %1406 = vector.broadcast %cst_460 : f32 to vector<8x32xf32>
    %1407 = arith.addf %1405, %1406 : vector<8x32xf32>
    %1408 = vector.extract_strided_slice %1402 {offsets = [0, 32], sizes = [8, 32], strides = [1, 1]} : vector<8x128xf32> to vector<8x32xf32>
    %cst_461 = arith.constant 5.000000e-01 : f32
    %1409 = vector.broadcast %cst_461 : f32 to vector<8x32xf32>
    %1410 = arith.mulf %1409, %1408 : vector<8x32xf32>
    %cst_462 = arith.constant 5.000000e-01 : f32
    %1411 = vector.broadcast %cst_462 : f32 to vector<8x32xf32>
    %1412 = arith.addf %1410, %1411 : vector<8x32xf32>
    %1413 = vector.extract_strided_slice %1402 {offsets = [0, 96], sizes = [8, 32], strides = [1, 1]} : vector<8x128xf32> to vector<8x32xf32>
    %cst_463 = arith.constant 5.000000e-01 : f32
    %1414 = vector.broadcast %cst_463 : f32 to vector<8x32xf32>
    %1415 = arith.mulf %1414, %1413 : vector<8x32xf32>
    %cst_464 = arith.constant 5.000000e-01 : f32
    %1416 = vector.broadcast %cst_464 : f32 to vector<8x32xf32>
    %1417 = arith.addf %1415, %1416 : vector<8x32xf32>
    %1418 = vector.extract_strided_slice %1399 {offsets = [0, 64], sizes = [8, 32], strides = [1, 1]} : vector<8x128xf32> to vector<8x32xf32>
    %1419 = math.tanh %1418 : vector<8x32xf32>
    %1420 = arith.mulf %1412, %1337 : vector<8x32xf32>
    %1421 = arith.mulf %1407, %1419 : vector<8x32xf32>
    %1422 = arith.addf %1420, %1421 : vector<8x32xf32>
    %1423 = math.tanh %1422 : vector<8x32xf32>
    %1424 = arith.mulf %1417, %1423 : vector<8x32xf32>
    %1425 = vector.broadcast %c6_i32_453 : i32 to vector<8x1xi32>
    %1426 = arith.cmpi slt, %1425, %0 : vector<8x1xi32>
    %1427 = vector.shape_cast %1426 : vector<8x1xi1> to vector<8x1xi1>
    %1428 = vector.broadcast %1427 : vector<8x1xi1> to vector<8x32xi1>
    %1429 = arith.select %1428, %1424, %1334 : vector<8x32xi1>, vector<8x32xf32>
    %1430 = vector.shape_cast %1426 : vector<8x1xi1> to vector<8x1xi1>
    %1431 = vector.broadcast %1430 : vector<8x1xi1> to vector<8x32xi1>
    %1432 = arith.select %1431, %1422, %1337 : vector<8x32xi1>, vector<8x32xf32>
    %cst_465 = arith.constant 0.000000e+00 : f32
    %1433 = vector.shape_cast %1426 : vector<8x1xi1> to vector<8x1xi1>
    %1434 = vector.broadcast %1433 : vector<8x1xi1> to vector<8x32xi1>
    %1435 = vector.broadcast %cst_465 : f32 to vector<8x32xf32>
    %1436 = arith.select %1434, %1424, %1435 : vector<8x32xi1>, vector<8x32xf32>
    %1437 = arith.index_cast %c6_i32_453 : i32 to index
    %c0_466 = arith.constant 0 : index
    %c0_467 = arith.constant 0 : index
    %1438 = vector.load %arg12[%1437, %c0_466, %c0_467] : memref<8x8x32xf32, #tpu.memory_space<vmem>>, vector<1x8x32xf32>
    %1439 = vector.shape_cast %1438 : vector<1x8x32xf32> to vector<8x32xf32>
    %1440 = vector.shape_cast %1436 : vector<8x32xf32> to vector<1x8x32xf32>
    tpu.vector_store %arg12[%1437, %c0_466, %c0_467], %1440 {strides = array<i32>} : memref<8x8x32xf32, #tpu.memory_space<vmem>>, vector<1x8x32xf32>,
    %1441 = arith.index_cast %1393 : i32 to index
    %c0_468 = arith.constant 0 : index
    %c0_469 = arith.constant 0 : index
    %1442 = vector.load %arg15[%1441, %c0_468, %c0_469] : memref<8x8x128xf32, #tpu.memory_space<vmem>>, vector<1x8x128xf32>
    %1443 = vector.shape_cast %1442 : vector<1x8x128xf32> to vector<8x128xf32>
    %1444 = arith.truncf %1381 : vector<8x32xf32> to vector<8x32xbf16>
    %cst_470 = arith.constant dense<0.000000e+00> : vector<8x128xf32>
    %1445 = tpu.matmul %1444, %821, %cst_470 {dimension_numbers = #tpu.dot_dimension_numbers<[1], [0], [0], [1], [0, 0, 1, 1], [], []>} : vector<8x32xbf16>, vector<32x128xbf16>, vector<8x128xf32> -> vector<8x128xf32>
    %1446 = arith.addf %1443, %1445 : vector<8x128xf32>
    %cst_471 = arith.constant 5.000000e-01 : f32
    %1447 = vector.broadcast %cst_471 : f32 to vector<8x128xf32>
    %1448 = arith.mulf %1447, %1446 : vector<8x128xf32>
    %1449 = math.tanh %1448 : vector<8x128xf32>
    %1450 = vector.extract_strided_slice %1449 {offsets = [0, 0], sizes = [8, 32], strides = [1, 1]} : vector<8x128xf32> to vector<8x32xf32>
    %cst_472 = arith.constant 5.000000e-01 : f32
    %1451 = vector.broadcast %cst_472 : f32 to vector<8x32xf32>
    %1452 = arith.mulf %1451, %1450 : vector<8x32xf32>
    %cst_473 = arith.constant 5.000000e-01 : f32
    %1453 = vector.broadcast %cst_473 : f32 to vector<8x32xf32>
    %1454 = arith.addf %1452, %1453 : vector<8x32xf32>
    %1455 = vector.extract_strided_slice %1449 {offsets = [0, 32], sizes = [8, 32], strides = [1, 1]} : vector<8x128xf32> to vector<8x32xf32>
    %cst_474 = arith.constant 5.000000e-01 : f32
    %1456 = vector.broadcast %cst_474 : f32 to vector<8x32xf32>
    %1457 = arith.mulf %1456, %1455 : vector<8x32xf32>
    %cst_475 = arith.constant 5.000000e-01 : f32
    %1458 = vector.broadcast %cst_475 : f32 to vector<8x32xf32>
    %1459 = arith.addf %1457, %1458 : vector<8x32xf32>
    %1460 = vector.extract_strided_slice %1449 {offsets = [0, 96], sizes = [8, 32], strides = [1, 1]} : vector<8x128xf32> to vector<8x32xf32>
    %cst_476 = arith.constant 5.000000e-01 : f32
    %1461 = vector.broadcast %cst_476 : f32 to vector<8x32xf32>
    %1462 = arith.mulf %1461, %1460 : vector<8x32xf32>
    %cst_477 = arith.constant 5.000000e-01 : f32
    %1463 = vector.broadcast %cst_477 : f32 to vector<8x32xf32>
    %1464 = arith.addf %1462, %1463 : vector<8x32xf32>
    %1465 = vector.extract_strided_slice %1446 {offsets = [0, 64], sizes = [8, 32], strides = [1, 1]} : vector<8x128xf32> to vector<8x32xf32>
    %1466 = math.tanh %1465 : vector<8x32xf32>
    %1467 = arith.mulf %1459, %1384 : vector<8x32xf32>
    %1468 = arith.mulf %1454, %1466 : vector<8x32xf32>
    %1469 = arith.addf %1467, %1468 : vector<8x32xf32>
    %1470 = math.tanh %1469 : vector<8x32xf32>
    %1471 = arith.mulf %1464, %1470 : vector<8x32xf32>
    %1472 = vector.broadcast %1393 : i32 to vector<8x1xi32>
    %1473 = arith.cmpi slt, %1472, %0 : vector<8x1xi32>
    %1474 = vector.shape_cast %1473 : vector<8x1xi1> to vector<8x1xi1>
    %1475 = vector.broadcast %1474 : vector<8x1xi1> to vector<8x32xi1>
    %1476 = arith.select %1475, %1471, %1381 : vector<8x32xi1>, vector<8x32xf32>
    %1477 = vector.shape_cast %1473 : vector<8x1xi1> to vector<8x1xi1>
    %1478 = vector.broadcast %1477 : vector<8x1xi1> to vector<8x32xi1>
    %1479 = arith.select %1478, %1469, %1384 : vector<8x32xi1>, vector<8x32xf32>
    %cst_478 = arith.constant 0.000000e+00 : f32
    %1480 = vector.shape_cast %1473 : vector<8x1xi1> to vector<8x1xi1>
    %1481 = vector.broadcast %1480 : vector<8x1xi1> to vector<8x32xi1>
    %1482 = vector.broadcast %cst_478 : f32 to vector<8x32xf32>
    %1483 = arith.select %1481, %1471, %1482 : vector<8x32xi1>, vector<8x32xf32>
    %1484 = arith.index_cast %1393 : i32 to index
    %c0_479 = arith.constant 0 : index
    %c0_480 = arith.constant 0 : index
    %1485 = vector.load %arg13[%1484, %c0_479, %c0_480] : memref<8x8x32xf32, #tpu.memory_space<vmem>>, vector<1x8x32xf32>
    %1486 = vector.shape_cast %1485 : vector<1x8x32xf32> to vector<8x32xf32>
    %1487 = vector.shape_cast %1483 : vector<8x32xf32> to vector<1x8x32xf32>
    tpu.vector_store %arg13[%1484, %c0_479, %c0_480], %1487 {strides = array<i32>} : memref<8x8x32xf32, #tpu.memory_space<vmem>>, vector<1x8x32xf32>,
    %c7_i32_481 = arith.constant 7 : i32
    %c7_i32_482 = arith.constant 7 : i32
    %1488 = arith.subi %c7_i32_482, %c7_i32_481 : i32
    %1489 = arith.index_cast %c7_i32_481 : i32 to index
    %c0_483 = arith.constant 0 : index
    %c0_484 = arith.constant 0 : index
    %1490 = vector.load %arg14[%1489, %c0_483, %c0_484] : memref<8x8x128xf32, #tpu.memory_space<vmem>>, vector<1x8x128xf32>
    %1491 = vector.shape_cast %1490 : vector<1x8x128xf32> to vector<8x128xf32>
    %1492 = arith.truncf %1429 : vector<8x32xf32> to vector<8x32xbf16>
    %cst_485 = arith.constant dense<0.000000e+00> : vector<8x128xf32>
    %1493 = tpu.matmul %1492, %819, %cst_485 {dimension_numbers = #tpu.dot_dimension_numbers<[1], [0], [0], [1], [0, 0, 1, 1], [], []>} : vector<8x32xbf16>, vector<32x128xbf16>, vector<8x128xf32> -> vector<8x128xf32>
    %1494 = arith.addf %1491, %1493 : vector<8x128xf32>
    %cst_486 = arith.constant 5.000000e-01 : f32
    %1495 = vector.broadcast %cst_486 : f32 to vector<8x128xf32>
    %1496 = arith.mulf %1495, %1494 : vector<8x128xf32>
    %1497 = math.tanh %1496 : vector<8x128xf32>
    %1498 = vector.extract_strided_slice %1497 {offsets = [0, 0], sizes = [8, 32], strides = [1, 1]} : vector<8x128xf32> to vector<8x32xf32>
    %cst_487 = arith.constant 5.000000e-01 : f32
    %1499 = vector.broadcast %cst_487 : f32 to vector<8x32xf32>
    %1500 = arith.mulf %1499, %1498 : vector<8x32xf32>
    %cst_488 = arith.constant 5.000000e-01 : f32
    %1501 = vector.broadcast %cst_488 : f32 to vector<8x32xf32>
    %1502 = arith.addf %1500, %1501 : vector<8x32xf32>
    %1503 = vector.extract_strided_slice %1497 {offsets = [0, 32], sizes = [8, 32], strides = [1, 1]} : vector<8x128xf32> to vector<8x32xf32>
    %cst_489 = arith.constant 5.000000e-01 : f32
    %1504 = vector.broadcast %cst_489 : f32 to vector<8x32xf32>
    %1505 = arith.mulf %1504, %1503 : vector<8x32xf32>
    %cst_490 = arith.constant 5.000000e-01 : f32
    %1506 = vector.broadcast %cst_490 : f32 to vector<8x32xf32>
    %1507 = arith.addf %1505, %1506 : vector<8x32xf32>
    %1508 = vector.extract_strided_slice %1497 {offsets = [0, 96], sizes = [8, 32], strides = [1, 1]} : vector<8x128xf32> to vector<8x32xf32>
    %cst_491 = arith.constant 5.000000e-01 : f32
    %1509 = vector.broadcast %cst_491 : f32 to vector<8x32xf32>
    %1510 = arith.mulf %1509, %1508 : vector<8x32xf32>
    %cst_492 = arith.constant 5.000000e-01 : f32
    %1511 = vector.broadcast %cst_492 : f32 to vector<8x32xf32>
    %1512 = arith.addf %1510, %1511 : vector<8x32xf32>
    %1513 = vector.extract_strided_slice %1494 {offsets = [0, 64], sizes = [8, 32], strides = [1, 1]} : vector<8x128xf32> to vector<8x32xf32>
    %1514 = math.tanh %1513 : vector<8x32xf32>
    %1515 = arith.mulf %1507, %1432 : vector<8x32xf32>
    %1516 = arith.mulf %1502, %1514 : vector<8x32xf32>
    %1517 = arith.addf %1515, %1516 : vector<8x32xf32>
    %1518 = math.tanh %1517 : vector<8x32xf32>
    %1519 = arith.mulf %1512, %1518 : vector<8x32xf32>
    %1520 = vector.broadcast %c7_i32_481 : i32 to vector<8x1xi32>
    %1521 = arith.cmpi slt, %1520, %0 : vector<8x1xi32>
    %1522 = vector.shape_cast %1521 : vector<8x1xi1> to vector<8x1xi1>
    %1523 = vector.broadcast %1522 : vector<8x1xi1> to vector<8x32xi1>
    %1524 = arith.select %1523, %1519, %1429 : vector<8x32xi1>, vector<8x32xf32>
    %1525 = vector.shape_cast %1521 : vector<8x1xi1> to vector<8x1xi1>
    %1526 = vector.broadcast %1525 : vector<8x1xi1> to vector<8x32xi1>
    %1527 = arith.select %1526, %1517, %1432 : vector<8x32xi1>, vector<8x32xf32>
    %cst_493 = arith.constant 0.000000e+00 : f32
    %1528 = vector.shape_cast %1521 : vector<8x1xi1> to vector<8x1xi1>
    %1529 = vector.broadcast %1528 : vector<8x1xi1> to vector<8x32xi1>
    %1530 = vector.broadcast %cst_493 : f32 to vector<8x32xf32>
    %1531 = arith.select %1529, %1519, %1530 : vector<8x32xi1>, vector<8x32xf32>
    %1532 = arith.index_cast %c7_i32_481 : i32 to index
    %c0_494 = arith.constant 0 : index
    %c0_495 = arith.constant 0 : index
    %1533 = vector.load %arg12[%1532, %c0_494, %c0_495] : memref<8x8x32xf32, #tpu.memory_space<vmem>>, vector<1x8x32xf32>
    %1534 = vector.shape_cast %1533 : vector<1x8x32xf32> to vector<8x32xf32>
    %1535 = vector.shape_cast %1531 : vector<8x32xf32> to vector<1x8x32xf32>
    tpu.vector_store %arg12[%1532, %c0_494, %c0_495], %1535 {strides = array<i32>} : memref<8x8x32xf32, #tpu.memory_space<vmem>>, vector<1x8x32xf32>,
    %1536 = arith.index_cast %1488 : i32 to index
    %c0_496 = arith.constant 0 : index
    %c0_497 = arith.constant 0 : index
    %1537 = vector.load %arg15[%1536, %c0_496, %c0_497] : memref<8x8x128xf32, #tpu.memory_space<vmem>>, vector<1x8x128xf32>
    %1538 = vector.shape_cast %1537 : vector<1x8x128xf32> to vector<8x128xf32>
    %1539 = arith.truncf %1476 : vector<8x32xf32> to vector<8x32xbf16>
    %cst_498 = arith.constant dense<0.000000e+00> : vector<8x128xf32>
    %1540 = tpu.matmul %1539, %821, %cst_498 {dimension_numbers = #tpu.dot_dimension_numbers<[1], [0], [0], [1], [0, 0, 1, 1], [], []>} : vector<8x32xbf16>, vector<32x128xbf16>, vector<8x128xf32> -> vector<8x128xf32>
    %1541 = arith.addf %1538, %1540 : vector<8x128xf32>
    %cst_499 = arith.constant 5.000000e-01 : f32
    %1542 = vector.broadcast %cst_499 : f32 to vector<8x128xf32>
    %1543 = arith.mulf %1542, %1541 : vector<8x128xf32>
    %1544 = math.tanh %1543 : vector<8x128xf32>
    %1545 = vector.extract_strided_slice %1544 {offsets = [0, 0], sizes = [8, 32], strides = [1, 1]} : vector<8x128xf32> to vector<8x32xf32>
    %cst_500 = arith.constant 5.000000e-01 : f32
    %1546 = vector.broadcast %cst_500 : f32 to vector<8x32xf32>
    %1547 = arith.mulf %1546, %1545 : vector<8x32xf32>
    %cst_501 = arith.constant 5.000000e-01 : f32
    %1548 = vector.broadcast %cst_501 : f32 to vector<8x32xf32>
    %1549 = arith.addf %1547, %1548 : vector<8x32xf32>
    %1550 = vector.extract_strided_slice %1544 {offsets = [0, 32], sizes = [8, 32], strides = [1, 1]} : vector<8x128xf32> to vector<8x32xf32>
    %cst_502 = arith.constant 5.000000e-01 : f32
    %1551 = vector.broadcast %cst_502 : f32 to vector<8x32xf32>
    %1552 = arith.mulf %1551, %1550 : vector<8x32xf32>
    %cst_503 = arith.constant 5.000000e-01 : f32
    %1553 = vector.broadcast %cst_503 : f32 to vector<8x32xf32>
    %1554 = arith.addf %1552, %1553 : vector<8x32xf32>
    %1555 = vector.extract_strided_slice %1544 {offsets = [0, 96], sizes = [8, 32], strides = [1, 1]} : vector<8x128xf32> to vector<8x32xf32>
    %cst_504 = arith.constant 5.000000e-01 : f32
    %1556 = vector.broadcast %cst_504 : f32 to vector<8x32xf32>
    %1557 = arith.mulf %1556, %1555 : vector<8x32xf32>
    %cst_505 = arith.constant 5.000000e-01 : f32
    %1558 = vector.broadcast %cst_505 : f32 to vector<8x32xf32>
    %1559 = arith.addf %1557, %1558 : vector<8x32xf32>
    %1560 = vector.extract_strided_slice %1541 {offsets = [0, 64], sizes = [8, 32], strides = [1, 1]} : vector<8x128xf32> to vector<8x32xf32>
    %1561 = math.tanh %1560 : vector<8x32xf32>
    %1562 = arith.mulf %1554, %1479 : vector<8x32xf32>
    %1563 = arith.mulf %1549, %1561 : vector<8x32xf32>
    %1564 = arith.addf %1562, %1563 : vector<8x32xf32>
    %1565 = math.tanh %1564 : vector<8x32xf32>
    %1566 = arith.mulf %1559, %1565 : vector<8x32xf32>
    %1567 = vector.broadcast %1488 : i32 to vector<8x1xi32>
    %1568 = arith.cmpi slt, %1567, %0 : vector<8x1xi32>
    %1569 = vector.shape_cast %1568 : vector<8x1xi1> to vector<8x1xi1>
    %1570 = vector.broadcast %1569 : vector<8x1xi1> to vector<8x32xi1>
    %1571 = arith.select %1570, %1566, %1476 : vector<8x32xi1>, vector<8x32xf32>
    %1572 = vector.shape_cast %1568 : vector<8x1xi1> to vector<8x1xi1>
    %1573 = vector.broadcast %1572 : vector<8x1xi1> to vector<8x32xi1>
    %1574 = arith.select %1573, %1564, %1479 : vector<8x32xi1>, vector<8x32xf32>
    %cst_506 = arith.constant 0.000000e+00 : f32
    %1575 = vector.shape_cast %1568 : vector<8x1xi1> to vector<8x1xi1>
    %1576 = vector.broadcast %1575 : vector<8x1xi1> to vector<8x32xi1>
    %1577 = vector.broadcast %cst_506 : f32 to vector<8x32xf32>
    %1578 = arith.select %1576, %1566, %1577 : vector<8x32xi1>, vector<8x32xf32>
    %1579 = arith.index_cast %1488 : i32 to index
    %c0_507 = arith.constant 0 : index
    %c0_508 = arith.constant 0 : index
    %1580 = vector.load %arg13[%1579, %c0_507, %c0_508] : memref<8x8x32xf32, #tpu.memory_space<vmem>>, vector<1x8x32xf32>
    %1581 = vector.shape_cast %1580 : vector<1x8x32xf32> to vector<8x32xf32>
    %1582 = vector.shape_cast %1578 : vector<8x32xf32> to vector<1x8x32xf32>
    tpu.vector_store %arg13[%1579, %c0_507, %c0_508], %1582 {strides = array<i32>} : memref<8x8x32xf32, #tpu.memory_space<vmem>>, vector<1x8x32xf32>,
    %c8_i32_509 = arith.constant 8 : i32
    %c0_510 = arith.constant 0 : index
    %c0_511 = arith.constant 0 : index
    %c0_512 = arith.constant 0 : index
    %1583 = vector.load %arg12[%c0_510, %c0_511, %c0_512] : memref<8x8x32xf32, #tpu.memory_space<vmem>>, vector<8x8x32xf32>
    %1584 = vector.shape_cast %1583 : vector<8x8x32xf32> to vector<64x32xf32>
    %1585 = arith.truncf %1584 : vector<64x32xf32> to vector<64x32xbf16>
    %c0_513 = arith.constant 0 : index
    %c0_514 = arith.constant 0 : index
    %c0_515 = arith.constant 0 : index
    %1586 = vector.load %arg13[%c0_513, %c0_514, %c0_515] : memref<8x8x32xf32, #tpu.memory_space<vmem>>, vector<8x8x32xf32>
    %1587 = vector.shape_cast %1586 : vector<8x8x32xf32> to vector<64x32xf32>
    %1588 = arith.truncf %1587 : vector<64x32xf32> to vector<64x32xbf16>
    %c0_516 = arith.constant 0 : index
    %c0_517 = arith.constant 0 : index
    %1589 = vector.load %arg9[%c0_516, %c0_517] : memref<32x32xbf16, #tpu.memory_space<vmem>>, vector<32x32xbf16>
    %c0_518 = arith.constant 0 : index
    %c0_519 = arith.constant 0 : index
    %1590 = vector.load %arg10[%c0_518, %c0_519] : memref<1x32xf32, #tpu.memory_space<vmem>>, vector<1x32xf32>
    %cst_520 = arith.constant dense<0.000000e+00> : vector<64x32xf32>
    %1591 = tpu.matmul %1585, %1589, %cst_520 {dimension_numbers = #tpu.dot_dimension_numbers<[1], [0], [0], [1], [0, 0, 1, 1], [], []>} : vector<64x32xbf16>, vector<32x32xbf16>, vector<64x32xf32> -> vector<64x32xf32>
    %1592 = vector.broadcast %1590 : vector<1x32xf32> to vector<64x32xf32>
    %1593 = arith.addf %1591, %1592 : vector<64x32xf32>
    %cst_521 = arith.constant dense<0.000000e+00> : vector<64x32xf32>
    %1594 = tpu.matmul %1588, %1589, %cst_521 {dimension_numbers = #tpu.dot_dimension_numbers<[1], [0], [0], [1], [0, 0, 1, 1], [], []>} : vector<64x32xbf16>, vector<32x32xbf16>, vector<64x32xf32> -> vector<64x32xf32>
    %1595 = vector.broadcast %1590 : vector<1x32xf32> to vector<64x32xf32>
    %1596 = arith.addf %1594, %1595 : vector<64x32xf32>
    %1597 = tpu.concatenate %1593, %1596 in 1 : vector<64x32xf32>, vector<64x32xf32> -> vector<64x64xf32>
    %1598 = vector.shape_cast %1597 : vector<64x64xf32> to vector<8x8x64xf32>
    %c0_522 = arith.constant 0 : index
    %c0_523 = arith.constant 0 : index
    %c0_524 = arith.constant 0 : index
    %1599 = vector.load %arg11[%c0_522, %c0_523, %c0_524] : memref<8x8x64xf32, #tpu.memory_space<vmem>>, vector<8x8x64xf32>
    tpu.vector_store %arg11[%c0_522, %c0_523, %c0_524], %1598 {strides = array<i32>} : memref<8x8x64xf32, #tpu.memory_space<vmem>>, vector<8x8x64xf32>,
    return
  }
  func.func @transform_0(%arg0: i32) -> (i32, i32) {
    %c0_i32 = arith.constant 0 : i32
    %c0_i32_0 = arith.constant 0 : i32
    %c0_i32_1 = arith.constant 0 : i32
    return %c0_i32, %c0_i32_0 : i32, i32
  }
  func.func @transform_1(%arg0: i32) -> (i32, i32, i32) {
    %c0_i32 = arith.constant 0 : i32
    %c0_i32_0 = arith.constant 0 : i32
    %c0_i32_1 = arith.constant 0 : i32
    %c0_i32_2 = arith.constant 0 : i32
    return %c0_i32, %c0_i32_0, %c0_i32_1 : i32, i32, i32
  }
  func.func @transform_2(%arg0: i32) -> (i32, i32, i32) {
    %c0_i32 = arith.constant 0 : i32
    %c0_i32_0 = arith.constant 0 : i32
    %c0_i32_1 = arith.constant 0 : i32
    %c0_i32_2 = arith.constant 0 : i32
    return %c0_i32, %c0_i32_0, %c0_i32_1 : i32, i32, i32
  }
  func.func @transform_3(%arg0: i32) -> (i32, i32, i32) {
    %c0_i32 = arith.constant 0 : i32
    %c0_i32_0 = arith.constant 0 : i32
    %c0_i32_1 = arith.constant 0 : i32
    %c0_i32_2 = arith.constant 0 : i32
    return %c0_i32, %c0_i32_0, %c0_i32_1 : i32, i32, i32
  }
  func.func @transform_4(%arg0: i32) -> (i32, i32, i32) {
    %c0_i32 = arith.constant 0 : i32
    %c0_i32_0 = arith.constant 0 : i32
    %c0_i32_1 = arith.constant 0 : i32
    %c0_i32_2 = arith.constant 0 : i32
    return %c0_i32, %c0_i32_0, %c0_i32_1 : i32, i32, i32
  }
  func.func @transform_5(%arg0: i32) -> (i32, i32, i32) {
    %c0_i32 = arith.constant 0 : i32
    %c0_i32_0 = arith.constant 0 : i32
    %c0_i32_1 = arith.constant 0 : i32
    %c0_i32_2 = arith.constant 0 : i32
    return %c0_i32, %c0_i32_0, %c0_i32_1 : i32, i32, i32
  }
  func.func @transform_6(%arg0: i32) -> (i32, i32, i32) {
    %c0_i32 = arith.constant 0 : i32
    %c0_i32_0 = arith.constant 0 : i32
    %c0_i32_1 = arith.constant 0 : i32
    %c0_i32_2 = arith.constant 0 : i32
    return %c0_i32, %c0_i32_0, %c0_i32_1 : i32, i32, i32
  }
  func.func @transform_7(%arg0: i32) -> (i32, i32, i32) {
    %c0_i32 = arith.constant 0 : i32
    %c0_i32_0 = arith.constant 0 : i32
    %c0_i32_1 = arith.constant 0 : i32
    %c0_i32_2 = arith.constant 0 : i32
    return %c0_i32, %c0_i32_0, %c0_i32_1 : i32, i32, i32
  }
  func.func @transform_8(%arg0: i32) -> (i32, i32) {
    %c0_i32 = arith.constant 0 : i32
    %c0_i32_0 = arith.constant 0 : i32
    %c0_i32_1 = arith.constant 0 : i32
    return %c0_i32, %c0_i32_0 : i32, i32
  }
  func.func @transform_9(%arg0: i32) -> (i32, i32) {
    %c0_i32 = arith.constant 0 : i32
    %c0_i32_0 = arith.constant 0 : i32
    %c0_i32_1 = arith.constant 0 : i32
    return %c0_i32, %c0_i32_0 : i32, i32
  }
  func.func @transform_10(%arg0: i32) -> (i32, i32, i32) {
    %c0_i32 = arith.constant 0 : i32
    %c0_i32_0 = arith.constant 0 : i32
    %c0_i32_1 = arith.constant 0 : i32
    %c0_i32_2 = arith.constant 0 : i32
    return %c0_i32, %c0_i32_0, %c0_i32_1 : i32, i32, i32
  }
}

</mosaic_0001>

<llo_original>
// kernel: lstm_bi_lm_forward.1
$region0: #{lstm_bi_lm_forward.1}
  #allocation0 [shape = 'u32[]', space=smem, size = 0x4, offset = 0x4, fixed_abs, tag = 'smem constant byte address 0x4 - core index']
  #allocation1 [shape = 'u32[144,128]{1,0:T(1,128)}', space=vmem, size = 0x12000, scoped, tag = 'internal scratch']
  #allocation2 [shape = 'f32[8,8,32]{2,1,0:T(8,128)}', space=vmem, size = 0x8000, scoped, tag = 'scratch operand']
  #allocation3 [shape = 'f32[8,8,32]{2,1,0:T(8,128)}', space=vmem, size = 0x8000, scoped, tag = 'scratch operand']
  #allocation4 [shape = 'f32[8,8,128]{2,1,0:T(8,128)}', space=vmem, size = 0x8000, scoped, tag = 'scratch operand']
  #allocation5 [shape = 'f32[8,8,128]{2,1,0:T(8,128)}', space=vmem, size = 0x8000, scoped, tag = 'scratch operand']
  %s0 = inlined_call_operand.vmem [shape: s32[8,1], index: 0, kind: input, shape index: {}]
  %s1 = inlined_call_operand.vmem [shape: bf16[8,8,32], index: 1, kind: input, shape index: {}]
  %s2 = inlined_call_operand.vmem [shape: bf16[2,32,128], index: 2, kind: input, shape index: {}]
  %s3 = inlined_call_operand.vmem [shape: bf16[2,32,128], index: 3, kind: input, shape index: {}]
  %s4 = inlined_call_operand.hbm [shape: f32[2,1,128], index: 4, kind: input, shape index: {}]
  %s5 = inlined_call_operand.vmem [shape: bf16[2,64,128], index: 5, kind: input, shape index: {}]
  %s6 = inlined_call_operand.hbm [shape: bf16[2,32,128], index: 6, kind: input, shape index: {}]
  %s7 = inlined_call_operand.hbm [shape: f32[2,1,128], index: 7, kind: input, shape index: {}]
  %s8 = inlined_call_operand.hbm [shape: bf16[32,32], index: 8, kind: input, shape index: {}]
  %s9 = inlined_call_operand.vmem [shape: f32[1,32], index: 9, kind: input, shape index: {}]
  %s10 = inlined_call_operand.vmem [shape: f32[8,8,64], index: 10, kind: output, shape index: {}]
  %s11 = sld [smem:[#allocation0]]
  $region66: #{lstm_bi_lm_forward.1} parent=0
    _
  %s13 = ssub.s32 1, %s11
  %s14 = scalar_select 0, %s13, %s11
  $region1: #{lstm_bi_lm_forward.1} parent=0
    #allocation6 [shape = 'u8[1024]{0}', space=vmem, size = 0x400, scoped, tag = 'input window, operand 4, single buffered']
    #allocation7 [shape = 's32[1]{0}', space=sflag, size = 0x4, scoped, tag = 'scoped memory for lstm_bi_lm_forward.1']
    #allocation8 [shape = 'u8[16384]{0}', space=vmem, size = 0x4000, scoped, tag = 'input window, operand 6, single buffered']
    #allocation9 [shape = 's32[1]{0}', space=sflag, size = 0x4, scoped, tag = 'scoped memory for lstm_bi_lm_forward.1']
    #allocation10 [shape = 'u8[1024]{0}', space=vmem, size = 0x400, scoped, tag = 'input window, operand 7, single buffered']
    #allocation11 [shape = 'u8[8192]{0}', space=vmem, size = 0x2000, scoped, tag = 'input window, operand 8, single buffered']
    #allocation12 [shape = 's32[1]{0}', space=sflag, size = 0x4, scoped, tag = 'scoped memory for lstm_bi_lm_forward.1']
    %15 = vsyncpa [#allocation7], 0
    %16 = vsyncpa [#allocation9], 0
    %17 = vsyncpa [#allocation12], 0
    // Predicated region
    $region2: #{lstm_bi_lm_forward.1} parent=1 // pred_check
      _
    $region3: #{lstm_bi_lm_forward.1} parent=1 // pred_check_branch
      %19 = sbr.rel (0) target = $region5
    $region4: #{lstm_bi_lm_forward.1} parent=1 // pred_region
      _
    $region5: #{lstm_bi_lm_forward.1} parent=1 // pred_fallthru
      _
    // Predicated region
    $region6: #{lstm_bi_lm_forward.1} parent=1 // pred_check
      _
    $region7: #{lstm_bi_lm_forward.1} parent=1 // pred_check_branch
      %21 = sbr.rel (0) target = $region9
    $region8: #{lstm_bi_lm_forward.1} parent=1 // pred_region
      _
    $region9: #{lstm_bi_lm_forward.1} parent=1 // pred_fallthru
      _
    // Predicated region
    $region10: #{lstm_bi_lm_forward.1} parent=1 // pred_check
      _
    $region11: #{lstm_bi_lm_forward.1} parent=1 // pred_check_branch
      %23 = sbr.rel (0) target = $region13
    $region12: #{lstm_bi_lm_forward.1} parent=1 // pred_region
      _
    $region13: #{lstm_bi_lm_forward.1} parent=1 // pred_fallthru
      _
    // Predicated region
    $region14: #{lstm_bi_lm_forward.1} parent=1 // pred_check
      _
    $region15: #{lstm_bi_lm_forward.1} parent=1 // pred_check_branch
      %25 = sbr.rel (0) target = $region17
    $region16: #{lstm_bi_lm_forward.1} parent=1 // pred_region
      _
    $region17: #{lstm_bi_lm_forward.1} parent=1 // pred_fallthru
      _
    // Predicated region
    $region18: #{lstm_bi_lm_forward.1} parent=1 // pred_check
      _
    $region19: #{lstm_bi_lm_forward.1} parent=1 // pred_check_branch
      %27 = sbr.rel (0) target = $region21
    $region20: #{lstm_bi_lm_forward.1} parent=1 // pred_region
      %s29 = ssub.s32 32, 32
      %30 = vsyncadd [#allocation7], %s29
      %s31 = sshll.u32 [#allocation6], 4
      %s32 = int_to_ptr.vmem [resolvable:$true] %s31
      %37 = dma.hbm_to_vmem [thread:$0]  %s4, 32, %s32, [#allocation7], 16, 16, 1
    $region21: #{lstm_bi_lm_forward.1} parent=1 // pred_fallthru
      _
    // Predicated region
    $region22: #{lstm_bi_lm_forward.1} parent=1 // pred_check
      _
    $region23: #{lstm_bi_lm_forward.1} parent=1 // pred_check_branch
      %39 = sbr.rel (0) target = $region25
    $region24: #{lstm_bi_lm_forward.1} parent=1 // pred_region
      _
    $region25: #{lstm_bi_lm_forward.1} parent=1 // pred_fallthru
      _
    // Predicated region
    $region26: #{lstm_bi_lm_forward.1} parent=1 // pred_check
      _
    $region27: #{lstm_bi_lm_forward.1} parent=1 // pred_check_branch
      %41 = sbr.rel (0) target = $region29
    $region28: #{lstm_bi_lm_forward.1} parent=1 // pred_region
      %s43 = ssub.s32 512, 512
      %44 = vsyncadd [#allocation9], %s43
      %s45 = sshll.u32 [#allocation8], 4
      %s46 = int_to_ptr.vmem [resolvable:$true] %s45
      %51 = dma.hbm_to_vmem [thread:$0]  %s6, 512, %s46, [#allocation9], 64, 64, 4
    $region29: #{lstm_bi_lm_forward.1} parent=1 // pred_fallthru
      _
    // Predicated region
    $region30: #{lstm_bi_lm_forward.1} parent=1 // pred_check
      _
    $region31: #{lstm_bi_lm_forward.1} parent=1 // pred_check_branch
      %53 = sbr.rel (0) target = $region33
    $region32: #{lstm_bi_lm_forward.1} parent=1 // pred_region
      %s55 = ssub.s32 32, 32
      %56 = vsyncadd [#allocation9], %s55
      %s57 = sshll.u32 [#allocation10], 4
      %s58 = int_to_ptr.vmem [resolvable:$true] %s57
      %63 = dma.hbm_to_vmem [thread:$0]  %s7, 32, %s58, [#allocation9], 16, 16, 1
    $region33: #{lstm_bi_lm_forward.1} parent=1 // pred_fallthru
      _
    // Predicated region
    $region34: #{lstm_bi_lm_forward.1} parent=1 // pred_check
      _
    $region35: #{lstm_bi_lm_forward.1} parent=1 // pred_check_branch
      %65 = sbr.rel (0) target = $region37
    $region36: #{lstm_bi_lm_forward.1} parent=1 // pred_region
      %s67 = ssub.s32 256, 256
      %68 = vsyncadd [#allocation12], %s67
      %s69 = sshll.u32 [#allocation11], 4
      %s70 = int_to_ptr.vmem [resolvable:$true] %s69
      %75 = dma.hbm_to_vmem [thread:$0]  %s8, 256, %s70, [#allocation12], 64, 64, 4
    $region37: #{lstm_bi_lm_forward.1} parent=1 // pred_fallthru
      _
    // Predicated region
    $region38: #{lstm_bi_lm_forward.1} parent=1 // pred_check
      _
    $region39: #{lstm_bi_lm_forward.1} parent=1 // pred_check_branch
      %77 = sbr.rel (0) target = $region41
    $region40: #{lstm_bi_lm_forward.1} parent=1 // pred_region
      _
    $region41: #{lstm_bi_lm_forward.1} parent=1 // pred_fallthru
      _
    // Predicated region
    $region42: #{lstm_bi_lm_forward.1} parent=1 // pred_check
      _
    $region43: #{lstm_bi_lm_forward.1} parent=1 // pred_check_branch
      %79 = sbr.rel (0) target = $region45
    $region44: #{lstm_bi_lm_forward.1} parent=1 // pred_region
      %80 = dma.done [#allocation7], 32
    $region45: #{lstm_bi_lm_forward.1} parent=1 // pred_fallthru
      _
    // Predicated region
    $region46: #{lstm_bi_lm_forward.1} parent=1 // pred_check
      _
    $region47: #{lstm_bi_lm_forward.1} parent=1 // pred_check_branch
      %82 = sbr.rel (0) target = $region49
    $region48: #{lstm_bi_lm_forward.1} parent=1 // pred_region
      %83 = dma.done [#allocation9], 512
    $region49: #{lstm_bi_lm_forward.1} parent=1 // pred_fallthru
      _
    // Predicated region
    $region50: #{lstm_bi_lm_forward.1} parent=1 // pred_check
      _
    $region51: #{lstm_bi_lm_forward.1} parent=1 // pred_check_branch
      %85 = sbr.rel (0) target = $region53
    $region52: #{lstm_bi_lm_forward.1} parent=1 // pred_region
      %86 = dma.done [#allocation9], 32
    $region53: #{lstm_bi_lm_forward.1} parent=1 // pred_fallthru
      _
    // Predicated region
    $region54: #{lstm_bi_lm_forward.1} parent=1 // pred_check
      _
    $region55: #{lstm_bi_lm_forward.1} parent=1 // pred_check_branch
      %88 = sbr.rel (0) target = $region57
    $region56: #{lstm_bi_lm_forward.1} parent=1 // pred_region
      %89 = dma.done [#allocation12], 256
    $region57: #{lstm_bi_lm_forward.1} parent=1 // pred_fallthru
      _
    %v91 = vld [vmem:[%s0] sm:$0xff]
    %v92 = vld [vmem:[%s1] sm:$0xf]
    %v93 = vld [vmem:[%s1 + $0x4] sm:$0xf]
    %v94 = vld [vmem:[%s1 + $0x8] sm:$0xf]
    %v95 = vld [vmem:[%s1 + $0xc] sm:$0xf]
    %v96 = vld [vmem:[%s1 + $0x10] sm:$0xf]
    %v97 = vld [vmem:[%s1 + $0x14] sm:$0xf]
    %v98 = vld [vmem:[%s1 + $0x18] sm:$0xf]
    %v99 = vld [vmem:[%s1 + $0x1c] sm:$0xf]
    %v100 = vld [vmem:[%s2] sm:$0xf]
    %v101 = vld [vmem:[%s2 + $0x4] sm:$0xf]
    %v102 = vld [vmem:[%s2 + $0x8] sm:$0xf]
    %v103 = vld [vmem:[%s2 + $0xc] sm:$0xf]
    %v104 = vld [vmem:[#allocation6] sm:$0x1]
    %v106 = vlaneseq
    %v107 = vshrl.u32 %v106, 7
    %v108 = vsub.s32 0, %v107
    %v109 = vrot.slane %v104, %v108
    %v119 = vunpack.c.l.b16 %v92
    %v120 = vunpack.c.l.b16 %v93
    %v121 = vunpack.c.l.b16 %v94
    %v122 = vunpack.c.l.b16 %v95
    %v123 = vunpack.c.l.b16 %v96
    %v124 = vunpack.c.l.b16 %v97
    %v125 = vunpack.c.l.b16 %v98
    %v126 = vunpack.c.l.b16 %v99
    %v127 = vpack.c.b16 %v120, %v119
    %v128 = vpack.c.b16 %v122, %v121
    %v129 = vpack.c.b16 %v124, %v123
    %v130 = vpack.c.b16 %v126, %v125
    %v135 = vunpack.c.l.b16 %v100
    %v136 = vunpack.c.l.b16 %v101
    %v137 = vunpack.c.l.b16 %v102
    %v138 = vunpack.c.l.b16 %v103
    %v139 = vpack.c.b16 %v136, %v135
    %v140 = vpack.c.b16 %v138, %v137
    %vm143 = vcmask 261120
    %v145 = vsel %vm143, %v127, 0
    %v148 = vsel %vm143, %v128, 0
    %v151 = vsel %vm143, %v129, 0
    %v154 = vsel %vm143, %v130, 0
    %156 = vmatprep.subr.bf16.mxu0 0
    %157 = vmatpush1.bf16.msra.mxu0 %v139
    %158 = vmatprep.subr.bf16.mxu0 0
    %159 = vmatpush1.bf16.msra.mxu0 %v140
    %160 = vmatprep.subr.bf16.mxu0 0
    %161 = vmatpush1.bf16.msra.mxu0 0
    %162 = vmatprep.subr.bf16.mxu0 0
    %163 = vmatpush1.bf16.msra.mxu0 0
    %164 = vmatprep.subr.bf16.mxu0 0
    %165 = vmatpush1.bf16.msra.mxu0 0
    %166 = vmatprep.subr.bf16.mxu0 0
    %167 = vmatpush1.bf16.msra.mxu0 0
    %168 = vmatprep.subr.bf16.mxu0 0
    %169 = vmatpush1.bf16.msra.mxu0 0
    %170 = vmatprep.subr.bf16.mxu0 0
    %171 = vmatpush1.bf16.msra.mxu0 0
    %172 = vmatprep.subr.bf16.mxu0 0
    %173 = vmatpush1.bf16.msra.mxu0 0
    %174 = vmatprep.subr.bf16.mxu0 0
    %175 = vmatpush1.bf16.msra.mxu0 0
    %176 = vmatprep.subr.bf16.mxu0 0
    %177 = vmatpush1.bf16.msra.mxu0 0
    %178 = vmatprep.subr.bf16.mxu0 0
    %179 = vmatpush1.bf16.msra.mxu0 0
    %180 = vmatprep.subr.bf16.mxu0 0
    %181 = vmatpush1.bf16.msra.mxu0 0
    %182 = vmatprep.subr.bf16.mxu0 0
    %183 = vmatpush1.bf16.msra.mxu0 0
    %184 = vmatprep.subr.bf16.mxu0 0
    %185 = vmatpush1.bf16.msra.mxu0 0
    %186 = vmatprep.subr.bf16.mxu0 0
    %187 = vmatpush1.bf16.msra.mxu0 0
    %188 = vmatprep.mubr.bf16.mxu0 0
    %189 = vmatmul.mubr.bf16.gmra.mrb[0].mxu0 %v145
    %v190 = vpop.f32.mrb[0].mxu0
    %v191 = vadd.f32 %v109, %v190
    %v192 = vpop.f32.mrb[0].mxu0
    %v193 = vpop.f32.mrb[0].mxu0
    %v194 = vadd.f32 %v109, %v193
    %v195 = vpop.f32.mrb[0].mxu0
    %196 = vmatprep.mubr.bf16.mxu0 0
    %197 = vmatmul.mubr.bf16.gmra.mrb[0].mxu0 %v148
    %v198 = vpop.f32.mrb[0].mxu0
    %v199 = vadd.f32 %v109, %v198
    %v200 = vpop.f32.mrb[0].mxu0
    %v201 = vpop.f32.mrb[0].mxu0
    %v202 = vadd.f32 %v109, %v201
    %v203 = vpop.f32.mrb[0].mxu0
    %204 = vmatprep.mubr.bf16.mxu0 0
    %205 = vmatmul.mubr.bf16.gmra.mrb[0].mxu0 %v151
    %v206 = vpop.f32.mrb[0].mxu0
    %v207 = vadd.f32 %v109, %v206
    %v208 = vpop.f32.mrb[0].mxu0
    %v209 = vpop.f32.mrb[0].mxu0
    %v210 = vadd.f32 %v109, %v209
    %v211 = vpop.f32.mrb[0].mxu0
    %212 = vmatprep.mubr.bf16.mxu0 0
    %213 = vmatmul.mubr.bf16.gmra.mrb[0].mxu0 %v154
    %v214 = vpop.f32.mrb[0].mxu0
    %v215 = vadd.f32 %v109, %v214
    %v216 = vpop.f32.mrb[0].mxu0
    %v217 = vpop.f32.mrb[0].mxu0
    %v218 = vadd.f32 %v109, %v217
    %v219 = vpop.f32.mrb[0].mxu0
    %220 = vdwg.mxu0
    %221 = vst [vmem:[#allocation4] sm:$0xff] %v191
    %222 = vst [vmem:[#allocation4 + $0x8] sm:$0xff] %v194
    %223 = vst [vmem:[#allocation4 + $0x10] sm:$0xff] %v199
    %224 = vst [vmem:[#allocation4 + $0x18] sm:$0xff] %v202
    %225 = vst [vmem:[#allocation4 + $0x20] sm:$0xff] %v207
    %226 = vst [vmem:[#allocation4 + $0x28] sm:$0xff] %v210
    %227 = vst [vmem:[#allocation4 + $0x30] sm:$0xff] %v215
    %228 = vst [vmem:[#allocation4 + $0x38] sm:$0xff] %v218
    %s229 = scalar_lea.vmem %s2, 16
    %v230 = vld [vmem:[%s229] sm:$0xf]
    %v231 = vld [vmem:[%s229 + $0x4] sm:$0xf]
    %v232 = vld [vmem:[%s229 + $0x8] sm:$0xf]
    %v233 = vld [vmem:[%s229 + $0xc] sm:$0xf]
    %s234 = scalar_lea.vmem [#allocation6], 1
    %v235 = vld [vmem:[%s234] sm:$0x1]
    %v237 = vlaneseq
    %v238 = vshrl.u32 %v237, 7
    %v239 = vsub.s32 0, %v238
    %v240 = vrot.slane %v235, %v239
    %v246 = vunpack.c.l.b16 %v230
    %v247 = vunpack.c.l.b16 %v231
    %v248 = vunpack.c.l.b16 %v232
    %v249 = vunpack.c.l.b16 %v233
    %v250 = vpack.c.b16 %v247, %v246
    %v251 = vpack.c.b16 %v249, %v248
    %254 = vmatprep.subr.bf16.mxu0 0
    %255 = vmatpush1.bf16.msra.mxu0 %v250
    %256 = vmatprep.subr.bf16.mxu0 0
    %257 = vmatpush1.bf16.msra.mxu0 %v251
    %258 = vmatprep.subr.bf16.mxu0 0
    %259 = vmatpush1.bf16.msra.mxu0 0
    %260 = vmatprep.subr.bf16.mxu0 0
    %261 = vmatpush1.bf16.msra.mxu0 0
    %262 = vmatprep.subr.bf16.mxu0 0
    %263 = vmatpush1.bf16.msra.mxu0 0
    %264 = vmatprep.subr.bf16.mxu0 0
    %265 = vmatpush1.bf16.msra.mxu0 0
    %266 = vmatprep.subr.bf16.mxu0 0
    %267 = vmatpush1.bf16.msra.mxu0 0
    %268 = vmatprep.subr.bf16.mxu0 0
    %269 = vmatpush1.bf16.msra.mxu0 0
    %270 = vmatprep.subr.bf16.mxu0 0
    %271 = vmatpush1.bf16.msra.mxu0 0
    %272 = vmatprep.subr.bf16.mxu0 0
    %273 = vmatpush1.bf16.msra.mxu0 0
    %274 = vmatprep.subr.bf16.mxu0 0
    %275 = vmatpush1.bf16.msra.mxu0 0
    %276 = vmatprep.subr.bf16.mxu0 0
    %277 = vmatpush1.bf16.msra.mxu0 0
    %278 = vmatprep.subr.bf16.mxu0 0
    %279 = vmatpush1.bf16.msra.mxu0 0
    %280 = vmatprep.subr.bf16.mxu0 0
    %281 = vmatpush1.bf16.msra.mxu0 0
    %282 = vmatprep.subr.bf16.mxu0 0
    %283 = vmatpush1.bf16.msra.mxu0 0
    %284 = vmatprep.subr.bf16.mxu0 0
    %285 = vmatpush1.bf16.msra.mxu0 0
    %286 = vmatprep.mubr.bf16.mxu0 0
    %287 = vmatmul.mubr.bf16.gmra.mrb[0].mxu0 %v145
    %v288 = vpop.f32.mrb[0].mxu0
    %v289 = vadd.f32 %v240, %v288
    %v290 = vpop.f32.mrb[0].mxu0
    %v291 = vpop.f32.mrb[0].mxu0
    %v292 = vadd.f32 %v240, %v291
    %v293 = vpop.f32.mrb[0].mxu0
    %294 = vmatprep.mubr.bf16.mxu0 0
    %295 = vmatmul.mubr.bf16.gmra.mrb[0].mxu0 %v148
    %v296 = vpop.f32.mrb[0].mxu0
    %v297 = vadd.f32 %v240, %v296
    %v298 = vpop.f32.mrb[0].mxu0
    %v299 = vpop.f32.mrb[0].mxu0
    %v300 = vadd.f32 %v240, %v299
    %v301 = vpop.f32.mrb[0].mxu0
    %302 = vmatprep.mubr.bf16.mxu0 0
    %303 = vmatmul.mubr.bf16.gmra.mrb[0].mxu0 %v151
    %v304 = vpop.f32.mrb[0].mxu0
    %v305 = vadd.f32 %v240, %v304
    %v306 = vpop.f32.mrb[0].mxu0
    %v307 = vpop.f32.mrb[0].mxu0
    %v308 = vadd.f32 %v240, %v307
    %v309 = vpop.f32.mrb[0].mxu0
    %310 = vmatprep.mubr.bf16.mxu0 0
    %311 = vmatmul.mubr.bf16.gmra.mrb[0].mxu0 %v154
    %v312 = vpop.f32.mrb[0].mxu0
    %v313 = vadd.f32 %v240, %v312
    %v314 = vpop.f32.mrb[0].mxu0
    %v315 = vpop.f32.mrb[0].mxu0
    %v316 = vadd.f32 %v240, %v315
    %v317 = vpop.f32.mrb[0].mxu0
    %318 = vdwg.mxu0
    %319 = vst [vmem:[#allocation5] sm:$0xff] %v289
    %320 = vst [vmem:[#allocation5 + $0x8] sm:$0xff] %v292
    %321 = vst [vmem:[#allocation5 + $0x10] sm:$0xff] %v297
    %322 = vst [vmem:[#allocation5 + $0x18] sm:$0xff] %v300
    %323 = vst [vmem:[#allocation5 + $0x20] sm:$0xff] %v305
    %324 = vst [vmem:[#allocation5 + $0x28] sm:$0xff] %v308
    %325 = vst [vmem:[#allocation5 + $0x30] sm:$0xff] %v313
    %326 = vst [vmem:[#allocation5 + $0x38] sm:$0xff] %v316
    %v327 = vld [vmem:[%s3] sm:$0xf]
    %v328 = vld [vmem:[%s3 + $0x4] sm:$0xf]
    %v329 = vld [vmem:[%s3 + $0x8] sm:$0xf]
    %v330 = vld [vmem:[%s3 + $0xc] sm:$0xf]
    %s331 = scalar_lea.vmem %s3, 16
    %v332 = vld [vmem:[%s331] sm:$0xf]
    %v333 = vld [vmem:[%s331 + $0x4] sm:$0xf]
    %v334 = vld [vmem:[%s331 + $0x8] sm:$0xf]
    %v335 = vld [vmem:[%s331 + $0xc] sm:$0xf]
    %v336 = vld [vmem:[#allocation4] sm:$0xff]
    %v341 = vunpack.c.l.b16 %v327
    %v342 = vunpack.c.l.b16 %v328
    %v343 = vunpack.c.l.b16 %v329
    %v344 = vunpack.c.l.b16 %v330
    %v345 = vpack.c.b16 %v342, %v341
    %v346 = vpack.c.b16 %v344, %v343
    %v350 = vsel %vm143, 0, 0
    %352 = vmatprep.subr.bf16.mxu0 0
    %353 = vmatpush1.bf16.msra.mxu0 %v345
    %354 = vmatprep.subr.bf16.mxu0 0
    %355 = vmatpush1.bf16.msra.mxu0 %v346
    %356 = vmatprep.subr.bf16.mxu0 0
    %357 = vmatpush1.bf16.msra.mxu0 0
    %358 = vmatprep.subr.bf16.mxu0 0
    %359 = vmatpush1.bf16.msra.mxu0 0
    %360 = vmatprep.subr.bf16.mxu0 0
    %361 = vmatpush1.bf16.msra.mxu0 0
    %362 = vmatprep.subr.bf16.mxu0 0
    %363 = vmatpush1.bf16.msra.mxu0 0
    %364 = vmatprep.subr.bf16.mxu0 0
    %365 = vmatpush1.bf16.msra.mxu0 0
    %366 = vmatprep.subr.bf16.mxu0 0
    %367 = vmatpush1.bf16.msra.mxu0 0
    %368 = vmatprep.subr.bf16.mxu0 0
    %369 = vmatpush1.bf16.msra.mxu0 0
    %370 = vmatprep.subr.bf16.mxu0 0
    %371 = vmatpush1.bf16.msra.mxu0 0
    %372 = vmatprep.subr.bf16.mxu0 0
    %373 = vmatpush1.bf16.msra.mxu0 0
    %374 = vmatprep.subr.bf16.mxu0 0
    %375 = vmatpush1.bf16.msra.mxu0 0
    %376 = vmatprep.subr.bf16.mxu0 0
    %377 = vmatpush1.bf16.msra.mxu0 0
    %378 = vmatprep.subr.bf16.mxu0 0
    %379 = vmatpush1.bf16.msra.mxu0 0
    %380 = vmatprep.subr.bf16.mxu0 0
    %381 = vmatpush1.bf16.msra.mxu0 0
    %382 = vmatprep.subr.bf16.mxu0 0
    %383 = vmatpush1.bf16.msra.mxu0 0
    %384 = vmatprep.mubr.bf16.mxu0 0
    %385 = vmatmul.mubr.bf16.gmra.mrb[0].mxu0 %v350
    %v386 = vpop.f32.mrb[0].mxu0
    %v387 = vadd.f32 0.0, %v386
    %v388 = vpop.f32.mrb[0].mxu0
    %v389 = vpop.f32.mrb[0].mxu0
    %v390 = vpop.f32.mrb[0].mxu0
    %391 = vdwg.mxu0
    %v392 = vadd.f32 %v336, %v387
    %v393 = vmul.f32 %v392, 0.5
    %v394 = vtanh.pop %v393
    %v395 = vmul.f32 %v394, 0.5
    %v396 = vadd.f32 %v395, 0.5
    %v397 = vtanh.pop %v392
    %v398 = vmul.f32 %v396, 0.0
    %400 = vrot.lane.b32.xlu0 %v397, 64
    %v401 = vpop.permute.xlu0 %400
    %v403 = vmul.f32 %v396, %v401
    %405 = vrot.lane.b32.xlu0 %v403, 32
    %v406 = vpop.permute.xlu0 %405
    %v408 = vadd.f32 %v398, %v406
    %v409 = vtanh.pop %v408
    %411 = vrot.lane.b32.xlu0 %v409, 64
    %v412 = vpop.permute.xlu0 %411
    %v414 = vmul.f32 %v396, %v412
    %vm415 = vcmp.gt.s32.totalorder %v91, 0
    %v416 = vsel %vm415, 1, 0
    %417 = vset.pattern.permute.xlu0 0
    %418 = vperm.xlu0 %417, %v416
    %v419 = vpop.permute.xlu0 %418
    %vm420 = vcmp.eq.s32.totalorder %v419, 1
    %v421 = vsel %vm420, %v414, 0.0
    %v422 = vsel %vm420, %v408, 0.0
    %424 = vrot.lane.b32.xlu0 %v421, 32
    %v425 = vpop.permute.xlu0 %424
    %427 = vst.msk [vmem:[#allocation2] sm:$0xff] %vm143, %v425
    %s428 = scalar_lea.vmem [#allocation5], 56
    %v429 = vld [vmem:[%s428] sm:$0xff]
    %v434 = vunpack.c.l.b16 %v332
    %v435 = vunpack.c.l.b16 %v333
    %v436 = vunpack.c.l.b16 %v334
    %v437 = vunpack.c.l.b16 %v335
    %v438 = vpack.c.b16 %v435, %v434
    %v439 = vpack.c.b16 %v437, %v436
    %442 = vmatprep.subr.bf16.mxu0 0
    %443 = vmatpush1.bf16.msra.mxu0 %v438
    %444 = vmatprep.subr.bf16.mxu0 0
    %445 = vmatpush1.bf16.msra.mxu0 %v439
    %446 = vmatprep.subr.bf16.mxu0 0
    %447 = vmatpush1.bf16.msra.mxu0 0
    %448 = vmatprep.subr.bf16.mxu0 0
    %449 = vmatpush1.bf16.msra.mxu0 0
    %450 = vmatprep.subr.bf16.mxu0 0
    %451 = vmatpush1.bf16.msra.mxu0 0
    %452 = vmatprep.subr.bf16.mxu0 0
    %453 = vmatpush1.bf16.msra.mxu0 0
    %454 = vmatprep.subr.bf16.mxu0 0
    %455 = vmatpush1.bf16.msra.mxu0 0
    %456 = vmatprep.subr.bf16.mxu0 0
    %457 = vmatpush1.bf16.msra.mxu0 0
    %458 = vmatprep.subr.bf16.mxu0 0
    %459 = vmatpush1.bf16.msra.mxu0 0
    %460 = vmatprep.subr.bf16.mxu0 0
    %461 = vmatpush1.bf16.msra.mxu0 0
    %462 = vmatprep.subr.bf16.mxu0 0
    %463 = vmatpush1.bf16.msra.mxu0 0
    %464 = vmatprep.subr.bf16.mxu0 0
    %465 = vmatpush1.bf16.msra.mxu0 0
    %466 = vmatprep.subr.bf16.mxu0 0
    %467 = vmatpush1.bf16.msra.mxu0 0
    %468 = vmatprep.subr.bf16.mxu0 0
    %469 = vmatpush1.bf16.msra.mxu0 0
    %470 = vmatprep.subr.bf16.mxu0 0
    %471 = vmatpush1.bf16.msra.mxu0 0
    %472 = vmatprep.subr.bf16.mxu0 0
    %473 = vmatpush1.bf16.msra.mxu0 0
    %474 = vmatprep.mubr.bf16.mxu0 0
    %475 = vmatmul.mubr.bf16.gmra.mrb[0].mxu0 %v350
    %v476 = vpop.f32.mrb[0].mxu0
    %v477 = vadd.f32 0.0, %v476
    %v478 = vpop.f32.mrb[0].mxu0
    %v479 = vpop.f32.mrb[0].mxu0
    %v480 = vpop.f32.mrb[0].mxu0
    %481 = vdwg.mxu0
    %v482 = vadd.f32 %v429, %v477
    %v483 = vmul.f32 %v482, 0.5
    %v484 = vtanh.pop %v483
    %v485 = vmul.f32 %v484, 0.5
    %v486 = vadd.f32 %v485, 0.5
    %v487 = vtanh.pop %v482
    %v488 = vmul.f32 %v486, 0.0
    %490 = vrot.lane.b32.xlu0 %v487, 64
    %v491 = vpop.permute.xlu0 %490
    %v493 = vmul.f32 %v486, %v491
    %495 = vrot.lane.b32.xlu0 %v493, 32
    %v496 = vpop.permute.xlu0 %495
    %v498 = vadd.f32 %v488, %v496
    %v499 = vtanh.pop %v498
    %501 = vrot.lane.b32.xlu0 %v499, 64
    %v502 = vpop.permute.xlu0 %501
    %v504 = vmul.f32 %v486, %v502
    %vm505 = vcmp.gt.s32.totalorder %v91, 7
    %v506 = vsel %vm505, 1, 0
    %507 = vset.pattern.permute.xlu0 0
    %508 = vperm.xlu0 %507, %v506
    %v509 = vpop.permute.xlu0 %508
    %vm510 = vcmp.eq.s32.totalorder %v509, 1
    %v511 = vsel %vm510, %v504, 0.0
    %v512 = vsel %vm510, %v498, 0.0
    %514 = vrot.lane.b32.xlu0 %v511, 32
    %v515 = vpop.permute.xlu0 %514
    %s517 = scalar_lea.vmem [#allocation3], 56
    %518 = vst.msk [vmem:[%s517] sm:$0xff] %vm143, %v515
    %s519 = scalar_lea.vmem [#allocation4], 8
    %v520 = vld [vmem:[%s519] sm:$0xff]
    %v521 = vpack.c.bf16 %v421, %v421
    %523 = vrot.lane.b32.xlu0 %v521, 32
    %v524 = vpop.permute.xlu0 %523
    %v526 = vsel %vm143, %v524, 0
    %528 = vmatprep.subr.bf16.mxu0 0
    %529 = vmatpush1.bf16.msra.mxu0 %v345
    %530 = vmatprep.subr.bf16.mxu0 0
    %531 = vmatpush1.bf16.msra.mxu0 %v346
    %532 = vmatprep.subr.bf16.mxu0 0
    %533 = vmatpush1.bf16.msra.mxu0 0
    %534 = vmatprep.subr.bf16.mxu0 0
    %535 = vmatpush1.bf16.msra.mxu0 0
    %536 = vmatprep.subr.bf16.mxu0 0
    %537 = vmatpush1.bf16.msra.mxu0 0
    %538 = vmatprep.subr.bf16.mxu0 0
    %539 = vmatpush1.bf16.msra.mxu0 0
    %540 = vmatprep.subr.bf16.mxu0 0
    %541 = vmatpush1.bf16.msra.mxu0 0
    %542 = vmatprep.subr.bf16.mxu0 0
    %543 = vmatpush1.bf16.msra.mxu0 0
    %544 = vmatprep.subr.bf16.mxu0 0
    %545 = vmatpush1.bf16.msra.mxu0 0
    %546 = vmatprep.subr.bf16.mxu0 0
    %547 = vmatpush1.bf16.msra.mxu0 0
    %548 = vmatprep.subr.bf16.mxu0 0
    %549 = vmatpush1.bf16.msra.mxu0 0
    %550 = vmatprep.subr.bf16.mxu0 0
    %551 = vmatpush1.bf16.msra.mxu0 0
    %552 = vmatprep.subr.bf16.mxu0 0
    %553 = vmatpush1.bf16.msra.mxu0 0
    %554 = vmatprep.subr.bf16.mxu0 0
    %555 = vmatpush1.bf16.msra.mxu0 0
    %556 = vmatprep.subr.bf16.mxu0 0
    %557 = vmatpush1.bf16.msra.mxu0 0
    %558 = vmatprep.subr.bf16.mxu0 0
    %559 = vmatpush1.bf16.msra.mxu0 0
    %560 = vmatprep.mubr.bf16.mxu0 0
    %561 = vmatmul.mubr.bf16.gmra.mrb[0].mxu0 %v526
    %v562 = vpop.f32.mrb[0].mxu0
    %v563 = vadd.f32 0.0, %v562
    %v564 = vpop.f32.mrb[0].mxu0
    %v565 = vpop.f32.mrb[0].mxu0
    %v566 = vpop.f32.mrb[0].mxu0
    %567 = vdwg.mxu0
    %v568 = vadd.f32 %v520, %v563
    %v569 = vmul.f32 %v568, 0.5
    %v570 = vtanh.pop %v569
    %v571 = vmul.f32 %v570, 0.5
    %v572 = vadd.f32 %v571, 0.5
    %v573 = vtanh.pop %v568
    %v574 = vmul.f32 %v572, %v422
    %576 = vrot.lane.b32.xlu0 %v573, 64
    %v577 = vpop.permute.xlu0 %576
    %v579 = vmul.f32 %v572, %v577
    %581 = vrot.lane.b32.xlu0 %v579, 32
    %v582 = vpop.permute.xlu0 %581
    %v584 = vadd.f32 %v574, %v582
    %v585 = vtanh.pop %v584
    %587 = vrot.lane.b32.xlu0 %v585, 64
    %v588 = vpop.permute.xlu0 %587
    %v590 = vmul.f32 %v572, %v588
    %vm591 = vcmp.gt.s32.totalorder %v91, 1
    %v592 = vsel %vm591, 1, 0
    %593 = vset.pattern.permute.xlu0 0
    %594 = vperm.xlu0 %593, %v592
    %v595 = vpop.permute.xlu0 %594
    %vm596 = vcmp.eq.s32.totalorder %v595, 1
    %v597 = vsel %vm596, %v590, %v421
    %v598 = vsel %vm596, %v584, %v422
    %v599 = vsel %vm596, %v590, 0.0
    %601 = vrot.lane.b32.xlu0 %v599, 32
    %v602 = vpop.permute.xlu0 %601
    %s604 = scalar_lea.vmem [#allocation2], 8
    %605 = vst.msk [vmem:[%s604] sm:$0xff] %vm143, %v602
    %s606 = scalar_lea.vmem [#allocation5], 48
    %v607 = vld [vmem:[%s606] sm:$0xff]
    %v608 = vpack.c.bf16 %v511, %v511
    %610 = vrot.lane.b32.xlu0 %v608, 32
    %v611 = vpop.permute.xlu0 %610
    %v613 = vsel %vm143, %v611, 0
    %615 = vmatprep.subr.bf16.mxu0 0
    %616 = vmatpush1.bf16.msra.mxu0 %v438
    %617 = vmatprep.subr.bf16.mxu0 0
    %618 = vmatpush1.bf16.msra.mxu0 %v439
    %619 = vmatprep.subr.bf16.mxu0 0
    %620 = vmatpush1.bf16.msra.mxu0 0
    %621 = vmatprep.subr.bf16.mxu0 0
    %622 = vmatpush1.bf16.msra.mxu0 0
    %623 = vmatprep.subr.bf16.mxu0 0
    %624 = vmatpush1.bf16.msra.mxu0 0
    %625 = vmatprep.subr.bf16.mxu0 0
    %626 = vmatpush1.bf16.msra.mxu0 0
    %627 = vmatprep.subr.bf16.mxu0 0
    %628 = vmatpush1.bf16.msra.mxu0 0
    %629 = vmatprep.subr.bf16.mxu0 0
    %630 = vmatpush1.bf16.msra.mxu0 0
    %631 = vmatprep.subr.bf16.mxu0 0
    %632 = vmatpush1.bf16.msra.mxu0 0
    %633 = vmatprep.subr.bf16.mxu0 0
    %634 = vmatpush1.bf16.msra.mxu0 0
    %635 = vmatprep.subr.bf16.mxu0 0
    %636 = vmatpush1.bf16.msra.mxu0 0
    %637 = vmatprep.subr.bf16.mxu0 0
    %638 = vmatpush1.bf16.msra.mxu0 0
    %639 = vmatprep.subr.bf16.mxu0 0
    %640 = vmatpush1.bf16.msra.mxu0 0
    %641 = vmatprep.subr.bf16.mxu0 0
    %642 = vmatpush1.bf16.msra.mxu0 0
    %643 = vmatprep.subr.bf16.mxu0 0
    %644 = vmatpush1.bf16.msra.mxu0 0
    %645 = vmatprep.subr.bf16.mxu0 0
    %646 = vmatpush1.bf16.msra.mxu0 0
    %647 = vmatprep.mubr.bf16.mxu0 0
    %648 = vmatmul.mubr.bf16.gmra.mrb[0].mxu0 %v613
    %v649 = vpop.f32.mrb[0].mxu0
    %v650 = vadd.f32 0.0, %v649
    %v651 = vpop.f32.mrb[0].mxu0
    %v652 = vpop.f32.mrb[0].mxu0
    %v653 = vpop.f32.mrb[0].mxu0
    %654 = vdwg.mxu0
    %v655 = vadd.f32 %v607, %v650
    %v656 = vmul.f32 %v655, 0.5
    %v657 = vtanh.pop %v656
    %v658 = vmul.f32 %v657, 0.5
    %v659 = vadd.f32 %v658, 0.5
    %v660 = vtanh.pop %v655
    %v661 = vmul.f32 %v659, %v512
    %663 = vrot.lane.b32.xlu0 %v660, 64
    %v664 = vpop.permute.xlu0 %663
    %v666 = vmul.f32 %v659, %v664
    %668 = vrot.lane.b32.xlu0 %v666, 32
    %v669 = vpop.permute.xlu0 %668
    %v671 = vadd.f32 %v661, %v669
    %v672 = vtanh.pop %v671
    %674 = vrot.lane.b32.xlu0 %v672, 64
    %v675 = vpop.permute.xlu0 %674
    %v677 = vmul.f32 %v659, %v675
    %vm678 = vcmp.gt.s32.totalorder %v91, 6
    %v679 = vsel %vm678, 1, 0
    %680 = vset.pattern.permute.xlu0 0
    %681 = vperm.xlu0 %680, %v679
    %v682 = vpop.permute.xlu0 %681
    %vm683 = vcmp.eq.s32.totalorder %v682, 1
    %v684 = vsel %vm683, %v677, %v511
    %v685 = vsel %vm683, %v671, %v512
    %v686 = vsel %vm683, %v677, 0.0
    %688 = vrot.lane.b32.xlu0 %v686, 32
    %v689 = vpop.permute.xlu0 %688
    %s691 = scalar_lea.vmem [#allocation3], 48
    %692 = vst.msk [vmem:[%s691] sm:$0xff] %vm143, %v689
    %s693 = scalar_lea.vmem [#allocation4], 16
    %v694 = vld [vmem:[%s693] sm:$0xff]
    %v695 = vpack.c.bf16 %v597, %v597
    %697 = vrot.lane.b32.xlu0 %v695, 32
    %v698 = vpop.permute.xlu0 %697
    %v700 = vsel %vm143, %v698, 0
    %702 = vmatprep.subr.bf16.mxu0 0
    %703 = vmatpush1.bf16.msra.mxu0 %v345
    %704 = vmatprep.subr.bf16.mxu0 0
    %705 = vmatpush1.bf16.msra.mxu0 %v346
    %706 = vmatprep.subr.bf16.mxu0 0
    %707 = vmatpush1.bf16.msra.mxu0 0
    %708 = vmatprep.subr.bf16.mxu0 0
    %709 = vmatpush1.bf16.msra.mxu0 0
    %710 = vmatprep.subr.bf16.mxu0 0
    %711 = vmatpush1.bf16.msra.mxu0 0
    %712 = vmatprep.subr.bf16.mxu0 0
    %713 = vmatpush1.bf16.msra.mxu0 0
    %714 = vmatprep.subr.bf16.mxu0 0
    %715 = vmatpush1.bf16.msra.mxu0 0
    %716 = vmatprep.subr.bf16.mxu0 0
    %717 = vmatpush1.bf16.msra.mxu0 0
    %718 = vmatprep.subr.bf16.mxu0 0
    %719 = vmatpush1.bf16.msra.mxu0 0
    %720 = vmatprep.subr.bf16.mxu0 0
    %721 = vmatpush1.bf16.msra.mxu0 0
    %722 = vmatprep.subr.bf16.mxu0 0
    %723 = vmatpush1.bf16.msra.mxu0 0
    %724 = vmatprep.subr.bf16.mxu0 0
    %725 = vmatpush1.bf16.msra.mxu0 0
    %726 = vmatprep.subr.bf16.mxu0 0
    %727 = vmatpush1.bf16.msra.mxu0 0
    %728 = vmatprep.subr.bf16.mxu0 0
    %729 = vmatpush1.bf16.msra.mxu0 0
    %730 = vmatprep.subr.bf16.mxu0 0
    %731 = vmatpush1.bf16.msra.mxu0 0
    %732 = vmatprep.subr.bf16.mxu0 0
    %733 = vmatpush1.bf16.msra.mxu0 0
    %734 = vmatprep.mubr.bf16.mxu0 0
    %735 = vmatmul.mubr.bf16.gmra.mrb[0].mxu0 %v700
    %v736 = vpop.f32.mrb[0].mxu0
    %v737 = vadd.f32 0.0, %v736
    %v738 = vpop.f32.mrb[0].mxu0
    %v739 = vpop.f32.mrb[0].mxu0
    %v740 = vpop.f32.mrb[0].mxu0
    %741 = vdwg.mxu0
    %v742 = vadd.f32 %v694, %v737
    %v743 = vmul.f32 %v742, 0.5
    %v744 = vtanh.pop %v743
    %v745 = vmul.f32 %v744, 0.5
    %v746 = vadd.f32 %v745, 0.5
    %v747 = vtanh.pop %v742
    %v748 = vmul.f32 %v746, %v598
    %750 = vrot.lane.b32.xlu0 %v747, 64
    %v751 = vpop.permute.xlu0 %750
    %v753 = vmul.f32 %v746, %v751
    %755 = vrot.lane.b32.xlu0 %v753, 32
    %v756 = vpop.permute.xlu0 %755
    %v758 = vadd.f32 %v748, %v756
    %v759 = vtanh.pop %v758
    %761 = vrot.lane.b32.xlu0 %v759, 64
    %v762 = vpop.permute.xlu0 %761
    %v764 = vmul.f32 %v746, %v762
    %vm765 = vcmp.gt.s32.totalorder %v91, 2
    %v766 = vsel %vm765, 1, 0
    %767 = vset.pattern.permute.xlu0 0
    %768 = vperm.xlu0 %767, %v766
    %v769 = vpop.permute.xlu0 %768
    %vm770 = vcmp.eq.s32.totalorder %v769, 1
    %v771 = vsel %vm770, %v764, %v597
    %v772 = vsel %vm770, %v758, %v598
    %v773 = vsel %vm770, %v764, 0.0
    %775 = vrot.lane.b32.xlu0 %v773, 32
    %v776 = vpop.permute.xlu0 %775
    %s778 = scalar_lea.vmem [#allocation2], 16
    %779 = vst.msk [vmem:[%s778] sm:$0xff] %vm143, %v776
    %s780 = scalar_lea.vmem [#allocation5], 40
    %v781 = vld [vmem:[%s780] sm:$0xff]
    %v782 = vpack.c.bf16 %v684, %v684
    %784 = vrot.lane.b32.xlu0 %v782, 32
    %v785 = vpop.permute.xlu0 %784
    %v787 = vsel %vm143, %v785, 0
    %789 = vmatprep.subr.bf16.mxu0 0
    %790 = vmatpush1.bf16.msra.mxu0 %v438
    %791 = vmatprep.subr.bf16.mxu0 0
    %792 = vmatpush1.bf16.msra.mxu0 %v439
    %793 = vmatprep.subr.bf16.mxu0 0
    %794 = vmatpush1.bf16.msra.mxu0 0
    %795 = vmatprep.subr.bf16.mxu0 0
    %796 = vmatpush1.bf16.msra.mxu0 0
    %797 = vmatprep.subr.bf16.mxu0 0
    %798 = vmatpush1.bf16.msra.mxu0 0
    %799 = vmatprep.subr.bf16.mxu0 0
    %800 = vmatpush1.bf16.msra.mxu0 0
    %801 = vmatprep.subr.bf16.mxu0 0
    %802 = vmatpush1.bf16.msra.mxu0 0
    %803 = vmatprep.subr.bf16.mxu0 0
    %804 = vmatpush1.bf16.msra.mxu0 0
    %805 = vmatprep.subr.bf16.mxu0 0
    %806 = vmatpush1.bf16.msra.mxu0 0
    %807 = vmatprep.subr.bf16.mxu0 0
    %808 = vmatpush1.bf16.msra.mxu0 0
    %809 = vmatprep.subr.bf16.mxu0 0
    %810 = vmatpush1.bf16.msra.mxu0 0
    %811 = vmatprep.subr.bf16.mxu0 0
    %812 = vmatpush1.bf16.msra.mxu0 0
    %813 = vmatprep.subr.bf16.mxu0 0
    %814 = vmatpush1.bf16.msra.mxu0 0
    %815 = vmatprep.subr.bf16.mxu0 0
    %816 = vmatpush1.bf16.msra.mxu0 0
    %817 = vmatprep.subr.bf16.mxu0 0
    %818 = vmatpush1.bf16.msra.mxu0 0
    %819 = vmatprep.subr.bf16.mxu0 0
    %820 = vmatpush1.bf16.msra.mxu0 0
    %821 = vmatprep.mubr.bf16.mxu0 0
    %822 = vmatmul.mubr.bf16.gmra.mrb[0].mxu0 %v787
    %v823 = vpop.f32.mrb[0].mxu0
    %v824 = vadd.f32 0.0, %v823
    %v825 = vpop.f32.mrb[0].mxu0
    %v826 = vpop.f32.mrb[0].mxu0
    %v827 = vpop.f32.mrb[0].mxu0
    %828 = vdwg.mxu0
    %v829 = vadd.f32 %v781, %v824
    %v830 = vmul.f32 %v829, 0.5
    %v831 = vtanh.pop %v830
    %v832 = vmul.f32 %v831, 0.5
    %v833 = vadd.f32 %v832, 0.5
    %v834 = vtanh.pop %v829
    %v835 = vmul.f32 %v833, %v685
    %837 = vrot.lane.b32.xlu0 %v834, 64
    %v838 = vpop.permute.xlu0 %837
    %v840 = vmul.f32 %v833, %v838
    %842 = vrot.lane.b32.xlu0 %v840, 32
    %v843 = vpop.permute.xlu0 %842
    %v845 = vadd.f32 %v835, %v843
    %v846 = vtanh.pop %v845
    %848 = vrot.lane.b32.xlu0 %v846, 64
    %v849 = vpop.permute.xlu0 %848
    %v851 = vmul.f32 %v833, %v849
    %vm852 = vcmp.gt.s32.totalorder %v91, 5
    %v853 = vsel %vm852, 1, 0
    %854 = vset.pattern.permute.xlu0 0
    %855 = vperm.xlu0 %854, %v853
    %v856 = vpop.permute.xlu0 %855
    %vm857 = vcmp.eq.s32.totalorder %v856, 1
    %v858 = vsel %vm857, %v851, %v684
    %v859 = vsel %vm857, %v845, %v685
    %v860 = vsel %vm857, %v851, 0.0
    %862 = vrot.lane.b32.xlu0 %v860, 32
    %v863 = vpop.permute.xlu0 %862
    %s865 = scalar_lea.vmem [#allocation3], 40
    %866 = vst.msk [vmem:[%s865] sm:$0xff] %vm143, %v863
    %s867 = scalar_lea.vmem [#allocation4], 24
    %v868 = vld [vmem:[%s867] sm:$0xff]
    %v869 = vpack.c.bf16 %v771, %v771
    %871 = vrot.lane.b32.xlu0 %v869, 32
    %v872 = vpop.permute.xlu0 %871
    %v874 = vsel %vm143, %v872, 0
    %876 = vmatprep.subr.bf16.mxu0 0
    %877 = vmatpush1.bf16.msra.mxu0 %v345
    %878 = vmatprep.subr.bf16.mxu0 0
    %879 = vmatpush1.bf16.msra.mxu0 %v346
    %880 = vmatprep.subr.bf16.mxu0 0
    %881 = vmatpush1.bf16.msra.mxu0 0
    %882 = vmatprep.subr.bf16.mxu0 0
    %883 = vmatpush1.bf16.msra.mxu0 0
    %884 = vmatprep.subr.bf16.mxu0 0
    %885 = vmatpush1.bf16.msra.mxu0 0
    %886 = vmatprep.subr.bf16.mxu0 0
    %887 = vmatpush1.bf16.msra.mxu0 0
    %888 = vmatprep.subr.bf16.mxu0 0
    %889 = vmatpush1.bf16.msra.mxu0 0
    %890 = vmatprep.subr.bf16.mxu0 0
    %891 = vmatpush1.bf16.msra.mxu0 0
    %892 = vmatprep.subr.bf16.mxu0 0
    %893 = vmatpush1.bf16.msra.mxu0 0
    %894 = vmatprep.subr.bf16.mxu0 0
    %895 = vmatpush1.bf16.msra.mxu0 0
    %896 = vmatprep.subr.bf16.mxu0 0
    %897 = vmatpush1.bf16.msra.mxu0 0
    %898 = vmatprep.subr.bf16.mxu0 0
    %899 = vmatpush1.bf16.msra.mxu0 0
    %900 = vmatprep.subr.bf16.mxu0 0
    %901 = vmatpush1.bf16.msra.mxu0 0
    %902 = vmatprep.subr.bf16.mxu0 0
    %903 = vmatpush1.bf16.msra.mxu0 0
    %904 = vmatprep.subr.bf16.mxu0 0
    %905 = vmatpush1.bf16.msra.mxu0 0
    %906 = vmatprep.subr.bf16.mxu0 0
    %907 = vmatpush1.bf16.msra.mxu0 0
    %908 = vmatprep.mubr.bf16.mxu0 0
    %909 = vmatmul.mubr.bf16.gmra.mrb[0].mxu0 %v874
    %v910 = vpop.f32.mrb[0].mxu0
    %v911 = vadd.f32 0.0, %v910
    %v912 = vpop.f32.mrb[0].mxu0
    %v913 = vpop.f32.mrb[0].mxu0
    %v914 = vpop.f32.mrb[0].mxu0
    %915 = vdwg.mxu0
    %v916 = vadd.f32 %v868, %v911
    %v917 = vmul.f32 %v916, 0.5
    %v918 = vtanh.pop %v917
    %v919 = vmul.f32 %v918, 0.5
    %v920 = vadd.f32 %v919, 0.5
    %v921 = vtanh.pop %v916
    %v922 = vmul.f32 %v920, %v772
    %924 = vrot.lane.b32.xlu0 %v921, 64
    %v925 = vpop.permute.xlu0 %924
    %v927 = vmul.f32 %v920, %v925
    %929 = vrot.lane.b32.xlu0 %v927, 32
    %v930 = vpop.permute.xlu0 %929
    %v932 = vadd.f32 %v922, %v930
    %v933 = vtanh.pop %v932
    %935 = vrot.lane.b32.xlu0 %v933, 64
    %v936 = vpop.permute.xlu0 %935
    %v938 = vmul.f32 %v920, %v936
    %vm939 = vcmp.gt.s32.totalorder %v91, 3
    %v940 = vsel %vm939, 1, 0
    %941 = vset.pattern.permute.xlu0 0
    %942 = vperm.xlu0 %941, %v940
    %v943 = vpop.permute.xlu0 %942
    %vm944 = vcmp.eq.s32.totalorder %v943, 1
    %v945 = vsel %vm944, %v938, %v771
    %v946 = vsel %vm944, %v932, %v772
    %v947 = vsel %vm944, %v938, 0.0
    %949 = vrot.lane.b32.xlu0 %v947, 32
    %v950 = vpop.permute.xlu0 %949
    %s952 = scalar_lea.vmem [#allocation2], 24
    %953 = vst.msk [vmem:[%s952] sm:$0xff] %vm143, %v950
    %s954 = scalar_lea.vmem [#allocation5], 32
    %v955 = vld [vmem:[%s954] sm:$0xff]
    %v956 = vpack.c.bf16 %v858, %v858
    %958 = vrot.lane.b32.xlu0 %v956, 32
    %v959 = vpop.permute.xlu0 %958
    %v961 = vsel %vm143, %v959, 0
    %963 = vmatprep.subr.bf16.mxu0 0
    %964 = vmatpush1.bf16.msra.mxu0 %v438
    %965 = vmatprep.subr.bf16.mxu0 0
    %966 = vmatpush1.bf16.msra.mxu0 %v439
    %967 = vmatprep.subr.bf16.mxu0 0
    %968 = vmatpush1.bf16.msra.mxu0 0
    %969 = vmatprep.subr.bf16.mxu0 0
    %970 = vmatpush1.bf16.msra.mxu0 0
    %971 = vmatprep.subr.bf16.mxu0 0
    %972 = vmatpush1.bf16.msra.mxu0 0
    %973 = vmatprep.subr.bf16.mxu0 0
    %974 = vmatpush1.bf16.msra.mxu0 0
    %975 = vmatprep.subr.bf16.mxu0 0
    %976 = vmatpush1.bf16.msra.mxu0 0
    %977 = vmatprep.subr.bf16.mxu0 0
    %978 = vmatpush1.bf16.msra.mxu0 0
    %979 = vmatprep.subr.bf16.mxu0 0
    %980 = vmatpush1.bf16.msra.mxu0 0
    %981 = vmatprep.subr.bf16.mxu0 0
    %982 = vmatpush1.bf16.msra.mxu0 0
    %983 = vmatprep.subr.bf16.mxu0 0
    %984 = vmatpush1.bf16.msra.mxu0 0
    %985 = vmatprep.subr.bf16.mxu0 0
    %986 = vmatpush1.bf16.msra.mxu0 0
    %987 = vmatprep.subr.bf16.mxu0 0
    %988 = vmatpush1.bf16.msra.mxu0 0
    %989 = vmatprep.subr.bf16.mxu0 0
    %990 = vmatpush1.bf16.msra.mxu0 0
    %991 = vmatprep.subr.bf16.mxu0 0
    %992 = vmatpush1.bf16.msra.mxu0 0
    %993 = vmatprep.subr.bf16.mxu0 0
    %994 = vmatpush1.bf16.msra.mxu0 0
    %995 = vmatprep.mubr.bf16.mxu0 0
    %996 = vmatmul.mubr.bf16.gmra.mrb[0].mxu0 %v961
    %v997 = vpop.f32.mrb[0].mxu0
    %v998 = vadd.f32 0.0, %v997
    %v999 = vpop.f32.mrb[0].mxu0
    %v1000 = vpop.f32.mrb[0].mxu0
    %v1001 = vpop.f32.mrb[0].mxu0
    %1002 = vdwg.mxu0
    %v1003 = vadd.f32 %v955, %v998
    %v1004 = vmul.f32 %v1003, 0.5
    %v1005 = vtanh.pop %v1004
    %v1006 = vmul.f32 %v1005, 0.5
    %v1007 = vadd.f32 %v1006, 0.5
    %v1008 = vtanh.pop %v1003
    %v1009 = vmul.f32 %v1007, %v859
    %1011 = vrot.lane.b32.xlu0 %v1008, 64
    %v1012 = vpop.permute.xlu0 %1011
    %v1014 = vmul.f32 %v1007, %v1012
    %1016 = vrot.lane.b32.xlu0 %v1014, 32
    %v1017 = vpop.permute.xlu0 %1016
    %v1019 = vadd.f32 %v1009, %v1017
    %v1020 = vtanh.pop %v1019
    %1022 = vrot.lane.b32.xlu0 %v1020, 64
    %v1023 = vpop.permute.xlu0 %1022
    %v1025 = vmul.f32 %v1007, %v1023
    %vm1026 = vcmp.gt.s32.totalorder %v91, 4
    %v1027 = vsel %vm1026, 1, 0
    %1028 = vset.pattern.permute.xlu0 0
    %1029 = vperm.xlu0 %1028, %v1027
    %v1030 = vpop.permute.xlu0 %1029
    %vm1031 = vcmp.eq.s32.totalorder %v1030, 1
    %v1032 = vsel %vm1031, %v1025, %v858
    %v1033 = vsel %vm1031, %v1019, %v859
    %v1034 = vsel %vm1031, %v1025, 0.0
    %1036 = vrot.lane.b32.xlu0 %v1034, 32
    %v1037 = vpop.permute.xlu0 %1036
    %s1039 = scalar_lea.vmem [#allocation3], 32
    %1040 = vst.msk [vmem:[%s1039] sm:$0xff] %vm143, %v1037
    %s1041 = scalar_lea.vmem [#allocation4], 32
    %v1042 = vld [vmem:[%s1041] sm:$0xff]
    %v1043 = vpack.c.bf16 %v945, %v945
    %1045 = vrot.lane.b32.xlu0 %v1043, 32
    %v1046 = vpop.permute.xlu0 %1045
    %v1048 = vsel %vm143, %v1046, 0
    %1050 = vmatprep.subr.bf16.mxu0 0
    %1051 = vmatpush1.bf16.msra.mxu0 %v345
    %1052 = vmatprep.subr.bf16.mxu0 0
    %1053 = vmatpush1.bf16.msra.mxu0 %v346
    %1054 = vmatprep.subr.bf16.mxu0 0
    %1055 = vmatpush1.bf16.msra.mxu0 0
    %1056 = vmatprep.subr.bf16.mxu0 0
    %1057 = vmatpush1.bf16.msra.mxu0 0
    %1058 = vmatprep.subr.bf16.mxu0 0
    %1059 = vmatpush1.bf16.msra.mxu0 0
    %1060 = vmatprep.subr.bf16.mxu0 0
    %1061 = vmatpush1.bf16.msra.mxu0 0
    %1062 = vmatprep.subr.bf16.mxu0 0
    %1063 = vmatpush1.bf16.msra.mxu0 0
    %1064 = vmatprep.subr.bf16.mxu0 0
    %1065 = vmatpush1.bf16.msra.mxu0 0
    %1066 = vmatprep.subr.bf16.mxu0 0
    %1067 = vmatpush1.bf16.msra.mxu0 0
    %1068 = vmatprep.subr.bf16.mxu0 0
    %1069 = vmatpush1.bf16.msra.mxu0 0
    %1070 = vmatprep.subr.bf16.mxu0 0
    %1071 = vmatpush1.bf16.msra.mxu0 0
    %1072 = vmatprep.subr.bf16.mxu0 0
    %1073 = vmatpush1.bf16.msra.mxu0 0
    %1074 = vmatprep.subr.bf16.mxu0 0
    %1075 = vmatpush1.bf16.msra.mxu0 0
    %1076 = vmatprep.subr.bf16.mxu0 0
    %1077 = vmatpush1.bf16.msra.mxu0 0
    %1078 = vmatprep.subr.bf16.mxu0 0
    %1079 = vmatpush1.bf16.msra.mxu0 0
    %1080 = vmatprep.subr.bf16.mxu0 0
    %1081 = vmatpush1.bf16.msra.mxu0 0
    %1082 = vmatprep.mubr.bf16.mxu0 0
    %1083 = vmatmul.mubr.bf16.gmra.mrb[0].mxu0 %v1048
    %v1084 = vpop.f32.mrb[0].mxu0
    %v1085 = vadd.f32 0.0, %v1084
    %v1086 = vpop.f32.mrb[0].mxu0
    %v1087 = vpop.f32.mrb[0].mxu0
    %v1088 = vpop.f32.mrb[0].mxu0
    %1089 = vdwg.mxu0
    %v1090 = vadd.f32 %v1042, %v1085
    %v1091 = vmul.f32 %v1090, 0.5
    %v1092 = vtanh.pop %v1091
    %v1093 = vmul.f32 %v1092, 0.5
    %v1094 = vadd.f32 %v1093, 0.5
    %v1095 = vtanh.pop %v1090
    %v1096 = vmul.f32 %v1094, %v946
    %1098 = vrot.lane.b32.xlu0 %v1095, 64
    %v1099 = vpop.permute.xlu0 %1098
    %v1101 = vmul.f32 %v1094, %v1099
    %1103 = vrot.lane.b32.xlu0 %v1101, 32
    %v1104 = vpop.permute.xlu0 %1103
    %v1106 = vadd.f32 %v1096, %v1104
    %v1107 = vtanh.pop %v1106
    %1109 = vrot.lane.b32.xlu0 %v1107, 64
    %v1110 = vpop.permute.xlu0 %1109
    %v1112 = vmul.f32 %v1094, %v1110
    %v1113 = vsel %vm1031, %v1112, %v945
    %v1114 = vsel %vm1031, %v1106, %v946
    %v1115 = vsel %vm1031, %v1112, 0.0
    %1117 = vrot.lane.b32.xlu0 %v1115, 32
    %v1118 = vpop.permute.xlu0 %1117
    %s1120 = scalar_lea.vmem [#allocation2], 32
    %1121 = vst.msk [vmem:[%s1120] sm:$0xff] %vm143, %v1118
    %s1122 = scalar_lea.vmem [#allocation5], 24
    %v1123 = vld [vmem:[%s1122] sm:$0xff]
    %v1124 = vpack.c.bf16 %v1032, %v1032
    %1126 = vrot.lane.b32.xlu0 %v1124, 32
    %v1127 = vpop.permute.xlu0 %1126
    %v1129 = vsel %vm143, %v1127, 0
    %1131 = vmatprep.subr.bf16.mxu0 0
    %1132 = vmatpush1.bf16.msra.mxu0 %v438
    %1133 = vmatprep.subr.bf16.mxu0 0
    %1134 = vmatpush1.bf16.msra.mxu0 %v439
    %1135 = vmatprep.subr.bf16.mxu0 0
    %1136 = vmatpush1.bf16.msra.mxu0 0
    %1137 = vmatprep.subr.bf16.mxu0 0
    %1138 = vmatpush1.bf16.msra.mxu0 0
    %1139 = vmatprep.subr.bf16.mxu0 0
    %1140 = vmatpush1.bf16.msra.mxu0 0
    %1141 = vmatprep.subr.bf16.mxu0 0
    %1142 = vmatpush1.bf16.msra.mxu0 0
    %1143 = vmatprep.subr.bf16.mxu0 0
    %1144 = vmatpush1.bf16.msra.mxu0 0
    %1145 = vmatprep.subr.bf16.mxu0 0
    %1146 = vmatpush1.bf16.msra.mxu0 0
    %1147 = vmatprep.subr.bf16.mxu0 0
    %1148 = vmatpush1.bf16.msra.mxu0 0
    %1149 = vmatprep.subr.bf16.mxu0 0
    %1150 = vmatpush1.bf16.msra.mxu0 0
    %1151 = vmatprep.subr.bf16.mxu0 0
    %1152 = vmatpush1.bf16.msra.mxu0 0
    %1153 = vmatprep.subr.bf16.mxu0 0
    %1154 = vmatpush1.bf16.msra.mxu0 0
    %1155 = vmatprep.subr.bf16.mxu0 0
    %1156 = vmatpush1.bf16.msra.mxu0 0
    %1157 = vmatprep.subr.bf16.mxu0 0
    %1158 = vmatpush1.bf16.msra.mxu0 0
    %1159 = vmatprep.subr.bf16.mxu0 0
    %1160 = vmatpush1.bf16.msra.mxu0 0
    %1161 = vmatprep.subr.bf16.mxu0 0
    %1162 = vmatpush1.bf16.msra.mxu0 0
    %1163 = vmatprep.mubr.bf16.mxu0 0
    %1164 = vmatmul.mubr.bf16.gmra.mrb[0].mxu0 %v1129
    %v1165 = vpop.f32.mrb[0].mxu0
    %v1166 = vadd.f32 0.0, %v1165
    %v1167 = vpop.f32.mrb[0].mxu0
    %v1168 = vpop.f32.mrb[0].mxu0
    %v1169 = vpop.f32.mrb[0].mxu0
    %1170 = vdwg.mxu0
    %v1171 = vadd.f32 %v1123, %v1166
    %v1172 = vmul.f32 %v1171, 0.5
    %v1173 = vtanh.pop %v1172
    %v1174 = vmul.f32 %v1173, 0.5
    %v1175 = vadd.f32 %v1174, 0.5
    %v1176 = vtanh.pop %v1171
    %v1177 = vmul.f32 %v1175, %v1033
    %1179 = vrot.lane.b32.xlu0 %v1176, 64
    %v1180 = vpop.permute.xlu0 %1179
    %v1182 = vmul.f32 %v1175, %v1180
    %1184 = vrot.lane.b32.xlu0 %v1182, 32
    %v1185 = vpop.permute.xlu0 %1184
    %v1187 = vadd.f32 %v1177, %v1185
    %v1188 = vtanh.pop %v1187
    %1190 = vrot.lane.b32.xlu0 %v1188, 64
    %v1191 = vpop.permute.xlu0 %1190
    %v1193 = vmul.f32 %v1175, %v1191
    %v1194 = vsel %vm944, %v1193, %v1032
    %v1195 = vsel %vm944, %v1187, %v1033
    %v1196 = vsel %vm944, %v1193, 0.0
    %1198 = vrot.lane.b32.xlu0 %v1196, 32
    %v1199 = vpop.permute.xlu0 %1198
    %s1201 = scalar_lea.vmem [#allocation3], 24
    %1202 = vst.msk [vmem:[%s1201] sm:$0xff] %vm143, %v1199
    %s1203 = scalar_lea.vmem [#allocation4], 40
    %v1204 = vld [vmem:[%s1203] sm:$0xff]
    %v1205 = vpack.c.bf16 %v1113, %v1113
    %1207 = vrot.lane.b32.xlu0 %v1205, 32
    %v1208 = vpop.permute.xlu0 %1207
    %v1210 = vsel %vm143, %v1208, 0
    %1212 = vmatprep.subr.bf16.mxu0 0
    %1213 = vmatpush1.bf16.msra.mxu0 %v345
    %1214 = vmatprep.subr.bf16.mxu0 0
    %1215 = vmatpush1.bf16.msra.mxu0 %v346
    %1216 = vmatprep.subr.bf16.mxu0 0
    %1217 = vmatpush1.bf16.msra.mxu0 0
    %1218 = vmatprep.subr.bf16.mxu0 0
    %1219 = vmatpush1.bf16.msra.mxu0 0
    %1220 = vmatprep.subr.bf16.mxu0 0
    %1221 = vmatpush1.bf16.msra.mxu0 0
    %1222 = vmatprep.subr.bf16.mxu0 0
    %1223 = vmatpush1.bf16.msra.mxu0 0
    %1224 = vmatprep.subr.bf16.mxu0 0
    %1225 = vmatpush1.bf16.msra.mxu0 0
    %1226 = vmatprep.subr.bf16.mxu0 0
    %1227 = vmatpush1.bf16.msra.mxu0 0
    %1228 = vmatprep.subr.bf16.mxu0 0
    %1229 = vmatpush1.bf16.msra.mxu0 0
    %1230 = vmatprep.subr.bf16.mxu0 0
    %1231 = vmatpush1.bf16.msra.mxu0 0
    %1232 = vmatprep.subr.bf16.mxu0 0
    %1233 = vmatpush1.bf16.msra.mxu0 0
    %1234 = vmatprep.subr.bf16.mxu0 0
    %1235 = vmatpush1.bf16.msra.mxu0 0
    %1236 = vmatprep.subr.bf16.mxu0 0
    %1237 = vmatpush1.bf16.msra.mxu0 0
    %1238 = vmatprep.subr.bf16.mxu0 0
    %1239 = vmatpush1.bf16.msra.mxu0 0
    %1240 = vmatprep.subr.bf16.mxu0 0
    %1241 = vmatpush1.bf16.msra.mxu0 0
    %1242 = vmatprep.subr.bf16.mxu0 0
    %1243 = vmatpush1.bf16.msra.mxu0 0
    %1244 = vmatprep.mubr.bf16.mxu0 0
    %1245 = vmatmul.mubr.bf16.gmra.mrb[0].mxu0 %v1210
    %v1246 = vpop.f32.mrb[0].mxu0
    %v1247 = vadd.f32 0.0, %v1246
    %v1248 = vpop.f32.mrb[0].mxu0
    %v1249 = vpop.f32.mrb[0].mxu0
    %v1250 = vpop.f32.mrb[0].mxu0
    %1251 = vdwg.mxu0
    %v1252 = vadd.f32 %v1204, %v1247
    %v1253 = vmul.f32 %v1252, 0.5
    %v1254 = vtanh.pop %v1253
    %v1255 = vmul.f32 %v1254, 0.5
    %v1256 = vadd.f32 %v1255, 0.5
    %v1257 = vtanh.pop %v1252
    %v1258 = vmul.f32 %v1256, %v1114
    %1260 = vrot.lane.b32.xlu0 %v1257, 64
    %v1261 = vpop.permute.xlu0 %1260
    %v1263 = vmul.f32 %v1256, %v1261
    %1265 = vrot.lane.b32.xlu0 %v1263, 32
    %v1266 = vpop.permute.xlu0 %1265
    %v1268 = vadd.f32 %v1258, %v1266
    %v1269 = vtanh.pop %v1268
    %1271 = vrot.lane.b32.xlu0 %v1269, 64
    %v1272 = vpop.permute.xlu0 %1271
    %v1274 = vmul.f32 %v1256, %v1272
    %v1275 = vsel %vm857, %v1274, %v1113
    %v1276 = vsel %vm857, %v1268, %v1114
    %v1277 = vsel %vm857, %v1274, 0.0
    %1279 = vrot.lane.b32.xlu0 %v1277, 32
    %v1280 = vpop.permute.xlu0 %1279
    %s1282 = scalar_lea.vmem [#allocation2], 40
    %1283 = vst.msk [vmem:[%s1282] sm:$0xff] %vm143, %v1280
    %s1284 = scalar_lea.vmem [#allocation5], 16
    %v1285 = vld [vmem:[%s1284] sm:$0xff]
    %v1286 = vpack.c.bf16 %v1194, %v1194
    %1288 = vrot.lane.b32.xlu0 %v1286, 32
    %v1289 = vpop.permute.xlu0 %1288
    %v1291 = vsel %vm143, %v1289, 0
    %1293 = vmatprep.subr.bf16.mxu0 0
    %1294 = vmatpush1.bf16.msra.mxu0 %v438
    %1295 = vmatprep.subr.bf16.mxu0 0
    %1296 = vmatpush1.bf16.msra.mxu0 %v439
    %1297 = vmatprep.subr.bf16.mxu0 0
    %1298 = vmatpush1.bf16.msra.mxu0 0
    %1299 = vmatprep.subr.bf16.mxu0 0
    %1300 = vmatpush1.bf16.msra.mxu0 0
    %1301 = vmatprep.subr.bf16.mxu0 0
    %1302 = vmatpush1.bf16.msra.mxu0 0
    %1303 = vmatprep.subr.bf16.mxu0 0
    %1304 = vmatpush1.bf16.msra.mxu0 0
    %1305 = vmatprep.subr.bf16.mxu0 0
    %1306 = vmatpush1.bf16.msra.mxu0 0
    %1307 = vmatprep.subr.bf16.mxu0 0
    %1308 = vmatpush1.bf16.msra.mxu0 0
    %1309 = vmatprep.subr.bf16.mxu0 0
    %1310 = vmatpush1.bf16.msra.mxu0 0
    %1311 = vmatprep.subr.bf16.mxu0 0
    %1312 = vmatpush1.bf16.msra.mxu0 0
    %1313 = vmatprep.subr.bf16.mxu0 0
    %1314 = vmatpush1.bf16.msra.mxu0 0
    %1315 = vmatprep.subr.bf16.mxu0 0
    %1316 = vmatpush1.bf16.msra.mxu0 0
    %1317 = vmatprep.subr.bf16.mxu0 0
    %1318 = vmatpush1.bf16.msra.mxu0 0
    %1319 = vmatprep.subr.bf16.mxu0 0
    %1320 = vmatpush1.bf16.msra.mxu0 0
    %1321 = vmatprep.subr.bf16.mxu0 0
    %1322 = vmatpush1.bf16.msra.mxu0 0
    %1323 = vmatprep.subr.bf16.mxu0 0
    %1324 = vmatpush1.bf16.msra.mxu0 0
    %1325 = vmatprep.mubr.bf16.mxu0 0
    %1326 = vmatmul.mubr.bf16.gmra.mrb[0].mxu0 %v1291
    %v1327 = vpop.f32.mrb[0].mxu0
    %v1328 = vadd.f32 0.0, %v1327
    %v1329 = vpop.f32.mrb[0].mxu0
    %v1330 = vpop.f32.mrb[0].mxu0
    %v1331 = vpop.f32.mrb[0].mxu0
    %1332 = vdwg.mxu0
    %v1333 = vadd.f32 %v1285, %v1328
    %v1334 = vmul.f32 %v1333, 0.5
    %v1335 = vtanh.pop %v1334
    %v1336 = vmul.f32 %v1335, 0.5
    %v1337 = vadd.f32 %v1336, 0.5
    %v1338 = vtanh.pop %v1333
    %v1339 = vmul.f32 %v1337, %v1195
    %1341 = vrot.lane.b32.xlu0 %v1338, 64
    %v1342 = vpop.permute.xlu0 %1341
    %v1344 = vmul.f32 %v1337, %v1342
    %1346 = vrot.lane.b32.xlu0 %v1344, 32
    %v1347 = vpop.permute.xlu0 %1346
    %v1349 = vadd.f32 %v1339, %v1347
    %v1350 = vtanh.pop %v1349
    %1352 = vrot.lane.b32.xlu0 %v1350, 64
    %v1353 = vpop.permute.xlu0 %1352
    %v1355 = vmul.f32 %v1337, %v1353
    %v1356 = vsel %vm770, %v1355, %v1194
    %v1357 = vsel %vm770, %v1349, %v1195
    %v1358 = vsel %vm770, %v1355, 0.0
    %1360 = vrot.lane.b32.xlu0 %v1358, 32
    %v1361 = vpop.permute.xlu0 %1360
    %s1363 = scalar_lea.vmem [#allocation3], 16
    %1364 = vst.msk [vmem:[%s1363] sm:$0xff] %vm143, %v1361
    %s1365 = scalar_lea.vmem [#allocation4], 48
    %v1366 = vld [vmem:[%s1365] sm:$0xff]
    %v1367 = vpack.c.bf16 %v1275, %v1275
    %1369 = vrot.lane.b32.xlu0 %v1367, 32
    %v1370 = vpop.permute.xlu0 %1369
    %v1372 = vsel %vm143, %v1370, 0
    %1374 = vmatprep.subr.bf16.mxu0 0
    %1375 = vmatpush1.bf16.msra.mxu0 %v345
    %1376 = vmatprep.subr.bf16.mxu0 0
    %1377 = vmatpush1.bf16.msra.mxu0 %v346
    %1378 = vmatprep.subr.bf16.mxu0 0
    %1379 = vmatpush1.bf16.msra.mxu0 0
    %1380 = vmatprep.subr.bf16.mxu0 0
    %1381 = vmatpush1.bf16.msra.mxu0 0
    %1382 = vmatprep.subr.bf16.mxu0 0
    %1383 = vmatpush1.bf16.msra.mxu0 0
    %1384 = vmatprep.subr.bf16.mxu0 0
    %1385 = vmatpush1.bf16.msra.mxu0 0
    %1386 = vmatprep.subr.bf16.mxu0 0
    %1387 = vmatpush1.bf16.msra.mxu0 0
    %1388 = vmatprep.subr.bf16.mxu0 0
    %1389 = vmatpush1.bf16.msra.mxu0 0
    %1390 = vmatprep.subr.bf16.mxu0 0
    %1391 = vmatpush1.bf16.msra.mxu0 0
    %1392 = vmatprep.subr.bf16.mxu0 0
    %1393 = vmatpush1.bf16.msra.mxu0 0
    %1394 = vmatprep.subr.bf16.mxu0 0
    %1395 = vmatpush1.bf16.msra.mxu0 0
    %1396 = vmatprep.subr.bf16.mxu0 0
    %1397 = vmatpush1.bf16.msra.mxu0 0
    %1398 = vmatprep.subr.bf16.mxu0 0
    %1399 = vmatpush1.bf16.msra.mxu0 0
    %1400 = vmatprep.subr.bf16.mxu0 0
    %1401 = vmatpush1.bf16.msra.mxu0 0
    %1402 = vmatprep.subr.bf16.mxu0 0
    %1403 = vmatpush1.bf16.msra.mxu0 0
    %1404 = vmatprep.subr.bf16.mxu0 0
    %1405 = vmatpush1.bf16.msra.mxu0 0
    %1406 = vmatprep.mubr.bf16.mxu0 0
    %1407 = vmatmul.mubr.bf16.gmra.mrb[0].mxu0 %v1372
    %v1408 = vpop.f32.mrb[0].mxu0
    %v1409 = vadd.f32 0.0, %v1408
    %v1410 = vpop.f32.mrb[0].mxu0
    %v1411 = vpop.f32.mrb[0].mxu0
    %v1412 = vpop.f32.mrb[0].mxu0
    %1413 = vdwg.mxu0
    %v1414 = vadd.f32 %v1366, %v1409
    %v1415 = vmul.f32 %v1414, 0.5
    %v1416 = vtanh.pop %v1415
    %v1417 = vmul.f32 %v1416, 0.5
    %v1418 = vadd.f32 %v1417, 0.5
    %v1419 = vtanh.pop %v1414
    %v1420 = vmul.f32 %v1418, %v1276
    %1422 = vrot.lane.b32.xlu0 %v1419, 64
    %v1423 = vpop.permute.xlu0 %1422
    %v1425 = vmul.f32 %v1418, %v1423
    %1427 = vrot.lane.b32.xlu0 %v1425, 32
    %v1428 = vpop.permute.xlu0 %1427
    %v1430 = vadd.f32 %v1420, %v1428
    %v1431 = vtanh.pop %v1430
    %1433 = vrot.lane.b32.xlu0 %v1431, 64
    %v1434 = vpop.permute.xlu0 %1433
    %v1436 = vmul.f32 %v1418, %v1434
    %v1437 = vsel %vm683, %v1436, %v1275
    %v1438 = vsel %vm683, %v1430, %v1276
    %v1439 = vsel %vm683, %v1436, 0.0
    %1441 = vrot.lane.b32.xlu0 %v1439, 32
    %v1442 = vpop.permute.xlu0 %1441
    %s1444 = scalar_lea.vmem [#allocation2], 48
    %1445 = vst.msk [vmem:[%s1444] sm:$0xff] %vm143, %v1442
    %s1446 = scalar_lea.vmem [#allocation5], 8
    %v1447 = vld [vmem:[%s1446] sm:$0xff]
    %v1448 = vpack.c.bf16 %v1356, %v1356
    %1450 = vrot.lane.b32.xlu0 %v1448, 32
    %v1451 = vpop.permute.xlu0 %1450
    %v1453 = vsel %vm143, %v1451, 0
    %1455 = vmatprep.subr.bf16.mxu0 0
    %1456 = vmatpush1.bf16.msra.mxu0 %v438
    %1457 = vmatprep.subr.bf16.mxu0 0
    %1458 = vmatpush1.bf16.msra.mxu0 %v439
    %1459 = vmatprep.subr.bf16.mxu0 0
    %1460 = vmatpush1.bf16.msra.mxu0 0
    %1461 = vmatprep.subr.bf16.mxu0 0
    %1462 = vmatpush1.bf16.msra.mxu0 0
    %1463 = vmatprep.subr.bf16.mxu0 0
    %1464 = vmatpush1.bf16.msra.mxu0 0
    %1465 = vmatprep.subr.bf16.mxu0 0
    %1466 = vmatpush1.bf16.msra.mxu0 0
    %1467 = vmatprep.subr.bf16.mxu0 0
    %1468 = vmatpush1.bf16.msra.mxu0 0
    %1469 = vmatprep.subr.bf16.mxu0 0
    %1470 = vmatpush1.bf16.msra.mxu0 0
    %1471 = vmatprep.subr.bf16.mxu0 0
    %1472 = vmatpush1.bf16.msra.mxu0 0
    %1473 = vmatprep.subr.bf16.mxu0 0
    %1474 = vmatpush1.bf16.msra.mxu0 0
    %1475 = vmatprep.subr.bf16.mxu0 0
    %1476 = vmatpush1.bf16.msra.mxu0 0
    %1477 = vmatprep.subr.bf16.mxu0 0
    %1478 = vmatpush1.bf16.msra.mxu0 0
    %1479 = vmatprep.subr.bf16.mxu0 0
    %1480 = vmatpush1.bf16.msra.mxu0 0
    %1481 = vmatprep.subr.bf16.mxu0 0
    %1482 = vmatpush1.bf16.msra.mxu0 0
    %1483 = vmatprep.subr.bf16.mxu0 0
    %1484 = vmatpush1.bf16.msra.mxu0 0
    %1485 = vmatprep.subr.bf16.mxu0 0
    %1486 = vmatpush1.bf16.msra.mxu0 0
    %1487 = vmatprep.mubr.bf16.mxu0 0
    %1488 = vmatmul.mubr.bf16.gmra.mrb[0].mxu0 %v1453
    %v1489 = vpop.f32.mrb[0].mxu0
    %v1490 = vadd.f32 0.0, %v1489
    %v1491 = vpop.f32.mrb[0].mxu0
    %v1492 = vpop.f32.mrb[0].mxu0
    %v1493 = vpop.f32.mrb[0].mxu0
    %1494 = vdwg.mxu0
    %v1495 = vadd.f32 %v1447, %v1490
    %v1496 = vmul.f32 %v1495, 0.5
    %v1497 = vtanh.pop %v1496
    %v1498 = vmul.f32 %v1497, 0.5
    %v1499 = vadd.f32 %v1498, 0.5
    %v1500 = vtanh.pop %v1495
    %v1501 = vmul.f32 %v1499, %v1357
    %1503 = vrot.lane.b32.xlu0 %v1500, 64
    %v1504 = vpop.permute.xlu0 %1503
    %v1506 = vmul.f32 %v1499, %v1504
    %1508 = vrot.lane.b32.xlu0 %v1506, 32
    %v1509 = vpop.permute.xlu0 %1508
    %v1511 = vadd.f32 %v1501, %v1509
    %v1512 = vtanh.pop %v1511
    %1514 = vrot.lane.b32.xlu0 %v1512, 64
    %v1515 = vpop.permute.xlu0 %1514
    %v1517 = vmul.f32 %v1499, %v1515
    %v1518 = vsel %vm596, %v1517, %v1356
    %v1519 = vsel %vm596, %v1511, %v1357
    %v1520 = vsel %vm596, %v1517, 0.0
    %1522 = vrot.lane.b32.xlu0 %v1520, 32
    %v1523 = vpop.permute.xlu0 %1522
    %s1525 = scalar_lea.vmem [#allocation3], 8
    %1526 = vst.msk [vmem:[%s1525] sm:$0xff] %vm143, %v1523
    %s1527 = scalar_lea.vmem [#allocation4], 56
    %v1528 = vld [vmem:[%s1527] sm:$0xff]
    %v1529 = vpack.c.bf16 %v1437, %v1437
    %1531 = vrot.lane.b32.xlu0 %v1529, 32
    %v1532 = vpop.permute.xlu0 %1531
    %v1534 = vsel %vm143, %v1532, 0
    %1536 = vmatprep.subr.bf16.mxu0 0
    %1537 = vmatpush1.bf16.msra.mxu0 %v345
    %1538 = vmatprep.subr.bf16.mxu0 0
    %1539 = vmatpush1.bf16.msra.mxu0 %v346
    %1540 = vmatprep.subr.bf16.mxu0 0
    %1541 = vmatpush1.bf16.msra.mxu0 0
    %1542 = vmatprep.subr.bf16.mxu0 0
    %1543 = vmatpush1.bf16.msra.mxu0 0
    %1544 = vmatprep.subr.bf16.mxu0 0
    %1545 = vmatpush1.bf16.msra.mxu0 0
    %1546 = vmatprep.subr.bf16.mxu0 0
    %1547 = vmatpush1.bf16.msra.mxu0 0
    %1548 = vmatprep.subr.bf16.mxu0 0
    %1549 = vmatpush1.bf16.msra.mxu0 0
    %1550 = vmatprep.subr.bf16.mxu0 0
    %1551 = vmatpush1.bf16.msra.mxu0 0
    %1552 = vmatprep.subr.bf16.mxu0 0
    %1553 = vmatpush1.bf16.msra.mxu0 0
    %1554 = vmatprep.subr.bf16.mxu0 0
    %1555 = vmatpush1.bf16.msra.mxu0 0
    %1556 = vmatprep.subr.bf16.mxu0 0
    %1557 = vmatpush1.bf16.msra.mxu0 0
    %1558 = vmatprep.subr.bf16.mxu0 0
    %1559 = vmatpush1.bf16.msra.mxu0 0
    %1560 = vmatprep.subr.bf16.mxu0 0
    %1561 = vmatpush1.bf16.msra.mxu0 0
    %1562 = vmatprep.subr.bf16.mxu0 0
    %1563 = vmatpush1.bf16.msra.mxu0 0
    %1564 = vmatprep.subr.bf16.mxu0 0
    %1565 = vmatpush1.bf16.msra.mxu0 0
    %1566 = vmatprep.subr.bf16.mxu0 0
    %1567 = vmatpush1.bf16.msra.mxu0 0
    %1568 = vmatprep.mubr.bf16.mxu0 0
    %1569 = vmatmul.mubr.bf16.gmra.mrb[0].mxu0 %v1534
    %v1570 = vpop.f32.mrb[0].mxu0
    %v1571 = vadd.f32 0.0, %v1570
    %v1572 = vpop.f32.mrb[0].mxu0
    %v1573 = vpop.f32.mrb[0].mxu0
    %v1574 = vpop.f32.mrb[0].mxu0
    %1575 = vdwg.mxu0
    %v1576 = vadd.f32 %v1528, %v1571
    %v1577 = vmul.f32 %v1576, 0.5
    %v1578 = vtanh.pop %v1577
    %v1579 = vmul.f32 %v1578, 0.5
    %v1580 = vadd.f32 %v1579, 0.5
    %v1581 = vtanh.pop %v1576
    %v1582 = vmul.f32 %v1580, %v1438
    %1584 = vrot.lane.b32.xlu0 %v1581, 64
    %v1585 = vpop.permute.xlu0 %1584
    %v1587 = vmul.f32 %v1580, %v1585
    %1589 = vrot.lane.b32.xlu0 %v1587, 32
    %v1590 = vpop.permute.xlu0 %1589
    %v1592 = vadd.f32 %v1582, %v1590
    %v1593 = vtanh.pop %v1592
    %1595 = vrot.lane.b32.xlu0 %v1593, 64
    %v1596 = vpop.permute.xlu0 %1595
    %v1598 = vmul.f32 %v1580, %v1596
    %v1599 = vsel %vm510, %v1598, 0.0
    %1601 = vrot.lane.b32.xlu0 %v1599, 32
    %v1602 = vpop.permute.xlu0 %1601
    %s1604 = scalar_lea.vmem [#allocation2], 56
    %1605 = vst.msk [vmem:[%s1604] sm:$0xff] %vm143, %v1602
    %v1606 = vld [vmem:[#allocation5] sm:$0xff]
    %v1607 = vpack.c.bf16 %v1518, %v1518
    %1609 = vrot.lane.b32.xlu0 %v1607, 32
    %v1610 = vpop.permute.xlu0 %1609
    %v1612 = vsel %vm143, %v1610, 0
    %1614 = vmatprep.subr.bf16.mxu0 0
    %1615 = vmatpush1.bf16.msra.mxu0 %v438
    %1616 = vmatprep.subr.bf16.mxu0 0
    %1617 = vmatpush1.bf16.msra.mxu0 %v439
    %1618 = vmatprep.subr.bf16.mxu0 0
    %1619 = vmatpush1.bf16.msra.mxu0 0
    %1620 = vmatprep.subr.bf16.mxu0 0
    %1621 = vmatpush1.bf16.msra.mxu0 0
    %1622 = vmatprep.subr.bf16.mxu0 0
    %1623 = vmatpush1.bf16.msra.mxu0 0
    %1624 = vmatprep.subr.bf16.mxu0 0
    %1625 = vmatpush1.bf16.msra.mxu0 0
    %1626 = vmatprep.subr.bf16.mxu0 0
    %1627 = vmatpush1.bf16.msra.mxu0 0
    %1628 = vmatprep.subr.bf16.mxu0 0
    %1629 = vmatpush1.bf16.msra.mxu0 0
    %1630 = vmatprep.subr.bf16.mxu0 0
    %1631 = vmatpush1.bf16.msra.mxu0 0
    %1632 = vmatprep.subr.bf16.mxu0 0
    %1633 = vmatpush1.bf16.msra.mxu0 0
    %1634 = vmatprep.subr.bf16.mxu0 0
    %1635 = vmatpush1.bf16.msra.mxu0 0
    %1636 = vmatprep.subr.bf16.mxu0 0
    %1637 = vmatpush1.bf16.msra.mxu0 0
    %1638 = vmatprep.subr.bf16.mxu0 0
    %1639 = vmatpush1.bf16.msra.mxu0 0
    %1640 = vmatprep.subr.bf16.mxu0 0
    %1641 = vmatpush1.bf16.msra.mxu0 0
    %1642 = vmatprep.subr.bf16.mxu0 0
    %1643 = vmatpush1.bf16.msra.mxu0 0
    %1644 = vmatprep.subr.bf16.mxu0 0
    %1645 = vmatpush1.bf16.msra.mxu0 0
    %1646 = vmatprep.mubr.bf16.mxu0 0
    %1647 = vmatmul.mubr.bf16.gmra.mrb[0].mxu0 %v1612
    %v1648 = vpop.f32.mrb[0].mxu0
    %v1649 = vadd.f32 0.0, %v1648
    %v1650 = vpop.f32.mrb[0].mxu0
    %v1651 = vpop.f32.mrb[0].mxu0
    %v1652 = vpop.f32.mrb[0].mxu0
    %1653 = vdwg.mxu0
    %v1654 = vadd.f32 %v1606, %v1649
    %v1655 = vmul.f32 %v1654, 0.5
    %v1656 = vtanh.pop %v1655
    %v1657 = vmul.f32 %v1656, 0.5
    %v1658 = vadd.f32 %v1657, 0.5
    %v1659 = vtanh.pop %v1654
    %v1660 = vmul.f32 %v1658, %v1519
    %1662 = vrot.lane.b32.xlu0 %v1659, 64
    %v1663 = vpop.permute.xlu0 %1662
    %v1665 = vmul.f32 %v1658, %v1663
    %1667 = vrot.lane.b32.xlu0 %v1665, 32
    %v1668 = vpop.permute.xlu0 %1667
    %v1670 = vadd.f32 %v1660, %v1668
    %v1671 = vtanh.pop %v1670
    %1673 = vrot.lane.b32.xlu0 %v1671, 64
    %v1674 = vpop.permute.xlu0 %1673
    %v1676 = vmul.f32 %v1658, %v1674
    %v1677 = vsel %vm420, %v1676, 0.0
    %1679 = vrot.lane.b32.xlu0 %v1677, 32
    %v1680 = vpop.permute.xlu0 %1679
    %1682 = vst.msk [vmem:[#allocation3] sm:$0xff] %vm143, %v1680
    %v1683 = vld [vmem:[#allocation2] sm:$0xff]
    %v1684 = vld [vmem:[#allocation2 + $0x8] sm:$0xff]
    %v1685 = vld [vmem:[#allocation2 + $0x10] sm:$0xff]
    %v1686 = vld [vmem:[#allocation2 + $0x18] sm:$0xff]
    %v1687 = vld [vmem:[#allocation2 + $0x20] sm:$0xff]
    %v1688 = vld [vmem:[#allocation2 + $0x28] sm:$0xff]
    %v1689 = vld [vmem:[#allocation2 + $0x30] sm:$0xff]
    %v1690 = vld [vmem:[#allocation2 + $0x38] sm:$0xff]
    %v1691 = vpack.c.bf16 %v1684, %v1683
    %v1692 = vpack.c.bf16 %v1686, %v1685
    %v1693 = vpack.c.bf16 %v1688, %v1687
    %v1694 = vpack.c.bf16 %v1690, %v1689
    %v1695 = vld [vmem:[#allocation3] sm:$0xff]
    %v1696 = vld [vmem:[#allocation3 + $0x8] sm:$0xff]
    %v1697 = vld [vmem:[#allocation3 + $0x10] sm:$0xff]
    %v1698 = vld [vmem:[#allocation3 + $0x18] sm:$0xff]
    %v1699 = vld [vmem:[#allocation3 + $0x20] sm:$0xff]
    %v1700 = vld [vmem:[#allocation3 + $0x28] sm:$0xff]
    %v1701 = vld [vmem:[#allocation3 + $0x30] sm:$0xff]
    %v1702 = vld [vmem:[#allocation3 + $0x38] sm:$0xff]
    %v1703 = vpack.c.bf16 %v1696, %v1695
    %v1704 = vpack.c.bf16 %v1698, %v1697
    %v1705 = vpack.c.bf16 %v1700, %v1699
    %v1706 = vpack.c.bf16 %v1702, %v1701
    %v1707 = vld [vmem:[%s5] sm:$0xf]
    %v1708 = vld [vmem:[%s5 + $0x4] sm:$0xf]
    %v1709 = vld [vmem:[%s5 + $0x8] sm:$0xf]
    %v1710 = vld [vmem:[%s5 + $0xc] sm:$0xf]
    %v1711 = vld [vmem:[%s5 + $0x10] sm:$0xf]
    %v1712 = vld [vmem:[%s5 + $0x14] sm:$0xf]
    %v1713 = vld [vmem:[%s5 + $0x18] sm:$0xf]
    %v1714 = vld [vmem:[%s5 + $0x1c] sm:$0xf]
    %v1719 = vunpack.c.l.b16 %v1711
    %v1720 = vunpack.c.l.b16 %v1712
    %v1721 = vunpack.c.l.b16 %v1713
    %v1722 = vunpack.c.l.b16 %v1714
    %v1723 = vpack.c.b16 %v1720, %v1719
    %v1724 = vpack.c.b16 %v1722, %v1721
    %v1728 = vsel %vm143, %v1703, 0
    %v1731 = vsel %vm143, %v1704, 0
    %v1734 = vsel %vm143, %v1705, 0
    %v1737 = vsel %vm143, %v1706, 0
    %1739 = vmatprep.subr.bf16.mxu0 0
    %1740 = vmatpush1.bf16.msra.mxu0 %v1723
    %1741 = vmatprep.subr.bf16.mxu0 0
    %1742 = vmatpush1.bf16.msra.mxu0 %v1724
    %1743 = vmatprep.subr.bf16.mxu0 0
    %1744 = vmatpush1.bf16.msra.mxu0 0
    %1745 = vmatprep.subr.bf16.mxu0 0
    %1746 = vmatpush1.bf16.msra.mxu0 0
    %1747 = vmatprep.subr.bf16.mxu0 0
    %1748 = vmatpush1.bf16.msra.mxu0 0
    %1749 = vmatprep.subr.bf16.mxu0 0
    %1750 = vmatpush1.bf16.msra.mxu0 0
    %1751 = vmatprep.subr.bf16.mxu0 0
    %1752 = vmatpush1.bf16.msra.mxu0 0
    %1753 = vmatprep.subr.bf16.mxu0 0
    %1754 = vmatpush1.bf16.msra.mxu0 0
    %1755 = vmatprep.subr.bf16.mxu0 0
    %1756 = vmatpush1.bf16.msra.mxu0 0
    %1757 = vmatprep.subr.bf16.mxu0 0
    %1758 = vmatpush1.bf16.msra.mxu0 0
    %1759 = vmatprep.subr.bf16.mxu0 0
    %1760 = vmatpush1.bf16.msra.mxu0 0
    %1761 = vmatprep.subr.bf16.mxu0 0
    %1762 = vmatpush1.bf16.msra.mxu0 0
    %1763 = vmatprep.subr.bf16.mxu0 0
    %1764 = vmatpush1.bf16.msra.mxu0 0
    %1765 = vmatprep.subr.bf16.mxu0 0
    %1766 = vmatpush1.bf16.msra.mxu0 0
    %1767 = vmatprep.subr.bf16.mxu0 0
    %1768 = vmatpush1.bf16.msra.mxu0 0
    %1769 = vmatprep.subr.bf16.mxu0 0
    %1770 = vmatpush1.bf16.msra.mxu0 0
    %1771 = vmatprep.mubr.bf16.mxu0 0
    %1772 = vmatmul.mubr.bf16.gmra.mrb[0].mxu0 %v1728
    %v1773 = vpop.f32.mrb[0].mxu0
    %v1774 = vadd.f32 0.0, %v1773
    %v1775 = vpop.f32.mrb[0].mxu0
    %v1776 = vpop.f32.mrb[0].mxu0
    %v1777 = vadd.f32 0.0, %v1776
    %v1778 = vpop.f32.mrb[0].mxu0
    %1779 = vmatprep.mubr.bf16.mxu0 0
    %1780 = vmatmul.mubr.bf16.gmra.mrb[0].mxu0 %v1731
    %v1781 = vpop.f32.mrb[0].mxu0
    %v1782 = vadd.f32 0.0, %v1781
    %v1783 = vpop.f32.mrb[0].mxu0
    %v1784 = vpop.f32.mrb[0].mxu0
    %v1785 = vadd.f32 0.0, %v1784
    %v1786 = vpop.f32.mrb[0].mxu0
    %1787 = vmatprep.mubr.bf16.mxu0 0
    %1788 = vmatmul.mubr.bf16.gmra.mrb[0].mxu0 %v1734
    %v1789 = vpop.f32.mrb[0].mxu0
    %v1790 = vadd.f32 0.0, %v1789
    %v1791 = vpop.f32.mrb[0].mxu0
    %v1792 = vpop.f32.mrb[0].mxu0
    %v1793 = vadd.f32 0.0, %v1792
    %v1794 = vpop.f32.mrb[0].mxu0
    %1795 = vmatprep.mubr.bf16.mxu0 0
    %1796 = vmatmul.mubr.bf16.gmra.mrb[0].mxu0 %v1737
    %v1797 = vpop.f32.mrb[0].mxu0
    %v1798 = vadd.f32 0.0, %v1797
    %v1799 = vpop.f32.mrb[0].mxu0
    %v1800 = vpop.f32.mrb[0].mxu0
    %v1801 = vadd.f32 0.0, %v1800
    %v1802 = vpop.f32.mrb[0].mxu0
    %1803 = vdwg.mxu0
    %v1808 = vunpack.c.l.b16 %v1707
    %v1809 = vunpack.c.l.b16 %v1708
    %v1810 = vunpack.c.l.b16 %v1709
    %v1811 = vunpack.c.l.b16 %v1710
    %v1812 = vpack.c.b16 %v1809, %v1808
    %v1813 = vpack.c.b16 %v1811, %v1810
    %v1817 = vsel %vm143, %v1691, 0
    %v1820 = vsel %vm143, %v1692, 0
    %v1823 = vsel %vm143, %v1693, 0
    %v1826 = vsel %vm143, %v1694, 0
    %1828 = vmatprep.subr.bf16.mxu0 0
    %1829 = vmatpush1.bf16.msra.mxu0 %v1812
    %1830 = vmatprep.subr.bf16.mxu0 0
    %1831 = vmatpush1.bf16.msra.mxu0 %v1813
    %1832 = vmatprep.subr.bf16.mxu0 0
    %1833 = vmatpush1.bf16.msra.mxu0 0
    %1834 = vmatprep.subr.bf16.mxu0 0
    %1835 = vmatpush1.bf16.msra.mxu0 0
    %1836 = vmatprep.subr.bf16.mxu0 0
    %1837 = vmatpush1.bf16.msra.mxu0 0
    %1838 = vmatprep.subr.bf16.mxu0 0
    %1839 = vmatpush1.bf16.msra.mxu0 0
    %1840 = vmatprep.subr.bf16.mxu0 0
    %1841 = vmatpush1.bf16.msra.mxu0 0
    %1842 = vmatprep.subr.bf16.mxu0 0
    %1843 = vmatpush1.bf16.msra.mxu0 0
    %1844 = vmatprep.subr.bf16.mxu0 0
    %1845 = vmatpush1.bf16.msra.mxu0 0
    %1846 = vmatprep.subr.bf16.mxu0 0
    %1847 = vmatpush1.bf16.msra.mxu0 0
    %1848 = vmatprep.subr.bf16.mxu0 0
    %1849 = vmatpush1.bf16.msra.mxu0 0
    %1850 = vmatprep.subr.bf16.mxu0 0
    %1851 = vmatpush1.bf16.msra.mxu0 0
    %1852 = vmatprep.subr.bf16.mxu0 0
    %1853 = vmatpush1.bf16.msra.mxu0 0
    %1854 = vmatprep.subr.bf16.mxu0 0
    %1855 = vmatpush1.bf16.msra.mxu0 0
    %1856 = vmatprep.subr.bf16.mxu0 0
    %1857 = vmatpush1.bf16.msra.mxu0 0
    %1858 = vmatprep.subr.bf16.mxu0 0
    %1859 = vmatpush1.bf16.msra.mxu0 0
    %1860 = vmatprep.mubr.bf16.mxu0 0
    %1861 = vmatmul.mubr.bf16.gmra.mrb[0].mxu0 %v1817
    %v1862 = vpop.f32.mrb[0].mxu0
    %v1863 = vadd.f32 %v1774, %v1862
    %v1864 = vpop.f32.mrb[0].mxu0
    %v1865 = vpop.f32.mrb[0].mxu0
    %v1866 = vadd.f32 %v1777, %v1865
    %v1867 = vpop.f32.mrb[0].mxu0
    %1868 = vmatprep.mubr.bf16.mxu0 0
    %1869 = vmatmul.mubr.bf16.gmra.mrb[0].mxu0 %v1820
    %v1870 = vpop.f32.mrb[0].mxu0
    %v1871 = vadd.f32 %v1782, %v1870
    %v1872 = vpop.f32.mrb[0].mxu0
    %v1873 = vpop.f32.mrb[0].mxu0
    %v1874 = vadd.f32 %v1785, %v1873
    %v1875 = vpop.f32.mrb[0].mxu0
    %1876 = vmatprep.mubr.bf16.mxu0 0
    %1877 = vmatmul.mubr.bf16.gmra.mrb[0].mxu0 %v1823
    %v1878 = vpop.f32.mrb[0].mxu0
    %v1879 = vadd.f32 %v1790, %v1878
    %v1880 = vpop.f32.mrb[0].mxu0
    %v1881 = vpop.f32.mrb[0].mxu0
    %v1882 = vadd.f32 %v1793, %v1881
    %v1883 = vpop.f32.mrb[0].mxu0
    %1884 = vmatprep.mubr.bf16.mxu0 0
    %1885 = vmatmul.mubr.bf16.gmra.mrb[0].mxu0 %v1826
    %v1886 = vpop.f32.mrb[0].mxu0
    %v1887 = vadd.f32 %v1798, %v1886
    %v1888 = vpop.f32.mrb[0].mxu0
    %v1889 = vpop.f32.mrb[0].mxu0
    %v1890 = vadd.f32 %v1801, %v1889
    %v1891 = vpop.f32.mrb[0].mxu0
    %1892 = vdwg.mxu0
    %v1893 = vld [vmem:[#allocation10] sm:$0x1]
    %v1895 = vlaneseq
    %v1896 = vshrl.u32 %v1895, 7
    %v1897 = vsub.s32 0, %v1896
    %v1898 = vrot.slane %v1893, %v1897
    %v1900 = vadd.f32 %v1863, %v1898
    %v1901 = vadd.f32 %v1866, %v1898
    %v1902 = vadd.f32 %v1871, %v1898
    %v1903 = vadd.f32 %v1874, %v1898
    %v1904 = vadd.f32 %v1879, %v1898
    %v1905 = vadd.f32 %v1882, %v1898
    %v1906 = vadd.f32 %v1887, %v1898
    %v1907 = vadd.f32 %v1890, %v1898
    %1908 = vst [vmem:[#allocation4] sm:$0xff] %v1900
    %1909 = vst [vmem:[#allocation4 + $0x8] sm:$0xff] %v1901
    %1910 = vst [vmem:[#allocation4 + $0x10] sm:$0xff] %v1902
    %1911 = vst [vmem:[#allocation4 + $0x18] sm:$0xff] %v1903
    %1912 = vst [vmem:[#allocation4 + $0x20] sm:$0xff] %v1904
    %1913 = vst [vmem:[#allocation4 + $0x28] sm:$0xff] %v1905
    %1914 = vst [vmem:[#allocation4 + $0x30] sm:$0xff] %v1906
    %1915 = vst [vmem:[#allocation4 + $0x38] sm:$0xff] %v1907
    %s1916 = scalar_lea.vmem %s5, 32
    %v1917 = vld [vmem:[%s1916] sm:$0xf]
    %v1918 = vld [vmem:[%s1916 + $0x4] sm:$0xf]
    %v1919 = vld [vmem:[%s1916 + $0x8] sm:$0xf]
    %v1920 = vld [vmem:[%s1916 + $0xc] sm:$0xf]
    %v1921 = vld [vmem:[%s1916 + $0x10] sm:$0xf]
    %v1922 = vld [vmem:[%s1916 + $0x14] sm:$0xf]
    %v1923 = vld [vmem:[%s1916 + $0x18] sm:$0xf]
    %v1924 = vld [vmem:[%s1916 + $0x1c] sm:$0xf]
    %v1929 = vunpack.c.l.b16 %v1921
    %v1930 = vunpack.c.l.b16 %v1922
    %v1931 = vunpack.c.l.b16 %v1923
    %v1932 = vunpack.c.l.b16 %v1924
    %v1933 = vpack.c.b16 %v1930, %v1929
    %v1934 = vpack.c.b16 %v1932, %v1931
    %1937 = vmatprep.subr.bf16.mxu0 0
    %1938 = vmatpush1.bf16.msra.mxu0 %v1933
    %1939 = vmatprep.subr.bf16.mxu0 0
    %1940 = vmatpush1.bf16.msra.mxu0 %v1934
    %1941 = vmatprep.subr.bf16.mxu0 0
    %1942 = vmatpush1.bf16.msra.mxu0 0
    %1943 = vmatprep.subr.bf16.mxu0 0
    %1944 = vmatpush1.bf16.msra.mxu0 0
    %1945 = vmatprep.subr.bf16.mxu0 0
    %1946 = vmatpush1.bf16.msra.mxu0 0
    %1947 = vmatprep.subr.bf16.mxu0 0
    %1948 = vmatpush1.bf16.msra.mxu0 0
    %1949 = vmatprep.subr.bf16.mxu0 0
    %1950 = vmatpush1.bf16.msra.mxu0 0
    %1951 = vmatprep.subr.bf16.mxu0 0
    %1952 = vmatpush1.bf16.msra.mxu0 0
    %1953 = vmatprep.subr.bf16.mxu0 0
    %1954 = vmatpush1.bf16.msra.mxu0 0
    %1955 = vmatprep.subr.bf16.mxu0 0
    %1956 = vmatpush1.bf16.msra.mxu0 0
    %1957 = vmatprep.subr.bf16.mxu0 0
    %1958 = vmatpush1.bf16.msra.mxu0 0
    %1959 = vmatprep.subr.bf16.mxu0 0
    %1960 = vmatpush1.bf16.msra.mxu0 0
    %1961 = vmatprep.subr.bf16.mxu0 0
    %1962 = vmatpush1.bf16.msra.mxu0 0
    %1963 = vmatprep.subr.bf16.mxu0 0
    %1964 = vmatpush1.bf16.msra.mxu0 0
    %1965 = vmatprep.subr.bf16.mxu0 0
    %1966 = vmatpush1.bf16.msra.mxu0 0
    %1967 = vmatprep.subr.bf16.mxu0 0
    %1968 = vmatpush1.bf16.msra.mxu0 0
    %1969 = vmatprep.mubr.bf16.mxu0 0
    %1970 = vmatmul.mubr.bf16.gmra.mrb[0].mxu0 %v1728
    %v1971 = vpop.f32.mrb[0].mxu0
    %v1972 = vadd.f32 0.0, %v1971
    %v1973 = vpop.f32.mrb[0].mxu0
    %v1974 = vpop.f32.mrb[0].mxu0
    %v1975 = vadd.f32 0.0, %v1974
    %v1976 = vpop.f32.mrb[0].mxu0
    %1977 = vmatprep.mubr.bf16.mxu0 0
    %1978 = vmatmul.mubr.bf16.gmra.mrb[0].mxu0 %v1731
    %v1979 = vpop.f32.mrb[0].mxu0
    %v1980 = vadd.f32 0.0, %v1979
    %v1981 = vpop.f32.mrb[0].mxu0
    %v1982 = vpop.f32.mrb[0].mxu0
    %v1983 = vadd.f32 0.0, %v1982
    %v1984 = vpop.f32.mrb[0].mxu0
    %1985 = vmatprep.mubr.bf16.mxu0 0
    %1986 = vmatmul.mubr.bf16.gmra.mrb[0].mxu0 %v1734
    %v1987 = vpop.f32.mrb[0].mxu0
    %v1988 = vadd.f32 0.0, %v1987
    %v1989 = vpop.f32.mrb[0].mxu0
    %v1990 = vpop.f32.mrb[0].mxu0
    %v1991 = vadd.f32 0.0, %v1990
    %v1992 = vpop.f32.mrb[0].mxu0
    %1993 = vmatprep.mubr.bf16.mxu0 0
    %1994 = vmatmul.mubr.bf16.gmra.mrb[0].mxu0 %v1737
    %v1995 = vpop.f32.mrb[0].mxu0
    %v1996 = vadd.f32 0.0, %v1995
    %v1997 = vpop.f32.mrb[0].mxu0
    %v1998 = vpop.f32.mrb[0].mxu0
    %v1999 = vadd.f32 0.0, %v1998
    %v2000 = vpop.f32.mrb[0].mxu0
    %2001 = vdwg.mxu0
    %v2006 = vunpack.c.l.b16 %v1917
    %v2007 = vunpack.c.l.b16 %v1918
    %v2008 = vunpack.c.l.b16 %v1919
    %v2009 = vunpack.c.l.b16 %v1920
    %v2010 = vpack.c.b16 %v2007, %v2006
    %v2011 = vpack.c.b16 %v2009, %v2008
    %2014 = vmatprep.subr.bf16.mxu0 0
    %2015 = vmatpush1.bf16.msra.mxu0 %v2010
    %2016 = vmatprep.subr.bf16.mxu0 0
    %2017 = vmatpush1.bf16.msra.mxu0 %v2011
    %2018 = vmatprep.subr.bf16.mxu0 0
    %2019 = vmatpush1.bf16.msra.mxu0 0
    %2020 = vmatprep.subr.bf16.mxu0 0
    %2021 = vmatpush1.bf16.msra.mxu0 0
    %2022 = vmatprep.subr.bf16.mxu0 0
    %2023 = vmatpush1.bf16.msra.mxu0 0
    %2024 = vmatprep.subr.bf16.mxu0 0
    %2025 = vmatpush1.bf16.msra.mxu0 0
    %2026 = vmatprep.subr.bf16.mxu0 0
    %2027 = vmatpush1.bf16.msra.mxu0 0
    %2028 = vmatprep.subr.bf16.mxu0 0
    %2029 = vmatpush1.bf16.msra.mxu0 0
    %2030 = vmatprep.subr.bf16.mxu0 0
    %2031 = vmatpush1.bf16.msra.mxu0 0
    %2032 = vmatprep.subr.bf16.mxu0 0
    %2033 = vmatpush1.bf16.msra.mxu0 0
    %2034 = vmatprep.subr.bf16.mxu0 0
    %2035 = vmatpush1.bf16.msra.mxu0 0
    %2036 = vmatprep.subr.bf16.mxu0 0
    %2037 = vmatpush1.bf16.msra.mxu0 0
    %2038 = vmatprep.subr.bf16.mxu0 0
    %2039 = vmatpush1.bf16.msra.mxu0 0
    %2040 = vmatprep.subr.bf16.mxu0 0
    %2041 = vmatpush1.bf16.msra.mxu0 0
    %2042 = vmatprep.subr.bf16.mxu0 0
    %2043 = vmatpush1.bf16.msra.mxu0 0
    %2044 = vmatprep.subr.bf16.mxu0 0
    %2045 = vmatpush1.bf16.msra.mxu0 0
    %2046 = vmatprep.mubr.bf16.mxu0 0
    %2047 = vmatmul.mubr.bf16.gmra.mrb[0].mxu0 %v1817
    %v2048 = vpop.f32.mrb[0].mxu0
    %v2049 = vadd.f32 %v1972, %v2048
    %v2050 = vpop.f32.mrb[0].mxu0
    %v2051 = vpop.f32.mrb[0].mxu0
    %v2052 = vadd.f32 %v1975, %v2051
    %v2053 = vpop.f32.mrb[0].mxu0
    %2054 = vmatprep.mubr.bf16.mxu0 0
    %2055 = vmatmul.mubr.bf16.gmra.mrb[0].mxu0 %v1820
    %v2056 = vpop.f32.mrb[0].mxu0
    %v2057 = vadd.f32 %v1980, %v2056
    %v2058 = vpop.f32.mrb[0].mxu0
    %v2059 = vpop.f32.mrb[0].mxu0
    %v2060 = vadd.f32 %v1983, %v2059
    %v2061 = vpop.f32.mrb[0].mxu0
    %2062 = vmatprep.mubr.bf16.mxu0 0
    %2063 = vmatmul.mubr.bf16.gmra.mrb[0].mxu0 %v1823
    %v2064 = vpop.f32.mrb[0].mxu0
    %v2065 = vadd.f32 %v1988, %v2064
    %v2066 = vpop.f32.mrb[0].mxu0
    %v2067 = vpop.f32.mrb[0].mxu0
    %v2068 = vadd.f32 %v1991, %v2067
    %v2069 = vpop.f32.mrb[0].mxu0
    %2070 = vmatprep.mubr.bf16.mxu0 0
    %2071 = vmatmul.mubr.bf16.gmra.mrb[0].mxu0 %v1826
    %v2072 = vpop.f32.mrb[0].mxu0
    %v2073 = vadd.f32 %v1996, %v2072
    %v2074 = vpop.f32.mrb[0].mxu0
    %v2075 = vpop.f32.mrb[0].mxu0
    %v2076 = vadd.f32 %v1999, %v2075
    %v2077 = vpop.f32.mrb[0].mxu0
    %2078 = vdwg.mxu0
    %s2079 = scalar_lea.vmem [#allocation10], 1
    %v2080 = vld [vmem:[%s2079] sm:$0x1]
    %v2082 = vlaneseq
    %v2083 = vshrl.u32 %v2082, 7
    %v2084 = vsub.s32 0, %v2083
    %v2085 = vrot.slane %v2080, %v2084
    %v2087 = vadd.f32 %v2049, %v2085
    %v2088 = vadd.f32 %v2052, %v2085
    %v2089 = vadd.f32 %v2057, %v2085
    %v2090 = vadd.f32 %v2060, %v2085
    %v2091 = vadd.f32 %v2065, %v2085
    %v2092 = vadd.f32 %v2068, %v2085
    %v2093 = vadd.f32 %v2073, %v2085
    %v2094 = vadd.f32 %v2076, %v2085
    %2095 = vst [vmem:[#allocation5] sm:$0xff] %v2087
    %2096 = vst [vmem:[#allocation5 + $0x8] sm:$0xff] %v2088
    %2097 = vst [vmem:[#allocation5 + $0x10] sm:$0xff] %v2089
    %2098 = vst [vmem:[#allocation5 + $0x18] sm:$0xff] %v2090
    %2099 = vst [vmem:[#allocation5 + $0x20] sm:$0xff] %v2091
    %2100 = vst [vmem:[#allocation5 + $0x28] sm:$0xff] %v2092
    %2101 = vst [vmem:[#allocation5 + $0x30] sm:$0xff] %v2093
    %2102 = vst [vmem:[#allocation5 + $0x38] sm:$0xff] %v2094
    %v2103 = vld [vmem:[#allocation8] sm:$0xf]
    %v2104 = vld [vmem:[#allocation8 + $0x4] sm:$0xf]
    %v2105 = vld [vmem:[#allocation8 + $0x8] sm:$0xf]
    %v2106 = vld [vmem:[#allocation8 + $0xc] sm:$0xf]
    %s2107 = scalar_lea.vmem [#allocation8], 16
    %v2108 = vld [vmem:[%s2107] sm:$0xf]
    %v2109 = vld [vmem:[%s2107 + $0x4] sm:$0xf]
    %v2110 = vld [vmem:[%s2107 + $0x8] sm:$0xf]
    %v2111 = vld [vmem:[%s2107 + $0xc] sm:$0xf]
    %v2112 = vld [vmem:[#allocation4] sm:$0xff]
    %v2117 = vunpack.c.l.b16 %v2103
    %v2118 = vunpack.c.l.b16 %v2104
    %v2119 = vunpack.c.l.b16 %v2105
    %v2120 = vunpack.c.l.b16 %v2106
    %v2121 = vpack.c.b16 %v2118, %v2117
    %v2122 = vpack.c.b16 %v2120, %v2119
    %2125 = vmatprep.subr.bf16.mxu0 0
    %2126 = vmatpush1.bf16.msra.mxu0 %v2121
    %2127 = vmatprep.subr.bf16.mxu0 0
    %2128 = vmatpush1.bf16.msra.mxu0 %v2122
    %2129 = vmatprep.subr.bf16.mxu0 0
    %2130 = vmatpush1.bf16.msra.mxu0 0
    %2131 = vmatprep.subr.bf16.mxu0 0
    %2132 = vmatpush1.bf16.msra.mxu0 0
    %2133 = vmatprep.subr.bf16.mxu0 0
    %2134 = vmatpush1.bf16.msra.mxu0 0
    %2135 = vmatprep.subr.bf16.mxu0 0
    %2136 = vmatpush1.bf16.msra.mxu0 0
    %2137 = vmatprep.subr.bf16.mxu0 0
    %2138 = vmatpush1.bf16.msra.mxu0 0
    %2139 = vmatprep.subr.bf16.mxu0 0
    %2140 = vmatpush1.bf16.msra.mxu0 0
    %2141 = vmatprep.subr.bf16.mxu0 0
    %2142 = vmatpush1.bf16.msra.mxu0 0
    %2143 = vmatprep.subr.bf16.mxu0 0
    %2144 = vmatpush1.bf16.msra.mxu0 0
    %2145 = vmatprep.subr.bf16.mxu0 0
    %2146 = vmatpush1.bf16.msra.mxu0 0
    %2147 = vmatprep.subr.bf16.mxu0 0
    %2148 = vmatpush1.bf16.msra.mxu0 0
    %2149 = vmatprep.subr.bf16.mxu0 0
    %2150 = vmatpush1.bf16.msra.mxu0 0
    %2151 = vmatprep.subr.bf16.mxu0 0
    %2152 = vmatpush1.bf16.msra.mxu0 0
    %2153 = vmatprep.subr.bf16.mxu0 0
    %2154 = vmatpush1.bf16.msra.mxu0 0
    %2155 = vmatprep.subr.bf16.mxu0 0
    %2156 = vmatpush1.bf16.msra.mxu0 0
    %2157 = vmatprep.mubr.bf16.mxu0 0
    %2158 = vmatmul.mubr.bf16.gmra.mrb[0].mxu0 %v350
    %v2159 = vpop.f32.mrb[0].mxu0
    %v2160 = vadd.f32 0.0, %v2159
    %v2161 = vpop.f32.mrb[0].mxu0
    %v2162 = vpop.f32.mrb[0].mxu0
    %v2163 = vpop.f32.mrb[0].mxu0
    %2164 = vdwg.mxu0
    %v2165 = vadd.f32 %v2112, %v2160
    %v2166 = vmul.f32 %v2165, 0.5
    %v2167 = vtanh.pop %v2166
    %v2168 = vmul.f32 %v2167, 0.5
    %v2169 = vadd.f32 %v2168, 0.5
    %v2170 = vtanh.pop %v2165
    %v2171 = vmul.f32 %v2169, 0.0
    %2173 = vrot.lane.b32.xlu0 %v2170, 64
    %v2174 = vpop.permute.xlu0 %2173
    %v2176 = vmul.f32 %v2169, %v2174
    %2178 = vrot.lane.b32.xlu0 %v2176, 32
    %v2179 = vpop.permute.xlu0 %2178
    %v2181 = vadd.f32 %v2171, %v2179
    %v2182 = vtanh.pop %v2181
    %2184 = vrot.lane.b32.xlu0 %v2182, 64
    %v2185 = vpop.permute.xlu0 %2184
    %v2187 = vmul.f32 %v2169, %v2185
    %v2188 = vsel %vm420, %v2187, 0.0
    %v2189 = vsel %vm420, %v2181, 0.0
    %2191 = vrot.lane.b32.xlu0 %v2188, 32
    %v2192 = vpop.permute.xlu0 %2191
    %2194 = vst.msk [vmem:[#allocation2] sm:$0xff] %vm143, %v2192
    %v2195 = vld [vmem:[%s428] sm:$0xff]
    %v2200 = vunpack.c.l.b16 %v2108
    %v2201 = vunpack.c.l.b16 %v2109
    %v2202 = vunpack.c.l.b16 %v2110
    %v2203 = vunpack.c.l.b16 %v2111
    %v2204 = vpack.c.b16 %v2201, %v2200
    %v2205 = vpack.c.b16 %v2203, %v2202
    %2208 = vmatprep.subr.bf16.mxu0 0
    %2209 = vmatpush1.bf16.msra.mxu0 %v2204
    %2210 = vmatprep.subr.bf16.mxu0 0
    %2211 = vmatpush1.bf16.msra.mxu0 %v2205
    %2212 = vmatprep.subr.bf16.mxu0 0
    %2213 = vmatpush1.bf16.msra.mxu0 0
    %2214 = vmatprep.subr.bf16.mxu0 0
    %2215 = vmatpush1.bf16.msra.mxu0 0
    %2216 = vmatprep.subr.bf16.mxu0 0
    %2217 = vmatpush1.bf16.msra.mxu0 0
    %2218 = vmatprep.subr.bf16.mxu0 0
    %2219 = vmatpush1.bf16.msra.mxu0 0
    %2220 = vmatprep.subr.bf16.mxu0 0
    %2221 = vmatpush1.bf16.msra.mxu0 0
    %2222 = vmatprep.subr.bf16.mxu0 0
    %2223 = vmatpush1.bf16.msra.mxu0 0
    %2224 = vmatprep.subr.bf16.mxu0 0
    %2225 = vmatpush1.bf16.msra.mxu0 0
    %2226 = vmatprep.subr.bf16.mxu0 0
    %2227 = vmatpush1.bf16.msra.mxu0 0
    %2228 = vmatprep.subr.bf16.mxu0 0
    %2229 = vmatpush1.bf16.msra.mxu0 0
    %2230 = vmatprep.subr.bf16.mxu0 0
    %2231 = vmatpush1.bf16.msra.mxu0 0
    %2232 = vmatprep.subr.bf16.mxu0 0
    %2233 = vmatpush1.bf16.msra.mxu0 0
    %2234 = vmatprep.subr.bf16.mxu0 0
    %2235 = vmatpush1.bf16.msra.mxu0 0
    %2236 = vmatprep.subr.bf16.mxu0 0
    %2237 = vmatpush1.bf16.msra.mxu0 0
    %2238 = vmatprep.subr.bf16.mxu0 0
    %2239 = vmatpush1.bf16.msra.mxu0 0
    %2240 = vmatprep.mubr.bf16.mxu0 0
    %2241 = vmatmul.mubr.bf16.gmra.mrb[0].mxu0 %v350
    %v2242 = vpop.f32.mrb[0].mxu0
    %v2243 = vadd.f32 0.0, %v2242
    %v2244 = vpop.f32.mrb[0].mxu0
    %v2245 = vpop.f32.mrb[0].mxu0
    %v2246 = vpop.f32.mrb[0].mxu0
    %2247 = vdwg.mxu0
    %v2248 = vadd.f32 %v2195, %v2243
    %v2249 = vmul.f32 %v2248, 0.5
    %v2250 = vtanh.pop %v2249
    %v2251 = vmul.f32 %v2250, 0.5
    %v2252 = vadd.f32 %v2251, 0.5
    %v2253 = vtanh.pop %v2248
    %v2254 = vmul.f32 %v2252, 0.0
    %2256 = vrot.lane.b32.xlu0 %v2253, 64
    %v2257 = vpop.permute.xlu0 %2256
    %v2259 = vmul.f32 %v2252, %v2257
    %2261 = vrot.lane.b32.xlu0 %v2259, 32
    %v2262 = vpop.permute.xlu0 %2261
    %v2264 = vadd.f32 %v2254, %v2262
    %v2265 = vtanh.pop %v2264
    %2267 = vrot.lane.b32.xlu0 %v2265, 64
    %v2268 = vpop.permute.xlu0 %2267
    %v2270 = vmul.f32 %v2252, %v2268
    %v2271 = vsel %vm510, %v2270, 0.0
    %v2272 = vsel %vm510, %v2264, 0.0
    %2274 = vrot.lane.b32.xlu0 %v2271, 32
    %v2275 = vpop.permute.xlu0 %2274
    %2277 = vst.msk [vmem:[%s517] sm:$0xff] %vm143, %v2275
    %v2278 = vld [vmem:[%s519] sm:$0xff]
    %v2279 = vpack.c.bf16 %v2188, %v2188
    %2281 = vrot.lane.b32.xlu0 %v2279, 32
    %v2282 = vpop.permute.xlu0 %2281
    %v2284 = vsel %vm143, %v2282, 0
    %2286 = vmatprep.subr.bf16.mxu0 0
    %2287 = vmatpush1.bf16.msra.mxu0 %v2121
    %2288 = vmatprep.subr.bf16.mxu0 0
    %2289 = vmatpush1.bf16.msra.mxu0 %v2122
    %2290 = vmatprep.subr.bf16.mxu0 0
    %2291 = vmatpush1.bf16.msra.mxu0 0
    %2292 = vmatprep.subr.bf16.mxu0 0
    %2293 = vmatpush1.bf16.msra.mxu0 0
    %2294 = vmatprep.subr.bf16.mxu0 0
    %2295 = vmatpush1.bf16.msra.mxu0 0
    %2296 = vmatprep.subr.bf16.mxu0 0
    %2297 = vmatpush1.bf16.msra.mxu0 0
    %2298 = vmatprep.subr.bf16.mxu0 0
    %2299 = vmatpush1.bf16.msra.mxu0 0
    %2300 = vmatprep.subr.bf16.mxu0 0
    %2301 = vmatpush1.bf16.msra.mxu0 0
    %2302 = vmatprep.subr.bf16.mxu0 0
    %2303 = vmatpush1.bf16.msra.mxu0 0
    %2304 = vmatprep.subr.bf16.mxu0 0
    %2305 = vmatpush1.bf16.msra.mxu0 0
    %2306 = vmatprep.subr.bf16.mxu0 0
    %2307 = vmatpush1.bf16.msra.mxu0 0
    %2308 = vmatprep.subr.bf16.mxu0 0
    %2309 = vmatpush1.bf16.msra.mxu0 0
    %2310 = vmatprep.subr.bf16.mxu0 0
    %2311 = vmatpush1.bf16.msra.mxu0 0
    %2312 = vmatprep.subr.bf16.mxu0 0
    %2313 = vmatpush1.bf16.msra.mxu0 0
    %2314 = vmatprep.subr.bf16.mxu0 0
    %2315 = vmatpush1.bf16.msra.mxu0 0
    %2316 = vmatprep.subr.bf16.mxu0 0
    %2317 = vmatpush1.bf16.msra.mxu0 0
    %2318 = vmatprep.mubr.bf16.mxu0 0
    %2319 = vmatmul.mubr.bf16.gmra.mrb[0].mxu0 %v2284
    %v2320 = vpop.f32.mrb[0].mxu0
    %v2321 = vadd.f32 0.0, %v2320
    %v2322 = vpop.f32.mrb[0].mxu0
    %v2323 = vpop.f32.mrb[0].mxu0
    %v2324 = vpop.f32.mrb[0].mxu0
    %2325 = vdwg.mxu0
    %v2326 = vadd.f32 %v2278, %v2321
    %v2327 = vmul.f32 %v2326, 0.5
    %v2328 = vtanh.pop %v2327
    %v2329 = vmul.f32 %v2328, 0.5
    %v2330 = vadd.f32 %v2329, 0.5
    %v2331 = vtanh.pop %v2326
    %v2332 = vmul.f32 %v2330, %v2189
    %2334 = vrot.lane.b32.xlu0 %v2331, 64
    %v2335 = vpop.permute.xlu0 %2334
    %v2337 = vmul.f32 %v2330, %v2335
    %2339 = vrot.lane.b32.xlu0 %v2337, 32
    %v2340 = vpop.permute.xlu0 %2339
    %v2342 = vadd.f32 %v2332, %v2340
    %v2343 = vtanh.pop %v2342
    %2345 = vrot.lane.b32.xlu0 %v2343, 64
    %v2346 = vpop.permute.xlu0 %2345
    %v2348 = vmul.f32 %v2330, %v2346
    %v2349 = vsel %vm596, %v2348, %v2188
    %v2350 = vsel %vm596, %v2342, %v2189
    %v2351 = vsel %vm596, %v2348, 0.0
    %2353 = vrot.lane.b32.xlu0 %v2351, 32
    %v2354 = vpop.permute.xlu0 %2353
    %2356 = vst.msk [vmem:[%s604] sm:$0xff] %vm143, %v2354
    %v2357 = vld [vmem:[%s606] sm:$0xff]
    %v2358 = vpack.c.bf16 %v2271, %v2271
    %2360 = vrot.lane.b32.xlu0 %v2358, 32
    %v2361 = vpop.permute.xlu0 %2360
    %v2363 = vsel %vm143, %v2361, 0
    %2365 = vmatprep.subr.bf16.mxu0 0
    %2366 = vmatpush1.bf16.msra.mxu0 %v2204
    %2367 = vmatprep.subr.bf16.mxu0 0
    %2368 = vmatpush1.bf16.msra.mxu0 %v2205
    %2369 = vmatprep.subr.bf16.mxu0 0
    %2370 = vmatpush1.bf16.msra.mxu0 0
    %2371 = vmatprep.subr.bf16.mxu0 0
    %2372 = vmatpush1.bf16.msra.mxu0 0
    %2373 = vmatprep.subr.bf16.mxu0 0
    %2374 = vmatpush1.bf16.msra.mxu0 0
    %2375 = vmatprep.subr.bf16.mxu0 0
    %2376 = vmatpush1.bf16.msra.mxu0 0
    %2377 = vmatprep.subr.bf16.mxu0 0
    %2378 = vmatpush1.bf16.msra.mxu0 0
    %2379 = vmatprep.subr.bf16.mxu0 0
    %2380 = vmatpush1.bf16.msra.mxu0 0
    %2381 = vmatprep.subr.bf16.mxu0 0
    %2382 = vmatpush1.bf16.msra.mxu0 0
    %2383 = vmatprep.subr.bf16.mxu0 0
    %2384 = vmatpush1.bf16.msra.mxu0 0
    %2385 = vmatprep.subr.bf16.mxu0 0
    %2386 = vmatpush1.bf16.msra.mxu0 0
    %2387 = vmatprep.subr.bf16.mxu0 0
    %2388 = vmatpush1.bf16.msra.mxu0 0
    %2389 = vmatprep.subr.bf16.mxu0 0
    %2390 = vmatpush1.bf16.msra.mxu0 0
    %2391 = vmatprep.subr.bf16.mxu0 0
    %2392 = vmatpush1.bf16.msra.mxu0 0
    %2393 = vmatprep.subr.bf16.mxu0 0
    %2394 = vmatpush1.bf16.msra.mxu0 0
    %2395 = vmatprep.subr.bf16.mxu0 0
    %2396 = vmatpush1.bf16.msra.mxu0 0
    %2397 = vmatprep.mubr.bf16.mxu0 0
    %2398 = vmatmul.mubr.bf16.gmra.mrb[0].mxu0 %v2363
    %v2399 = vpop.f32.mrb[0].mxu0
    %v2400 = vadd.f32 0.0, %v2399
    %v2401 = vpop.f32.mrb[0].mxu0
    %v2402 = vpop.f32.mrb[0].mxu0
    %v2403 = vpop.f32.mrb[0].mxu0
    %2404 = vdwg.mxu0
    %v2405 = vadd.f32 %v2357, %v2400
    %v2406 = vmul.f32 %v2405, 0.5
    %v2407 = vtanh.pop %v2406
    %v2408 = vmul.f32 %v2407, 0.5
    %v2409 = vadd.f32 %v2408, 0.5
    %v2410 = vtanh.pop %v2405
    %v2411 = vmul.f32 %v2409, %v2272
    %2413 = vrot.lane.b32.xlu0 %v2410, 64
    %v2414 = vpop.permute.xlu0 %2413
    %v2416 = vmul.f32 %v2409, %v2414
    %2418 = vrot.lane.b32.xlu0 %v2416, 32
    %v2419 = vpop.permute.xlu0 %2418
    %v2421 = vadd.f32 %v2411, %v2419
    %v2422 = vtanh.pop %v2421
    %2424 = vrot.lane.b32.xlu0 %v2422, 64
    %v2425 = vpop.permute.xlu0 %2424
    %v2427 = vmul.f32 %v2409, %v2425
    %v2428 = vsel %vm683, %v2427, %v2271
    %v2429 = vsel %vm683, %v2421, %v2272
    %v2430 = vsel %vm683, %v2427, 0.0
    %2432 = vrot.lane.b32.xlu0 %v2430, 32
    %v2433 = vpop.permute.xlu0 %2432
    %2435 = vst.msk [vmem:[%s691] sm:$0xff] %vm143, %v2433
    %v2436 = vld [vmem:[%s693] sm:$0xff]
    %v2437 = vpack.c.bf16 %v2349, %v2349
    %2439 = vrot.lane.b32.xlu0 %v2437, 32
    %v2440 = vpop.permute.xlu0 %2439
    %v2442 = vsel %vm143, %v2440, 0
    %2444 = vmatprep.subr.bf16.mxu0 0
    %2445 = vmatpush1.bf16.msra.mxu0 %v2121
    %2446 = vmatprep.subr.bf16.mxu0 0
    %2447 = vmatpush1.bf16.msra.mxu0 %v2122
    %2448 = vmatprep.subr.bf16.mxu0 0
    %2449 = vmatpush1.bf16.msra.mxu0 0
    %2450 = vmatprep.subr.bf16.mxu0 0
    %2451 = vmatpush1.bf16.msra.mxu0 0
    %2452 = vmatprep.subr.bf16.mxu0 0
    %2453 = vmatpush1.bf16.msra.mxu0 0
    %2454 = vmatprep.subr.bf16.mxu0 0
    %2455 = vmatpush1.bf16.msra.mxu0 0
    %2456 = vmatprep.subr.bf16.mxu0 0
    %2457 = vmatpush1.bf16.msra.mxu0 0
    %2458 = vmatprep.subr.bf16.mxu0 0
    %2459 = vmatpush1.bf16.msra.mxu0 0
    %2460 = vmatprep.subr.bf16.mxu0 0
    %2461 = vmatpush1.bf16.msra.mxu0 0
    %2462 = vmatprep.subr.bf16.mxu0 0
    %2463 = vmatpush1.bf16.msra.mxu0 0
    %2464 = vmatprep.subr.bf16.mxu0 0
    %2465 = vmatpush1.bf16.msra.mxu0 0
    %2466 = vmatprep.subr.bf16.mxu0 0
    %2467 = vmatpush1.bf16.msra.mxu0 0
    %2468 = vmatprep.subr.bf16.mxu0 0
    %2469 = vmatpush1.bf16.msra.mxu0 0
    %2470 = vmatprep.subr.bf16.mxu0 0
    %2471 = vmatpush1.bf16.msra.mxu0 0
    %2472 = vmatprep.subr.bf16.mxu0 0
    %2473 = vmatpush1.bf16.msra.mxu0 0
    %2474 = vmatprep.subr.bf16.mxu0 0
    %2475 = vmatpush1.bf16.msra.mxu0 0
    %2476 = vmatprep.mubr.bf16.mxu0 0
    %2477 = vmatmul.mubr.bf16.gmra.mrb[0].mxu0 %v2442
    %v2478 = vpop.f32.mrb[0].mxu0
    %v2479 = vadd.f32 0.0, %v2478
    %v2480 = vpop.f32.mrb[0].mxu0
    %v2481 = vpop.f32.mrb[0].mxu0
    %v2482 = vpop.f32.mrb[0].mxu0
    %2483 = vdwg.mxu0
    %v2484 = vadd.f32 %v2436, %v2479
    %v2485 = vmul.f32 %v2484, 0.5
    %v2486 = vtanh.pop %v2485
    %v2487 = vmul.f32 %v2486, 0.5
    %v2488 = vadd.f32 %v2487, 0.5
    %v2489 = vtanh.pop %v2484
    %v2490 = vmul.f32 %v2488, %v2350
    %2492 = vrot.lane.b32.xlu0 %v2489, 64
    %v2493 = vpop.permute.xlu0 %2492
    %v2495 = vmul.f32 %v2488, %v2493
    %2497 = vrot.lane.b32.xlu0 %v2495, 32
    %v2498 = vpop.permute.xlu0 %2497
    %v2500 = vadd.f32 %v2490, %v2498
    %v2501 = vtanh.pop %v2500
    %2503 = vrot.lane.b32.xlu0 %v2501, 64
    %v2504 = vpop.permute.xlu0 %2503
    %v2506 = vmul.f32 %v2488, %v2504
    %v2507 = vsel %vm770, %v2506, %v2349
    %v2508 = vsel %vm770, %v2500, %v2350
    %v2509 = vsel %vm770, %v2506, 0.0
    %2511 = vrot.lane.b32.xlu0 %v2509, 32
    %v2512 = vpop.permute.xlu0 %2511
    %2514 = vst.msk [vmem:[%s778] sm:$0xff] %vm143, %v2512
    %v2515 = vld [vmem:[%s780] sm:$0xff]
    %v2516 = vpack.c.bf16 %v2428, %v2428
    %2518 = vrot.lane.b32.xlu0 %v2516, 32
    %v2519 = vpop.permute.xlu0 %2518
    %v2521 = vsel %vm143, %v2519, 0
    %2523 = vmatprep.subr.bf16.mxu0 0
    %2524 = vmatpush1.bf16.msra.mxu0 %v2204
    %2525 = vmatprep.subr.bf16.mxu0 0
    %2526 = vmatpush1.bf16.msra.mxu0 %v2205
    %2527 = vmatprep.subr.bf16.mxu0 0
    %2528 = vmatpush1.bf16.msra.mxu0 0
    %2529 = vmatprep.subr.bf16.mxu0 0
    %2530 = vmatpush1.bf16.msra.mxu0 0
    %2531 = vmatprep.subr.bf16.mxu0 0
    %2532 = vmatpush1.bf16.msra.mxu0 0
    %2533 = vmatprep.subr.bf16.mxu0 0
    %2534 = vmatpush1.bf16.msra.mxu0 0
    %2535 = vmatprep.subr.bf16.mxu0 0
    %2536 = vmatpush1.bf16.msra.mxu0 0
    %2537 = vmatprep.subr.bf16.mxu0 0
    %2538 = vmatpush1.bf16.msra.mxu0 0
    %2539 = vmatprep.subr.bf16.mxu0 0
    %2540 = vmatpush1.bf16.msra.mxu0 0
    %2541 = vmatprep.subr.bf16.mxu0 0
    %2542 = vmatpush1.bf16.msra.mxu0 0
    %2543 = vmatprep.subr.bf16.mxu0 0
    %2544 = vmatpush1.bf16.msra.mxu0 0
    %2545 = vmatprep.subr.bf16.mxu0 0
    %2546 = vmatpush1.bf16.msra.mxu0 0
    %2547 = vmatprep.subr.bf16.mxu0 0
    %2548 = vmatpush1.bf16.msra.mxu0 0
    %2549 = vmatprep.subr.bf16.mxu0 0
    %2550 = vmatpush1.bf16.msra.mxu0 0
    %2551 = vmatprep.subr.bf16.mxu0 0
    %2552 = vmatpush1.bf16.msra.mxu0 0
    %2553 = vmatprep.subr.bf16.mxu0 0
    %2554 = vmatpush1.bf16.msra.mxu0 0
    %2555 = vmatprep.mubr.bf16.mxu0 0
    %2556 = vmatmul.mubr.bf16.gmra.mrb[0].mxu0 %v2521
    %v2557 = vpop.f32.mrb[0].mxu0
    %v2558 = vadd.f32 0.0, %v2557
    %v2559 = vpop.f32.mrb[0].mxu0
    %v2560 = vpop.f32.mrb[0].mxu0
    %v2561 = vpop.f32.mrb[0].mxu0
    %2562 = vdwg.mxu0
    %v2563 = vadd.f32 %v2515, %v2558
    %v2564 = vmul.f32 %v2563, 0.5
    %v2565 = vtanh.pop %v2564
    %v2566 = vmul.f32 %v2565, 0.5
    %v2567 = vadd.f32 %v2566, 0.5
    %v2568 = vtanh.pop %v2563
    %v2569 = vmul.f32 %v2567, %v2429
    %2571 = vrot.lane.b32.xlu0 %v2568, 64
    %v2572 = vpop.permute.xlu0 %2571
    %v2574 = vmul.f32 %v2567, %v2572
    %2576 = vrot.lane.b32.xlu0 %v2574, 32
    %v2577 = vpop.permute.xlu0 %2576
    %v2579 = vadd.f32 %v2569, %v2577
    %v2580 = vtanh.pop %v2579
    %2582 = vrot.lane.b32.xlu0 %v2580, 64
    %v2583 = vpop.permute.xlu0 %2582
    %v2585 = vmul.f32 %v2567, %v2583
    %v2586 = vsel %vm857, %v2585, %v2428
    %v2587 = vsel %vm857, %v2579, %v2429
    %v2588 = vsel %vm857, %v2585, 0.0
    %2590 = vrot.lane.b32.xlu0 %v2588, 32
    %v2591 = vpop.permute.xlu0 %2590
    %2593 = vst.msk [vmem:[%s865] sm:$0xff] %vm143, %v2591
    %v2594 = vld [vmem:[%s867] sm:$0xff]
    %v2595 = vpack.c.bf16 %v2507, %v2507
    %2597 = vrot.lane.b32.xlu0 %v2595, 32
    %v2598 = vpop.permute.xlu0 %2597
    %v2600 = vsel %vm143, %v2598, 0
    %2602 = vmatprep.subr.bf16.mxu0 0
    %2603 = vmatpush1.bf16.msra.mxu0 %v2121
    %2604 = vmatprep.subr.bf16.mxu0 0
    %2605 = vmatpush1.bf16.msra.mxu0 %v2122
    %2606 = vmatprep.subr.bf16.mxu0 0
    %2607 = vmatpush1.bf16.msra.mxu0 0
    %2608 = vmatprep.subr.bf16.mxu0 0
    %2609 = vmatpush1.bf16.msra.mxu0 0
    %2610 = vmatprep.subr.bf16.mxu0 0
    %2611 = vmatpush1.bf16.msra.mxu0 0
    %2612 = vmatprep.subr.bf16.mxu0 0
    %2613 = vmatpush1.bf16.msra.mxu0 0
    %2614 = vmatprep.subr.bf16.mxu0 0
    %2615 = vmatpush1.bf16.msra.mxu0 0
    %2616 = vmatprep.subr.bf16.mxu0 0
    %2617 = vmatpush1.bf16.msra.mxu0 0
    %2618 = vmatprep.subr.bf16.mxu0 0
    %2619 = vmatpush1.bf16.msra.mxu0 0
    %2620 = vmatprep.subr.bf16.mxu0 0
    %2621 = vmatpush1.bf16.msra.mxu0 0
    %2622 = vmatprep.subr.bf16.mxu0 0
    %2623 = vmatpush1.bf16.msra.mxu0 0
    %2624 = vmatprep.subr.bf16.mxu0 0
    %2625 = vmatpush1.bf16.msra.mxu0 0
    %2626 = vmatprep.subr.bf16.mxu0 0
    %2627 = vmatpush1.bf16.msra.mxu0 0
    %2628 = vmatprep.subr.bf16.mxu0 0
    %2629 = vmatpush1.bf16.msra.mxu0 0
    %2630 = vmatprep.subr.bf16.mxu0 0
    %2631 = vmatpush1.bf16.msra.mxu0 0
    %2632 = vmatprep.subr.bf16.mxu0 0
    %2633 = vmatpush1.bf16.msra.mxu0 0
    %2634 = vmatprep.mubr.bf16.mxu0 0
    %2635 = vmatmul.mubr.bf16.gmra.mrb[0].mxu0 %v2600
    %v2636 = vpop.f32.mrb[0].mxu0
    %v2637 = vadd.f32 0.0, %v2636
    %v2638 = vpop.f32.mrb[0].mxu0
    %v2639 = vpop.f32.mrb[0].mxu0
    %v2640 = vpop.f32.mrb[0].mxu0
    %2641 = vdwg.mxu0
    %v2642 = vadd.f32 %v2594, %v2637
    %v2643 = vmul.f32 %v2642, 0.5
    %v2644 = vtanh.pop %v2643
    %v2645 = vmul.f32 %v2644, 0.5
    %v2646 = vadd.f32 %v2645, 0.5
    %v2647 = vtanh.pop %v2642
    %v2648 = vmul.f32 %v2646, %v2508
    %2650 = vrot.lane.b32.xlu0 %v2647, 64
    %v2651 = vpop.permute.xlu0 %2650
    %v2653 = vmul.f32 %v2646, %v2651
    %2655 = vrot.lane.b32.xlu0 %v2653, 32
    %v2656 = vpop.permute.xlu0 %2655
    %v2658 = vadd.f32 %v2648, %v2656
    %v2659 = vtanh.pop %v2658
    %2661 = vrot.lane.b32.xlu0 %v2659, 64
    %v2662 = vpop.permute.xlu0 %2661
    %v2664 = vmul.f32 %v2646, %v2662
    %v2665 = vsel %vm944, %v2664, %v2507
    %v2666 = vsel %vm944, %v2658, %v2508
    %v2667 = vsel %vm944, %v2664, 0.0
    %2669 = vrot.lane.b32.xlu0 %v2667, 32
    %v2670 = vpop.permute.xlu0 %2669
    %2672 = vst.msk [vmem:[%s952] sm:$0xff] %vm143, %v2670
    %v2673 = vld [vmem:[%s954] sm:$0xff]
    %v2674 = vpack.c.bf16 %v2586, %v2586
    %2676 = vrot.lane.b32.xlu0 %v2674, 32
    %v2677 = vpop.permute.xlu0 %2676
    %v2679 = vsel %vm143, %v2677, 0
    %2681 = vmatprep.subr.bf16.mxu0 0
    %2682 = vmatpush1.bf16.msra.mxu0 %v2204
    %2683 = vmatprep.subr.bf16.mxu0 0
    %2684 = vmatpush1.bf16.msra.mxu0 %v2205
    %2685 = vmatprep.subr.bf16.mxu0 0
    %2686 = vmatpush1.bf16.msra.mxu0 0
    %2687 = vmatprep.subr.bf16.mxu0 0
    %2688 = vmatpush1.bf16.msra.mxu0 0
    %2689 = vmatprep.subr.bf16.mxu0 0
    %2690 = vmatpush1.bf16.msra.mxu0 0
    %2691 = vmatprep.subr.bf16.mxu0 0
    %2692 = vmatpush1.bf16.msra.mxu0 0
    %2693 = vmatprep.subr.bf16.mxu0 0
    %2694 = vmatpush1.bf16.msra.mxu0 0
    %2695 = vmatprep.subr.bf16.mxu0 0
    %2696 = vmatpush1.bf16.msra.mxu0 0
    %2697 = vmatprep.subr.bf16.mxu0 0
    %2698 = vmatpush1.bf16.msra.mxu0 0
    %2699 = vmatprep.subr.bf16.mxu0 0
    %2700 = vmatpush1.bf16.msra.mxu0 0
    %2701 = vmatprep.subr.bf16.mxu0 0
    %2702 = vmatpush1.bf16.msra.mxu0 0
    %2703 = vmatprep.subr.bf16.mxu0 0
    %2704 = vmatpush1.bf16.msra.mxu0 0
    %2705 = vmatprep.subr.bf16.mxu0 0
    %2706 = vmatpush1.bf16.msra.mxu0 0
    %2707 = vmatprep.subr.bf16.mxu0 0
    %2708 = vmatpush1.bf16.msra.mxu0 0
    %2709 = vmatprep.subr.bf16.mxu0 0
    %2710 = vmatpush1.bf16.msra.mxu0 0
    %2711 = vmatprep.subr.bf16.mxu0 0
    %2712 = vmatpush1.bf16.msra.mxu0 0
    %2713 = vmatprep.mubr.bf16.mxu0 0
    %2714 = vmatmul.mubr.bf16.gmra.mrb[0].mxu0 %v2679
    %v2715 = vpop.f32.mrb[0].mxu0
    %v2716 = vadd.f32 0.0, %v2715
    %v2717 = vpop.f32.mrb[0].mxu0
    %v2718 = vpop.f32.mrb[0].mxu0
    %v2719 = vpop.f32.mrb[0].mxu0
    %2720 = vdwg.mxu0
    %v2721 = vadd.f32 %v2673, %v2716
    %v2722 = vmul.f32 %v2721, 0.5
    %v2723 = vtanh.pop %v2722
    %v2724 = vmul.f32 %v2723, 0.5
    %v2725 = vadd.f32 %v2724, 0.5
    %v2726 = vtanh.pop %v2721
    %v2727 = vmul.f32 %v2725, %v2587
    %2729 = vrot.lane.b32.xlu0 %v2726, 64
    %v2730 = vpop.permute.xlu0 %2729
    %v2732 = vmul.f32 %v2725, %v2730
    %2734 = vrot.lane.b32.xlu0 %v2732, 32
    %v2735 = vpop.permute.xlu0 %2734
    %v2737 = vadd.f32 %v2727, %v2735
    %v2738 = vtanh.pop %v2737
    %2740 = vrot.lane.b32.xlu0 %v2738, 64
    %v2741 = vpop.permute.xlu0 %2740
    %v2743 = vmul.f32 %v2725, %v2741
    %v2744 = vsel %vm1031, %v2743, %v2586
    %v2745 = vsel %vm1031, %v2737, %v2587
    %v2746 = vsel %vm1031, %v2743, 0.0
    %2748 = vrot.lane.b32.xlu0 %v2746, 32
    %v2749 = vpop.permute.xlu0 %2748
    %2751 = vst.msk [vmem:[%s1039] sm:$0xff] %vm143, %v2749
    %v2752 = vld [vmem:[%s1041] sm:$0xff]
    %v2753 = vpack.c.bf16 %v2665, %v2665
    %2755 = vrot.lane.b32.xlu0 %v2753, 32
    %v2756 = vpop.permute.xlu0 %2755
    %v2758 = vsel %vm143, %v2756, 0
    %2760 = vmatprep.subr.bf16.mxu0 0
    %2761 = vmatpush1.bf16.msra.mxu0 %v2121
    %2762 = vmatprep.subr.bf16.mxu0 0
    %2763 = vmatpush1.bf16.msra.mxu0 %v2122
    %2764 = vmatprep.subr.bf16.mxu0 0
    %2765 = vmatpush1.bf16.msra.mxu0 0
    %2766 = vmatprep.subr.bf16.mxu0 0
    %2767 = vmatpush1.bf16.msra.mxu0 0
    %2768 = vmatprep.subr.bf16.mxu0 0
    %2769 = vmatpush1.bf16.msra.mxu0 0
    %2770 = vmatprep.subr.bf16.mxu0 0
    %2771 = vmatpush1.bf16.msra.mxu0 0
    %2772 = vmatprep.subr.bf16.mxu0 0
    %2773 = vmatpush1.bf16.msra.mxu0 0
    %2774 = vmatprep.subr.bf16.mxu0 0
    %2775 = vmatpush1.bf16.msra.mxu0 0
    %2776 = vmatprep.subr.bf16.mxu0 0
    %2777 = vmatpush1.bf16.msra.mxu0 0
    %2778 = vmatprep.subr.bf16.mxu0 0
    %2779 = vmatpush1.bf16.msra.mxu0 0
    %2780 = vmatprep.subr.bf16.mxu0 0
    %2781 = vmatpush1.bf16.msra.mxu0 0
    %2782 = vmatprep.subr.bf16.mxu0 0
    %2783 = vmatpush1.bf16.msra.mxu0 0
    %2784 = vmatprep.subr.bf16.mxu0 0
    %2785 = vmatpush1.bf16.msra.mxu0 0
    %2786 = vmatprep.subr.bf16.mxu0 0
    %2787 = vmatpush1.bf16.msra.mxu0 0
    %2788 = vmatprep.subr.bf16.mxu0 0
    %2789 = vmatpush1.bf16.msra.mxu0 0
    %2790 = vmatprep.subr.bf16.mxu0 0
    %2791 = vmatpush1.bf16.msra.mxu0 0
    %2792 = vmatprep.mubr.bf16.mxu0 0
    %2793 = vmatmul.mubr.bf16.gmra.mrb[0].mxu0 %v2758
    %v2794 = vpop.f32.mrb[0].mxu0
    %v2795 = vadd.f32 0.0, %v2794
    %v2796 = vpop.f32.mrb[0].mxu0
    %v2797 = vpop.f32.mrb[0].mxu0
    %v2798 = vpop.f32.mrb[0].mxu0
    %2799 = vdwg.mxu0
    %v2800 = vadd.f32 %v2752, %v2795
    %v2801 = vmul.f32 %v2800, 0.5
    %v2802 = vtanh.pop %v2801
    %v2803 = vmul.f32 %v2802, 0.5
    %v2804 = vadd.f32 %v2803, 0.5
    %v2805 = vtanh.pop %v2800
    %v2806 = vmul.f32 %v2804, %v2666
    %2808 = vrot.lane.b32.xlu0 %v2805, 64
    %v2809 = vpop.permute.xlu0 %2808
    %v2811 = vmul.f32 %v2804, %v2809
    %2813 = vrot.lane.b32.xlu0 %v2811, 32
    %v2814 = vpop.permute.xlu0 %2813
    %v2816 = vadd.f32 %v2806, %v2814
    %v2817 = vtanh.pop %v2816
    %2819 = vrot.lane.b32.xlu0 %v2817, 64
    %v2820 = vpop.permute.xlu0 %2819
    %v2822 = vmul.f32 %v2804, %v2820
    %v2823 = vsel %vm1031, %v2822, %v2665
    %v2824 = vsel %vm1031, %v2816, %v2666
    %v2825 = vsel %vm1031, %v2822, 0.0
    %2827 = vrot.lane.b32.xlu0 %v2825, 32
    %v2828 = vpop.permute.xlu0 %2827
    %2830 = vst.msk [vmem:[%s1120] sm:$0xff] %vm143, %v2828
    %v2831 = vld [vmem:[%s1122] sm:$0xff]
    %v2832 = vpack.c.bf16 %v2744, %v2744
    %2834 = vrot.lane.b32.xlu0 %v2832, 32
    %v2835 = vpop.permute.xlu0 %2834
    %v2837 = vsel %vm143, %v2835, 0
    %2839 = vmatprep.subr.bf16.mxu0 0
    %2840 = vmatpush1.bf16.msra.mxu0 %v2204
    %2841 = vmatprep.subr.bf16.mxu0 0
    %2842 = vmatpush1.bf16.msra.mxu0 %v2205
    %2843 = vmatprep.subr.bf16.mxu0 0
    %2844 = vmatpush1.bf16.msra.mxu0 0
    %2845 = vmatprep.subr.bf16.mxu0 0
    %2846 = vmatpush1.bf16.msra.mxu0 0
    %2847 = vmatprep.subr.bf16.mxu0 0
    %2848 = vmatpush1.bf16.msra.mxu0 0
    %2849 = vmatprep.subr.bf16.mxu0 0
    %2850 = vmatpush1.bf16.msra.mxu0 0
    %2851 = vmatprep.subr.bf16.mxu0 0
    %2852 = vmatpush1.bf16.msra.mxu0 0
    %2853 = vmatprep.subr.bf16.mxu0 0
    %2854 = vmatpush1.bf16.msra.mxu0 0
    %2855 = vmatprep.subr.bf16.mxu0 0
    %2856 = vmatpush1.bf16.msra.mxu0 0
    %2857 = vmatprep.subr.bf16.mxu0 0
    %2858 = vmatpush1.bf16.msra.mxu0 0
    %2859 = vmatprep.subr.bf16.mxu0 0
    %2860 = vmatpush1.bf16.msra.mxu0 0
    %2861 = vmatprep.subr.bf16.mxu0 0
    %2862 = vmatpush1.bf16.msra.mxu0 0
    %2863 = vmatprep.subr.bf16.mxu0 0
    %2864 = vmatpush1.bf16.msra.mxu0 0
    %2865 = vmatprep.subr.bf16.mxu0 0
    %2866 = vmatpush1.bf16.msra.mxu0 0
    %2867 = vmatprep.subr.bf16.mxu0 0
    %2868 = vmatpush1.bf16.msra.mxu0 0
    %2869 = vmatprep.subr.bf16.mxu0 0
    %2870 = vmatpush1.bf16.msra.mxu0 0
    %2871 = vmatprep.mubr.bf16.mxu0 0
    %2872 = vmatmul.mubr.bf16.gmra.mrb[0].mxu0 %v2837
    %v2873 = vpop.f32.mrb[0].mxu0
    %v2874 = vadd.f32 0.0, %v2873
    %v2875 = vpop.f32.mrb[0].mxu0
    %v2876 = vpop.f32.mrb[0].mxu0
    %v2877 = vpop.f32.mrb[0].mxu0
    %2878 = vdwg.mxu0
    %v2879 = vadd.f32 %v2831, %v2874
    %v2880 = vmul.f32 %v2879, 0.5
    %v2881 = vtanh.pop %v2880
    %v2882 = vmul.f32 %v2881, 0.5
    %v2883 = vadd.f32 %v2882, 0.5
    %v2884 = vtanh.pop %v2879
    %v2885 = vmul.f32 %v2883, %v2745
    %2887 = vrot.lane.b32.xlu0 %v2884, 64
    %v2888 = vpop.permute.xlu0 %2887
    %v2890 = vmul.f32 %v2883, %v2888
    %2892 = vrot.lane.b32.xlu0 %v2890, 32
    %v2893 = vpop.permute.xlu0 %2892
    %v2895 = vadd.f32 %v2885, %v2893
    %v2896 = vtanh.pop %v2895
    %2898 = vrot.lane.b32.xlu0 %v2896, 64
    %v2899 = vpop.permute.xlu0 %2898
    %v2901 = vmul.f32 %v2883, %v2899
    %v2902 = vsel %vm944, %v2901, %v2744
    %v2903 = vsel %vm944, %v2895, %v2745
    %v2904 = vsel %vm944, %v2901, 0.0
    %2906 = vrot.lane.b32.xlu0 %v2904, 32
    %v2907 = vpop.permute.xlu0 %2906
    %2909 = vst.msk [vmem:[%s1201] sm:$0xff] %vm143, %v2907
    %v2910 = vld [vmem:[%s1203] sm:$0xff]
    %v2911 = vpack.c.bf16 %v2823, %v2823
    %2913 = vrot.lane.b32.xlu0 %v2911, 32
    %v2914 = vpop.permute.xlu0 %2913
    %v2916 = vsel %vm143, %v2914, 0
    %2918 = vmatprep.subr.bf16.mxu0 0
    %2919 = vmatpush1.bf16.msra.mxu0 %v2121
    %2920 = vmatprep.subr.bf16.mxu0 0
    %2921 = vmatpush1.bf16.msra.mxu0 %v2122
    %2922 = vmatprep.subr.bf16.mxu0 0
    %2923 = vmatpush1.bf16.msra.mxu0 0
    %2924 = vmatprep.subr.bf16.mxu0 0
    %2925 = vmatpush1.bf16.msra.mxu0 0
    %2926 = vmatprep.subr.bf16.mxu0 0
    %2927 = vmatpush1.bf16.msra.mxu0 0
    %2928 = vmatprep.subr.bf16.mxu0 0
    %2929 = vmatpush1.bf16.msra.mxu0 0
    %2930 = vmatprep.subr.bf16.mxu0 0
    %2931 = vmatpush1.bf16.msra.mxu0 0
    %2932 = vmatprep.subr.bf16.mxu0 0
    %2933 = vmatpush1.bf16.msra.mxu0 0
    %2934 = vmatprep.subr.bf16.mxu0 0
    %2935 = vmatpush1.bf16.msra.mxu0 0
    %2936 = vmatprep.subr.bf16.mxu0 0
    %2937 = vmatpush1.bf16.msra.mxu0 0
    %2938 = vmatprep.subr.bf16.mxu0 0
    %2939 = vmatpush1.bf16.msra.mxu0 0
    %2940 = vmatprep.subr.bf16.mxu0 0
    %2941 = vmatpush1.bf16.msra.mxu0 0
    %2942 = vmatprep.subr.bf16.mxu0 0
    %2943 = vmatpush1.bf16.msra.mxu0 0
    %2944 = vmatprep.subr.bf16.mxu0 0
    %2945 = vmatpush1.bf16.msra.mxu0 0
    %2946 = vmatprep.subr.bf16.mxu0 0
    %2947 = vmatpush1.bf16.msra.mxu0 0
    %2948 = vmatprep.subr.bf16.mxu0 0
    %2949 = vmatpush1.bf16.msra.mxu0 0
    %2950 = vmatprep.mubr.bf16.mxu0 0
    %2951 = vmatmul.mubr.bf16.gmra.mrb[0].mxu0 %v2916
    %v2952 = vpop.f32.mrb[0].mxu0
    %v2953 = vadd.f32 0.0, %v2952
    %v2954 = vpop.f32.mrb[0].mxu0
    %v2955 = vpop.f32.mrb[0].mxu0
    %v2956 = vpop.f32.mrb[0].mxu0
    %2957 = vdwg.mxu0
    %v2958 = vadd.f32 %v2910, %v2953
    %v2959 = vmul.f32 %v2958, 0.5
    %v2960 = vtanh.pop %v2959
    %v2961 = vmul.f32 %v2960, 0.5
    %v2962 = vadd.f32 %v2961, 0.5
    %v2963 = vtanh.pop %v2958
    %v2964 = vmul.f32 %v2962, %v2824
    %2966 = vrot.lane.b32.xlu0 %v2963, 64
    %v2967 = vpop.permute.xlu0 %2966
    %v2969 = vmul.f32 %v2962, %v2967
    %2971 = vrot.lane.b32.xlu0 %v2969, 32
    %v2972 = vpop.permute.xlu0 %2971
    %v2974 = vadd.f32 %v2964, %v2972
    %v2975 = vtanh.pop %v2974
    %2977 = vrot.lane.b32.xlu0 %v2975, 64
    %v2978 = vpop.permute.xlu0 %2977
    %v2980 = vmul.f32 %v2962, %v2978
    %v2981 = vsel %vm857, %v2980, %v2823
    %v2982 = vsel %vm857, %v2974, %v2824
    %v2983 = vsel %vm857, %v2980, 0.0
    %2985 = vrot.lane.b32.xlu0 %v2983, 32
    %v2986 = vpop.permute.xlu0 %2985
    %2988 = vst.msk [vmem:[%s1282] sm:$0xff] %vm143, %v2986
    %v2989 = vld [vmem:[%s1284] sm:$0xff]
    %v2990 = vpack.c.bf16 %v2902, %v2902
    %2992 = vrot.lane.b32.xlu0 %v2990, 32
    %v2993 = vpop.permute.xlu0 %2992
    %v2995 = vsel %vm143, %v2993, 0
    %2997 = vmatprep.subr.bf16.mxu0 0
    %2998 = vmatpush1.bf16.msra.mxu0 %v2204
    %2999 = vmatprep.subr.bf16.mxu0 0
    %3000 = vmatpush1.bf16.msra.mxu0 %v2205
    %3001 = vmatprep.subr.bf16.mxu0 0
    %3002 = vmatpush1.bf16.msra.mxu0 0
    %3003 = vmatprep.subr.bf16.mxu0 0
    %3004 = vmatpush1.bf16.msra.mxu0 0
    %3005 = vmatprep.subr.bf16.mxu0 0
    %3006 = vmatpush1.bf16.msra.mxu0 0
    %3007 = vmatprep.subr.bf16.mxu0 0
    %3008 = vmatpush1.bf16.msra.mxu0 0
    %3009 = vmatprep.subr.bf16.mxu0 0
    %3010 = vmatpush1.bf16.msra.mxu0 0
    %3011 = vmatprep.subr.bf16.mxu0 0
    %3012 = vmatpush1.bf16.msra.mxu0 0
    %3013 = vmatprep.subr.bf16.mxu0 0
    %3014 = vmatpush1.bf16.msra.mxu0 0
    %3015 = vmatprep.subr.bf16.mxu0 0
    %3016 = vmatpush1.bf16.msra.mxu0 0
    %3017 = vmatprep.subr.bf16.mxu0 0
    %3018 = vmatpush1.bf16.msra.mxu0 0
    %3019 = vmatprep.subr.bf16.mxu0 0
    %3020 = vmatpush1.bf16.msra.mxu0 0
    %3021 = vmatprep.subr.bf16.mxu0 0
    %3022 = vmatpush1.bf16.msra.mxu0 0
    %3023 = vmatprep.subr.bf16.mxu0 0
    %3024 = vmatpush1.bf16.msra.mxu0 0
    %3025 = vmatprep.subr.bf16.mxu0 0
    %3026 = vmatpush1.bf16.msra.mxu0 0
    %3027 = vmatprep.subr.bf16.mxu0 0
    %3028 = vmatpush1.bf16.msra.mxu0 0
    %3029 = vmatprep.mubr.bf16.mxu0 0
    %3030 = vmatmul.mubr.bf16.gmra.mrb[0].mxu0 %v2995
    %v3031 = vpop.f32.mrb[0].mxu0
    %v3032 = vadd.f32 0.0, %v3031
    %v3033 = vpop.f32.mrb[0].mxu0
    %v3034 = vpop.f32.mrb[0].mxu0
    %v3035 = vpop.f32.mrb[0].mxu0
    %3036 = vdwg.mxu0
    %v3037 = vadd.f32 %v2989, %v3032
    %v3038 = vmul.f32 %v3037, 0.5
    %v3039 = vtanh.pop %v3038
    %v3040 = vmul.f32 %v3039, 0.5
    %v3041 = vadd.f32 %v3040, 0.5
    %v3042 = vtanh.pop %v3037
    %v3043 = vmul.f32 %v3041, %v2903
    %3045 = vrot.lane.b32.xlu0 %v3042, 64
    %v3046 = vpop.permute.xlu0 %3045
    %v3048 = vmul.f32 %v3041, %v3046
    %3050 = vrot.lane.b32.xlu0 %v3048, 32
    %v3051 = vpop.permute.xlu0 %3050
    %v3053 = vadd.f32 %v3043, %v3051
    %v3054 = vtanh.pop %v3053
    %3056 = vrot.lane.b32.xlu0 %v3054, 64
    %v3057 = vpop.permute.xlu0 %3056
    %v3059 = vmul.f32 %v3041, %v3057
    %v3060 = vsel %vm770, %v3059, %v2902
    %v3061 = vsel %vm770, %v3053, %v2903
    %v3062 = vsel %vm770, %v3059, 0.0
    %3064 = vrot.lane.b32.xlu0 %v3062, 32
    %v3065 = vpop.permute.xlu0 %3064
    %3067 = vst.msk [vmem:[%s1363] sm:$0xff] %vm143, %v3065
    %v3068 = vld [vmem:[%s1365] sm:$0xff]
    %v3069 = vpack.c.bf16 %v2981, %v2981
    %3071 = vrot.lane.b32.xlu0 %v3069, 32
    %v3072 = vpop.permute.xlu0 %3071
    %v3074 = vsel %vm143, %v3072, 0
    %3076 = vmatprep.subr.bf16.mxu0 0
    %3077 = vmatpush1.bf16.msra.mxu0 %v2121
    %3078 = vmatprep.subr.bf16.mxu0 0
    %3079 = vmatpush1.bf16.msra.mxu0 %v2122
    %3080 = vmatprep.subr.bf16.mxu0 0
    %3081 = vmatpush1.bf16.msra.mxu0 0
    %3082 = vmatprep.subr.bf16.mxu0 0
    %3083 = vmatpush1.bf16.msra.mxu0 0
    %3084 = vmatprep.subr.bf16.mxu0 0
    %3085 = vmatpush1.bf16.msra.mxu0 0
    %3086 = vmatprep.subr.bf16.mxu0 0
    %3087 = vmatpush1.bf16.msra.mxu0 0
    %3088 = vmatprep.subr.bf16.mxu0 0
    %3089 = vmatpush1.bf16.msra.mxu0 0
    %3090 = vmatprep.subr.bf16.mxu0 0
    %3091 = vmatpush1.bf16.msra.mxu0 0
    %3092 = vmatprep.subr.bf16.mxu0 0
    %3093 = vmatpush1.bf16.msra.mxu0 0
    %3094 = vmatprep.subr.bf16.mxu0 0
    %3095 = vmatpush1.bf16.msra.mxu0 0
    %3096 = vmatprep.subr.bf16.mxu0 0
    %3097 = vmatpush1.bf16.msra.mxu0 0
    %3098 = vmatprep.subr.bf16.mxu0 0
    %3099 = vmatpush1.bf16.msra.mxu0 0
    %3100 = vmatprep.subr.bf16.mxu0 0
    %3101 = vmatpush1.bf16.msra.mxu0 0
    %3102 = vmatprep.subr.bf16.mxu0 0
    %3103 = vmatpush1.bf16.msra.mxu0 0
    %3104 = vmatprep.subr.bf16.mxu0 0
    %3105 = vmatpush1.bf16.msra.mxu0 0
    %3106 = vmatprep.subr.bf16.mxu0 0
    %3107 = vmatpush1.bf16.msra.mxu0 0
    %3108 = vmatprep.mubr.bf16.mxu0 0
    %3109 = vmatmul.mubr.bf16.gmra.mrb[0].mxu0 %v3074
    %v3110 = vpop.f32.mrb[0].mxu0
    %v3111 = vadd.f32 0.0, %v3110
    %v3112 = vpop.f32.mrb[0].mxu0
    %v3113 = vpop.f32.mrb[0].mxu0
    %v3114 = vpop.f32.mrb[0].mxu0
    %3115 = vdwg.mxu0
    %v3116 = vadd.f32 %v3068, %v3111
    %v3117 = vmul.f32 %v3116, 0.5
    %v3118 = vtanh.pop %v3117
    %v3119 = vmul.f32 %v3118, 0.5
    %v3120 = vadd.f32 %v3119, 0.5
    %v3121 = vtanh.pop %v3116
    %v3122 = vmul.f32 %v3120, %v2982
    %3124 = vrot.lane.b32.xlu0 %v3121, 64
    %v3125 = vpop.permute.xlu0 %3124
    %v3127 = vmul.f32 %v3120, %v3125
    %3129 = vrot.lane.b32.xlu0 %v3127, 32
    %v3130 = vpop.permute.xlu0 %3129
    %v3132 = vadd.f32 %v3122, %v3130
    %v3133 = vtanh.pop %v3132
    %3135 = vrot.lane.b32.xlu0 %v3133, 64
    %v3136 = vpop.permute.xlu0 %3135
    %v3138 = vmul.f32 %v3120, %v3136
    %v3139 = vsel %vm683, %v3138, %v2981
    %v3140 = vsel %vm683, %v3132, %v2982
    %v3141 = vsel %vm683, %v3138, 0.0
    %3143 = vrot.lane.b32.xlu0 %v3141, 32
    %v3144 = vpop.permute.xlu0 %3143
    %3146 = vst.msk [vmem:[%s1444] sm:$0xff] %vm143, %v3144
    %v3147 = vld [vmem:[%s1446] sm:$0xff]
    %v3148 = vpack.c.bf16 %v3060, %v3060
    %3150 = vrot.lane.b32.xlu0 %v3148, 32
    %v3151 = vpop.permute.xlu0 %3150
    %v3153 = vsel %vm143, %v3151, 0
    %3155 = vmatprep.subr.bf16.mxu0 0
    %3156 = vmatpush1.bf16.msra.mxu0 %v2204
    %3157 = vmatprep.subr.bf16.mxu0 0
    %3158 = vmatpush1.bf16.msra.mxu0 %v2205
    %3159 = vmatprep.subr.bf16.mxu0 0
    %3160 = vmatpush1.bf16.msra.mxu0 0
    %3161 = vmatprep.subr.bf16.mxu0 0
    %3162 = vmatpush1.bf16.msra.mxu0 0
    %3163 = vmatprep.subr.bf16.mxu0 0
    %3164 = vmatpush1.bf16.msra.mxu0 0
    %3165 = vmatprep.subr.bf16.mxu0 0
    %3166 = vmatpush1.bf16.msra.mxu0 0
    %3167 = vmatprep.subr.bf16.mxu0 0
    %3168 = vmatpush1.bf16.msra.mxu0 0
    %3169 = vmatprep.subr.bf16.mxu0 0
    %3170 = vmatpush1.bf16.msra.mxu0 0
    %3171 = vmatprep.subr.bf16.mxu0 0
    %3172 = vmatpush1.bf16.msra.mxu0 0
    %3173 = vmatprep.subr.bf16.mxu0 0
    %3174 = vmatpush1.bf16.msra.mxu0 0
    %3175 = vmatprep.subr.bf16.mxu0 0
    %3176 = vmatpush1.bf16.msra.mxu0 0
    %3177 = vmatprep.subr.bf16.mxu0 0
    %3178 = vmatpush1.bf16.msra.mxu0 0
    %3179 = vmatprep.subr.bf16.mxu0 0
    %3180 = vmatpush1.bf16.msra.mxu0 0
    %3181 = vmatprep.subr.bf16.mxu0 0
    %3182 = vmatpush1.bf16.msra.mxu0 0
    %3183 = vmatprep.subr.bf16.mxu0 0
    %3184 = vmatpush1.bf16.msra.mxu0 0
    %3185 = vmatprep.subr.bf16.mxu0 0
    %3186 = vmatpush1.bf16.msra.mxu0 0
    %3187 = vmatprep.mubr.bf16.mxu0 0
    %3188 = vmatmul.mubr.bf16.gmra.mrb[0].mxu0 %v3153
    %v3189 = vpop.f32.mrb[0].mxu0
    %v3190 = vadd.f32 0.0, %v3189
    %v3191 = vpop.f32.mrb[0].mxu0
    %v3192 = vpop.f32.mrb[0].mxu0
    %v3193 = vpop.f32.mrb[0].mxu0
    %3194 = vdwg.mxu0
    %v3195 = vadd.f32 %v3147, %v3190
    %v3196 = vmul.f32 %v3195, 0.5
    %v3197 = vtanh.pop %v3196
    %v3198 = vmul.f32 %v3197, 0.5
    %v3199 = vadd.f32 %v3198, 0.5
    %v3200 = vtanh.pop %v3195
    %v3201 = vmul.f32 %v3199, %v3061
    %3203 = vrot.lane.b32.xlu0 %v3200, 64
    %v3204 = vpop.permute.xlu0 %3203
    %v3206 = vmul.f32 %v3199, %v3204
    %3208 = vrot.lane.b32.xlu0 %v3206, 32
    %v3209 = vpop.permute.xlu0 %3208
    %v3211 = vadd.f32 %v3201, %v3209
    %v3212 = vtanh.pop %v3211
    %3214 = vrot.lane.b32.xlu0 %v3212, 64
    %v3215 = vpop.permute.xlu0 %3214
    %v3217 = vmul.f32 %v3199, %v3215
    %v3218 = vsel %vm596, %v3217, %v3060
    %v3219 = vsel %vm596, %v3211, %v3061
    %v3220 = vsel %vm596, %v3217, 0.0
    %3222 = vrot.lane.b32.xlu0 %v3220, 32
    %v3223 = vpop.permute.xlu0 %3222
    %3225 = vst.msk [vmem:[%s1525] sm:$0xff] %vm143, %v3223
    %v3226 = vld [vmem:[%s1527] sm:$0xff]
    %v3227 = vpack.c.bf16 %v3139, %v3139
    %3229 = vrot.lane.b32.xlu0 %v3227, 32
    %v3230 = vpop.permute.xlu0 %3229
    %v3232 = vsel %vm143, %v3230, 0
    %3234 = vmatprep.subr.bf16.mxu0 0
    %3235 = vmatpush1.bf16.msra.mxu0 %v2121
    %3236 = vmatprep.subr.bf16.mxu0 0
    %3237 = vmatpush1.bf16.msra.mxu0 %v2122
    %3238 = vmatprep.subr.bf16.mxu0 0
    %3239 = vmatpush1.bf16.msra.mxu0 0
    %3240 = vmatprep.subr.bf16.mxu0 0
    %3241 = vmatpush1.bf16.msra.mxu0 0
    %3242 = vmatprep.subr.bf16.mxu0 0
    %3243 = vmatpush1.bf16.msra.mxu0 0
    %3244 = vmatprep.subr.bf16.mxu0 0
    %3245 = vmatpush1.bf16.msra.mxu0 0
    %3246 = vmatprep.subr.bf16.mxu0 0
    %3247 = vmatpush1.bf16.msra.mxu0 0
    %3248 = vmatprep.subr.bf16.mxu0 0
    %3249 = vmatpush1.bf16.msra.mxu0 0
    %3250 = vmatprep.subr.bf16.mxu0 0
    %3251 = vmatpush1.bf16.msra.mxu0 0
    %3252 = vmatprep.subr.bf16.mxu0 0
    %3253 = vmatpush1.bf16.msra.mxu0 0
    %3254 = vmatprep.subr.bf16.mxu0 0
    %3255 = vmatpush1.bf16.msra.mxu0 0
    %3256 = vmatprep.subr.bf16.mxu0 0
    %3257 = vmatpush1.bf16.msra.mxu0 0
    %3258 = vmatprep.subr.bf16.mxu0 0
    %3259 = vmatpush1.bf16.msra.mxu0 0
    %3260 = vmatprep.subr.bf16.mxu0 0
    %3261 = vmatpush1.bf16.msra.mxu0 0
    %3262 = vmatprep.subr.bf16.mxu0 0
    %3263 = vmatpush1.bf16.msra.mxu0 0
    %3264 = vmatprep.subr.bf16.mxu0 0
    %3265 = vmatpush1.bf16.msra.mxu0 0
    %3266 = vmatprep.mubr.bf16.mxu0 0
    %3267 = vmatmul.mubr.bf16.gmra.mrb[0].mxu0 %v3232
    %v3268 = vpop.f32.mrb[0].mxu0
    %v3269 = vadd.f32 0.0, %v3268
    %v3270 = vpop.f32.mrb[0].mxu0
    %v3271 = vpop.f32.mrb[0].mxu0
    %v3272 = vpop.f32.mrb[0].mxu0
    %3273 = vdwg.mxu0
    %v3274 = vadd.f32 %v3226, %v3269
    %v3275 = vmul.f32 %v3274, 0.5
    %v3276 = vtanh.pop %v3275
    %v3277 = vmul.f32 %v3276, 0.5
    %v3278 = vadd.f32 %v3277, 0.5
    %v3279 = vtanh.pop %v3274
    %v3280 = vmul.f32 %v3278, %v3140
    %3282 = vrot.lane.b32.xlu0 %v3279, 64
    %v3283 = vpop.permute.xlu0 %3282
    %v3285 = vmul.f32 %v3278, %v3283
    %3287 = vrot.lane.b32.xlu0 %v3285, 32
    %v3288 = vpop.permute.xlu0 %3287
    %v3290 = vadd.f32 %v3280, %v3288
    %v3291 = vtanh.pop %v3290
    %3293 = vrot.lane.b32.xlu0 %v3291, 64
    %v3294 = vpop.permute.xlu0 %3293
    %v3296 = vmul.f32 %v3278, %v3294
    %v3297 = vsel %vm510, %v3296, 0.0
    %3299 = vrot.lane.b32.xlu0 %v3297, 32
    %v3300 = vpop.permute.xlu0 %3299
    %3302 = vst.msk [vmem:[%s1604] sm:$0xff] %vm143, %v3300
    %v3303 = vld [vmem:[#allocation5] sm:$0xff]
    %v3304 = vpack.c.bf16 %v3218, %v3218
    %3306 = vrot.lane.b32.xlu0 %v3304, 32
    %v3307 = vpop.permute.xlu0 %3306
    %v3309 = vsel %vm143, %v3307, 0
    %3311 = vmatprep.subr.bf16.mxu0 0
    %3312 = vmatpush1.bf16.msra.mxu0 %v2204
    %3313 = vmatprep.subr.bf16.mxu0 0
    %3314 = vmatpush1.bf16.msra.mxu0 %v2205
    %3315 = vmatprep.subr.bf16.mxu0 0
    %3316 = vmatpush1.bf16.msra.mxu0 0
    %3317 = vmatprep.subr.bf16.mxu0 0
    %3318 = vmatpush1.bf16.msra.mxu0 0
    %3319 = vmatprep.subr.bf16.mxu0 0
    %3320 = vmatpush1.bf16.msra.mxu0 0
    %3321 = vmatprep.subr.bf16.mxu0 0
    %3322 = vmatpush1.bf16.msra.mxu0 0
    %3323 = vmatprep.subr.bf16.mxu0 0
    %3324 = vmatpush1.bf16.msra.mxu0 0
    %3325 = vmatprep.subr.bf16.mxu0 0
    %3326 = vmatpush1.bf16.msra.mxu0 0
    %3327 = vmatprep.subr.bf16.mxu0 0
    %3328 = vmatpush1.bf16.msra.mxu0 0
    %3329 = vmatprep.subr.bf16.mxu0 0
    %3330 = vmatpush1.bf16.msra.mxu0 0
    %3331 = vmatprep.subr.bf16.mxu0 0
    %3332 = vmatpush1.bf16.msra.mxu0 0
    %3333 = vmatprep.subr.bf16.mxu0 0
    %3334 = vmatpush1.bf16.msra.mxu0 0
    %3335 = vmatprep.subr.bf16.mxu0 0
    %3336 = vmatpush1.bf16.msra.mxu0 0
    %3337 = vmatprep.subr.bf16.mxu0 0
    %3338 = vmatpush1.bf16.msra.mxu0 0
    %3339 = vmatprep.subr.bf16.mxu0 0
    %3340 = vmatpush1.bf16.msra.mxu0 0
    %3341 = vmatprep.subr.bf16.mxu0 0
    %3342 = vmatpush1.bf16.msra.mxu0 0
    %3343 = vmatprep.mubr.bf16.mxu0 0
    %3344 = vmatmul.mubr.bf16.gmra.mrb[0].mxu0 %v3309
    %v3345 = vpop.f32.mrb[0].mxu0
    %v3346 = vadd.f32 0.0, %v3345
    %v3347 = vpop.f32.mrb[0].mxu0
    %v3348 = vpop.f32.mrb[0].mxu0
    %v3349 = vpop.f32.mrb[0].mxu0
    %3350 = vdwg.mxu0
    %v3351 = vadd.f32 %v3303, %v3346
    %v3352 = vmul.f32 %v3351, 0.5
    %v3353 = vtanh.pop %v3352
    %v3354 = vmul.f32 %v3353, 0.5
    %v3355 = vadd.f32 %v3354, 0.5
    %v3356 = vtanh.pop %v3351
    %v3357 = vmul.f32 %v3355, %v3219
    %3359 = vrot.lane.b32.xlu0 %v3356, 64
    %v3360 = vpop.permute.xlu0 %3359
    %v3362 = vmul.f32 %v3355, %v3360
    %3364 = vrot.lane.b32.xlu0 %v3362, 32
    %v3365 = vpop.permute.xlu0 %3364
    %v3367 = vadd.f32 %v3357, %v3365
    %v3368 = vtanh.pop %v3367
    %3370 = vrot.lane.b32.xlu0 %v3368, 64
    %v3371 = vpop.permute.xlu0 %3370
    %v3373 = vmul.f32 %v3355, %v3371
    %v3374 = vsel %vm420, %v3373, 0.0
    %3376 = vrot.lane.b32.xlu0 %v3374, 32
    %v3377 = vpop.permute.xlu0 %3376
    %3379 = vst.msk [vmem:[#allocation3] sm:$0xff] %vm143, %v3377
    %v3380 = vld [vmem:[#allocation2] sm:$0xff]
    %v3381 = vld [vmem:[#allocation2 + $0x8] sm:$0xff]
    %v3382 = vld [vmem:[#allocation2 + $0x10] sm:$0xff]
    %v3383 = vld [vmem:[#allocation2 + $0x18] sm:$0xff]
    %v3384 = vld [vmem:[#allocation2 + $0x20] sm:$0xff]
    %v3385 = vld [vmem:[#allocation2 + $0x28] sm:$0xff]
    %v3386 = vld [vmem:[#allocation2 + $0x30] sm:$0xff]
    %v3387 = vld [vmem:[#allocation2 + $0x38] sm:$0xff]
    %v3388 = vpack.c.bf16 %v3381, %v3380
    %v3389 = vpack.c.bf16 %v3383, %v3382
    %v3390 = vpack.c.bf16 %v3385, %v3384
    %v3391 = vpack.c.bf16 %v3387, %v3386
    %v3392 = vld [vmem:[#allocation3] sm:$0xff]
    %v3393 = vld [vmem:[#allocation3 + $0x8] sm:$0xff]
    %v3394 = vld [vmem:[#allocation3 + $0x10] sm:$0xff]
    %v3395 = vld [vmem:[#allocation3 + $0x18] sm:$0xff]
    %v3396 = vld [vmem:[#allocation3 + $0x20] sm:$0xff]
    %v3397 = vld [vmem:[#allocation3 + $0x28] sm:$0xff]
    %v3398 = vld [vmem:[#allocation3 + $0x30] sm:$0xff]
    %v3399 = vld [vmem:[#allocation3 + $0x38] sm:$0xff]
    %v3400 = vpack.c.bf16 %v3393, %v3392
    %v3401 = vpack.c.bf16 %v3395, %v3394
    %v3402 = vpack.c.bf16 %v3397, %v3396
    %v3403 = vpack.c.bf16 %v3399, %v3398
    %v3404 = vld [vmem:[#allocation11] sm:$0xf]
    %v3405 = vld [vmem:[#allocation11 + $0x4] sm:$0xf]
    %v3406 = vld [vmem:[#allocation11 + $0x8] sm:$0xf]
    %v3407 = vld [vmem:[#allocation11 + $0xc] sm:$0xf]
    %v3408 = vld [vmem:[%s9] sm:$0x1]
    %v3410 = vlaneseq
    %v3411 = vshrl.u32 %v3410, 7
    %v3412 = vsub.s32 0, %v3411
    %v3413 = vrot.slane %v3408, %v3412
    %v3419 = vunpack.c.l.b16 %v3404
    %v3420 = vunpack.c.l.b16 %v3405
    %v3421 = vunpack.c.l.b16 %v3406
    %v3422 = vunpack.c.l.b16 %v3407
    %v3423 = vpack.c.b16 %v3420, %v3419
    %v3424 = vpack.c.b16 %v3422, %v3421
    %v3428 = vsel %vm143, %v3388, 0
    %v3431 = vsel %vm143, %v3389, 0
    %v3434 = vsel %vm143, %v3390, 0
    %v3437 = vsel %vm143, %v3391, 0
    %3439 = vmatprep.subr.bf16.mxu0 0
    %3440 = vmatpush1.bf16.msra.mxu0 %v3423
    %3441 = vmatprep.subr.bf16.mxu0 0
    %3442 = vmatpush1.bf16.msra.mxu0 %v3424
    %3443 = vmatprep.subr.bf16.mxu0 0
    %3444 = vmatpush1.bf16.msra.mxu0 0
    %3445 = vmatprep.subr.bf16.mxu0 0
    %3446 = vmatpush1.bf16.msra.mxu0 0
    %3447 = vmatprep.subr.bf16.mxu0 0
    %3448 = vmatpush1.bf16.msra.mxu0 0
    %3449 = vmatprep.subr.bf16.mxu0 0
    %3450 = vmatpush1.bf16.msra.mxu0 0
    %3451 = vmatprep.subr.bf16.mxu0 0
    %3452 = vmatpush1.bf16.msra.mxu0 0
    %3453 = vmatprep.subr.bf16.mxu0 0
    %3454 = vmatpush1.bf16.msra.mxu0 0
    %3455 = vmatprep.subr.bf16.mxu0 0
    %3456 = vmatpush1.bf16.msra.mxu0 0
    %3457 = vmatprep.subr.bf16.mxu0 0
    %3458 = vmatpush1.bf16.msra.mxu0 0
    %3459 = vmatprep.subr.bf16.mxu0 0
    %3460 = vmatpush1.bf16.msra.mxu0 0
    %3461 = vmatprep.subr.bf16.mxu0 0
    %3462 = vmatpush1.bf16.msra.mxu0 0
    %3463 = vmatprep.subr.bf16.mxu0 0
    %3464 = vmatpush1.bf16.msra.mxu0 0
    %3465 = vmatprep.subr.bf16.mxu0 0
    %3466 = vmatpush1.bf16.msra.mxu0 0
    %3467 = vmatprep.subr.bf16.mxu0 0
    %3468 = vmatpush1.bf16.msra.mxu0 0
    %3469 = vmatprep.subr.bf16.mxu0 0
    %3470 = vmatpush1.bf16.msra.mxu0 0
    %3471 = vmatprep.mubr.bf16.mxu0 0
    %3472 = vmatmul.mubr.bf16.gmra.mrb[0].mxu0 %v3428
    %v3473 = vpop.f32.mrb[0].mxu0
    %v3474 = vadd.f32 %v3413, %v3473
    %v3475 = vpop.f32.mrb[0].mxu0
    %v3476 = vpop.f32.mrb[0].mxu0
    %v3477 = vadd.f32 %v3413, %v3476
    %v3478 = vpop.f32.mrb[0].mxu0
    %3479 = vmatprep.mubr.bf16.mxu0 0
    %3480 = vmatmul.mubr.bf16.gmra.mrb[0].mxu0 %v3431
    %v3481 = vpop.f32.mrb[0].mxu0
    %v3482 = vadd.f32 %v3413, %v3481
    %v3483 = vpop.f32.mrb[0].mxu0
    %v3484 = vpop.f32.mrb[0].mxu0
    %v3485 = vadd.f32 %v3413, %v3484
    %v3486 = vpop.f32.mrb[0].mxu0
    %3487 = vmatprep.mubr.bf16.mxu0 0
    %3488 = vmatmul.mubr.bf16.gmra.mrb[0].mxu0 %v3434
    %v3489 = vpop.f32.mrb[0].mxu0
    %v3490 = vadd.f32 %v3413, %v3489
    %v3491 = vpop.f32.mrb[0].mxu0
    %v3492 = vpop.f32.mrb[0].mxu0
    %v3493 = vadd.f32 %v3413, %v3492
    %v3494 = vpop.f32.mrb[0].mxu0
    %3495 = vmatprep.mubr.bf16.mxu0 0
    %3496 = vmatmul.mubr.bf16.gmra.mrb[0].mxu0 %v3437
    %v3497 = vpop.f32.mrb[0].mxu0
    %v3498 = vadd.f32 %v3413, %v3497
    %v3499 = vpop.f32.mrb[0].mxu0
    %v3500 = vpop.f32.mrb[0].mxu0
    %v3501 = vadd.f32 %v3413, %v3500
    %v3502 = vpop.f32.mrb[0].mxu0
    %3503 = vdwg.mxu0
    %v3505 = vsel %vm143, %v3400, 0
    %v3508 = vsel %vm143, %v3401, 0
    %v3511 = vsel %vm143, %v3402, 0
    %v3514 = vsel %vm143, %v3403, 0
    %3516 = vmatprep.subr.bf16.mxu0 0
    %3517 = vmatpush1.bf16.msra.mxu0 %v3423
    %3518 = vmatprep.subr.bf16.mxu0 0
    %3519 = vmatpush1.bf16.msra.mxu0 %v3424
    %3520 = vmatprep.subr.bf16.mxu0 0
    %3521 = vmatpush1.bf16.msra.mxu0 0
    %3522 = vmatprep.subr.bf16.mxu0 0
    %3523 = vmatpush1.bf16.msra.mxu0 0
    %3524 = vmatprep.subr.bf16.mxu0 0
    %3525 = vmatpush1.bf16.msra.mxu0 0
    %3526 = vmatprep.subr.bf16.mxu0 0
    %3527 = vmatpush1.bf16.msra.mxu0 0
    %3528 = vmatprep.subr.bf16.mxu0 0
    %3529 = vmatpush1.bf16.msra.mxu0 0
    %3530 = vmatprep.subr.bf16.mxu0 0
    %3531 = vmatpush1.bf16.msra.mxu0 0
    %3532 = vmatprep.subr.bf16.mxu0 0
    %3533 = vmatpush1.bf16.msra.mxu0 0
    %3534 = vmatprep.subr.bf16.mxu0 0
    %3535 = vmatpush1.bf16.msra.mxu0 0
    %3536 = vmatprep.subr.bf16.mxu0 0
    %3537 = vmatpush1.bf16.msra.mxu0 0
    %3538 = vmatprep.subr.bf16.mxu0 0
    %3539 = vmatpush1.bf16.msra.mxu0 0
    %3540 = vmatprep.subr.bf16.mxu0 0
    %3541 = vmatpush1.bf16.msra.mxu0 0
    %3542 = vmatprep.subr.bf16.mxu0 0
    %3543 = vmatpush1.bf16.msra.mxu0 0
    %3544 = vmatprep.subr.bf16.mxu0 0
    %3545 = vmatpush1.bf16.msra.mxu0 0
    %3546 = vmatprep.subr.bf16.mxu0 0
    %3547 = vmatpush1.bf16.msra.mxu0 0
    %3548 = vmatprep.mubr.bf16.mxu0 0
    %3549 = vmatmul.mubr.bf16.gmra.mrb[0].mxu0 %v3505
    %v3550 = vpop.f32.mrb[0].mxu0
    %v3551 = vadd.f32 %v3413, %v3550
    %v3552 = vpop.f32.mrb[0].mxu0
    %v3553 = vpop.f32.mrb[0].mxu0
    %v3554 = vadd.f32 %v3413, %v3553
    %v3555 = vpop.f32.mrb[0].mxu0
    %3556 = vmatprep.mubr.bf16.mxu0 0
    %3557 = vmatmul.mubr.bf16.gmra.mrb[0].mxu0 %v3508
    %v3558 = vpop.f32.mrb[0].mxu0
    %v3559 = vadd.f32 %v3413, %v3558
    %v3560 = vpop.f32.mrb[0].mxu0
    %v3561 = vpop.f32.mrb[0].mxu0
    %v3562 = vadd.f32 %v3413, %v3561
    %v3563 = vpop.f32.mrb[0].mxu0
    %3564 = vmatprep.mubr.bf16.mxu0 0
    %3565 = vmatmul.mubr.bf16.gmra.mrb[0].mxu0 %v3511
    %v3566 = vpop.f32.mrb[0].mxu0
    %v3567 = vadd.f32 %v3413, %v3566
    %v3568 = vpop.f32.mrb[0].mxu0
    %v3569 = vpop.f32.mrb[0].mxu0
    %v3570 = vadd.f32 %v3413, %v3569
    %v3571 = vpop.f32.mrb[0].mxu0
    %3572 = vmatprep.mubr.bf16.mxu0 0
    %3573 = vmatmul.mubr.bf16.gmra.mrb[0].mxu0 %v3514
    %v3574 = vpop.f32.mrb[0].mxu0
    %v3575 = vadd.f32 %v3413, %v3574
    %v3576 = vpop.f32.mrb[0].mxu0
    %v3577 = vpop.f32.mrb[0].mxu0
    %v3578 = vadd.f32 %v3413, %v3577
    %v3579 = vpop.f32.mrb[0].mxu0
    %3580 = vdwg.mxu0
    %3589 = vrot.lane.b32.xlu0 %v3551, 32
    %v3590 = vpop.permute.xlu0 %3589
    %3591 = vrot.lane.b32.xlu0 %v3554, 32
    %v3592 = vpop.permute.xlu0 %3591
    %3593 = vrot.lane.b32.xlu0 %v3559, 32
    %v3594 = vpop.permute.xlu0 %3593
    %3595 = vrot.lane.b32.xlu0 %v3562, 32
    %v3596 = vpop.permute.xlu0 %3595
    %3597 = vrot.lane.b32.xlu0 %v3567, 32
    %v3598 = vpop.permute.xlu0 %3597
    %3599 = vrot.lane.b32.xlu0 %v3570, 32
    %v3600 = vpop.permute.xlu0 %3599
    %3601 = vrot.lane.b32.xlu0 %v3575, 32
    %v3602 = vpop.permute.xlu0 %3601
    %3603 = vrot.lane.b32.xlu0 %v3578, 32
    %v3604 = vpop.permute.xlu0 %3603
    %v3613 = vsel %vm143, %v3474, %v3590
    %v3614 = vsel %vm143, %v3477, %v3592
    %v3615 = vsel %vm143, %v3482, %v3594
    %v3616 = vsel %vm143, %v3485, %v3596
    %v3617 = vsel %vm143, %v3490, %v3598
    %v3618 = vsel %vm143, %v3493, %v3600
    %v3619 = vsel %vm143, %v3498, %v3602
    %v3620 = vsel %vm143, %v3501, %v3604
    %vm3621 = vcmask 523264
    %3622 = vst.msk [vmem:[%s10] sm:$0xff] %vm3621, %v3613
    %3623 = vst.msk [vmem:[%s10 + $0x8] sm:$0xff] %vm3621, %v3614
    %3624 = vst.msk [vmem:[%s10 + $0x10] sm:$0xff] %vm3621, %v3615
    %3625 = vst.msk [vmem:[%s10 + $0x18] sm:$0xff] %vm3621, %v3616
    %3626 = vst.msk [vmem:[%s10 + $0x20] sm:$0xff] %vm3621, %v3617
    %3627 = vst.msk [vmem:[%s10 + $0x28] sm:$0xff] %vm3621, %v3618
    %3628 = vst.msk [vmem:[%s10 + $0x30] sm:$0xff] %vm3621, %v3619
    %3629 = vst.msk [vmem:[%s10 + $0x38] sm:$0xff] %vm3621, %v3620
    // Predicated region
    $region58: #{lstm_bi_lm_forward.1} parent=1 // pred_check
      _
    $region59: #{lstm_bi_lm_forward.1} parent=1 // pred_check_branch
      %3631 = sbr.rel (0) target = $region61
    $region60: #{lstm_bi_lm_forward.1} parent=1 // pred_region
      _
    $region61: #{lstm_bi_lm_forward.1} parent=1 // pred_fallthru
      _
    // Predicated region
    $region62: #{lstm_bi_lm_forward.1} parent=1 // pred_check
      _
    $region63: #{lstm_bi_lm_forward.1} parent=1 // pred_check_branch
      %3633 = sbr.rel (0) target = $region65
    $region64: #{lstm_bi_lm_forward.1} parent=1 // pred_region
      _
    $region65: #{lstm_bi_lm_forward.1} parent=1 // pred_fallthru
      _
    %3634 = vsyncpa [#allocation7], 1
    %3635 = vsyncpa [#allocation9], 1
    %3636 = vsyncpa [#allocation12], 1

</llo_original>
